<compile_context>
chip_gen: v7x
topology: tpu7x:2x2x1
jax: 0.10.0
libtpu: 0.0.40
codegen_flags: <defaults>
</compile_context>

<pallas_src>
import jax
import jax.numpy as jnp
from jax.experimental import pallas as pl
from jax.experimental.pallas import tpu as pltpu

# Network dimensions (from the PyTorch module).
D_IN, D_H1, D_H2, D_H3, D_OUT = 2048, 512, 512, 2048, 10562

TM = 8                         # f32/bf16 batch tile; batch is padded to this
TN = 512                       # fc4 output-tile width (pads 10562 -> 10752)
VMEM_LIMIT = 32 * 1024 * 1024  # resident set is ~14 MB; plenty of headroom


def _round_up(x, m):
    return ((x + m - 1) // m) * m


# ----------------------------------------------------------------------------
# Single fused kernel: fc1+relu -> fc2+relu -> fc3+relu (once per batch tile,
# cached in VMEM scratch) -> fc4 tile for the current output-column block.
# ----------------------------------------------------------------------------
def _onestep_kernel(x_ref, w1_ref, b1_ref, w2_ref, b2_ref, w3_ref, b3_ref,
                    w4_ref, b4_ref, o_ref, h_scratch):
    j = pl.program_id(0)                      # fc4 output-column tile (outer)
    i = pl.program_id(1)                      # batch tile (inner)
    row0 = pl.multiple_of(i * TM, TM)

    @pl.when(j == 0)
    def _():
        # Compute the fc1-3 activations for this batch tile exactly once.
        xb = x_ref[...].astype(jnp.bfloat16)
        h = jnp.dot(xb, w1_ref[...], preferred_element_type=jnp.float32)
        h = jnp.maximum(h + b1_ref[...], 0.0).astype(jnp.bfloat16)
        h = jnp.dot(h, w2_ref[...], preferred_element_type=jnp.float32)
        h = jnp.maximum(h + b2_ref[...], 0.0).astype(jnp.bfloat16)
        h = jnp.dot(h, w3_ref[...], preferred_element_type=jnp.float32)
        h = jnp.maximum(h + b3_ref[...], 0.0).astype(jnp.bfloat16)
        h_scratch[pl.ds(row0, TM), :] = h

    # fc4 for this (batch tile, output-column tile).
    h = h_scratch[pl.ds(row0, TM), :]
    out = jnp.dot(h, w4_ref[...], preferred_element_type=jnp.float32)
    o_ref[...] = (out + b4_ref[...]).astype(o_ref.dtype)


def one_step_net_pallas(x, p):
    """x: (Mp, D_IN) f32, Mp % TM == 0; p: pre-padded/bf16 params dict."""
    Mp = x.shape[0]
    Np = p["w4"].shape[1]
    assert Mp % TM == 0 and Np % TN == 0
    grid = (Np // TN, Mp // TM)   # N outermost: w4 streamed exactly once.
    return pl.pallas_call(
        _onestep_kernel,
        out_shape=jax.ShapeDtypeStruct((Mp, Np), jnp.float32),
        grid_spec=pltpu.PrefetchScalarGridSpec(
            num_scalar_prefetch=0,
            grid=grid,
            in_specs=[
                pl.BlockSpec((TM, D_IN), lambda j, i: (i, 0)),     # x
                pl.BlockSpec((D_IN, D_H1), lambda j, i: (0, 0)),   # w1 (bf16)
                pl.BlockSpec((1, D_H1), lambda j, i: (0, 0)),      # b1 (f32)
                pl.BlockSpec((D_H1, D_H2), lambda j, i: (0, 0)),   # w2 (bf16)
                pl.BlockSpec((1, D_H2), lambda j, i: (0, 0)),      # b2 (f32)
                pl.BlockSpec((D_H2, D_H3), lambda j, i: (0, 0)),   # w3 (bf16)
                pl.BlockSpec((1, D_H3), lambda j, i: (0, 0)),      # b3 (f32)
                pl.BlockSpec((D_H3, TN), lambda j, i: (0, j)),     # w4 (bf16)
                pl.BlockSpec((1, TN), lambda j, i: (0, j)),        # b4 (f32)
            ],
            out_specs=pl.BlockSpec((TM, TN), lambda j, i: (i, j)),
            scratch_shapes=[pltpu.VMEM((Mp, D_H3), jnp.bfloat16)],  # cached h
        ),
        compiler_params=pltpu.CompilerParams(
            # N axis carries the h_scratch write->read dependency; keep both
            # axes sequential ("arbitrary").
            dimension_semantics=("arbitrary", "arbitrary"),
            vmem_limit_bytes=VMEM_LIMIT,
        ),
    )(x, p["w1"], p["b1"], p["w2"], p["b2"], p["w3"], p["b3"], p["w4"], p["b4"])


# ----------------------------------------------------------------------------
# Parameters
# ----------------------------------------------------------------------------
def init_params(key):
    """Deterministic parameter init; shapes match the PyTorch module (f32)."""
    dims = [(D_IN, D_H1), (D_H1, D_H2), (D_H2, D_H3), (D_H3, D_OUT)]
    params = []
    for i, (din, dout) in enumerate(dims):
        kw, kb = jax.random.split(jax.random.fold_in(key, i))
        bound = 1.0 / jnp.sqrt(din)
        w = jax.random.uniform(kw, (din, dout), jnp.float32, -bound, bound)
        b = jax.random.uniform(kb, (dout,), jnp.float32, -bound, bound)
        params.append((w, b))
    return params


def prepare_padded_params(params):
    """Pad + cast params ONCE, outside the hot (jitted) forward path.

    Weights -> bf16 (halves the HBM-bound byte stream); biases stay f32.
    fc4 is padded along N to a multiple of TN (10562 -> 10752).
    """
    (w1, b1), (w2, b2), (w3, b3), (w4, b4) = params
    n_pad = _round_up(D_OUT, TN)
    w4p = jnp.pad(w4, ((0, 0), (0, n_pad - D_OUT)))
    b4p = jnp.pad(b4, (0, n_pad - D_OUT))
    return {
        "w1": w1.astype(jnp.bfloat16), "b1": b1.reshape(1, -1).astype(jnp.float32),
        "w2": w2.astype(jnp.bfloat16), "b2": b2.reshape(1, -1).astype(jnp.float32),
        "w3": w3.astype(jnp.bfloat16), "b3": b3.reshape(1, -1).astype(jnp.float32),
        "w4": w4p.astype(jnp.bfloat16), "b4": b4p.reshape(1, -1).astype(jnp.float32),
    }


# ----------------------------------------------------------------------------
# Forward
# ----------------------------------------------------------------------------
@jax.jit
def one_step_net_forward(x, padded_params):
    x = x.astype(jnp.float32)
    M = x.shape[0]
    Mp = _round_up(M, TM)
    xp = jnp.pad(x, ((0, Mp - M), (0, 0)))  # tiny pad; weights are pre-padded
    out = one_step_net_pallas(xp, padded_params)
    return out[:M, :D_OUT]


def reference_forward(x, params):
    x = x.astype(jnp.float32)
    for i, (w, b) in enumerate(params):
        x = x @ w + b
        if i < len(params) - 1:
            x = jnp.maximum(x, 0.0)
    return x


if __name__ == "__main__":
    key = jax.random.PRNGKey(0)
    kx, kp = jax.random.split(key)

    batch = 2
    x = jax.random.normal(kx, (batch, D_IN), jnp.float32)
    params = init_params(kp)
    padded_params = prepare_padded_params(params)

    out = one_step_net_forward(x, padded_params)
    out = jax.block_until_ready(out)

    assert out.shape == (batch, D_OUT), out.shape
    ref = reference_forward(x, params)  # f32 reference (full-precision weights)
    # Tolerance loosened for bf16 weight storage (f32 accumulation retained).
    assert jnp.allclose(out, ref, atol=1e-2, rtol=2e-2), (
        float(jnp.max(jnp.abs(out - ref)))
    )

    print("KERNEL_OK")
</pallas_src>

<mosaic_0001>
module attributes {stable_mosaic.version = 11 : i64} {
  func.func @_onestep_kernel(%arg0: i32, %arg1: i32, %arg2: memref<8x2048xf32, #tpu.memory_space<vmem>>, %arg3: memref<2048x512xbf16, #tpu.memory_space<vmem>>, %arg4: memref<1x512xf32, #tpu.memory_space<vmem>>, %arg5: memref<512x512xbf16, #tpu.memory_space<vmem>>, %arg6: memref<1x512xf32, #tpu.memory_space<vmem>>, %arg7: memref<512x2048xbf16, #tpu.memory_space<vmem>>, %arg8: memref<1x2048xf32, #tpu.memory_space<vmem>>, %arg9: memref<2048x512xbf16, #tpu.memory_space<vmem>>, %arg10: memref<1x512xf32, #tpu.memory_space<vmem>>, %arg11: memref<8x512xf32, #tpu.memory_space<vmem>>, %arg12: memref<8x2048xbf16, #tpu.memory_space<vmem>>) attributes {dimension_semantics = [#tpu.dimension_semantics<arbitrary>, #tpu.dimension_semantics<arbitrary>], iteration_bounds = array<i64: 21, 1>, scalar_prefetch = 0 : i64, scratch_operands = 1 : i64, tpu.core_type = #tpu.core_type<tc>, window_params = [{transform_indices = @transform_0, window_bounds = array<i64: 8, 2048>}, {pipeline_mode = #tpu.pipeline_mode<synchronous>, transform_indices = @transform_1, window_bounds = array<i64: 2048, 512>}, {pipeline_mode = #tpu.pipeline_mode<synchronous>, transform_indices = @transform_2, window_bounds = array<i64: 1, 512>}, {pipeline_mode = #tpu.pipeline_mode<synchronous>, transform_indices = @transform_3, window_bounds = array<i64: 512, 512>}, {pipeline_mode = #tpu.pipeline_mode<synchronous>, transform_indices = @transform_4, window_bounds = array<i64: 1, 512>}, {pipeline_mode = #tpu.pipeline_mode<synchronous>, transform_indices = @transform_5, window_bounds = array<i64: 512, 2048>}, {pipeline_mode = #tpu.pipeline_mode<synchronous>, transform_indices = @transform_6, window_bounds = array<i64: 1, 2048>}, {transform_indices = @transform_7, window_bounds = array<i64: 2048, 512>}, {transform_indices = @transform_8, window_bounds = array<i64: 1, 512>}, {transform_indices = @transform_9, window_bounds = array<i64: 8, 512>}]} {
    %c8_i32 = arith.constant 8 : i32
    %0 = arith.muli %arg1, %c8_i32 : i32
    %1 = tpu.assume_multiple %0, 8 : i32
    %c0_i32 = arith.constant 0 : i32
    %2 = arith.cmpi eq, %arg0, %c0_i32 : i32
    %3 = arith.extui %2 : i1 to i32
    %c0_i32_0 = arith.constant 0 : i32
    %4 = arith.cmpi ne, %3, %c0_i32_0 : i32
    scf.if %4 {
      %c0_7 = arith.constant 0 : index
      %c0_8 = arith.constant 0 : index
      %13 = vector.load %arg2[%c0_7, %c0_8] : memref<8x2048xf32, #tpu.memory_space<vmem>>, vector<8x2048xf32>
      %14 = arith.truncf %13 : vector<8x2048xf32> to vector<8x2048xbf16>
      %c0_9 = arith.constant 0 : index
      %c0_10 = arith.constant 0 : index
      %15 = vector.load %arg3[%c0_9, %c0_10] : memref<2048x512xbf16, #tpu.memory_space<vmem>>, vector<2048x512xbf16>
      %cst_11 = arith.constant dense<0.000000e+00> : vector<8x512xf32>
      %16 = tpu.matmul %14, %15, %cst_11 {dimension_numbers = #tpu.dot_dimension_numbers<[1], [0], [0], [1], [0, 0, 1, 1], [], []>} : vector<8x2048xbf16>, vector<2048x512xbf16>, vector<8x512xf32> -> vector<8x512xf32>
      %c0_12 = arith.constant 0 : index
      %c0_13 = arith.constant 0 : index
      %17 = vector.load %arg4[%c0_12, %c0_13] : memref<1x512xf32, #tpu.memory_space<vmem>>, vector<1x512xf32>
      %18 = vector.broadcast %17 : vector<1x512xf32> to vector<8x512xf32>
      %19 = arith.addf %16, %18 : vector<8x512xf32>
      %cst_14 = arith.constant 0.000000e+00 : f32
      %20 = vector.broadcast %cst_14 : f32 to vector<8x512xf32>
      %21 = arith.maximumf %19, %20 : vector<8x512xf32>
      %22 = arith.truncf %21 : vector<8x512xf32> to vector<8x512xbf16>
      %c0_15 = arith.constant 0 : index
      %c0_16 = arith.constant 0 : index
      %23 = vector.load %arg5[%c0_15, %c0_16] : memref<512x512xbf16, #tpu.memory_space<vmem>>, vector<512x512xbf16>
      %cst_17 = arith.constant dense<0.000000e+00> : vector<8x512xf32>
      %24 = tpu.matmul %22, %23, %cst_17 {dimension_numbers = #tpu.dot_dimension_numbers<[1], [0], [0], [1], [0, 0, 1, 1], [], []>} : vector<8x512xbf16>, vector<512x512xbf16>, vector<8x512xf32> -> vector<8x512xf32>
      %c0_18 = arith.constant 0 : index
      %c0_19 = arith.constant 0 : index
      %25 = vector.load %arg6[%c0_18, %c0_19] : memref<1x512xf32, #tpu.memory_space<vmem>>, vector<1x512xf32>
      %26 = vector.broadcast %25 : vector<1x512xf32> to vector<8x512xf32>
      %27 = arith.addf %24, %26 : vector<8x512xf32>
      %cst_20 = arith.constant 0.000000e+00 : f32
      %28 = vector.broadcast %cst_20 : f32 to vector<8x512xf32>
      %29 = arith.maximumf %27, %28 : vector<8x512xf32>
      %30 = arith.truncf %29 : vector<8x512xf32> to vector<8x512xbf16>
      %c0_21 = arith.constant 0 : index
      %c0_22 = arith.constant 0 : index
      %31 = vector.load %arg7[%c0_21, %c0_22] : memref<512x2048xbf16, #tpu.memory_space<vmem>>, vector<512x2048xbf16>
      %cst_23 = arith.constant dense<0.000000e+00> : vector<8x2048xf32>
      %32 = tpu.matmul %30, %31, %cst_23 {dimension_numbers = #tpu.dot_dimension_numbers<[1], [0], [0], [1], [0, 0, 1, 1], [], []>} : vector<8x512xbf16>, vector<512x2048xbf16>, vector<8x2048xf32> -> vector<8x2048xf32>
      %c0_24 = arith.constant 0 : index
      %c0_25 = arith.constant 0 : index
      %33 = vector.load %arg8[%c0_24, %c0_25] : memref<1x2048xf32, #tpu.memory_space<vmem>>, vector<1x2048xf32>
      %34 = vector.broadcast %33 : vector<1x2048xf32> to vector<8x2048xf32>
      %35 = arith.addf %32, %34 : vector<8x2048xf32>
      %cst_26 = arith.constant 0.000000e+00 : f32
      %36 = vector.broadcast %cst_26 : f32 to vector<8x2048xf32>
      %37 = arith.maximumf %35, %36 : vector<8x2048xf32>
      %38 = arith.truncf %37 : vector<8x2048xf32> to vector<8x2048xbf16>
      %39 = arith.index_cast %1 : i32 to index
      %c0_27 = arith.constant 0 : index
      %40 = vector.load %arg12[%39, %c0_27] : memref<8x2048xbf16, #tpu.memory_space<vmem>>, vector<8x2048xbf16>
      tpu.vector_store %arg12[%39, %c0_27], %38 {strides = array<i32>} : memref<8x2048xbf16, #tpu.memory_space<vmem>>, vector<8x2048xbf16>,
    } else {
    }
    %5 = arith.index_cast %1 : i32 to index
    %c0 = arith.constant 0 : index
    %6 = vector.load %arg12[%5, %c0] : memref<8x2048xbf16, #tpu.memory_space<vmem>>, vector<8x2048xbf16>
    %c0_1 = arith.constant 0 : index
    %c0_2 = arith.constant 0 : index
    %7 = vector.load %arg9[%c0_1, %c0_2] : memref<2048x512xbf16, #tpu.memory_space<vmem>>, vector<2048x512xbf16>
    %cst = arith.constant dense<0.000000e+00> : vector<8x512xf32>
    %8 = tpu.matmul %6, %7, %cst {dimension_numbers = #tpu.dot_dimension_numbers<[1], [0], [0], [1], [0, 0, 1, 1], [], []>} : vector<8x2048xbf16>, vector<2048x512xbf16>, vector<8x512xf32> -> vector<8x512xf32>
    %c0_3 = arith.constant 0 : index
    %c0_4 = arith.constant 0 : index
    %9 = vector.load %arg10[%c0_3, %c0_4] : memref<1x512xf32, #tpu.memory_space<vmem>>, vector<1x512xf32>
    %10 = vector.broadcast %9 : vector<1x512xf32> to vector<8x512xf32>
    %11 = arith.addf %8, %10 : vector<8x512xf32>
    %c0_5 = arith.constant 0 : index
    %c0_6 = arith.constant 0 : index
    %12 = vector.load %arg11[%c0_5, %c0_6] : memref<8x512xf32, #tpu.memory_space<vmem>>, vector<8x512xf32>
    tpu.vector_store %arg11[%c0_5, %c0_6], %11 {strides = array<i32>} : memref<8x512xf32, #tpu.memory_space<vmem>>, vector<8x512xf32>,
    return
  }
  func.func @transform_0(%arg0: i32, %arg1: i32) -> (i32, i32) {
    %c0_i32 = arith.constant 0 : i32
    %c0_i32_0 = arith.constant 0 : i32
    return %arg1, %c0_i32 : i32, i32
  }
  func.func @transform_1(%arg0: i32, %arg1: i32) -> (i32, i32) {
    %c0_i32 = arith.constant 0 : i32
    %c0_i32_0 = arith.constant 0 : i32
    %c0_i32_1 = arith.constant 0 : i32
    return %c0_i32, %c0_i32_0 : i32, i32
  }
  func.func @transform_2(%arg0: i32, %arg1: i32) -> (i32, i32) {
    %c0_i32 = arith.constant 0 : i32
    %c0_i32_0 = arith.constant 0 : i32
    %c0_i32_1 = arith.constant 0 : i32
    return %c0_i32, %c0_i32_0 : i32, i32
  }
  func.func @transform_3(%arg0: i32, %arg1: i32) -> (i32, i32) {
    %c0_i32 = arith.constant 0 : i32
    %c0_i32_0 = arith.constant 0 : i32
    %c0_i32_1 = arith.constant 0 : i32
    return %c0_i32, %c0_i32_0 : i32, i32
  }
  func.func @transform_4(%arg0: i32, %arg1: i32) -> (i32, i32) {
    %c0_i32 = arith.constant 0 : i32
    %c0_i32_0 = arith.constant 0 : i32
    %c0_i32_1 = arith.constant 0 : i32
    return %c0_i32, %c0_i32_0 : i32, i32
  }
  func.func @transform_5(%arg0: i32, %arg1: i32) -> (i32, i32) {
    %c0_i32 = arith.constant 0 : i32
    %c0_i32_0 = arith.constant 0 : i32
    %c0_i32_1 = arith.constant 0 : i32
    return %c0_i32, %c0_i32_0 : i32, i32
  }
  func.func @transform_6(%arg0: i32, %arg1: i32) -> (i32, i32) {
    %c0_i32 = arith.constant 0 : i32
    %c0_i32_0 = arith.constant 0 : i32
    %c0_i32_1 = arith.constant 0 : i32
    return %c0_i32, %c0_i32_0 : i32, i32
  }
  func.func @transform_7(%arg0: i32, %arg1: i32) -> (i32, i32) {
    %c0_i32 = arith.constant 0 : i32
    %c0_i32_0 = arith.constant 0 : i32
    return %c0_i32, %arg0 : i32, i32
  }
  func.func @transform_8(%arg0: i32, %arg1: i32) -> (i32, i32) {
    %c0_i32 = arith.constant 0 : i32
    %c0_i32_0 = arith.constant 0 : i32
    return %c0_i32, %arg0 : i32, i32
  }
  func.func @transform_9(%arg0: i32, %arg1: i32) -> (i32, i32) {
    %c0_i32 = arith.constant 0 : i32
    return %arg1, %arg0 : i32, i32
  }
}

</mosaic_0001>

<llo_original>
// kernel: one_step_net_forward.1
$region0: #{one_step_net_forward.1}
  #allocation0 [shape = 'u32[]', space=smem, size = 0x4, offset = 0x4, fixed_abs, tag = 'smem constant byte address 0x4 - core index']
  #allocation1 [shape = 'u32[144,128]{1,0:T(1,128)}', space=vmem, size = 0x12000, scoped, tag = 'internal scratch']
  #allocation2 [shape = 'bf16[8,2048]{1,0:T(8,128)(2,1)}', space=vmem, size = 0x8000, scoped, tag = 'scratch operand']
  %s0 = inlined_call_operand.vmem [shape: f32[8,2048], index: 0, kind: input, shape index: {}]
  %s1 = inlined_call_operand.hbm [shape: bf16[2048,512], index: 1, kind: input, shape index: {}]
  %s2 = inlined_call_operand.hbm [shape: f32[1,512], index: 2, kind: input, shape index: {}]
  %s3 = inlined_call_operand.hbm [shape: bf16[512,512], index: 3, kind: input, shape index: {}]
  %s4 = inlined_call_operand.hbm [shape: f32[1,512], index: 4, kind: input, shape index: {}]
  %s5 = inlined_call_operand.hbm [shape: bf16[512,2048], index: 5, kind: input, shape index: {}]
  %s6 = inlined_call_operand.hbm [shape: f32[1,2048], index: 6, kind: input, shape index: {}]
  %s7 = inlined_call_operand.hbm [shape: bf16[2048,10752], index: 7, kind: input, shape index: {}]
  %s8 = inlined_call_operand.hbm [shape: f32[1,10752], index: 8, kind: input, shape index: {}]
  %s9 = inlined_call_operand.vmem [shape: f32[8,10752], index: 9, kind: output, shape index: {}]
  %s10 = sld [smem:[#allocation0]]
  $region105: #{one_step_net_forward.1} parent=0
    _
  %s12 = ssub.s32 1, %s10
  %s13 = scalar_select 0, %s12, %s10
  $region1: #{one_step_net_forward.1} parent=0
    #allocation3 [shape = 'u8[2097152]{0}', space=vmem, size = 0x200000, scoped, tag = 'input window, operand 1, single buffered']
    #allocation4 [shape = 's32[2]{0}', space=sflag, size = 0x8, scoped, tag = 'scoped memory for one_step_net_forward.1']
    #allocation5 [shape = 'u8[2048]{0}', space=vmem, size = 0x800, scoped, tag = 'input window, operand 2, single buffered']
    #allocation6 [shape = 's32[1]{0}', space=sflag, size = 0x4, scoped, tag = 'scoped memory for one_step_net_forward.1']
    #allocation7 [shape = 'u8[524288]{0}', space=vmem, size = 0x80000, scoped, tag = 'input window, operand 3, single buffered']
    #allocation8 [shape = 'u8[2048]{0}', space=vmem, size = 0x800, scoped, tag = 'input window, operand 4, single buffered']
    #allocation9 [shape = 's32[1]{0}', space=sflag, size = 0x4, scoped, tag = 'scoped memory for one_step_net_forward.1']
    #allocation10 [shape = 'u8[2097152]{0}', space=vmem, size = 0x200000, scoped, tag = 'input window, operand 5, single buffered']
    #allocation11 [shape = 'u8[8192]{0}', space=vmem, size = 0x2000, scoped, tag = 'input window, operand 6, single buffered']
    #allocation12 [shape = 's32[1]{0}', space=sflag, size = 0x4, scoped, tag = 'scoped memory for one_step_net_forward.1']
    #allocation13 [shape = 'u8[4194304]{0}', space=vmem, size = 0x400000, scoped, tag = 'input window, operand 7']
    #allocation14 [shape = 'u8[4096]{0}', space=vmem, size = 0x1000, scoped, tag = 'input window, operand 8']
    %14 = vsyncpa [#allocation4], 0
    %15 = vsyncpa [#allocation6], 0
    %16 = vsyncpa [#allocation9], 0
    %17 = vsyncpa [#allocation12], 0
    loop: start=0, step=1, limit=23
    $region2: #{one_step_net_forward.1} parent=1 // loop_pre_header
      _
    $region3: #{one_step_net_forward.1} parent=1 // loop_header
      %s19 = sphi 0, %s23
      %p20 = scmp.ge.s32.totalorder %s19, 23
      %s26 = sphi 0, %s38
      %s27 = sphi 0, %s34
      %s28 = sphi 0, %s26
      %s29 = sphi 0, %s27
      %s30 = sphi 0, %s28
      %s31 = sphi 0, %s29
      %s41 = sphi 0, %s43
      %s44 = sphi 0, %s41
      %s45 = sphi 0, %s44
      %s61 = sphi 0, %s45
      %s65 = sphi 0, %s65
      %s67 = sphi 0, %s65
      %s68 = sphi 0, %s67
      %s82 = sphi 0, %s68
      %s86 = sphi 0, %s86
      %s88 = sphi 0, %s86
      %s89 = sphi 0, %s88
      %s103 = sphi 0, %s89
      %s107 = sphi 0, %s107
      %s109 = sphi 0, %s107
      %s110 = sphi 0, %s109
      %s124 = sphi 0, %s110
      %s128 = sphi 0, %s128
      %s130 = sphi 0, %s128
      %s131 = sphi 0, %s130
      %s145 = sphi 0, %s131
      %s149 = sphi 0, %s149
      %s151 = sphi 0, %s149
      %s152 = sphi 0, %s151
      %s166 = sphi 0, %s152
      %s170 = sphi 0, %s170
      %s172 = sphi 0, %s170
      %s173 = sphi 0, %s172
      %s187 = sphi 0, %s173
      %s193 = sphi 0, %s195
      %s196 = sphi 0, %s193
      %s197 = sphi 0, %s196
      %s213 = sphi 0, %s197
      %s219 = sphi 0, %s221
      %s222 = sphi 0, %s219
      %s223 = sphi 0, %s222
      %s239 = sphi 0, %s223
      %s247 = sphi 0, %s249
      %s250 = sphi 0, %s247
      %s251 = sphi 0, %s250
      %s267 = sphi 0, %s251
    $region4: #{one_step_net_forward.1} parent=1 // loop_header_branch
      %22 = sbr.rel (%p20) target = $region8
    $region5: #{one_step_net_forward.1} parent=1 // loop_body
      %s24 = ssub.s32 %s19, 1
      %s25 = ssub.s32 %s19, 2
      %s32 = sadd.s32 1, %s27
      %p33 = scmp.ge.s32.totalorder %s32, 1
      %s34 = scalar_select %p33, 0, %s32
      %s35 = sadd.s32 1, %s26
      %s36 = scalar_select %p33, %s35, %s26
      %p37 = scmp.ge.s32.totalorder %s36, 21
      %s38 = scalar_select %p37, 0, %s36
      %s39 = ssub.s32 %s27, %s34
      %p40 = scmp.eq.s32.totalorder %s39, 0
      %s42 = sadd.s32 %s41, 1
      %s43 = scalar_select %p40, %s41, %s42
      %p46 = pneg %p40
      %p47 = scmp.eq.s32.totalorder %s19, 20
      %p48 = por %p46, %p47
      %p49 = scmp.ne.s32.totalorder %s41, %s44
      %p50 = scmp.eq.s32.totalorder %s19, 0
      %p51 = por %p49, %p50
      %p52 = scmp.ne.s32.totalorder %s41, %s44
      %p53 = scmp.eq.s32.totalorder %s24, 20
      %p54 = por %p52, %p53
      %p55 = scmp.ne.s32.totalorder %s44, %s45
      %p56 = scmp.eq.s32.totalorder %s24, 0
      %p57 = por %p55, %p56
      %p58 = scmp.ne.s32.totalorder %s44, %s45
      %p59 = scmp.eq.s32.totalorder %s25, 20
      %p60 = por %p58, %p59
      %p62 = scmp.ne.s32.totalorder %s45, %s61
      %p63 = scmp.eq.s32.totalorder %s25, 0
      %p64 = por %p62, %p63
      %s66 = sadd.s32 %s65, 1
      %p69 = scmp.eq.s32.totalorder %s19, 20
      %p70 = scmp.ne.s32.totalorder %s65, %s67
      %p71 = scmp.eq.s32.totalorder %s19, 0
      %p72 = por %p70, %p71
      %p73 = scmp.ne.s32.totalorder %s65, %s67
      %p74 = scmp.eq.s32.totalorder %s24, 20
      %p75 = por %p73, %p74
      %p76 = scmp.ne.s32.totalorder %s67, %s68
      %p77 = scmp.eq.s32.totalorder %s24, 0
      %p78 = por %p76, %p77
      %p79 = scmp.ne.s32.totalorder %s67, %s68
      %p80 = scmp.eq.s32.totalorder %s25, 20
      %p81 = por %p79, %p80
      %p83 = scmp.ne.s32.totalorder %s68, %s82
      %p84 = scmp.eq.s32.totalorder %s25, 0
      %p85 = por %p83, %p84
      %s87 = sadd.s32 %s86, 1
      %p90 = scmp.eq.s32.totalorder %s19, 20
      %p91 = scmp.ne.s32.totalorder %s86, %s88
      %p92 = scmp.eq.s32.totalorder %s19, 0
      %p93 = por %p91, %p92
      %p94 = scmp.ne.s32.totalorder %s86, %s88
      %p95 = scmp.eq.s32.totalorder %s24, 20
      %p96 = por %p94, %p95
      %p97 = scmp.ne.s32.totalorder %s88, %s89
      %p98 = scmp.eq.s32.totalorder %s24, 0
      %p99 = por %p97, %p98
      %p100 = scmp.ne.s32.totalorder %s88, %s89
      %p101 = scmp.eq.s32.totalorder %s25, 20
      %p102 = por %p100, %p101
      %p104 = scmp.ne.s32.totalorder %s89, %s103
      %p105 = scmp.eq.s32.totalorder %s25, 0
      %p106 = por %p104, %p105
      %s108 = sadd.s32 %s107, 1
      %p111 = scmp.eq.s32.totalorder %s19, 20
      %p112 = scmp.ne.s32.totalorder %s107, %s109
      %p113 = scmp.eq.s32.totalorder %s19, 0
      %p114 = por %p112, %p113
      %p115 = scmp.ne.s32.totalorder %s107, %s109
      %p116 = scmp.eq.s32.totalorder %s24, 20
      %p117 = por %p115, %p116
      %p118 = scmp.ne.s32.totalorder %s109, %s110
      %p119 = scmp.eq.s32.totalorder %s24, 0
      %p120 = por %p118, %p119
      %p121 = scmp.ne.s32.totalorder %s109, %s110
      %p122 = scmp.eq.s32.totalorder %s25, 20
      %p123 = por %p121, %p122
      %p125 = scmp.ne.s32.totalorder %s110, %s124
      %p126 = scmp.eq.s32.totalorder %s25, 0
      %p127 = por %p125, %p126
      %s129 = sadd.s32 %s128, 1
      %p132 = scmp.eq.s32.totalorder %s19, 20
      %p133 = scmp.ne.s32.totalorder %s128, %s130
      %p134 = scmp.eq.s32.totalorder %s19, 0
      %p135 = por %p133, %p134
      %p136 = scmp.ne.s32.totalorder %s128, %s130
      %p137 = scmp.eq.s32.totalorder %s24, 20
      %p138 = por %p136, %p137
      %p139 = scmp.ne.s32.totalorder %s130, %s131
      %p140 = scmp.eq.s32.totalorder %s24, 0
      %p141 = por %p139, %p140
      %p142 = scmp.ne.s32.totalorder %s130, %s131
      %p143 = scmp.eq.s32.totalorder %s25, 20
      %p144 = por %p142, %p143
      %p146 = scmp.ne.s32.totalorder %s131, %s145
      %p147 = scmp.eq.s32.totalorder %s25, 0
      %p148 = por %p146, %p147
      %s150 = sadd.s32 %s149, 1
      %p153 = scmp.eq.s32.totalorder %s19, 20
      %p154 = scmp.ne.s32.totalorder %s149, %s151
      %p155 = scmp.eq.s32.totalorder %s19, 0
      %p156 = por %p154, %p155
      %p157 = scmp.ne.s32.totalorder %s149, %s151
      %p158 = scmp.eq.s32.totalorder %s24, 20
      %p159 = por %p157, %p158
      %p160 = scmp.ne.s32.totalorder %s151, %s152
      %p161 = scmp.eq.s32.totalorder %s24, 0
      %p162 = por %p160, %p161
      %p163 = scmp.ne.s32.totalorder %s151, %s152
      %p164 = scmp.eq.s32.totalorder %s25, 20
      %p165 = por %p163, %p164
      %p167 = scmp.ne.s32.totalorder %s152, %s166
      %p168 = scmp.eq.s32.totalorder %s25, 0
      %p169 = por %p167, %p168
      %s171 = sadd.s32 %s170, 1
      %p174 = scmp.eq.s32.totalorder %s19, 20
      %p175 = scmp.ne.s32.totalorder %s170, %s172
      %p176 = scmp.eq.s32.totalorder %s19, 0
      %p177 = por %p175, %p176
      %p178 = scmp.ne.s32.totalorder %s170, %s172
      %p179 = scmp.eq.s32.totalorder %s24, 20
      %p180 = por %p178, %p179
      %p181 = scmp.ne.s32.totalorder %s172, %s173
      %p182 = scmp.eq.s32.totalorder %s24, 0
      %p183 = por %p181, %p182
      %p184 = scmp.ne.s32.totalorder %s172, %s173
      %p185 = scmp.eq.s32.totalorder %s25, 20
      %p186 = por %p184, %p185
      %p188 = scmp.ne.s32.totalorder %s173, %s187
      %p189 = scmp.eq.s32.totalorder %s25, 0
      %p190 = por %p188, %p189
      %s191 = ssub.s32 %s26, %s38
      %p192 = scmp.eq.s32.totalorder %s191, 0
      %s194 = sadd.s32 %s193, 1
      %s195 = scalar_select %p192, %s193, %s194
      %p198 = pneg %p192
      %p199 = scmp.eq.s32.totalorder %s19, 20
      %p200 = por %p198, %p199
      %p201 = scmp.ne.s32.totalorder %s193, %s196
      %p202 = scmp.eq.s32.totalorder %s19, 0
      %p203 = por %p201, %p202
      %p204 = scmp.ne.s32.totalorder %s193, %s196
      %p205 = scmp.eq.s32.totalorder %s24, 20
      %p206 = por %p204, %p205
      %p207 = scmp.ne.s32.totalorder %s196, %s197
      %p208 = scmp.eq.s32.totalorder %s24, 0
      %p209 = por %p207, %p208
      %p210 = scmp.ne.s32.totalorder %s196, %s197
      %p211 = scmp.eq.s32.totalorder %s25, 20
      %p212 = por %p210, %p211
      %p214 = scmp.ne.s32.totalorder %s197, %s213
      %p215 = scmp.eq.s32.totalorder %s25, 0
      %p216 = por %p214, %p215
      %s217 = ssub.s32 %s26, %s38
      %p218 = scmp.eq.s32.totalorder %s217, 0
      %s220 = sadd.s32 %s219, 1
      %s221 = scalar_select %p218, %s219, %s220
      %p224 = pneg %p218
      %p225 = scmp.eq.s32.totalorder %s19, 20
      %p226 = por %p224, %p225
      %p227 = scmp.ne.s32.totalorder %s219, %s222
      %p228 = scmp.eq.s32.totalorder %s19, 0
      %p229 = por %p227, %p228
      %p230 = scmp.ne.s32.totalorder %s219, %s222
      %p231 = scmp.eq.s32.totalorder %s24, 20
      %p232 = por %p230, %p231
      %p233 = scmp.ne.s32.totalorder %s222, %s223
      %p234 = scmp.eq.s32.totalorder %s24, 0
      %p235 = por %p233, %p234
      %p236 = scmp.ne.s32.totalorder %s222, %s223
      %p237 = scmp.eq.s32.totalorder %s25, 20
      %p238 = por %p236, %p237
      %p240 = scmp.ne.s32.totalorder %s223, %s239
      %p241 = scmp.eq.s32.totalorder %s25, 0
      %p242 = por %p240, %p241
      %s243 = ssub.s32 %s27, %s34
      %s244 = ssub.s32 %s26, %s38
      %s245 = sor.u32 %s243, %s244
      %p246 = scmp.eq.s32.totalorder %s245, 0
      %s248 = sadd.s32 %s247, 1
      %s249 = scalar_select %p246, %s247, %s248
      %p252 = pneg %p246
      %p253 = scmp.eq.s32.totalorder %s19, 20
      %p254 = por %p252, %p253
      %p255 = scmp.ne.s32.totalorder %s247, %s250
      %p256 = scmp.eq.s32.totalorder %s19, 0
      %p257 = por %p255, %p256
      %p258 = scmp.ne.s32.totalorder %s247, %s250
      %p259 = scmp.eq.s32.totalorder %s24, 20
      %p260 = por %p258, %p259
      %p261 = scmp.ne.s32.totalorder %s250, %s251
      %p262 = scmp.eq.s32.totalorder %s24, 0
      %p263 = por %p261, %p262
      %p264 = scmp.ne.s32.totalorder %s250, %s251
      %p265 = scmp.eq.s32.totalorder %s25, 20
      %p266 = por %p264, %p265
      %p268 = scmp.ne.s32.totalorder %s251, %s267
      %p269 = scmp.eq.s32.totalorder %s25, 0
      %p270 = por %p268, %p269
      %p271 = scmp.le.s32.totalorder 1, %s19
      %p272 = scmp.lt.s32.totalorder %s19, 22
      %p273 = pnand %p271, %p272
      %p274 = pneg %p273
      // Predicated region
      $region9: #{one_step_net_forward.1} parent=5 // pred_check
        _
      $region10: #{one_step_net_forward.1} parent=5 // pred_check_branch
        %276 = sbr.rel (%p273) target = $region12
      $region11: #{one_step_net_forward.1} parent=5 // pred_region
        %s277 = ssub.s32 %s19, 1
        // Predicated region
        $region13: #{one_step_net_forward.1} parent=11 // pred_check
          %p278 = pneg %p57
        $region14: #{one_step_net_forward.1} parent=11 // pred_check_branch
          %280 = sbr.rel (%p278) target = $region16
        $region15: #{one_step_net_forward.1} parent=11 // pred_region
          %p281 = scmp.lt.s32.totalorder %s29, 0
          %s282 = scalar_select %p281, %s29, 0
          %s283 = smul.addr %s282, 16
          %s284 = smul.addr %s283, 8
          %s285 = scalar_lea.vmem %s0, %s284
        $region16: #{one_step_net_forward.1} parent=11 // pred_fallthru
          _
        // Predicated region
        $region17: #{one_step_net_forward.1} parent=11 // pred_check
          %p286 = pneg %p78
        $region18: #{one_step_net_forward.1} parent=11 // pred_check_branch
          %288 = sbr.rel (%p286) target = $region20
        $region19: #{one_step_net_forward.1} parent=11 // pred_region
          %s290 = ssub.s32 65536, 65536
          %291 = vsyncadd [#allocation4], %s290
          %s292 = sshll.u32 [#allocation3], 4
          %s293 = int_to_ptr.vmem [resolvable:$true] %s292
          %298 = dma.hbm_to_vmem [thread:$0]  %s1, 65536, %s293, [#allocation4], 256, 256, 16
        $region20: #{one_step_net_forward.1} parent=11 // pred_fallthru
          _
        // Predicated region
        $region21: #{one_step_net_forward.1} parent=11 // pred_check
          %p299 = pneg %p99
        $region22: #{one_step_net_forward.1} parent=11 // pred_check_branch
          %301 = sbr.rel (%p299) target = $region24
        $region23: #{one_step_net_forward.1} parent=11 // pred_region
          %s303 = ssub.s32 64, 64
          %304 = vsyncadd [#allocation6], %s303
          %s306 = sshll.u32 [#allocation5], 4
          %s307 = int_to_ptr.vmem [resolvable:$true] %s306
          %309 = dma.hbm_to_vmem [thread:$0]  %s2, 64, %s307, [#allocation6]
        $region24: #{one_step_net_forward.1} parent=11 // pred_fallthru
          _
        // Predicated region
        $region25: #{one_step_net_forward.1} parent=11 // pred_check
          %p310 = pneg %p120
        $region26: #{one_step_net_forward.1} parent=11 // pred_check_branch
          %312 = sbr.rel (%p310) target = $region28
        $region27: #{one_step_net_forward.1} parent=11 // pred_region
          %s314 = ssub.s32 16384, 16384
          %315 = vsyncadd [#allocation6], %s314
          %s316 = sshll.u32 [#allocation7], 4
          %s317 = int_to_ptr.vmem [resolvable:$true] %s316
          %322 = dma.hbm_to_vmem [thread:$0]  %s3, 16384, %s317, [#allocation6], 256, 256, 16
        $region28: #{one_step_net_forward.1} parent=11 // pred_fallthru
          _
        // Predicated region
        $region29: #{one_step_net_forward.1} parent=11 // pred_check
          %p323 = pneg %p141
        $region30: #{one_step_net_forward.1} parent=11 // pred_check_branch
          %325 = sbr.rel (%p323) target = $region32
        $region31: #{one_step_net_forward.1} parent=11 // pred_region
          %s327 = ssub.s32 64, 64
          %328 = vsyncadd [#allocation9], %s327
          %s330 = sshll.u32 [#allocation8], 4
          %s331 = int_to_ptr.vmem [resolvable:$true] %s330
          %333 = dma.hbm_to_vmem [thread:$0]  %s4, 64, %s331, [#allocation9]
        $region32: #{one_step_net_forward.1} parent=11 // pred_fallthru
          _
        // Predicated region
        $region33: #{one_step_net_forward.1} parent=11 // pred_check
          %p334 = pneg %p162
        $region34: #{one_step_net_forward.1} parent=11 // pred_check_branch
          %336 = sbr.rel (%p334) target = $region36
        $region35: #{one_step_net_forward.1} parent=11 // pred_region
          %s338 = ssub.s32 65536, 65536
          %339 = vsyncadd [#allocation9], %s338
          %s340 = sshll.u32 [#allocation10], 4
          %s341 = int_to_ptr.vmem [resolvable:$true] %s340
          %346 = dma.hbm_to_vmem [thread:$0]  %s5, 65536, %s341, [#allocation9], 1024, 1024, 64
        $region36: #{one_step_net_forward.1} parent=11 // pred_fallthru
          _
        // Predicated region
        $region37: #{one_step_net_forward.1} parent=11 // pred_check
          %p347 = pneg %p183
        $region38: #{one_step_net_forward.1} parent=11 // pred_check_branch
          %349 = sbr.rel (%p347) target = $region40
        $region39: #{one_step_net_forward.1} parent=11 // pred_region
          %s351 = ssub.s32 256, 256
          %352 = vsyncadd [#allocation12], %s351
          %s354 = sshll.u32 [#allocation11], 4
          %s355 = int_to_ptr.vmem [resolvable:$true] %s354
          %357 = dma.hbm_to_vmem [thread:$0]  %s6, 256, %s355, [#allocation12]
        $region40: #{one_step_net_forward.1} parent=11 // pred_fallthru
          _
      $region12: #{one_step_net_forward.1} parent=5 // pred_fallthru
        _
      %p358 = scmp.lt.s32.totalorder %s19, 21
      // Predicated region
      $region41: #{one_step_net_forward.1} parent=5 // pred_check
        %p359 = pneg %p358
      $region42: #{one_step_net_forward.1} parent=5 // pred_check_branch
        %361 = sbr.rel (%p359) target = $region44
      $region43: #{one_step_net_forward.1} parent=5 // pred_region
        // Predicated region
        $region45: #{one_step_net_forward.1} parent=43 // pred_check
          %p362 = pneg %p203
        $region46: #{one_step_net_forward.1} parent=43 // pred_check_branch
          %364 = sbr.rel (%p362) target = $region48
        $region47: #{one_step_net_forward.1} parent=43 // pred_region
          %s365 = sand.u32 %s19, 1
          %s366 = scalar_lea.sflag [#allocation4], %s365
          %s367 = sand.u32 %s193, 1
          %s368 = smul.addr %s367, 4096
          %s369 = scalar_lea.vmem [#allocation13], %s368
          %s370 = smul.u32 4, %s26
          %s372 = ssub.s32 65536, 65536
          %373 = vsyncadd %s366, %s372
          %s374 = smul.addr %s370, 64
          %s375 = scalar_lea.hbm %s7, %s374
          %s376 = sshll.u32 %s369, 4
          %s377 = int_to_ptr.vmem [resolvable:$true] %s376
          %382 = dma.hbm_to_vmem [thread:$0]  %s375, 65536, %s377, %s366, 5376, 256, 16
        $region48: #{one_step_net_forward.1} parent=43 // pred_fallthru
          _
        // Predicated region
        $region49: #{one_step_net_forward.1} parent=43 // pred_check
          %p383 = pneg %p229
        $region50: #{one_step_net_forward.1} parent=43 // pred_check_branch
          %385 = sbr.rel (%p383) target = $region52
        $region51: #{one_step_net_forward.1} parent=43 // pred_region
          %s386 = sand.u32 %s19, 1
          %s387 = scalar_lea.sflag [#allocation4], %s386
          %s388 = sand.u32 %s219, 1
          %s389 = smul.addr %s388, 4
          %s390 = scalar_lea.vmem [#allocation14], %s389
          %s391 = smul.u32 4, %s26
          %s393 = ssub.s32 64, 64
          %394 = vsyncadd %s387, %s393
          %s395 = smul.addr %s391, 16
          %s396 = scalar_lea.hbm %s8, %s395
          %s398 = sshll.u32 %s390, 4
          %s399 = int_to_ptr.vmem [resolvable:$true] %s398
          %401 = dma.hbm_to_vmem [thread:$0]  %s396, 64, %s399, %s387
        $region52: #{one_step_net_forward.1} parent=43 // pred_fallthru
          _
      $region44: #{one_step_net_forward.1} parent=5 // pred_fallthru
        _
      %p402 = scmp.le.s32.totalorder 1, %s19
      %p403 = scmp.lt.s32.totalorder %s19, 22
      %p404 = pnand %p402, %p403
      %p405 = pneg %p404
      // Predicated region
      $region53: #{one_step_net_forward.1} parent=5 // pred_check
        _
      $region54: #{one_step_net_forward.1} parent=5 // pred_check_branch
        %407 = sbr.rel (%p404) target = $region56
      $region55: #{one_step_net_forward.1} parent=5 // pred_region
        %s408 = ssub.s32 %s19, 1
        // Predicated region
        $region57: #{one_step_net_forward.1} parent=55 // pred_check
          %p409 = pneg %p78
        $region58: #{one_step_net_forward.1} parent=55 // pred_check_branch
          %411 = sbr.rel (%p409) target = $region60
        $region59: #{one_step_net_forward.1} parent=55 // pred_region
          %412 = dma.done [#allocation4], 65536
        $region60: #{one_step_net_forward.1} parent=55 // pred_fallthru
          _
        // Predicated region
        $region61: #{one_step_net_forward.1} parent=55 // pred_check
          %p413 = pneg %p99
        $region62: #{one_step_net_forward.1} parent=55 // pred_check_branch
          %415 = sbr.rel (%p413) target = $region64
        $region63: #{one_step_net_forward.1} parent=55 // pred_region
          %416 = dma.done [#allocation6], 64
        $region64: #{one_step_net_forward.1} parent=55 // pred_fallthru
          _
        // Predicated region
        $region65: #{one_step_net_forward.1} parent=55 // pred_check
          %p417 = pneg %p120
        $region66: #{one_step_net_forward.1} parent=55 // pred_check_branch
          %419 = sbr.rel (%p417) target = $region68
        $region67: #{one_step_net_forward.1} parent=55 // pred_region
          %420 = dma.done [#allocation6], 16384
        $region68: #{one_step_net_forward.1} parent=55 // pred_fallthru
          _
        // Predicated region
        $region69: #{one_step_net_forward.1} parent=55 // pred_check
          %p421 = pneg %p141
        $region70: #{one_step_net_forward.1} parent=55 // pred_check_branch
          %423 = sbr.rel (%p421) target = $region72
        $region71: #{one_step_net_forward.1} parent=55 // pred_region
          %424 = dma.done [#allocation9], 64
        $region72: #{one_step_net_forward.1} parent=55 // pred_fallthru
          _
        // Predicated region
        $region73: #{one_step_net_forward.1} parent=55 // pred_check
          %p425 = pneg %p162
        $region74: #{one_step_net_forward.1} parent=55 // pred_check_branch
          %427 = sbr.rel (%p425) target = $region76
        $region75: #{one_step_net_forward.1} parent=55 // pred_region
          %428 = dma.done [#allocation9], 65536
        $region76: #{one_step_net_forward.1} parent=55 // pred_fallthru
          _
        // Predicated region
        $region77: #{one_step_net_forward.1} parent=55 // pred_check
          %p429 = pneg %p183
        $region78: #{one_step_net_forward.1} parent=55 // pred_check_branch
          %431 = sbr.rel (%p429) target = $region80
        $region79: #{one_step_net_forward.1} parent=55 // pred_region
          %432 = dma.done [#allocation12], 256
        $region80: #{one_step_net_forward.1} parent=55 // pred_fallthru
          _
        %s433 = sand.u32 %s24, 1
        %s434 = scalar_lea.sflag [#allocation4], %s433
        %s435 = sand.u32 %s196, 1
        %s436 = smul.addr %s435, 4096
        %s437 = scalar_lea.vmem [#allocation13], %s436
        // Predicated region
        $region81: #{one_step_net_forward.1} parent=55 // pred_check
          %p438 = pneg %p209
        $region82: #{one_step_net_forward.1} parent=55 // pred_check_branch
          %440 = sbr.rel (%p438) target = $region84
        $region83: #{one_step_net_forward.1} parent=55 // pred_region
          %441 = dma.done %s434, 65536
        $region84: #{one_step_net_forward.1} parent=55 // pred_fallthru
          _
        %s442 = sand.u32 %s24, 1
        %s443 = scalar_lea.sflag [#allocation4], %s442
        %s444 = sand.u32 %s222, 1
        %s445 = smul.addr %s444, 4
        %s446 = scalar_lea.vmem [#allocation14], %s445
        // Predicated region
        $region85: #{one_step_net_forward.1} parent=55 // pred_check
          %p447 = pneg %p235
        $region86: #{one_step_net_forward.1} parent=55 // pred_check_branch
          %449 = sbr.rel (%p447) target = $region88
        $region87: #{one_step_net_forward.1} parent=55 // pred_region
          %450 = dma.done %s443, 64
        $region88: #{one_step_net_forward.1} parent=55 // pred_fallthru
          _
        %p451 = scmp.lt.s32.totalorder %s29, 0
        %s452 = scalar_select %p451, %s29, 0
        %s453 = smul.addr %s452, 16
        %s454 = smul.addr %s453, 8
        %s455 = scalar_lea.vmem %s0, %s454
        %p456 = pneg %p57
        %p457 = pneg %p54
        %p458 = pneg %p78
        %p459 = pneg %p75
        %p460 = pneg %p99
        %p461 = pneg %p96
        %p462 = pneg %p120
        %p463 = pneg %p117
        %p464 = pneg %p141
        %p465 = pneg %p138
        %p466 = pneg %p162
        %p467 = pneg %p159
        %p468 = pneg %p183
        %p469 = pneg %p180
        %s470 = sand.u32 %s24, 1
        %s471 = scalar_lea.sflag [#allocation4], %s470
        %s472 = sand.u32 %s196, 1
        %s473 = smul.addr %s472, 4096
        %s474 = scalar_lea.vmem [#allocation13], %s473
        %p475 = pneg %p209
        %p476 = pneg %p206
        %s477 = sand.u32 %s24, 1
        %s478 = scalar_lea.sflag [#allocation4], %s477
        %s479 = sand.u32 %s222, 1
        %s480 = smul.addr %s479, 4
        %s481 = scalar_lea.vmem [#allocation14], %s480
        %p482 = pneg %p235
        %p483 = pneg %p232
        %p484 = pneg %p263
        %p485 = pneg %p260
        %s486 = smul.u32 4, %s28
        %p487 = scmp.lt.s32.totalorder %s29, 0
        %s488 = scalar_select %p487, %s29, 0
        %p489 = scmp.lt.s32.totalorder %s486, 83
        %s490 = scalar_select %p489, %s486, 83
        %s491 = smul.addr %s488, 84
        %s492 = sadd.s32 %s490, %s491
        %s493 = smul.addr %s492, 8
        %s494 = scalar_lea.vmem %s9, %s493
        %p495 = scmp.lt.s32.totalorder %s29, 0
        %s496 = scalar_select %p495, %s29, 0
        %s497 = smul.addr %s496, 16
        %s498 = smul.addr %s497, 8
        %s499 = scalar_lea.vmem %s0, %s498
        %s500 = smul.u32 4, %s28
        %s501 = smul.u32 4, %s28
        %s502 = smul.u32 4, %s28
        %p503 = scmp.lt.s32.totalorder %s29, 0
        %s504 = scalar_select %p503, %s29, 0
        %p505 = scmp.lt.s32.totalorder %s502, 83
        %s506 = scalar_select %p505, %s502, 83
        %s507 = smul.addr %s504, 84
        %s508 = sadd.s32 %s506, %s507
        %s509 = smul.addr %s508, 8
        %s510 = scalar_lea.vmem %s9, %s509
        %s511 = smul.u32 4, %s28
        %s512 = smul.u32 %s29, 8
        %p513 = scmp.eq.s32.totalorder %s28, 0
        // Predicated region
        $region89: #{one_step_net_forward.1} parent=55 // pred_check
          %p514 = pneg %p513
        $region90: #{one_step_net_forward.1} parent=55 // pred_check_branch
          %516 = sbr.rel (%p514) target = $region92
        $region91: #{one_step_net_forward.1} parent=55 // pred_region
          %v517 = vld [vmem:[%s499] sm:$0xff]
          %v518 = vld [vmem:[%s499 + $0x8] sm:$0xff]
          %v519 = vld [vmem:[%s499 + $0x10] sm:$0xff]
          %v520 = vld [vmem:[%s499 + $0x18] sm:$0xff]
          %v521 = vld [vmem:[%s499 + $0x20] sm:$0xff]
          %v522 = vld [vmem:[%s499 + $0x28] sm:$0xff]
          %v523 = vld [vmem:[%s499 + $0x30] sm:$0xff]
          %v524 = vld [vmem:[%s499 + $0x38] sm:$0xff]
          %v525 = vld [vmem:[%s499 + $0x40] sm:$0xff]
          %v526 = vld [vmem:[%s499 + $0x48] sm:$0xff]
          %v527 = vld [vmem:[%s499 + $0x50] sm:$0xff]
          %v528 = vld [vmem:[%s499 + $0x58] sm:$0xff]
          %v529 = vld [vmem:[%s499 + $0x60] sm:$0xff]
          %v530 = vld [vmem:[%s499 + $0x68] sm:$0xff]
          %v531 = vld [vmem:[%s499 + $0x70] sm:$0xff]
          %v532 = vld [vmem:[%s499 + $0x78] sm:$0xff]
          %v533 = vpack.c.bf16 %v517, %v517
          %v534 = vpack.c.bf16 %v518, %v518
          %v535 = vpack.c.bf16 %v519, %v519
          %v536 = vpack.c.bf16 %v520, %v520
          %v537 = vpack.c.bf16 %v521, %v521
          %v538 = vpack.c.bf16 %v522, %v522
          %v539 = vpack.c.bf16 %v523, %v523
          %v540 = vpack.c.bf16 %v524, %v524
          %v541 = vpack.c.bf16 %v525, %v525
          %v542 = vpack.c.bf16 %v526, %v526
          %v543 = vpack.c.bf16 %v527, %v527
          %v544 = vpack.c.bf16 %v528, %v528
          %v545 = vpack.c.bf16 %v529, %v529
          %v546 = vpack.c.bf16 %v530, %v530
          %v547 = vpack.c.bf16 %v531, %v531
          %v548 = vpack.c.bf16 %v532, %v532
          %v549 = vld [vmem:[#allocation3] sm:$0xff]
          %v550 = vld [vmem:[#allocation3 + $0x8] sm:$0xff]
          %v551 = vld [vmem:[#allocation3 + $0x10] sm:$0xff]
          %v552 = vld [vmem:[#allocation3 + $0x18] sm:$0xff]
          %v553 = vld [vmem:[#allocation3 + $0x20] sm:$0xff]
          %v554 = vld [vmem:[#allocation3 + $0x28] sm:$0xff]
          %v555 = vld [vmem:[#allocation3 + $0x30] sm:$0xff]
          %v556 = vld [vmem:[#allocation3 + $0x38] sm:$0xff]
          %v557 = vld [vmem:[#allocation3 + $0x40] sm:$0xff]
          %v558 = vld [vmem:[#allocation3 + $0x48] sm:$0xff]
          %v559 = vld [vmem:[#allocation3 + $0x50] sm:$0xff]
          %v560 = vld [vmem:[#allocation3 + $0x58] sm:$0xff]
          %v561 = vld [vmem:[#allocation3 + $0x60] sm:$0xff]
          %v562 = vld [vmem:[#allocation3 + $0x68] sm:$0xff]
          %v563 = vld [vmem:[#allocation3 + $0x70] sm:$0xff]
          %v564 = vld [vmem:[#allocation3 + $0x78] sm:$0xff]
          %v565 = vld [vmem:[#allocation3 + $0x80] sm:$0xff]
          %v566 = vld [vmem:[#allocation3 + $0x88] sm:$0xff]
          %v567 = vld [vmem:[#allocation3 + $0x90] sm:$0xff]
          %v568 = vld [vmem:[#allocation3 + $0x98] sm:$0xff]
          %v569 = vld [vmem:[#allocation3 + $0xa0] sm:$0xff]
          %v570 = vld [vmem:[#allocation3 + $0xa8] sm:$0xff]
          %v571 = vld [vmem:[#allocation3 + $0xb0] sm:$0xff]
          %v572 = vld [vmem:[#allocation3 + $0xb8] sm:$0xff]
          %v573 = vld [vmem:[#allocation3 + $0xc0] sm:$0xff]
          %v574 = vld [vmem:[#allocation3 + $0xc8] sm:$0xff]
          %v575 = vld [vmem:[#allocation3 + $0xd0] sm:$0xff]
          %v576 = vld [vmem:[#allocation3 + $0xd8] sm:$0xff]
          %v577 = vld [vmem:[#allocation3 + $0xe0] sm:$0xff]
          %v578 = vld [vmem:[#allocation3 + $0xe8] sm:$0xff]
          %v579 = vld [vmem:[#allocation3 + $0xf0] sm:$0xff]
          %v580 = vld [vmem:[#allocation3 + $0xf8] sm:$0xff]
          %v581 = vld [vmem:[#allocation3 + $0x100] sm:$0xff]
          %v582 = vld [vmem:[#allocation3 + $0x108] sm:$0xff]
          %v583 = vld [vmem:[#allocation3 + $0x110] sm:$0xff]
          %v584 = vld [vmem:[#allocation3 + $0x118] sm:$0xff]
          %v585 = vld [vmem:[#allocation3 + $0x120] sm:$0xff]
          %v586 = vld [vmem:[#allocation3 + $0x128] sm:$0xff]
          %v587 = vld [vmem:[#allocation3 + $0x130] sm:$0xff]
          %v588 = vld [vmem:[#allocation3 + $0x138] sm:$0xff]
          %v589 = vld [vmem:[#allocation3 + $0x140] sm:$0xff]
          %v590 = vld [vmem:[#allocation3 + $0x148] sm:$0xff]
          %v591 = vld [vmem:[#allocation3 + $0x150] sm:$0xff]
          %v592 = vld [vmem:[#allocation3 + $0x158] sm:$0xff]
          %v593 = vld [vmem:[#allocation3 + $0x160] sm:$0xff]
          %v594 = vld [vmem:[#allocation3 + $0x168] sm:$0xff]
          %v595 = vld [vmem:[#allocation3 + $0x170] sm:$0xff]
          %v596 = vld [vmem:[#allocation3 + $0x178] sm:$0xff]
          %v597 = vld [vmem:[#allocation3 + $0x180] sm:$0xff]
          %v598 = vld [vmem:[#allocation3 + $0x188] sm:$0xff]
          %v599 = vld [vmem:[#allocation3 + $0x190] sm:$0xff]
          %v600 = vld [vmem:[#allocation3 + $0x198] sm:$0xff]
          %v601 = vld [vmem:[#allocation3 + $0x1a0] sm:$0xff]
          %v602 = vld [vmem:[#allocation3 + $0x1a8] sm:$0xff]
          %v603 = vld [vmem:[#allocation3 + $0x1b0] sm:$0xff]
          %v604 = vld [vmem:[#allocation3 + $0x1b8] sm:$0xff]
          %v605 = vld [vmem:[#allocation3 + $0x1c0] sm:$0xff]
          %v606 = vld [vmem:[#allocation3 + $0x1c8] sm:$0xff]
          %v607 = vld [vmem:[#allocation3 + $0x1d0] sm:$0xff]
          %v608 = vld [vmem:[#allocation3 + $0x1d8] sm:$0xff]
          %v609 = vld [vmem:[#allocation3 + $0x1e0] sm:$0xff]
          %v610 = vld [vmem:[#allocation3 + $0x1e8] sm:$0xff]
          %v611 = vld [vmem:[#allocation3 + $0x1f0] sm:$0xff]
          %v612 = vld [vmem:[#allocation3 + $0x1f8] sm:$0xff]
          %v613 = vld [vmem:[#allocation3 + $0x200] sm:$0xff]
          %v614 = vld [vmem:[#allocation3 + $0x208] sm:$0xff]
          %v615 = vld [vmem:[#allocation3 + $0x210] sm:$0xff]
          %v616 = vld [vmem:[#allocation3 + $0x218] sm:$0xff]
          %v617 = vld [vmem:[#allocation3 + $0x220] sm:$0xff]
          %v618 = vld [vmem:[#allocation3 + $0x228] sm:$0xff]
          %v619 = vld [vmem:[#allocation3 + $0x230] sm:$0xff]
          %v620 = vld [vmem:[#allocation3 + $0x238] sm:$0xff]
          %v621 = vld [vmem:[#allocation3 + $0x240] sm:$0xff]
          %v622 = vld [vmem:[#allocation3 + $0x248] sm:$0xff]
          %v623 = vld [vmem:[#allocation3 + $0x250] sm:$0xff]
          %v624 = vld [vmem:[#allocation3 + $0x258] sm:$0xff]
          %v625 = vld [vmem:[#allocation3 + $0x260] sm:$0xff]
          %v626 = vld [vmem:[#allocation3 + $0x268] sm:$0xff]
          %v627 = vld [vmem:[#allocation3 + $0x270] sm:$0xff]
          %v628 = vld [vmem:[#allocation3 + $0x278] sm:$0xff]
          %v629 = vld [vmem:[#allocation3 + $0x280] sm:$0xff]
          %v630 = vld [vmem:[#allocation3 + $0x288] sm:$0xff]
          %v631 = vld [vmem:[#allocation3 + $0x290] sm:$0xff]
          %v632 = vld [vmem:[#allocation3 + $0x298] sm:$0xff]
          %v633 = vld [vmem:[#allocation3 + $0x2a0] sm:$0xff]
          %v634 = vld [vmem:[#allocation3 + $0x2a8] sm:$0xff]
          %v635 = vld [vmem:[#allocation3 + $0x2b0] sm:$0xff]
          %v636 = vld [vmem:[#allocation3 + $0x2b8] sm:$0xff]
          %v637 = vld [vmem:[#allocation3 + $0x2c0] sm:$0xff]
          %v638 = vld [vmem:[#allocation3 + $0x2c8] sm:$0xff]
          %v639 = vld [vmem:[#allocation3 + $0x2d0] sm:$0xff]
          %v640 = vld [vmem:[#allocation3 + $0x2d8] sm:$0xff]
          %v641 = vld [vmem:[#allocation3 + $0x2e0] sm:$0xff]
          %v642 = vld [vmem:[#allocation3 + $0x2e8] sm:$0xff]
          %v643 = vld [vmem:[#allocation3 + $0x2f0] sm:$0xff]
          %v644 = vld [vmem:[#allocation3 + $0x2f8] sm:$0xff]
          %v645 = vld [vmem:[#allocation3 + $0x300] sm:$0xff]
          %v646 = vld [vmem:[#allocation3 + $0x308] sm:$0xff]
          %v647 = vld [vmem:[#allocation3 + $0x310] sm:$0xff]
          %v648 = vld [vmem:[#allocation3 + $0x318] sm:$0xff]
          %v649 = vld [vmem:[#allocation3 + $0x320] sm:$0xff]
          %v650 = vld [vmem:[#allocation3 + $0x328] sm:$0xff]
          %v651 = vld [vmem:[#allocation3 + $0x330] sm:$0xff]
          %v652 = vld [vmem:[#allocation3 + $0x338] sm:$0xff]
          %v653 = vld [vmem:[#allocation3 + $0x340] sm:$0xff]
          %v654 = vld [vmem:[#allocation3 + $0x348] sm:$0xff]
          %v655 = vld [vmem:[#allocation3 + $0x350] sm:$0xff]
          %v656 = vld [vmem:[#allocation3 + $0x358] sm:$0xff]
          %v657 = vld [vmem:[#allocation3 + $0x360] sm:$0xff]
          %v658 = vld [vmem:[#allocation3 + $0x368] sm:$0xff]
          %v659 = vld [vmem:[#allocation3 + $0x370] sm:$0xff]
          %v660 = vld [vmem:[#allocation3 + $0x378] sm:$0xff]
          %v661 = vld [vmem:[#allocation3 + $0x380] sm:$0xff]
          %v662 = vld [vmem:[#allocation3 + $0x388] sm:$0xff]
          %v663 = vld [vmem:[#allocation3 + $0x390] sm:$0xff]
          %v664 = vld [vmem:[#allocation3 + $0x398] sm:$0xff]
          %v665 = vld [vmem:[#allocation3 + $0x3a0] sm:$0xff]
          %v666 = vld [vmem:[#allocation3 + $0x3a8] sm:$0xff]
          %v667 = vld [vmem:[#allocation3 + $0x3b0] sm:$0xff]
          %v668 = vld [vmem:[#allocation3 + $0x3b8] sm:$0xff]
          %v669 = vld [vmem:[#allocation3 + $0x3c0] sm:$0xff]
          %v670 = vld [vmem:[#allocation3 + $0x3c8] sm:$0xff]
          %v671 = vld [vmem:[#allocation3 + $0x3d0] sm:$0xff]
          %v672 = vld [vmem:[#allocation3 + $0x3d8] sm:$0xff]
          %v673 = vld [vmem:[#allocation3 + $0x3e0] sm:$0xff]
          %v674 = vld [vmem:[#allocation3 + $0x3e8] sm:$0xff]
          %v675 = vld [vmem:[#allocation3 + $0x3f0] sm:$0xff]
          %v676 = vld [vmem:[#allocation3 + $0x3f8] sm:$0xff]
          %v677 = vld [vmem:[#allocation3 + $0x400] sm:$0xff]
          %v678 = vld [vmem:[#allocation3 + $0x408] sm:$0xff]
          %v679 = vld [vmem:[#allocation3 + $0x410] sm:$0xff]
          %v680 = vld [vmem:[#allocation3 + $0x418] sm:$0xff]
          %v681 = vld [vmem:[#allocation3 + $0x420] sm:$0xff]
          %v682 = vld [vmem:[#allocation3 + $0x428] sm:$0xff]
          %v683 = vld [vmem:[#allocation3 + $0x430] sm:$0xff]
          %v684 = vld [vmem:[#allocation3 + $0x438] sm:$0xff]
          %v685 = vld [vmem:[#allocation3 + $0x440] sm:$0xff]
          %v686 = vld [vmem:[#allocation3 + $0x448] sm:$0xff]
          %v687 = vld [vmem:[#allocation3 + $0x450] sm:$0xff]
          %v688 = vld [vmem:[#allocation3 + $0x458] sm:$0xff]
          %v689 = vld [vmem:[#allocation3 + $0x460] sm:$0xff]
          %v690 = vld [vmem:[#allocation3 + $0x468] sm:$0xff]
          %v691 = vld [vmem:[#allocation3 + $0x470] sm:$0xff]
          %v692 = vld [vmem:[#allocation3 + $0x478] sm:$0xff]
          %v693 = vld [vmem:[#allocation3 + $0x480] sm:$0xff]
          %v694 = vld [vmem:[#allocation3 + $0x488] sm:$0xff]
          %v695 = vld [vmem:[#allocation3 + $0x490] sm:$0xff]
          %v696 = vld [vmem:[#allocation3 + $0x498] sm:$0xff]
          %v697 = vld [vmem:[#allocation3 + $0x4a0] sm:$0xff]
          %v698 = vld [vmem:[#allocation3 + $0x4a8] sm:$0xff]
          %v699 = vld [vmem:[#allocation3 + $0x4b0] sm:$0xff]
          %v700 = vld [vmem:[#allocation3 + $0x4b8] sm:$0xff]
          %v701 = vld [vmem:[#allocation3 + $0x4c0] sm:$0xff]
          %v702 = vld [vmem:[#allocation3 + $0x4c8] sm:$0xff]
          %v703 = vld [vmem:[#allocation3 + $0x4d0] sm:$0xff]
          %v704 = vld [vmem:[#allocation3 + $0x4d8] sm:$0xff]
          %v705 = vld [vmem:[#allocation3 + $0x4e0] sm:$0xff]
          %v706 = vld [vmem:[#allocation3 + $0x4e8] sm:$0xff]
          %v707 = vld [vmem:[#allocation3 + $0x4f0] sm:$0xff]
          %v708 = vld [vmem:[#allocation3 + $0x4f8] sm:$0xff]
          %v709 = vld [vmem:[#allocation3 + $0x500] sm:$0xff]
          %v710 = vld [vmem:[#allocation3 + $0x508] sm:$0xff]
          %v711 = vld [vmem:[#allocation3 + $0x510] sm:$0xff]
          %v712 = vld [vmem:[#allocation3 + $0x518] sm:$0xff]
          %v713 = vld [vmem:[#allocation3 + $0x520] sm:$0xff]
          %v714 = vld [vmem:[#allocation3 + $0x528] sm:$0xff]
          %v715 = vld [vmem:[#allocation3 + $0x530] sm:$0xff]
          %v716 = vld [vmem:[#allocation3 + $0x538] sm:$0xff]
          %v717 = vld [vmem:[#allocation3 + $0x540] sm:$0xff]
          %v718 = vld [vmem:[#allocation3 + $0x548] sm:$0xff]
          %v719 = vld [vmem:[#allocation3 + $0x550] sm:$0xff]
          %v720 = vld [vmem:[#allocation3 + $0x558] sm:$0xff]
          %v721 = vld [vmem:[#allocation3 + $0x560] sm:$0xff]
          %v722 = vld [vmem:[#allocation3 + $0x568] sm:$0xff]
          %v723 = vld [vmem:[#allocation3 + $0x570] sm:$0xff]
          %v724 = vld [vmem:[#allocation3 + $0x578] sm:$0xff]
          %v725 = vld [vmem:[#allocation3 + $0x580] sm:$0xff]
          %v726 = vld [vmem:[#allocation3 + $0x588] sm:$0xff]
          %v727 = vld [vmem:[#allocation3 + $0x590] sm:$0xff]
          %v728 = vld [vmem:[#allocation3 + $0x598] sm:$0xff]
          %v729 = vld [vmem:[#allocation3 + $0x5a0] sm:$0xff]
          %v730 = vld [vmem:[#allocation3 + $0x5a8] sm:$0xff]
          %v731 = vld [vmem:[#allocation3 + $0x5b0] sm:$0xff]
          %v732 = vld [vmem:[#allocation3 + $0x5b8] sm:$0xff]
          %v733 = vld [vmem:[#allocation3 + $0x5c0] sm:$0xff]
          %v734 = vld [vmem:[#allocation3 + $0x5c8] sm:$0xff]
          %v735 = vld [vmem:[#allocation3 + $0x5d0] sm:$0xff]
          %v736 = vld [vmem:[#allocation3 + $0x5d8] sm:$0xff]
          %v737 = vld [vmem:[#allocation3 + $0x5e0] sm:$0xff]
          %v738 = vld [vmem:[#allocation3 + $0x5e8] sm:$0xff]
          %v739 = vld [vmem:[#allocation3 + $0x5f0] sm:$0xff]
          %v740 = vld [vmem:[#allocation3 + $0x5f8] sm:$0xff]
          %v741 = vld [vmem:[#allocation3 + $0x600] sm:$0xff]
          %v742 = vld [vmem:[#allocation3 + $0x608] sm:$0xff]
          %v743 = vld [vmem:[#allocation3 + $0x610] sm:$0xff]
          %v744 = vld [vmem:[#allocation3 + $0x618] sm:$0xff]
          %v745 = vld [vmem:[#allocation3 + $0x620] sm:$0xff]
          %v746 = vld [vmem:[#allocation3 + $0x628] sm:$0xff]
          %v747 = vld [vmem:[#allocation3 + $0x630] sm:$0xff]
          %v748 = vld [vmem:[#allocation3 + $0x638] sm:$0xff]
          %v749 = vld [vmem:[#allocation3 + $0x640] sm:$0xff]
          %v750 = vld [vmem:[#allocation3 + $0x648] sm:$0xff]
          %v751 = vld [vmem:[#allocation3 + $0x650] sm:$0xff]
          %v752 = vld [vmem:[#allocation3 + $0x658] sm:$0xff]
          %v753 = vld [vmem:[#allocation3 + $0x660] sm:$0xff]
          %v754 = vld [vmem:[#allocation3 + $0x668] sm:$0xff]
          %v755 = vld [vmem:[#allocation3 + $0x670] sm:$0xff]
          %v756 = vld [vmem:[#allocation3 + $0x678] sm:$0xff]
          %v757 = vld [vmem:[#allocation3 + $0x680] sm:$0xff]
          %v758 = vld [vmem:[#allocation3 + $0x688] sm:$0xff]
          %v759 = vld [vmem:[#allocation3 + $0x690] sm:$0xff]
          %v760 = vld [vmem:[#allocation3 + $0x698] sm:$0xff]
          %v761 = vld [vmem:[#allocation3 + $0x6a0] sm:$0xff]
          %v762 = vld [vmem:[#allocation3 + $0x6a8] sm:$0xff]
          %v763 = vld [vmem:[#allocation3 + $0x6b0] sm:$0xff]
          %v764 = vld [vmem:[#allocation3 + $0x6b8] sm:$0xff]
          %v765 = vld [vmem:[#allocation3 + $0x6c0] sm:$0xff]
          %v766 = vld [vmem:[#allocation3 + $0x6c8] sm:$0xff]
          %v767 = vld [vmem:[#allocation3 + $0x6d0] sm:$0xff]
          %v768 = vld [vmem:[#allocation3 + $0x6d8] sm:$0xff]
          %v769 = vld [vmem:[#allocation3 + $0x6e0] sm:$0xff]
          %v770 = vld [vmem:[#allocation3 + $0x6e8] sm:$0xff]
          %v771 = vld [vmem:[#allocation3 + $0x6f0] sm:$0xff]
          %v772 = vld [vmem:[#allocation3 + $0x6f8] sm:$0xff]
          %v773 = vld [vmem:[#allocation3 + $0x700] sm:$0xff]
          %v774 = vld [vmem:[#allocation3 + $0x708] sm:$0xff]
          %v775 = vld [vmem:[#allocation3 + $0x710] sm:$0xff]
          %v776 = vld [vmem:[#allocation3 + $0x718] sm:$0xff]
          %v777 = vld [vmem:[#allocation3 + $0x720] sm:$0xff]
          %v778 = vld [vmem:[#allocation3 + $0x728] sm:$0xff]
          %v779 = vld [vmem:[#allocation3 + $0x730] sm:$0xff]
          %v780 = vld [vmem:[#allocation3 + $0x738] sm:$0xff]
          %v781 = vld [vmem:[#allocation3 + $0x740] sm:$0xff]
          %v782 = vld [vmem:[#allocation3 + $0x748] sm:$0xff]
          %v783 = vld [vmem:[#allocation3 + $0x750] sm:$0xff]
          %v784 = vld [vmem:[#allocation3 + $0x758] sm:$0xff]
          %v785 = vld [vmem:[#allocation3 + $0x760] sm:$0xff]
          %v786 = vld [vmem:[#allocation3 + $0x768] sm:$0xff]
          %v787 = vld [vmem:[#allocation3 + $0x770] sm:$0xff]
          %v788 = vld [vmem:[#allocation3 + $0x778] sm:$0xff]
          %v789 = vld [vmem:[#allocation3 + $0x780] sm:$0xff]
          %v790 = vld [vmem:[#allocation3 + $0x788] sm:$0xff]
          %v791 = vld [vmem:[#allocation3 + $0x790] sm:$0xff]
          %v792 = vld [vmem:[#allocation3 + $0x798] sm:$0xff]
          %v793 = vld [vmem:[#allocation3 + $0x7a0] sm:$0xff]
          %v794 = vld [vmem:[#allocation3 + $0x7a8] sm:$0xff]
          %v795 = vld [vmem:[#allocation3 + $0x7b0] sm:$0xff]
          %v796 = vld [vmem:[#allocation3 + $0x7b8] sm:$0xff]
          %v797 = vld [vmem:[#allocation3 + $0x7c0] sm:$0xff]
          %v798 = vld [vmem:[#allocation3 + $0x7c8] sm:$0xff]
          %v799 = vld [vmem:[#allocation3 + $0x7d0] sm:$0xff]
          %v800 = vld [vmem:[#allocation3 + $0x7d8] sm:$0xff]
          %v801 = vld [vmem:[#allocation3 + $0x7e0] sm:$0xff]
          %v802 = vld [vmem:[#allocation3 + $0x7e8] sm:$0xff]
          %v803 = vld [vmem:[#allocation3 + $0x7f0] sm:$0xff]
          %v804 = vld [vmem:[#allocation3 + $0x7f8] sm:$0xff]
          %v805 = vld [vmem:[#allocation3 + $0x800] sm:$0xff]
          %v806 = vld [vmem:[#allocation3 + $0x808] sm:$0xff]
          %v807 = vld [vmem:[#allocation3 + $0x810] sm:$0xff]
          %v808 = vld [vmem:[#allocation3 + $0x818] sm:$0xff]
          %v809 = vld [vmem:[#allocation3 + $0x820] sm:$0xff]
          %v810 = vld [vmem:[#allocation3 + $0x828] sm:$0xff]
          %v811 = vld [vmem:[#allocation3 + $0x830] sm:$0xff]
          %v812 = vld [vmem:[#allocation3 + $0x838] sm:$0xff]
          %v813 = vld [vmem:[#allocation3 + $0x840] sm:$0xff]
          %v814 = vld [vmem:[#allocation3 + $0x848] sm:$0xff]
          %v815 = vld [vmem:[#allocation3 + $0x850] sm:$0xff]
          %v816 = vld [vmem:[#allocation3 + $0x858] sm:$0xff]
          %v817 = vld [vmem:[#allocation3 + $0x860] sm:$0xff]
          %v818 = vld [vmem:[#allocation3 + $0x868] sm:$0xff]
          %v819 = vld [vmem:[#allocation3 + $0x870] sm:$0xff]
          %v820 = vld [vmem:[#allocation3 + $0x878] sm:$0xff]
          %v821 = vld [vmem:[#allocation3 + $0x880] sm:$0xff]
          %v822 = vld [vmem:[#allocation3 + $0x888] sm:$0xff]
          %v823 = vld [vmem:[#allocation3 + $0x890] sm:$0xff]
          %v824 = vld [vmem:[#allocation3 + $0x898] sm:$0xff]
          %v825 = vld [vmem:[#allocation3 + $0x8a0] sm:$0xff]
          %v826 = vld [vmem:[#allocation3 + $0x8a8] sm:$0xff]
          %v827 = vld [vmem:[#allocation3 + $0x8b0] sm:$0xff]
          %v828 = vld [vmem:[#allocation3 + $0x8b8] sm:$0xff]
          %v829 = vld [vmem:[#allocation3 + $0x8c0] sm:$0xff]
          %v830 = vld [vmem:[#allocation3 + $0x8c8] sm:$0xff]
          %v831 = vld [vmem:[#allocation3 + $0x8d0] sm:$0xff]
          %v832 = vld [vmem:[#allocation3 + $0x8d8] sm:$0xff]
          %v833 = vld [vmem:[#allocation3 + $0x8e0] sm:$0xff]
          %v834 = vld [vmem:[#allocation3 + $0x8e8] sm:$0xff]
          %v835 = vld [vmem:[#allocation3 + $0x8f0] sm:$0xff]
          %v836 = vld [vmem:[#allocation3 + $0x8f8] sm:$0xff]
          %v837 = vld [vmem:[#allocation3 + $0x900] sm:$0xff]
          %v838 = vld [vmem:[#allocation3 + $0x908] sm:$0xff]
          %v839 = vld [vmem:[#allocation3 + $0x910] sm:$0xff]
          %v840 = vld [vmem:[#allocation3 + $0x918] sm:$0xff]
          %v841 = vld [vmem:[#allocation3 + $0x920] sm:$0xff]
          %v842 = vld [vmem:[#allocation3 + $0x928] sm:$0xff]
          %v843 = vld [vmem:[#allocation3 + $0x930] sm:$0xff]
          %v844 = vld [vmem:[#allocation3 + $0x938] sm:$0xff]
          %v845 = vld [vmem:[#allocation3 + $0x940] sm:$0xff]
          %v846 = vld [vmem:[#allocation3 + $0x948] sm:$0xff]
          %v847 = vld [vmem:[#allocation3 + $0x950] sm:$0xff]
          %v848 = vld [vmem:[#allocation3 + $0x958] sm:$0xff]
          %v849 = vld [vmem:[#allocation3 + $0x960] sm:$0xff]
          %v850 = vld [vmem:[#allocation3 + $0x968] sm:$0xff]
          %v851 = vld [vmem:[#allocation3 + $0x970] sm:$0xff]
          %v852 = vld [vmem:[#allocation3 + $0x978] sm:$0xff]
          %v853 = vld [vmem:[#allocation3 + $0x980] sm:$0xff]
          %v854 = vld [vmem:[#allocation3 + $0x988] sm:$0xff]
          %v855 = vld [vmem:[#allocation3 + $0x990] sm:$0xff]
          %v856 = vld [vmem:[#allocation3 + $0x998] sm:$0xff]
          %v857 = vld [vmem:[#allocation3 + $0x9a0] sm:$0xff]
          %v858 = vld [vmem:[#allocation3 + $0x9a8] sm:$0xff]
          %v859 = vld [vmem:[#allocation3 + $0x9b0] sm:$0xff]
          %v860 = vld [vmem:[#allocation3 + $0x9b8] sm:$0xff]
          %v861 = vld [vmem:[#allocation3 + $0x9c0] sm:$0xff]
          %v862 = vld [vmem:[#allocation3 + $0x9c8] sm:$0xff]
          %v863 = vld [vmem:[#allocation3 + $0x9d0] sm:$0xff]
          %v864 = vld [vmem:[#allocation3 + $0x9d8] sm:$0xff]
          %v865 = vld [vmem:[#allocation3 + $0x9e0] sm:$0xff]
          %v866 = vld [vmem:[#allocation3 + $0x9e8] sm:$0xff]
          %v867 = vld [vmem:[#allocation3 + $0x9f0] sm:$0xff]
          %v868 = vld [vmem:[#allocation3 + $0x9f8] sm:$0xff]
          %v869 = vld [vmem:[#allocation3 + $0xa00] sm:$0xff]
          %v870 = vld [vmem:[#allocation3 + $0xa08] sm:$0xff]
          %v871 = vld [vmem:[#allocation3 + $0xa10] sm:$0xff]
          %v872 = vld [vmem:[#allocation3 + $0xa18] sm:$0xff]
          %v873 = vld [vmem:[#allocation3 + $0xa20] sm:$0xff]
          %v874 = vld [vmem:[#allocation3 + $0xa28] sm:$0xff]
          %v875 = vld [vmem:[#allocation3 + $0xa30] sm:$0xff]
          %v876 = vld [vmem:[#allocation3 + $0xa38] sm:$0xff]
          %v877 = vld [vmem:[#allocation3 + $0xa40] sm:$0xff]
          %v878 = vld [vmem:[#allocation3 + $0xa48] sm:$0xff]
          %v879 = vld [vmem:[#allocation3 + $0xa50] sm:$0xff]
          %v880 = vld [vmem:[#allocation3 + $0xa58] sm:$0xff]
          %v881 = vld [vmem:[#allocation3 + $0xa60] sm:$0xff]
          %v882 = vld [vmem:[#allocation3 + $0xa68] sm:$0xff]
          %v883 = vld [vmem:[#allocation3 + $0xa70] sm:$0xff]
          %v884 = vld [vmem:[#allocation3 + $0xa78] sm:$0xff]
          %v885 = vld [vmem:[#allocation3 + $0xa80] sm:$0xff]
          %v886 = vld [vmem:[#allocation3 + $0xa88] sm:$0xff]
          %v887 = vld [vmem:[#allocation3 + $0xa90] sm:$0xff]
          %v888 = vld [vmem:[#allocation3 + $0xa98] sm:$0xff]
          %v889 = vld [vmem:[#allocation3 + $0xaa0] sm:$0xff]
          %v890 = vld [vmem:[#allocation3 + $0xaa8] sm:$0xff]
          %v891 = vld [vmem:[#allocation3 + $0xab0] sm:$0xff]
          %v892 = vld [vmem:[#allocation3 + $0xab8] sm:$0xff]
          %v893 = vld [vmem:[#allocation3 + $0xac0] sm:$0xff]
          %v894 = vld [vmem:[#allocation3 + $0xac8] sm:$0xff]
          %v895 = vld [vmem:[#allocation3 + $0xad0] sm:$0xff]
          %v896 = vld [vmem:[#allocation3 + $0xad8] sm:$0xff]
          %v897 = vld [vmem:[#allocation3 + $0xae0] sm:$0xff]
          %v898 = vld [vmem:[#allocation3 + $0xae8] sm:$0xff]
          %v899 = vld [vmem:[#allocation3 + $0xaf0] sm:$0xff]
          %v900 = vld [vmem:[#allocation3 + $0xaf8] sm:$0xff]
          %v901 = vld [vmem:[#allocation3 + $0xb00] sm:$0xff]
          %v902 = vld [vmem:[#allocation3 + $0xb08] sm:$0xff]
          %v903 = vld [vmem:[#allocation3 + $0xb10] sm:$0xff]
          %v904 = vld [vmem:[#allocation3 + $0xb18] sm:$0xff]
          %v905 = vld [vmem:[#allocation3 + $0xb20] sm:$0xff]
          %v906 = vld [vmem:[#allocation3 + $0xb28] sm:$0xff]
          %v907 = vld [vmem:[#allocation3 + $0xb30] sm:$0xff]
          %v908 = vld [vmem:[#allocation3 + $0xb38] sm:$0xff]
          %v909 = vld [vmem:[#allocation3 + $0xb40] sm:$0xff]
          %v910 = vld [vmem:[#allocation3 + $0xb48] sm:$0xff]
          %v911 = vld [vmem:[#allocation3 + $0xb50] sm:$0xff]
          %v912 = vld [vmem:[#allocation3 + $0xb58] sm:$0xff]
          %v913 = vld [vmem:[#allocation3 + $0xb60] sm:$0xff]
          %v914 = vld [vmem:[#allocation3 + $0xb68] sm:$0xff]
          %v915 = vld [vmem:[#allocation3 + $0xb70] sm:$0xff]
          %v916 = vld [vmem:[#allocation3 + $0xb78] sm:$0xff]
          %v917 = vld [vmem:[#allocation3 + $0xb80] sm:$0xff]
          %v918 = vld [vmem:[#allocation3 + $0xb88] sm:$0xff]
          %v919 = vld [vmem:[#allocation3 + $0xb90] sm:$0xff]
          %v920 = vld [vmem:[#allocation3 + $0xb98] sm:$0xff]
          %v921 = vld [vmem:[#allocation3 + $0xba0] sm:$0xff]
          %v922 = vld [vmem:[#allocation3 + $0xba8] sm:$0xff]
          %v923 = vld [vmem:[#allocation3 + $0xbb0] sm:$0xff]
          %v924 = vld [vmem:[#allocation3 + $0xbb8] sm:$0xff]
          %v925 = vld [vmem:[#allocation3 + $0xbc0] sm:$0xff]
          %v926 = vld [vmem:[#allocation3 + $0xbc8] sm:$0xff]
          %v927 = vld [vmem:[#allocation3 + $0xbd0] sm:$0xff]
          %v928 = vld [vmem:[#allocation3 + $0xbd8] sm:$0xff]
          %v929 = vld [vmem:[#allocation3 + $0xbe0] sm:$0xff]
          %v930 = vld [vmem:[#allocation3 + $0xbe8] sm:$0xff]
          %v931 = vld [vmem:[#allocation3 + $0xbf0] sm:$0xff]
          %v932 = vld [vmem:[#allocation3 + $0xbf8] sm:$0xff]
          %v933 = vld [vmem:[#allocation3 + $0xc00] sm:$0xff]
          %v934 = vld [vmem:[#allocation3 + $0xc08] sm:$0xff]
          %v935 = vld [vmem:[#allocation3 + $0xc10] sm:$0xff]
          %v936 = vld [vmem:[#allocation3 + $0xc18] sm:$0xff]
          %v937 = vld [vmem:[#allocation3 + $0xc20] sm:$0xff]
          %v938 = vld [vmem:[#allocation3 + $0xc28] sm:$0xff]
          %v939 = vld [vmem:[#allocation3 + $0xc30] sm:$0xff]
          %v940 = vld [vmem:[#allocation3 + $0xc38] sm:$0xff]
          %v941 = vld [vmem:[#allocation3 + $0xc40] sm:$0xff]
          %v942 = vld [vmem:[#allocation3 + $0xc48] sm:$0xff]
          %v943 = vld [vmem:[#allocation3 + $0xc50] sm:$0xff]
          %v944 = vld [vmem:[#allocation3 + $0xc58] sm:$0xff]
          %v945 = vld [vmem:[#allocation3 + $0xc60] sm:$0xff]
          %v946 = vld [vmem:[#allocation3 + $0xc68] sm:$0xff]
          %v947 = vld [vmem:[#allocation3 + $0xc70] sm:$0xff]
          %v948 = vld [vmem:[#allocation3 + $0xc78] sm:$0xff]
          %v949 = vld [vmem:[#allocation3 + $0xc80] sm:$0xff]
          %v950 = vld [vmem:[#allocation3 + $0xc88] sm:$0xff]
          %v951 = vld [vmem:[#allocation3 + $0xc90] sm:$0xff]
          %v952 = vld [vmem:[#allocation3 + $0xc98] sm:$0xff]
          %v953 = vld [vmem:[#allocation3 + $0xca0] sm:$0xff]
          %v954 = vld [vmem:[#allocation3 + $0xca8] sm:$0xff]
          %v955 = vld [vmem:[#allocation3 + $0xcb0] sm:$0xff]
          %v956 = vld [vmem:[#allocation3 + $0xcb8] sm:$0xff]
          %v957 = vld [vmem:[#allocation3 + $0xcc0] sm:$0xff]
          %v958 = vld [vmem:[#allocation3 + $0xcc8] sm:$0xff]
          %v959 = vld [vmem:[#allocation3 + $0xcd0] sm:$0xff]
          %v960 = vld [vmem:[#allocation3 + $0xcd8] sm:$0xff]
          %v961 = vld [vmem:[#allocation3 + $0xce0] sm:$0xff]
          %v962 = vld [vmem:[#allocation3 + $0xce8] sm:$0xff]
          %v963 = vld [vmem:[#allocation3 + $0xcf0] sm:$0xff]
          %v964 = vld [vmem:[#allocation3 + $0xcf8] sm:$0xff]
          %v965 = vld [vmem:[#allocation3 + $0xd00] sm:$0xff]
          %v966 = vld [vmem:[#allocation3 + $0xd08] sm:$0xff]
          %v967 = vld [vmem:[#allocation3 + $0xd10] sm:$0xff]
          %v968 = vld [vmem:[#allocation3 + $0xd18] sm:$0xff]
          %v969 = vld [vmem:[#allocation3 + $0xd20] sm:$0xff]
          %v970 = vld [vmem:[#allocation3 + $0xd28] sm:$0xff]
          %v971 = vld [vmem:[#allocation3 + $0xd30] sm:$0xff]
          %v972 = vld [vmem:[#allocation3 + $0xd38] sm:$0xff]
          %v973 = vld [vmem:[#allocation3 + $0xd40] sm:$0xff]
          %v974 = vld [vmem:[#allocation3 + $0xd48] sm:$0xff]
          %v975 = vld [vmem:[#allocation3 + $0xd50] sm:$0xff]
          %v976 = vld [vmem:[#allocation3 + $0xd58] sm:$0xff]
          %v977 = vld [vmem:[#allocation3 + $0xd60] sm:$0xff]
          %v978 = vld [vmem:[#allocation3 + $0xd68] sm:$0xff]
          %v979 = vld [vmem:[#allocation3 + $0xd70] sm:$0xff]
          %v980 = vld [vmem:[#allocation3 + $0xd78] sm:$0xff]
          %v981 = vld [vmem:[#allocation3 + $0xd80] sm:$0xff]
          %v982 = vld [vmem:[#allocation3 + $0xd88] sm:$0xff]
          %v983 = vld [vmem:[#allocation3 + $0xd90] sm:$0xff]
          %v984 = vld [vmem:[#allocation3 + $0xd98] sm:$0xff]
          %v985 = vld [vmem:[#allocation3 + $0xda0] sm:$0xff]
          %v986 = vld [vmem:[#allocation3 + $0xda8] sm:$0xff]
          %v987 = vld [vmem:[#allocation3 + $0xdb0] sm:$0xff]
          %v988 = vld [vmem:[#allocation3 + $0xdb8] sm:$0xff]
          %v989 = vld [vmem:[#allocation3 + $0xdc0] sm:$0xff]
          %v990 = vld [vmem:[#allocation3 + $0xdc8] sm:$0xff]
          %v991 = vld [vmem:[#allocation3 + $0xdd0] sm:$0xff]
          %v992 = vld [vmem:[#allocation3 + $0xdd8] sm:$0xff]
          %v993 = vld [vmem:[#allocation3 + $0xde0] sm:$0xff]
          %v994 = vld [vmem:[#allocation3 + $0xde8] sm:$0xff]
          %v995 = vld [vmem:[#allocation3 + $0xdf0] sm:$0xff]
          %v996 = vld [vmem:[#allocation3 + $0xdf8] sm:$0xff]
          %v997 = vld [vmem:[#allocation3 + $0xe00] sm:$0xff]
          %v998 = vld [vmem:[#allocation3 + $0xe08] sm:$0xff]
          %v999 = vld [vmem:[#allocation3 + $0xe10] sm:$0xff]
          %v1000 = vld [vmem:[#allocation3 + $0xe18] sm:$0xff]
          %v1001 = vld [vmem:[#allocation3 + $0xe20] sm:$0xff]
          %v1002 = vld [vmem:[#allocation3 + $0xe28] sm:$0xff]
          %v1003 = vld [vmem:[#allocation3 + $0xe30] sm:$0xff]
          %v1004 = vld [vmem:[#allocation3 + $0xe38] sm:$0xff]
          %v1005 = vld [vmem:[#allocation3 + $0xe40] sm:$0xff]
          %v1006 = vld [vmem:[#allocation3 + $0xe48] sm:$0xff]
          %v1007 = vld [vmem:[#allocation3 + $0xe50] sm:$0xff]
          %v1008 = vld [vmem:[#allocation3 + $0xe58] sm:$0xff]
          %v1009 = vld [vmem:[#allocation3 + $0xe60] sm:$0xff]
          %v1010 = vld [vmem:[#allocation3 + $0xe68] sm:$0xff]
          %v1011 = vld [vmem:[#allocation3 + $0xe70] sm:$0xff]
          %v1012 = vld [vmem:[#allocation3 + $0xe78] sm:$0xff]
          %v1013 = vld [vmem:[#allocation3 + $0xe80] sm:$0xff]
          %v1014 = vld [vmem:[#allocation3 + $0xe88] sm:$0xff]
          %v1015 = vld [vmem:[#allocation3 + $0xe90] sm:$0xff]
          %v1016 = vld [vmem:[#allocation3 + $0xe98] sm:$0xff]
          %v1017 = vld [vmem:[#allocation3 + $0xea0] sm:$0xff]
          %v1018 = vld [vmem:[#allocation3 + $0xea8] sm:$0xff]
          %v1019 = vld [vmem:[#allocation3 + $0xeb0] sm:$0xff]
          %v1020 = vld [vmem:[#allocation3 + $0xeb8] sm:$0xff]
          %v1021 = vld [vmem:[#allocation3 + $0xec0] sm:$0xff]
          %v1022 = vld [vmem:[#allocation3 + $0xec8] sm:$0xff]
          %v1023 = vld [vmem:[#allocation3 + $0xed0] sm:$0xff]
          %v1024 = vld [vmem:[#allocation3 + $0xed8] sm:$0xff]
          %v1025 = vld [vmem:[#allocation3 + $0xee0] sm:$0xff]
          %v1026 = vld [vmem:[#allocation3 + $0xee8] sm:$0xff]
          %v1027 = vld [vmem:[#allocation3 + $0xef0] sm:$0xff]
          %v1028 = vld [vmem:[#allocation3 + $0xef8] sm:$0xff]
          %v1029 = vld [vmem:[#allocation3 + $0xf00] sm:$0xff]
          %v1030 = vld [vmem:[#allocation3 + $0xf08] sm:$0xff]
          %v1031 = vld [vmem:[#allocation3 + $0xf10] sm:$0xff]
          %v1032 = vld [vmem:[#allocation3 + $0xf18] sm:$0xff]
          %v1033 = vld [vmem:[#allocation3 + $0xf20] sm:$0xff]
          %v1034 = vld [vmem:[#allocation3 + $0xf28] sm:$0xff]
          %v1035 = vld [vmem:[#allocation3 + $0xf30] sm:$0xff]
          %v1036 = vld [vmem:[#allocation3 + $0xf38] sm:$0xff]
          %v1037 = vld [vmem:[#allocation3 + $0xf40] sm:$0xff]
          %v1038 = vld [vmem:[#allocation3 + $0xf48] sm:$0xff]
          %v1039 = vld [vmem:[#allocation3 + $0xf50] sm:$0xff]
          %v1040 = vld [vmem:[#allocation3 + $0xf58] sm:$0xff]
          %v1041 = vld [vmem:[#allocation3 + $0xf60] sm:$0xff]
          %v1042 = vld [vmem:[#allocation3 + $0xf68] sm:$0xff]
          %v1043 = vld [vmem:[#allocation3 + $0xf70] sm:$0xff]
          %v1044 = vld [vmem:[#allocation3 + $0xf78] sm:$0xff]
          %v1045 = vld [vmem:[#allocation3 + $0xf80] sm:$0xff]
          %v1046 = vld [vmem:[#allocation3 + $0xf88] sm:$0xff]
          %v1047 = vld [vmem:[#allocation3 + $0xf90] sm:$0xff]
          %v1048 = vld [vmem:[#allocation3 + $0xf98] sm:$0xff]
          %v1049 = vld [vmem:[#allocation3 + $0xfa0] sm:$0xff]
          %v1050 = vld [vmem:[#allocation3 + $0xfa8] sm:$0xff]
          %v1051 = vld [vmem:[#allocation3 + $0xfb0] sm:$0xff]
          %v1052 = vld [vmem:[#allocation3 + $0xfb8] sm:$0xff]
          %v1053 = vld [vmem:[#allocation3 + $0xfc0] sm:$0xff]
          %v1054 = vld [vmem:[#allocation3 + $0xfc8] sm:$0xff]
          %v1055 = vld [vmem:[#allocation3 + $0xfd0] sm:$0xff]
          %v1056 = vld [vmem:[#allocation3 + $0xfd8] sm:$0xff]
          %v1057 = vld [vmem:[#allocation3 + $0xfe0] sm:$0xff]
          %v1058 = vld [vmem:[#allocation3 + $0xfe8] sm:$0xff]
          %v1059 = vld [vmem:[#allocation3 + $0xff0] sm:$0xff]
          %v1060 = vld [vmem:[#allocation3 + $0xff8] sm:$0xff]
          %v1061 = vld [vmem:[#allocation5] sm:$0xf]
          %v1063 = vlaneseq
          %v1064 = vshrl.u32 %v1063, 7
          %v1065 = vsub.s32 0, %v1064
          %v1066 = vrot.slane %v1061, %v1065
          %v1067 = vlaneseq
          %v1068 = vshrl.u32 %v1067, 7
          %v1069 = vsub.s32 1, %v1068
          %v1070 = vrot.slane %v1061, %v1069
          %v1071 = vlaneseq
          %v1072 = vshrl.u32 %v1071, 7
          %v1073 = vsub.s32 2, %v1072
          %v1074 = vrot.slane %v1061, %v1073
          %v1075 = vlaneseq
          %v1076 = vshrl.u32 %v1075, 7
          %v1077 = vsub.s32 3, %v1076
          %v1078 = vrot.slane %v1061, %v1077
          %v1595 = vunpack.c.l.b16 %v549
          %v1596 = vunpack.c.h.b16 %v549
          %v1597 = vunpack.c.l.b16 %v550
          %v1598 = vunpack.c.h.b16 %v550
          %v1599 = vunpack.c.l.b16 %v551
          %v1600 = vunpack.c.h.b16 %v551
          %v1601 = vunpack.c.l.b16 %v552
          %v1602 = vunpack.c.h.b16 %v552
          %v1603 = vunpack.c.l.b16 %v553
          %v1604 = vunpack.c.h.b16 %v553
          %v1605 = vunpack.c.l.b16 %v554
          %v1606 = vunpack.c.h.b16 %v554
          %v1607 = vunpack.c.l.b16 %v555
          %v1608 = vunpack.c.h.b16 %v555
          %v1609 = vunpack.c.l.b16 %v556
          %v1610 = vunpack.c.h.b16 %v556
          %v1611 = vunpack.c.l.b16 %v557
          %v1612 = vunpack.c.h.b16 %v557
          %v1613 = vunpack.c.l.b16 %v558
          %v1614 = vunpack.c.h.b16 %v558
          %v1615 = vunpack.c.l.b16 %v559
          %v1616 = vunpack.c.h.b16 %v559
          %v1617 = vunpack.c.l.b16 %v560
          %v1618 = vunpack.c.h.b16 %v560
          %v1619 = vunpack.c.l.b16 %v561
          %v1620 = vunpack.c.h.b16 %v561
          %v1621 = vunpack.c.l.b16 %v562
          %v1622 = vunpack.c.h.b16 %v562
          %v1623 = vunpack.c.l.b16 %v563
          %v1624 = vunpack.c.h.b16 %v563
          %v1625 = vunpack.c.l.b16 %v564
          %v1626 = vunpack.c.h.b16 %v564
          %v1627 = vunpack.c.l.b16 %v565
          %v1628 = vunpack.c.h.b16 %v565
          %v1629 = vunpack.c.l.b16 %v566
          %v1630 = vunpack.c.h.b16 %v566
          %v1631 = vunpack.c.l.b16 %v567
          %v1632 = vunpack.c.h.b16 %v567
          %v1633 = vunpack.c.l.b16 %v568
          %v1634 = vunpack.c.h.b16 %v568
          %v1635 = vunpack.c.l.b16 %v569
          %v1636 = vunpack.c.h.b16 %v569
          %v1637 = vunpack.c.l.b16 %v570
          %v1638 = vunpack.c.h.b16 %v570
          %v1639 = vunpack.c.l.b16 %v571
          %v1640 = vunpack.c.h.b16 %v571
          %v1641 = vunpack.c.l.b16 %v572
          %v1642 = vunpack.c.h.b16 %v572
          %v1643 = vunpack.c.l.b16 %v573
          %v1644 = vunpack.c.h.b16 %v573
          %v1645 = vunpack.c.l.b16 %v574
          %v1646 = vunpack.c.h.b16 %v574
          %v1647 = vunpack.c.l.b16 %v575
          %v1648 = vunpack.c.h.b16 %v575
          %v1649 = vunpack.c.l.b16 %v576
          %v1650 = vunpack.c.h.b16 %v576
          %v1651 = vunpack.c.l.b16 %v577
          %v1652 = vunpack.c.h.b16 %v577
          %v1653 = vunpack.c.l.b16 %v578
          %v1654 = vunpack.c.h.b16 %v578
          %v1655 = vunpack.c.l.b16 %v579
          %v1656 = vunpack.c.h.b16 %v579
          %v1657 = vunpack.c.l.b16 %v580
          %v1658 = vunpack.c.h.b16 %v580
          %v1659 = vunpack.c.l.b16 %v581
          %v1660 = vunpack.c.h.b16 %v581
          %v1661 = vunpack.c.l.b16 %v582
          %v1662 = vunpack.c.h.b16 %v582
          %v1663 = vunpack.c.l.b16 %v583
          %v1664 = vunpack.c.h.b16 %v583
          %v1665 = vunpack.c.l.b16 %v584
          %v1666 = vunpack.c.h.b16 %v584
          %v1667 = vunpack.c.l.b16 %v585
          %v1668 = vunpack.c.h.b16 %v585
          %v1669 = vunpack.c.l.b16 %v586
          %v1670 = vunpack.c.h.b16 %v586
          %v1671 = vunpack.c.l.b16 %v587
          %v1672 = vunpack.c.h.b16 %v587
          %v1673 = vunpack.c.l.b16 %v588
          %v1674 = vunpack.c.h.b16 %v588
          %v1675 = vunpack.c.l.b16 %v589
          %v1676 = vunpack.c.h.b16 %v589
          %v1677 = vunpack.c.l.b16 %v590
          %v1678 = vunpack.c.h.b16 %v590
          %v1679 = vunpack.c.l.b16 %v591
          %v1680 = vunpack.c.h.b16 %v591
          %v1681 = vunpack.c.l.b16 %v592
          %v1682 = vunpack.c.h.b16 %v592
          %v1683 = vunpack.c.l.b16 %v593
          %v1684 = vunpack.c.h.b16 %v593
          %v1685 = vunpack.c.l.b16 %v594
          %v1686 = vunpack.c.h.b16 %v594
          %v1687 = vunpack.c.l.b16 %v595
          %v1688 = vunpack.c.h.b16 %v595
          %v1689 = vunpack.c.l.b16 %v596
          %v1690 = vunpack.c.h.b16 %v596
          %v1691 = vunpack.c.l.b16 %v597
          %v1692 = vunpack.c.h.b16 %v597
          %v1693 = vunpack.c.l.b16 %v598
          %v1694 = vunpack.c.h.b16 %v598
          %v1695 = vunpack.c.l.b16 %v599
          %v1696 = vunpack.c.h.b16 %v599
          %v1697 = vunpack.c.l.b16 %v600
          %v1698 = vunpack.c.h.b16 %v600
          %v1699 = vunpack.c.l.b16 %v601
          %v1700 = vunpack.c.h.b16 %v601
          %v1701 = vunpack.c.l.b16 %v602
          %v1702 = vunpack.c.h.b16 %v602
          %v1703 = vunpack.c.l.b16 %v603
          %v1704 = vunpack.c.h.b16 %v603
          %v1705 = vunpack.c.l.b16 %v604
          %v1706 = vunpack.c.h.b16 %v604
          %v1707 = vunpack.c.l.b16 %v605
          %v1708 = vunpack.c.h.b16 %v605
          %v1709 = vunpack.c.l.b16 %v606
          %v1710 = vunpack.c.h.b16 %v606
          %v1711 = vunpack.c.l.b16 %v607
          %v1712 = vunpack.c.h.b16 %v607
          %v1713 = vunpack.c.l.b16 %v608
          %v1714 = vunpack.c.h.b16 %v608
          %v1715 = vunpack.c.l.b16 %v609
          %v1716 = vunpack.c.h.b16 %v609
          %v1717 = vunpack.c.l.b16 %v610
          %v1718 = vunpack.c.h.b16 %v610
          %v1719 = vunpack.c.l.b16 %v611
          %v1720 = vunpack.c.h.b16 %v611
          %v1721 = vunpack.c.l.b16 %v612
          %v1722 = vunpack.c.h.b16 %v612
          %v1723 = vunpack.c.l.b16 %v613
          %v1724 = vunpack.c.h.b16 %v613
          %v1725 = vunpack.c.l.b16 %v614
          %v1726 = vunpack.c.h.b16 %v614
          %v1727 = vunpack.c.l.b16 %v615
          %v1728 = vunpack.c.h.b16 %v615
          %v1729 = vunpack.c.l.b16 %v616
          %v1730 = vunpack.c.h.b16 %v616
          %v1731 = vunpack.c.l.b16 %v617
          %v1732 = vunpack.c.h.b16 %v617
          %v1733 = vunpack.c.l.b16 %v618
          %v1734 = vunpack.c.h.b16 %v618
          %v1735 = vunpack.c.l.b16 %v619
          %v1736 = vunpack.c.h.b16 %v619
          %v1737 = vunpack.c.l.b16 %v620
          %v1738 = vunpack.c.h.b16 %v620
          %v1739 = vunpack.c.l.b16 %v621
          %v1740 = vunpack.c.h.b16 %v621
          %v1741 = vunpack.c.l.b16 %v622
          %v1742 = vunpack.c.h.b16 %v622
          %v1743 = vunpack.c.l.b16 %v623
          %v1744 = vunpack.c.h.b16 %v623
          %v1745 = vunpack.c.l.b16 %v624
          %v1746 = vunpack.c.h.b16 %v624
          %v1747 = vunpack.c.l.b16 %v625
          %v1748 = vunpack.c.h.b16 %v625
          %v1749 = vunpack.c.l.b16 %v626
          %v1750 = vunpack.c.h.b16 %v626
          %v1751 = vunpack.c.l.b16 %v627
          %v1752 = vunpack.c.h.b16 %v627
          %v1753 = vunpack.c.l.b16 %v628
          %v1754 = vunpack.c.h.b16 %v628
          %v1755 = vunpack.c.l.b16 %v629
          %v1756 = vunpack.c.h.b16 %v629
          %v1757 = vunpack.c.l.b16 %v630
          %v1758 = vunpack.c.h.b16 %v630
          %v1759 = vunpack.c.l.b16 %v631
          %v1760 = vunpack.c.h.b16 %v631
          %v1761 = vunpack.c.l.b16 %v632
          %v1762 = vunpack.c.h.b16 %v632
          %v1763 = vunpack.c.l.b16 %v633
          %v1764 = vunpack.c.h.b16 %v633
          %v1765 = vunpack.c.l.b16 %v634
          %v1766 = vunpack.c.h.b16 %v634
          %v1767 = vunpack.c.l.b16 %v635
          %v1768 = vunpack.c.h.b16 %v635
          %v1769 = vunpack.c.l.b16 %v636
          %v1770 = vunpack.c.h.b16 %v636
          %v1771 = vunpack.c.l.b16 %v637
          %v1772 = vunpack.c.h.b16 %v637
          %v1773 = vunpack.c.l.b16 %v638
          %v1774 = vunpack.c.h.b16 %v638
          %v1775 = vunpack.c.l.b16 %v639
          %v1776 = vunpack.c.h.b16 %v639
          %v1777 = vunpack.c.l.b16 %v640
          %v1778 = vunpack.c.h.b16 %v640
          %v1779 = vunpack.c.l.b16 %v641
          %v1780 = vunpack.c.h.b16 %v641
          %v1781 = vunpack.c.l.b16 %v642
          %v1782 = vunpack.c.h.b16 %v642
          %v1783 = vunpack.c.l.b16 %v643
          %v1784 = vunpack.c.h.b16 %v643
          %v1785 = vunpack.c.l.b16 %v644
          %v1786 = vunpack.c.h.b16 %v644
          %v1787 = vunpack.c.l.b16 %v645
          %v1788 = vunpack.c.h.b16 %v645
          %v1789 = vunpack.c.l.b16 %v646
          %v1790 = vunpack.c.h.b16 %v646
          %v1791 = vunpack.c.l.b16 %v647
          %v1792 = vunpack.c.h.b16 %v647
          %v1793 = vunpack.c.l.b16 %v648
          %v1794 = vunpack.c.h.b16 %v648
          %v1795 = vunpack.c.l.b16 %v649
          %v1796 = vunpack.c.h.b16 %v649
          %v1797 = vunpack.c.l.b16 %v650
          %v1798 = vunpack.c.h.b16 %v650
          %v1799 = vunpack.c.l.b16 %v651
          %v1800 = vunpack.c.h.b16 %v651
          %v1801 = vunpack.c.l.b16 %v652
          %v1802 = vunpack.c.h.b16 %v652
          %v1803 = vunpack.c.l.b16 %v653
          %v1804 = vunpack.c.h.b16 %v653
          %v1805 = vunpack.c.l.b16 %v654
          %v1806 = vunpack.c.h.b16 %v654
          %v1807 = vunpack.c.l.b16 %v655
          %v1808 = vunpack.c.h.b16 %v655
          %v1809 = vunpack.c.l.b16 %v656
          %v1810 = vunpack.c.h.b16 %v656
          %v1811 = vunpack.c.l.b16 %v657
          %v1812 = vunpack.c.h.b16 %v657
          %v1813 = vunpack.c.l.b16 %v658
          %v1814 = vunpack.c.h.b16 %v658
          %v1815 = vunpack.c.l.b16 %v659
          %v1816 = vunpack.c.h.b16 %v659
          %v1817 = vunpack.c.l.b16 %v660
          %v1818 = vunpack.c.h.b16 %v660
          %v1819 = vunpack.c.l.b16 %v661
          %v1820 = vunpack.c.h.b16 %v661
          %v1821 = vunpack.c.l.b16 %v662
          %v1822 = vunpack.c.h.b16 %v662
          %v1823 = vunpack.c.l.b16 %v663
          %v1824 = vunpack.c.h.b16 %v663
          %v1825 = vunpack.c.l.b16 %v664
          %v1826 = vunpack.c.h.b16 %v664
          %v1827 = vunpack.c.l.b16 %v665
          %v1828 = vunpack.c.h.b16 %v665
          %v1829 = vunpack.c.l.b16 %v666
          %v1830 = vunpack.c.h.b16 %v666
          %v1831 = vunpack.c.l.b16 %v667
          %v1832 = vunpack.c.h.b16 %v667
          %v1833 = vunpack.c.l.b16 %v668
          %v1834 = vunpack.c.h.b16 %v668
          %v1835 = vunpack.c.l.b16 %v669
          %v1836 = vunpack.c.h.b16 %v669
          %v1837 = vunpack.c.l.b16 %v670
          %v1838 = vunpack.c.h.b16 %v670
          %v1839 = vunpack.c.l.b16 %v671
          %v1840 = vunpack.c.h.b16 %v671
          %v1841 = vunpack.c.l.b16 %v672
          %v1842 = vunpack.c.h.b16 %v672
          %v1843 = vunpack.c.l.b16 %v673
          %v1844 = vunpack.c.h.b16 %v673
          %v1845 = vunpack.c.l.b16 %v674
          %v1846 = vunpack.c.h.b16 %v674
          %v1847 = vunpack.c.l.b16 %v675
          %v1848 = vunpack.c.h.b16 %v675
          %v1849 = vunpack.c.l.b16 %v676
          %v1850 = vunpack.c.h.b16 %v676
          %v1851 = vunpack.c.l.b16 %v677
          %v1852 = vunpack.c.h.b16 %v677
          %v1853 = vunpack.c.l.b16 %v678
          %v1854 = vunpack.c.h.b16 %v678
          %v1855 = vunpack.c.l.b16 %v679
          %v1856 = vunpack.c.h.b16 %v679
          %v1857 = vunpack.c.l.b16 %v680
          %v1858 = vunpack.c.h.b16 %v680
          %v1859 = vunpack.c.l.b16 %v681
          %v1860 = vunpack.c.h.b16 %v681
          %v1861 = vunpack.c.l.b16 %v682
          %v1862 = vunpack.c.h.b16 %v682
          %v1863 = vunpack.c.l.b16 %v683
          %v1864 = vunpack.c.h.b16 %v683
          %v1865 = vunpack.c.l.b16 %v684
          %v1866 = vunpack.c.h.b16 %v684
          %v1867 = vunpack.c.l.b16 %v685
          %v1868 = vunpack.c.h.b16 %v685
          %v1869 = vunpack.c.l.b16 %v686
          %v1870 = vunpack.c.h.b16 %v686
          %v1871 = vunpack.c.l.b16 %v687
          %v1872 = vunpack.c.h.b16 %v687
          %v1873 = vunpack.c.l.b16 %v688
          %v1874 = vunpack.c.h.b16 %v688
          %v1875 = vunpack.c.l.b16 %v689
          %v1876 = vunpack.c.h.b16 %v689
          %v1877 = vunpack.c.l.b16 %v690
          %v1878 = vunpack.c.h.b16 %v690
          %v1879 = vunpack.c.l.b16 %v691
          %v1880 = vunpack.c.h.b16 %v691
          %v1881 = vunpack.c.l.b16 %v692
          %v1882 = vunpack.c.h.b16 %v692
          %v1883 = vunpack.c.l.b16 %v693
          %v1884 = vunpack.c.h.b16 %v693
          %v1885 = vunpack.c.l.b16 %v694
          %v1886 = vunpack.c.h.b16 %v694
          %v1887 = vunpack.c.l.b16 %v695
          %v1888 = vunpack.c.h.b16 %v695
          %v1889 = vunpack.c.l.b16 %v696
          %v1890 = vunpack.c.h.b16 %v696
          %v1891 = vunpack.c.l.b16 %v697
          %v1892 = vunpack.c.h.b16 %v697
          %v1893 = vunpack.c.l.b16 %v698
          %v1894 = vunpack.c.h.b16 %v698
          %v1895 = vunpack.c.l.b16 %v699
          %v1896 = vunpack.c.h.b16 %v699
          %v1897 = vunpack.c.l.b16 %v700
          %v1898 = vunpack.c.h.b16 %v700
          %v1899 = vunpack.c.l.b16 %v701
          %v1900 = vunpack.c.h.b16 %v701
          %v1901 = vunpack.c.l.b16 %v702
          %v1902 = vunpack.c.h.b16 %v702
          %v1903 = vunpack.c.l.b16 %v703
          %v1904 = vunpack.c.h.b16 %v703
          %v1905 = vunpack.c.l.b16 %v704
          %v1906 = vunpack.c.h.b16 %v704
          %v1907 = vunpack.c.l.b16 %v705
          %v1908 = vunpack.c.h.b16 %v705
          %v1909 = vunpack.c.l.b16 %v706
          %v1910 = vunpack.c.h.b16 %v706
          %v1911 = vunpack.c.l.b16 %v707
          %v1912 = vunpack.c.h.b16 %v707
          %v1913 = vunpack.c.l.b16 %v708
          %v1914 = vunpack.c.h.b16 %v708
          %v1915 = vunpack.c.l.b16 %v709
          %v1916 = vunpack.c.h.b16 %v709
          %v1917 = vunpack.c.l.b16 %v710
          %v1918 = vunpack.c.h.b16 %v710
          %v1919 = vunpack.c.l.b16 %v711
          %v1920 = vunpack.c.h.b16 %v711
          %v1921 = vunpack.c.l.b16 %v712
          %v1922 = vunpack.c.h.b16 %v712
          %v1923 = vunpack.c.l.b16 %v713
          %v1924 = vunpack.c.h.b16 %v713
          %v1925 = vunpack.c.l.b16 %v714
          %v1926 = vunpack.c.h.b16 %v714
          %v1927 = vunpack.c.l.b16 %v715
          %v1928 = vunpack.c.h.b16 %v715
          %v1929 = vunpack.c.l.b16 %v716
          %v1930 = vunpack.c.h.b16 %v716
          %v1931 = vunpack.c.l.b16 %v717
          %v1932 = vunpack.c.h.b16 %v717
          %v1933 = vunpack.c.l.b16 %v718
          %v1934 = vunpack.c.h.b16 %v718
          %v1935 = vunpack.c.l.b16 %v719
          %v1936 = vunpack.c.h.b16 %v719
          %v1937 = vunpack.c.l.b16 %v720
          %v1938 = vunpack.c.h.b16 %v720
          %v1939 = vunpack.c.l.b16 %v721
          %v1940 = vunpack.c.h.b16 %v721
          %v1941 = vunpack.c.l.b16 %v722
          %v1942 = vunpack.c.h.b16 %v722
          %v1943 = vunpack.c.l.b16 %v723
          %v1944 = vunpack.c.h.b16 %v723
          %v1945 = vunpack.c.l.b16 %v724
          %v1946 = vunpack.c.h.b16 %v724
          %v1947 = vunpack.c.l.b16 %v725
          %v1948 = vunpack.c.h.b16 %v725
          %v1949 = vunpack.c.l.b16 %v726
          %v1950 = vunpack.c.h.b16 %v726
          %v1951 = vunpack.c.l.b16 %v727
          %v1952 = vunpack.c.h.b16 %v727
          %v1953 = vunpack.c.l.b16 %v728
          %v1954 = vunpack.c.h.b16 %v728
          %v1955 = vunpack.c.l.b16 %v729
          %v1956 = vunpack.c.h.b16 %v729
          %v1957 = vunpack.c.l.b16 %v730
          %v1958 = vunpack.c.h.b16 %v730
          %v1959 = vunpack.c.l.b16 %v731
          %v1960 = vunpack.c.h.b16 %v731
          %v1961 = vunpack.c.l.b16 %v732
          %v1962 = vunpack.c.h.b16 %v732
          %v1963 = vunpack.c.l.b16 %v733
          %v1964 = vunpack.c.h.b16 %v733
          %v1965 = vunpack.c.l.b16 %v734
          %v1966 = vunpack.c.h.b16 %v734
          %v1967 = vunpack.c.l.b16 %v735
          %v1968 = vunpack.c.h.b16 %v735
          %v1969 = vunpack.c.l.b16 %v736
          %v1970 = vunpack.c.h.b16 %v736
          %v1971 = vunpack.c.l.b16 %v737
          %v1972 = vunpack.c.h.b16 %v737
          %v1973 = vunpack.c.l.b16 %v738
          %v1974 = vunpack.c.h.b16 %v738
          %v1975 = vunpack.c.l.b16 %v739
          %v1976 = vunpack.c.h.b16 %v739
          %v1977 = vunpack.c.l.b16 %v740
          %v1978 = vunpack.c.h.b16 %v740
          %v1979 = vunpack.c.l.b16 %v741
          %v1980 = vunpack.c.h.b16 %v741
          %v1981 = vunpack.c.l.b16 %v742
          %v1982 = vunpack.c.h.b16 %v742
          %v1983 = vunpack.c.l.b16 %v743
          %v1984 = vunpack.c.h.b16 %v743
          %v1985 = vunpack.c.l.b16 %v744
          %v1986 = vunpack.c.h.b16 %v744
          %v1987 = vunpack.c.l.b16 %v745
          %v1988 = vunpack.c.h.b16 %v745
          %v1989 = vunpack.c.l.b16 %v746
          %v1990 = vunpack.c.h.b16 %v746
          %v1991 = vunpack.c.l.b16 %v747
          %v1992 = vunpack.c.h.b16 %v747
          %v1993 = vunpack.c.l.b16 %v748
          %v1994 = vunpack.c.h.b16 %v748
          %v1995 = vunpack.c.l.b16 %v749
          %v1996 = vunpack.c.h.b16 %v749
          %v1997 = vunpack.c.l.b16 %v750
          %v1998 = vunpack.c.h.b16 %v750
          %v1999 = vunpack.c.l.b16 %v751
          %v2000 = vunpack.c.h.b16 %v751
          %v2001 = vunpack.c.l.b16 %v752
          %v2002 = vunpack.c.h.b16 %v752
          %v2003 = vunpack.c.l.b16 %v753
          %v2004 = vunpack.c.h.b16 %v753
          %v2005 = vunpack.c.l.b16 %v754
          %v2006 = vunpack.c.h.b16 %v754
          %v2007 = vunpack.c.l.b16 %v755
          %v2008 = vunpack.c.h.b16 %v755
          %v2009 = vunpack.c.l.b16 %v756
          %v2010 = vunpack.c.h.b16 %v756
          %v2011 = vunpack.c.l.b16 %v757
          %v2012 = vunpack.c.h.b16 %v757
          %v2013 = vunpack.c.l.b16 %v758
          %v2014 = vunpack.c.h.b16 %v758
          %v2015 = vunpack.c.l.b16 %v759
          %v2016 = vunpack.c.h.b16 %v759
          %v2017 = vunpack.c.l.b16 %v760
          %v2018 = vunpack.c.h.b16 %v760
          %v2019 = vunpack.c.l.b16 %v761
          %v2020 = vunpack.c.h.b16 %v761
          %v2021 = vunpack.c.l.b16 %v762
          %v2022 = vunpack.c.h.b16 %v762
          %v2023 = vunpack.c.l.b16 %v763
          %v2024 = vunpack.c.h.b16 %v763
          %v2025 = vunpack.c.l.b16 %v764
          %v2026 = vunpack.c.h.b16 %v764
          %v2027 = vunpack.c.l.b16 %v765
          %v2028 = vunpack.c.h.b16 %v765
          %v2029 = vunpack.c.l.b16 %v766
          %v2030 = vunpack.c.h.b16 %v766
          %v2031 = vunpack.c.l.b16 %v767
          %v2032 = vunpack.c.h.b16 %v767
          %v2033 = vunpack.c.l.b16 %v768
          %v2034 = vunpack.c.h.b16 %v768
          %v2035 = vunpack.c.l.b16 %v769
          %v2036 = vunpack.c.h.b16 %v769
          %v2037 = vunpack.c.l.b16 %v770
          %v2038 = vunpack.c.h.b16 %v770
          %v2039 = vunpack.c.l.b16 %v771
          %v2040 = vunpack.c.h.b16 %v771
          %v2041 = vunpack.c.l.b16 %v772
          %v2042 = vunpack.c.h.b16 %v772
          %v2043 = vunpack.c.l.b16 %v773
          %v2044 = vunpack.c.h.b16 %v773
          %v2045 = vunpack.c.l.b16 %v774
          %v2046 = vunpack.c.h.b16 %v774
          %v2047 = vunpack.c.l.b16 %v775
          %v2048 = vunpack.c.h.b16 %v775
          %v2049 = vunpack.c.l.b16 %v776
          %v2050 = vunpack.c.h.b16 %v776
          %v2051 = vunpack.c.l.b16 %v777
          %v2052 = vunpack.c.h.b16 %v777
          %v2053 = vunpack.c.l.b16 %v778
          %v2054 = vunpack.c.h.b16 %v778
          %v2055 = vunpack.c.l.b16 %v779
          %v2056 = vunpack.c.h.b16 %v779
          %v2057 = vunpack.c.l.b16 %v780
          %v2058 = vunpack.c.h.b16 %v780
          %v2059 = vunpack.c.l.b16 %v781
          %v2060 = vunpack.c.h.b16 %v781
          %v2061 = vunpack.c.l.b16 %v782
          %v2062 = vunpack.c.h.b16 %v782
          %v2063 = vunpack.c.l.b16 %v783
          %v2064 = vunpack.c.h.b16 %v783
          %v2065 = vunpack.c.l.b16 %v784
          %v2066 = vunpack.c.h.b16 %v784
          %v2067 = vunpack.c.l.b16 %v785
          %v2068 = vunpack.c.h.b16 %v785
          %v2069 = vunpack.c.l.b16 %v786
          %v2070 = vunpack.c.h.b16 %v786
          %v2071 = vunpack.c.l.b16 %v787
          %v2072 = vunpack.c.h.b16 %v787
          %v2073 = vunpack.c.l.b16 %v788
          %v2074 = vunpack.c.h.b16 %v788
          %v2075 = vunpack.c.l.b16 %v789
          %v2076 = vunpack.c.h.b16 %v789
          %v2077 = vunpack.c.l.b16 %v790
          %v2078 = vunpack.c.h.b16 %v790
          %v2079 = vunpack.c.l.b16 %v791
          %v2080 = vunpack.c.h.b16 %v791
          %v2081 = vunpack.c.l.b16 %v792
          %v2082 = vunpack.c.h.b16 %v792
          %v2083 = vunpack.c.l.b16 %v793
          %v2084 = vunpack.c.h.b16 %v793
          %v2085 = vunpack.c.l.b16 %v794
          %v2086 = vunpack.c.h.b16 %v794
          %v2087 = vunpack.c.l.b16 %v795
          %v2088 = vunpack.c.h.b16 %v795
          %v2089 = vunpack.c.l.b16 %v796
          %v2090 = vunpack.c.h.b16 %v796
          %v2091 = vunpack.c.l.b16 %v797
          %v2092 = vunpack.c.h.b16 %v797
          %v2093 = vunpack.c.l.b16 %v798
          %v2094 = vunpack.c.h.b16 %v798
          %v2095 = vunpack.c.l.b16 %v799
          %v2096 = vunpack.c.h.b16 %v799
          %v2097 = vunpack.c.l.b16 %v800
          %v2098 = vunpack.c.h.b16 %v800
          %v2099 = vunpack.c.l.b16 %v801
          %v2100 = vunpack.c.h.b16 %v801
          %v2101 = vunpack.c.l.b16 %v802
          %v2102 = vunpack.c.h.b16 %v802
          %v2103 = vunpack.c.l.b16 %v803
          %v2104 = vunpack.c.h.b16 %v803
          %v2105 = vunpack.c.l.b16 %v804
          %v2106 = vunpack.c.h.b16 %v804
          %v2107 = vunpack.c.l.b16 %v805
          %v2108 = vunpack.c.h.b16 %v805
          %v2109 = vunpack.c.l.b16 %v806
          %v2110 = vunpack.c.h.b16 %v806
          %v2111 = vunpack.c.l.b16 %v807
          %v2112 = vunpack.c.h.b16 %v807
          %v2113 = vunpack.c.l.b16 %v808
          %v2114 = vunpack.c.h.b16 %v808
          %v2115 = vunpack.c.l.b16 %v809
          %v2116 = vunpack.c.h.b16 %v809
          %v2117 = vunpack.c.l.b16 %v810
          %v2118 = vunpack.c.h.b16 %v810
          %v2119 = vunpack.c.l.b16 %v811
          %v2120 = vunpack.c.h.b16 %v811
          %v2121 = vunpack.c.l.b16 %v812
          %v2122 = vunpack.c.h.b16 %v812
          %v2123 = vunpack.c.l.b16 %v813
          %v2124 = vunpack.c.h.b16 %v813
          %v2125 = vunpack.c.l.b16 %v814
          %v2126 = vunpack.c.h.b16 %v814
          %v2127 = vunpack.c.l.b16 %v815
          %v2128 = vunpack.c.h.b16 %v815
          %v2129 = vunpack.c.l.b16 %v816
          %v2130 = vunpack.c.h.b16 %v816
          %v2131 = vunpack.c.l.b16 %v817
          %v2132 = vunpack.c.h.b16 %v817
          %v2133 = vunpack.c.l.b16 %v818
          %v2134 = vunpack.c.h.b16 %v818
          %v2135 = vunpack.c.l.b16 %v819
          %v2136 = vunpack.c.h.b16 %v819
          %v2137 = vunpack.c.l.b16 %v820
          %v2138 = vunpack.c.h.b16 %v820
          %v2139 = vunpack.c.l.b16 %v821
          %v2140 = vunpack.c.h.b16 %v821
          %v2141 = vunpack.c.l.b16 %v822
          %v2142 = vunpack.c.h.b16 %v822
          %v2143 = vunpack.c.l.b16 %v823
          %v2144 = vunpack.c.h.b16 %v823
          %v2145 = vunpack.c.l.b16 %v824
          %v2146 = vunpack.c.h.b16 %v824
          %v2147 = vunpack.c.l.b16 %v825
          %v2148 = vunpack.c.h.b16 %v825
          %v2149 = vunpack.c.l.b16 %v826
          %v2150 = vunpack.c.h.b16 %v826
          %v2151 = vunpack.c.l.b16 %v827
          %v2152 = vunpack.c.h.b16 %v827
          %v2153 = vunpack.c.l.b16 %v828
          %v2154 = vunpack.c.h.b16 %v828
          %v2155 = vunpack.c.l.b16 %v829
          %v2156 = vunpack.c.h.b16 %v829
          %v2157 = vunpack.c.l.b16 %v830
          %v2158 = vunpack.c.h.b16 %v830
          %v2159 = vunpack.c.l.b16 %v831
          %v2160 = vunpack.c.h.b16 %v831
          %v2161 = vunpack.c.l.b16 %v832
          %v2162 = vunpack.c.h.b16 %v832
          %v2163 = vunpack.c.l.b16 %v833
          %v2164 = vunpack.c.h.b16 %v833
          %v2165 = vunpack.c.l.b16 %v834
          %v2166 = vunpack.c.h.b16 %v834
          %v2167 = vunpack.c.l.b16 %v835
          %v2168 = vunpack.c.h.b16 %v835
          %v2169 = vunpack.c.l.b16 %v836
          %v2170 = vunpack.c.h.b16 %v836
          %v2171 = vunpack.c.l.b16 %v837
          %v2172 = vunpack.c.h.b16 %v837
          %v2173 = vunpack.c.l.b16 %v838
          %v2174 = vunpack.c.h.b16 %v838
          %v2175 = vunpack.c.l.b16 %v839
          %v2176 = vunpack.c.h.b16 %v839
          %v2177 = vunpack.c.l.b16 %v840
          %v2178 = vunpack.c.h.b16 %v840
          %v2179 = vunpack.c.l.b16 %v841
          %v2180 = vunpack.c.h.b16 %v841
          %v2181 = vunpack.c.l.b16 %v842
          %v2182 = vunpack.c.h.b16 %v842
          %v2183 = vunpack.c.l.b16 %v843
          %v2184 = vunpack.c.h.b16 %v843
          %v2185 = vunpack.c.l.b16 %v844
          %v2186 = vunpack.c.h.b16 %v844
          %v2187 = vunpack.c.l.b16 %v845
          %v2188 = vunpack.c.h.b16 %v845
          %v2189 = vunpack.c.l.b16 %v846
          %v2190 = vunpack.c.h.b16 %v846
          %v2191 = vunpack.c.l.b16 %v847
          %v2192 = vunpack.c.h.b16 %v847
          %v2193 = vunpack.c.l.b16 %v848
          %v2194 = vunpack.c.h.b16 %v848
          %v2195 = vunpack.c.l.b16 %v849
          %v2196 = vunpack.c.h.b16 %v849
          %v2197 = vunpack.c.l.b16 %v850
          %v2198 = vunpack.c.h.b16 %v850
          %v2199 = vunpack.c.l.b16 %v851
          %v2200 = vunpack.c.h.b16 %v851
          %v2201 = vunpack.c.l.b16 %v852
          %v2202 = vunpack.c.h.b16 %v852
          %v2203 = vunpack.c.l.b16 %v853
          %v2204 = vunpack.c.h.b16 %v853
          %v2205 = vunpack.c.l.b16 %v854
          %v2206 = vunpack.c.h.b16 %v854
          %v2207 = vunpack.c.l.b16 %v855
          %v2208 = vunpack.c.h.b16 %v855
          %v2209 = vunpack.c.l.b16 %v856
          %v2210 = vunpack.c.h.b16 %v856
          %v2211 = vunpack.c.l.b16 %v857
          %v2212 = vunpack.c.h.b16 %v857
          %v2213 = vunpack.c.l.b16 %v858
          %v2214 = vunpack.c.h.b16 %v858
          %v2215 = vunpack.c.l.b16 %v859
          %v2216 = vunpack.c.h.b16 %v859
          %v2217 = vunpack.c.l.b16 %v860
          %v2218 = vunpack.c.h.b16 %v860
          %v2219 = vunpack.c.l.b16 %v861
          %v2220 = vunpack.c.h.b16 %v861
          %v2221 = vunpack.c.l.b16 %v862
          %v2222 = vunpack.c.h.b16 %v862
          %v2223 = vunpack.c.l.b16 %v863
          %v2224 = vunpack.c.h.b16 %v863
          %v2225 = vunpack.c.l.b16 %v864
          %v2226 = vunpack.c.h.b16 %v864
          %v2227 = vunpack.c.l.b16 %v865
          %v2228 = vunpack.c.h.b16 %v865
          %v2229 = vunpack.c.l.b16 %v866
          %v2230 = vunpack.c.h.b16 %v866
          %v2231 = vunpack.c.l.b16 %v867
          %v2232 = vunpack.c.h.b16 %v867
          %v2233 = vunpack.c.l.b16 %v868
          %v2234 = vunpack.c.h.b16 %v868
          %v2235 = vunpack.c.l.b16 %v869
          %v2236 = vunpack.c.h.b16 %v869
          %v2237 = vunpack.c.l.b16 %v870
          %v2238 = vunpack.c.h.b16 %v870
          %v2239 = vunpack.c.l.b16 %v871
          %v2240 = vunpack.c.h.b16 %v871
          %v2241 = vunpack.c.l.b16 %v872
          %v2242 = vunpack.c.h.b16 %v872
          %v2243 = vunpack.c.l.b16 %v873
          %v2244 = vunpack.c.h.b16 %v873
          %v2245 = vunpack.c.l.b16 %v874
          %v2246 = vunpack.c.h.b16 %v874
          %v2247 = vunpack.c.l.b16 %v875
          %v2248 = vunpack.c.h.b16 %v875
          %v2249 = vunpack.c.l.b16 %v876
          %v2250 = vunpack.c.h.b16 %v876
          %v2251 = vunpack.c.l.b16 %v877
          %v2252 = vunpack.c.h.b16 %v877
          %v2253 = vunpack.c.l.b16 %v878
          %v2254 = vunpack.c.h.b16 %v878
          %v2255 = vunpack.c.l.b16 %v879
          %v2256 = vunpack.c.h.b16 %v879
          %v2257 = vunpack.c.l.b16 %v880
          %v2258 = vunpack.c.h.b16 %v880
          %v2259 = vunpack.c.l.b16 %v881
          %v2260 = vunpack.c.h.b16 %v881
          %v2261 = vunpack.c.l.b16 %v882
          %v2262 = vunpack.c.h.b16 %v882
          %v2263 = vunpack.c.l.b16 %v883
          %v2264 = vunpack.c.h.b16 %v883
          %v2265 = vunpack.c.l.b16 %v884
          %v2266 = vunpack.c.h.b16 %v884
          %v2267 = vunpack.c.l.b16 %v885
          %v2268 = vunpack.c.h.b16 %v885
          %v2269 = vunpack.c.l.b16 %v886
          %v2270 = vunpack.c.h.b16 %v886
          %v2271 = vunpack.c.l.b16 %v887
          %v2272 = vunpack.c.h.b16 %v887
          %v2273 = vunpack.c.l.b16 %v888
          %v2274 = vunpack.c.h.b16 %v888
          %v2275 = vunpack.c.l.b16 %v889
          %v2276 = vunpack.c.h.b16 %v889
          %v2277 = vunpack.c.l.b16 %v890
          %v2278 = vunpack.c.h.b16 %v890
          %v2279 = vunpack.c.l.b16 %v891
          %v2280 = vunpack.c.h.b16 %v891
          %v2281 = vunpack.c.l.b16 %v892
          %v2282 = vunpack.c.h.b16 %v892
          %v2283 = vunpack.c.l.b16 %v893
          %v2284 = vunpack.c.h.b16 %v893
          %v2285 = vunpack.c.l.b16 %v894
          %v2286 = vunpack.c.h.b16 %v894
          %v2287 = vunpack.c.l.b16 %v895
          %v2288 = vunpack.c.h.b16 %v895
          %v2289 = vunpack.c.l.b16 %v896
          %v2290 = vunpack.c.h.b16 %v896
          %v2291 = vunpack.c.l.b16 %v897
          %v2292 = vunpack.c.h.b16 %v897
          %v2293 = vunpack.c.l.b16 %v898
          %v2294 = vunpack.c.h.b16 %v898
          %v2295 = vunpack.c.l.b16 %v899
          %v2296 = vunpack.c.h.b16 %v899
          %v2297 = vunpack.c.l.b16 %v900
          %v2298 = vunpack.c.h.b16 %v900
          %v2299 = vunpack.c.l.b16 %v901
          %v2300 = vunpack.c.h.b16 %v901
          %v2301 = vunpack.c.l.b16 %v902
          %v2302 = vunpack.c.h.b16 %v902
          %v2303 = vunpack.c.l.b16 %v903
          %v2304 = vunpack.c.h.b16 %v903
          %v2305 = vunpack.c.l.b16 %v904
          %v2306 = vunpack.c.h.b16 %v904
          %v2307 = vunpack.c.l.b16 %v905
          %v2308 = vunpack.c.h.b16 %v905
          %v2309 = vunpack.c.l.b16 %v906
          %v2310 = vunpack.c.h.b16 %v906
          %v2311 = vunpack.c.l.b16 %v907
          %v2312 = vunpack.c.h.b16 %v907
          %v2313 = vunpack.c.l.b16 %v908
          %v2314 = vunpack.c.h.b16 %v908
          %v2315 = vunpack.c.l.b16 %v909
          %v2316 = vunpack.c.h.b16 %v909
          %v2317 = vunpack.c.l.b16 %v910
          %v2318 = vunpack.c.h.b16 %v910
          %v2319 = vunpack.c.l.b16 %v911
          %v2320 = vunpack.c.h.b16 %v911
          %v2321 = vunpack.c.l.b16 %v912
          %v2322 = vunpack.c.h.b16 %v912
          %v2323 = vunpack.c.l.b16 %v913
          %v2324 = vunpack.c.h.b16 %v913
          %v2325 = vunpack.c.l.b16 %v914
          %v2326 = vunpack.c.h.b16 %v914
          %v2327 = vunpack.c.l.b16 %v915
          %v2328 = vunpack.c.h.b16 %v915
          %v2329 = vunpack.c.l.b16 %v916
          %v2330 = vunpack.c.h.b16 %v916
          %v2331 = vunpack.c.l.b16 %v917
          %v2332 = vunpack.c.h.b16 %v917
          %v2333 = vunpack.c.l.b16 %v918
          %v2334 = vunpack.c.h.b16 %v918
          %v2335 = vunpack.c.l.b16 %v919
          %v2336 = vunpack.c.h.b16 %v919
          %v2337 = vunpack.c.l.b16 %v920
          %v2338 = vunpack.c.h.b16 %v920
          %v2339 = vunpack.c.l.b16 %v921
          %v2340 = vunpack.c.h.b16 %v921
          %v2341 = vunpack.c.l.b16 %v922
          %v2342 = vunpack.c.h.b16 %v922
          %v2343 = vunpack.c.l.b16 %v923
          %v2344 = vunpack.c.h.b16 %v923
          %v2345 = vunpack.c.l.b16 %v924
          %v2346 = vunpack.c.h.b16 %v924
          %v2347 = vunpack.c.l.b16 %v925
          %v2348 = vunpack.c.h.b16 %v925
          %v2349 = vunpack.c.l.b16 %v926
          %v2350 = vunpack.c.h.b16 %v926
          %v2351 = vunpack.c.l.b16 %v927
          %v2352 = vunpack.c.h.b16 %v927
          %v2353 = vunpack.c.l.b16 %v928
          %v2354 = vunpack.c.h.b16 %v928
          %v2355 = vunpack.c.l.b16 %v929
          %v2356 = vunpack.c.h.b16 %v929
          %v2357 = vunpack.c.l.b16 %v930
          %v2358 = vunpack.c.h.b16 %v930
          %v2359 = vunpack.c.l.b16 %v931
          %v2360 = vunpack.c.h.b16 %v931
          %v2361 = vunpack.c.l.b16 %v932
          %v2362 = vunpack.c.h.b16 %v932
          %v2363 = vunpack.c.l.b16 %v933
          %v2364 = vunpack.c.h.b16 %v933
          %v2365 = vunpack.c.l.b16 %v934
          %v2366 = vunpack.c.h.b16 %v934
          %v2367 = vunpack.c.l.b16 %v935
          %v2368 = vunpack.c.h.b16 %v935
          %v2369 = vunpack.c.l.b16 %v936
          %v2370 = vunpack.c.h.b16 %v936
          %v2371 = vunpack.c.l.b16 %v937
          %v2372 = vunpack.c.h.b16 %v937
          %v2373 = vunpack.c.l.b16 %v938
          %v2374 = vunpack.c.h.b16 %v938
          %v2375 = vunpack.c.l.b16 %v939
          %v2376 = vunpack.c.h.b16 %v939
          %v2377 = vunpack.c.l.b16 %v940
          %v2378 = vunpack.c.h.b16 %v940
          %v2379 = vunpack.c.l.b16 %v941
          %v2380 = vunpack.c.h.b16 %v941
          %v2381 = vunpack.c.l.b16 %v942
          %v2382 = vunpack.c.h.b16 %v942
          %v2383 = vunpack.c.l.b16 %v943
          %v2384 = vunpack.c.h.b16 %v943
          %v2385 = vunpack.c.l.b16 %v944
          %v2386 = vunpack.c.h.b16 %v944
          %v2387 = vunpack.c.l.b16 %v945
          %v2388 = vunpack.c.h.b16 %v945
          %v2389 = vunpack.c.l.b16 %v946
          %v2390 = vunpack.c.h.b16 %v946
          %v2391 = vunpack.c.l.b16 %v947
          %v2392 = vunpack.c.h.b16 %v947
          %v2393 = vunpack.c.l.b16 %v948
          %v2394 = vunpack.c.h.b16 %v948
          %v2395 = vunpack.c.l.b16 %v949
          %v2396 = vunpack.c.h.b16 %v949
          %v2397 = vunpack.c.l.b16 %v950
          %v2398 = vunpack.c.h.b16 %v950
          %v2399 = vunpack.c.l.b16 %v951
          %v2400 = vunpack.c.h.b16 %v951
          %v2401 = vunpack.c.l.b16 %v952
          %v2402 = vunpack.c.h.b16 %v952
          %v2403 = vunpack.c.l.b16 %v953
          %v2404 = vunpack.c.h.b16 %v953
          %v2405 = vunpack.c.l.b16 %v954
          %v2406 = vunpack.c.h.b16 %v954
          %v2407 = vunpack.c.l.b16 %v955
          %v2408 = vunpack.c.h.b16 %v955
          %v2409 = vunpack.c.l.b16 %v956
          %v2410 = vunpack.c.h.b16 %v956
          %v2411 = vunpack.c.l.b16 %v957
          %v2412 = vunpack.c.h.b16 %v957
          %v2413 = vunpack.c.l.b16 %v958
          %v2414 = vunpack.c.h.b16 %v958
          %v2415 = vunpack.c.l.b16 %v959
          %v2416 = vunpack.c.h.b16 %v959
          %v2417 = vunpack.c.l.b16 %v960
          %v2418 = vunpack.c.h.b16 %v960
          %v2419 = vunpack.c.l.b16 %v961
          %v2420 = vunpack.c.h.b16 %v961
          %v2421 = vunpack.c.l.b16 %v962
          %v2422 = vunpack.c.h.b16 %v962
          %v2423 = vunpack.c.l.b16 %v963
          %v2424 = vunpack.c.h.b16 %v963
          %v2425 = vunpack.c.l.b16 %v964
          %v2426 = vunpack.c.h.b16 %v964
          %v2427 = vunpack.c.l.b16 %v965
          %v2428 = vunpack.c.h.b16 %v965
          %v2429 = vunpack.c.l.b16 %v966
          %v2430 = vunpack.c.h.b16 %v966
          %v2431 = vunpack.c.l.b16 %v967
          %v2432 = vunpack.c.h.b16 %v967
          %v2433 = vunpack.c.l.b16 %v968
          %v2434 = vunpack.c.h.b16 %v968
          %v2435 = vunpack.c.l.b16 %v969
          %v2436 = vunpack.c.h.b16 %v969
          %v2437 = vunpack.c.l.b16 %v970
          %v2438 = vunpack.c.h.b16 %v970
          %v2439 = vunpack.c.l.b16 %v971
          %v2440 = vunpack.c.h.b16 %v971
          %v2441 = vunpack.c.l.b16 %v972
          %v2442 = vunpack.c.h.b16 %v972
          %v2443 = vunpack.c.l.b16 %v973
          %v2444 = vunpack.c.h.b16 %v973
          %v2445 = vunpack.c.l.b16 %v974
          %v2446 = vunpack.c.h.b16 %v974
          %v2447 = vunpack.c.l.b16 %v975
          %v2448 = vunpack.c.h.b16 %v975
          %v2449 = vunpack.c.l.b16 %v976
          %v2450 = vunpack.c.h.b16 %v976
          %v2451 = vunpack.c.l.b16 %v977
          %v2452 = vunpack.c.h.b16 %v977
          %v2453 = vunpack.c.l.b16 %v978
          %v2454 = vunpack.c.h.b16 %v978
          %v2455 = vunpack.c.l.b16 %v979
          %v2456 = vunpack.c.h.b16 %v979
          %v2457 = vunpack.c.l.b16 %v980
          %v2458 = vunpack.c.h.b16 %v980
          %v2459 = vunpack.c.l.b16 %v981
          %v2460 = vunpack.c.h.b16 %v981
          %v2461 = vunpack.c.l.b16 %v982
          %v2462 = vunpack.c.h.b16 %v982
          %v2463 = vunpack.c.l.b16 %v983
          %v2464 = vunpack.c.h.b16 %v983
          %v2465 = vunpack.c.l.b16 %v984
          %v2466 = vunpack.c.h.b16 %v984
          %v2467 = vunpack.c.l.b16 %v985
          %v2468 = vunpack.c.h.b16 %v985
          %v2469 = vunpack.c.l.b16 %v986
          %v2470 = vunpack.c.h.b16 %v986
          %v2471 = vunpack.c.l.b16 %v987
          %v2472 = vunpack.c.h.b16 %v987
          %v2473 = vunpack.c.l.b16 %v988
          %v2474 = vunpack.c.h.b16 %v988
          %v2475 = vunpack.c.l.b16 %v989
          %v2476 = vunpack.c.h.b16 %v989
          %v2477 = vunpack.c.l.b16 %v990
          %v2478 = vunpack.c.h.b16 %v990
          %v2479 = vunpack.c.l.b16 %v991
          %v2480 = vunpack.c.h.b16 %v991
          %v2481 = vunpack.c.l.b16 %v992
          %v2482 = vunpack.c.h.b16 %v992
          %v2483 = vunpack.c.l.b16 %v993
          %v2484 = vunpack.c.h.b16 %v993
          %v2485 = vunpack.c.l.b16 %v994
          %v2486 = vunpack.c.h.b16 %v994
          %v2487 = vunpack.c.l.b16 %v995
          %v2488 = vunpack.c.h.b16 %v995
          %v2489 = vunpack.c.l.b16 %v996
          %v2490 = vunpack.c.h.b16 %v996
          %v2491 = vunpack.c.l.b16 %v997
          %v2492 = vunpack.c.h.b16 %v997
          %v2493 = vunpack.c.l.b16 %v998
          %v2494 = vunpack.c.h.b16 %v998
          %v2495 = vunpack.c.l.b16 %v999
          %v2496 = vunpack.c.h.b16 %v999
          %v2497 = vunpack.c.l.b16 %v1000
          %v2498 = vunpack.c.h.b16 %v1000
          %v2499 = vunpack.c.l.b16 %v1001
          %v2500 = vunpack.c.h.b16 %v1001
          %v2501 = vunpack.c.l.b16 %v1002
          %v2502 = vunpack.c.h.b16 %v1002
          %v2503 = vunpack.c.l.b16 %v1003
          %v2504 = vunpack.c.h.b16 %v1003
          %v2505 = vunpack.c.l.b16 %v1004
          %v2506 = vunpack.c.h.b16 %v1004
          %v2507 = vunpack.c.l.b16 %v1005
          %v2508 = vunpack.c.h.b16 %v1005
          %v2509 = vunpack.c.l.b16 %v1006
          %v2510 = vunpack.c.h.b16 %v1006
          %v2511 = vunpack.c.l.b16 %v1007
          %v2512 = vunpack.c.h.b16 %v1007
          %v2513 = vunpack.c.l.b16 %v1008
          %v2514 = vunpack.c.h.b16 %v1008
          %v2515 = vunpack.c.l.b16 %v1009
          %v2516 = vunpack.c.h.b16 %v1009
          %v2517 = vunpack.c.l.b16 %v1010
          %v2518 = vunpack.c.h.b16 %v1010
          %v2519 = vunpack.c.l.b16 %v1011
          %v2520 = vunpack.c.h.b16 %v1011
          %v2521 = vunpack.c.l.b16 %v1012
          %v2522 = vunpack.c.h.b16 %v1012
          %v2523 = vunpack.c.l.b16 %v1013
          %v2524 = vunpack.c.h.b16 %v1013
          %v2525 = vunpack.c.l.b16 %v1014
          %v2526 = vunpack.c.h.b16 %v1014
          %v2527 = vunpack.c.l.b16 %v1015
          %v2528 = vunpack.c.h.b16 %v1015
          %v2529 = vunpack.c.l.b16 %v1016
          %v2530 = vunpack.c.h.b16 %v1016
          %v2531 = vunpack.c.l.b16 %v1017
          %v2532 = vunpack.c.h.b16 %v1017
          %v2533 = vunpack.c.l.b16 %v1018
          %v2534 = vunpack.c.h.b16 %v1018
          %v2535 = vunpack.c.l.b16 %v1019
          %v2536 = vunpack.c.h.b16 %v1019
          %v2537 = vunpack.c.l.b16 %v1020
          %v2538 = vunpack.c.h.b16 %v1020
          %v2539 = vunpack.c.l.b16 %v1021
          %v2540 = vunpack.c.h.b16 %v1021
          %v2541 = vunpack.c.l.b16 %v1022
          %v2542 = vunpack.c.h.b16 %v1022
          %v2543 = vunpack.c.l.b16 %v1023
          %v2544 = vunpack.c.h.b16 %v1023
          %v2545 = vunpack.c.l.b16 %v1024
          %v2546 = vunpack.c.h.b16 %v1024
          %v2547 = vunpack.c.l.b16 %v1025
          %v2548 = vunpack.c.h.b16 %v1025
          %v2549 = vunpack.c.l.b16 %v1026
          %v2550 = vunpack.c.h.b16 %v1026
          %v2551 = vunpack.c.l.b16 %v1027
          %v2552 = vunpack.c.h.b16 %v1027
          %v2553 = vunpack.c.l.b16 %v1028
          %v2554 = vunpack.c.h.b16 %v1028
          %v2555 = vunpack.c.l.b16 %v1029
          %v2556 = vunpack.c.h.b16 %v1029
          %v2557 = vunpack.c.l.b16 %v1030
          %v2558 = vunpack.c.h.b16 %v1030
          %v2559 = vunpack.c.l.b16 %v1031
          %v2560 = vunpack.c.h.b16 %v1031
          %v2561 = vunpack.c.l.b16 %v1032
          %v2562 = vunpack.c.h.b16 %v1032
          %v2563 = vunpack.c.l.b16 %v1033
          %v2564 = vunpack.c.h.b16 %v1033
          %v2565 = vunpack.c.l.b16 %v1034
          %v2566 = vunpack.c.h.b16 %v1034
          %v2567 = vunpack.c.l.b16 %v1035
          %v2568 = vunpack.c.h.b16 %v1035
          %v2569 = vunpack.c.l.b16 %v1036
          %v2570 = vunpack.c.h.b16 %v1036
          %v2571 = vunpack.c.l.b16 %v1037
          %v2572 = vunpack.c.h.b16 %v1037
          %v2573 = vunpack.c.l.b16 %v1038
          %v2574 = vunpack.c.h.b16 %v1038
          %v2575 = vunpack.c.l.b16 %v1039
          %v2576 = vunpack.c.h.b16 %v1039
          %v2577 = vunpack.c.l.b16 %v1040
          %v2578 = vunpack.c.h.b16 %v1040
          %v2579 = vunpack.c.l.b16 %v1041
          %v2580 = vunpack.c.h.b16 %v1041
          %v2581 = vunpack.c.l.b16 %v1042
          %v2582 = vunpack.c.h.b16 %v1042
          %v2583 = vunpack.c.l.b16 %v1043
          %v2584 = vunpack.c.h.b16 %v1043
          %v2585 = vunpack.c.l.b16 %v1044
          %v2586 = vunpack.c.h.b16 %v1044
          %v2587 = vunpack.c.l.b16 %v1045
          %v2588 = vunpack.c.h.b16 %v1045
          %v2589 = vunpack.c.l.b16 %v1046
          %v2590 = vunpack.c.h.b16 %v1046
          %v2591 = vunpack.c.l.b16 %v1047
          %v2592 = vunpack.c.h.b16 %v1047
          %v2593 = vunpack.c.l.b16 %v1048
          %v2594 = vunpack.c.h.b16 %v1048
          %v2595 = vunpack.c.l.b16 %v1049
          %v2596 = vunpack.c.h.b16 %v1049
          %v2597 = vunpack.c.l.b16 %v1050
          %v2598 = vunpack.c.h.b16 %v1050
          %v2599 = vunpack.c.l.b16 %v1051
          %v2600 = vunpack.c.h.b16 %v1051
          %v2601 = vunpack.c.l.b16 %v1052
          %v2602 = vunpack.c.h.b16 %v1052
          %v2603 = vunpack.c.l.b16 %v1053
          %v2604 = vunpack.c.h.b16 %v1053
          %v2605 = vunpack.c.l.b16 %v1054
          %v2606 = vunpack.c.h.b16 %v1054
          %v2607 = vunpack.c.l.b16 %v1055
          %v2608 = vunpack.c.h.b16 %v1055
          %v2609 = vunpack.c.l.b16 %v1056
          %v2610 = vunpack.c.h.b16 %v1056
          %v2611 = vunpack.c.l.b16 %v1057
          %v2612 = vunpack.c.h.b16 %v1057
          %v2613 = vunpack.c.l.b16 %v1058
          %v2614 = vunpack.c.h.b16 %v1058
          %v2615 = vunpack.c.l.b16 %v1059
          %v2616 = vunpack.c.h.b16 %v1059
          %v2617 = vunpack.c.l.b16 %v1060
          %v2618 = vunpack.c.h.b16 %v1060
          %v2619 = vpack.c.b16 %v1599, %v1595
          %v2620 = vpack.c.b16 %v1600, %v1596
          %v2621 = vpack.c.b16 %v1601, %v1597
          %v2622 = vpack.c.b16 %v1602, %v1598
          %v2623 = vpack.c.b16 %v1607, %v1603
          %v2624 = vpack.c.b16 %v1608, %v1604
          %v2625 = vpack.c.b16 %v1609, %v1605
          %v2626 = vpack.c.b16 %v1610, %v1606
          %v2627 = vpack.c.b16 %v1615, %v1611
          %v2628 = vpack.c.b16 %v1616, %v1612
          %v2629 = vpack.c.b16 %v1617, %v1613
          %v2630 = vpack.c.b16 %v1618, %v1614
          %v2631 = vpack.c.b16 %v1623, %v1619
          %v2632 = vpack.c.b16 %v1624, %v1620
          %v2633 = vpack.c.b16 %v1625, %v1621
          %v2634 = vpack.c.b16 %v1626, %v1622
          %v2635 = vpack.c.b16 %v1631, %v1627
          %v2636 = vpack.c.b16 %v1632, %v1628
          %v2637 = vpack.c.b16 %v1633, %v1629
          %v2638 = vpack.c.b16 %v1634, %v1630
          %v2639 = vpack.c.b16 %v1639, %v1635
          %v2640 = vpack.c.b16 %v1640, %v1636
          %v2641 = vpack.c.b16 %v1641, %v1637
          %v2642 = vpack.c.b16 %v1642, %v1638
          %v2643 = vpack.c.b16 %v1647, %v1643
          %v2644 = vpack.c.b16 %v1648, %v1644
          %v2645 = vpack.c.b16 %v1649, %v1645
          %v2646 = vpack.c.b16 %v1650, %v1646
          %v2647 = vpack.c.b16 %v1655, %v1651
          %v2648 = vpack.c.b16 %v1656, %v1652
          %v2649 = vpack.c.b16 %v1657, %v1653
          %v2650 = vpack.c.b16 %v1658, %v1654
          %v2651 = vpack.c.b16 %v1663, %v1659
          %v2652 = vpack.c.b16 %v1664, %v1660
          %v2653 = vpack.c.b16 %v1665, %v1661
          %v2654 = vpack.c.b16 %v1666, %v1662
          %v2655 = vpack.c.b16 %v1671, %v1667
          %v2656 = vpack.c.b16 %v1672, %v1668
          %v2657 = vpack.c.b16 %v1673, %v1669
          %v2658 = vpack.c.b16 %v1674, %v1670
          %v2659 = vpack.c.b16 %v1679, %v1675
          %v2660 = vpack.c.b16 %v1680, %v1676
          %v2661 = vpack.c.b16 %v1681, %v1677
          %v2662 = vpack.c.b16 %v1682, %v1678
          %v2663 = vpack.c.b16 %v1687, %v1683
          %v2664 = vpack.c.b16 %v1688, %v1684
          %v2665 = vpack.c.b16 %v1689, %v1685
          %v2666 = vpack.c.b16 %v1690, %v1686
          %v2667 = vpack.c.b16 %v1695, %v1691
          %v2668 = vpack.c.b16 %v1696, %v1692
          %v2669 = vpack.c.b16 %v1697, %v1693
          %v2670 = vpack.c.b16 %v1698, %v1694
          %v2671 = vpack.c.b16 %v1703, %v1699
          %v2672 = vpack.c.b16 %v1704, %v1700
          %v2673 = vpack.c.b16 %v1705, %v1701
          %v2674 = vpack.c.b16 %v1706, %v1702
          %v2675 = vpack.c.b16 %v1711, %v1707
          %v2676 = vpack.c.b16 %v1712, %v1708
          %v2677 = vpack.c.b16 %v1713, %v1709
          %v2678 = vpack.c.b16 %v1714, %v1710
          %v2679 = vpack.c.b16 %v1719, %v1715
          %v2680 = vpack.c.b16 %v1720, %v1716
          %v2681 = vpack.c.b16 %v1721, %v1717
          %v2682 = vpack.c.b16 %v1722, %v1718
          %v2683 = vpack.c.b16 %v1727, %v1723
          %v2684 = vpack.c.b16 %v1728, %v1724
          %v2685 = vpack.c.b16 %v1729, %v1725
          %v2686 = vpack.c.b16 %v1730, %v1726
          %v2687 = vpack.c.b16 %v1735, %v1731
          %v2688 = vpack.c.b16 %v1736, %v1732
          %v2689 = vpack.c.b16 %v1737, %v1733
          %v2690 = vpack.c.b16 %v1738, %v1734
          %v2691 = vpack.c.b16 %v1743, %v1739
          %v2692 = vpack.c.b16 %v1744, %v1740
          %v2693 = vpack.c.b16 %v1745, %v1741
          %v2694 = vpack.c.b16 %v1746, %v1742
          %v2695 = vpack.c.b16 %v1751, %v1747
          %v2696 = vpack.c.b16 %v1752, %v1748
          %v2697 = vpack.c.b16 %v1753, %v1749
          %v2698 = vpack.c.b16 %v1754, %v1750
          %v2699 = vpack.c.b16 %v1759, %v1755
          %v2700 = vpack.c.b16 %v1760, %v1756
          %v2701 = vpack.c.b16 %v1761, %v1757
          %v2702 = vpack.c.b16 %v1762, %v1758
          %v2703 = vpack.c.b16 %v1767, %v1763
          %v2704 = vpack.c.b16 %v1768, %v1764
          %v2705 = vpack.c.b16 %v1769, %v1765
          %v2706 = vpack.c.b16 %v1770, %v1766
          %v2707 = vpack.c.b16 %v1775, %v1771
          %v2708 = vpack.c.b16 %v1776, %v1772
          %v2709 = vpack.c.b16 %v1777, %v1773
          %v2710 = vpack.c.b16 %v1778, %v1774
          %v2711 = vpack.c.b16 %v1783, %v1779
          %v2712 = vpack.c.b16 %v1784, %v1780
          %v2713 = vpack.c.b16 %v1785, %v1781
          %v2714 = vpack.c.b16 %v1786, %v1782
          %v2715 = vpack.c.b16 %v1791, %v1787
          %v2716 = vpack.c.b16 %v1792, %v1788
          %v2717 = vpack.c.b16 %v1793, %v1789
          %v2718 = vpack.c.b16 %v1794, %v1790
          %v2719 = vpack.c.b16 %v1799, %v1795
          %v2720 = vpack.c.b16 %v1800, %v1796
          %v2721 = vpack.c.b16 %v1801, %v1797
          %v2722 = vpack.c.b16 %v1802, %v1798
          %v2723 = vpack.c.b16 %v1807, %v1803
          %v2724 = vpack.c.b16 %v1808, %v1804
          %v2725 = vpack.c.b16 %v1809, %v1805
          %v2726 = vpack.c.b16 %v1810, %v1806
          %v2727 = vpack.c.b16 %v1815, %v1811
          %v2728 = vpack.c.b16 %v1816, %v1812
          %v2729 = vpack.c.b16 %v1817, %v1813
          %v2730 = vpack.c.b16 %v1818, %v1814
          %v2731 = vpack.c.b16 %v1823, %v1819
          %v2732 = vpack.c.b16 %v1824, %v1820
          %v2733 = vpack.c.b16 %v1825, %v1821
          %v2734 = vpack.c.b16 %v1826, %v1822
          %v2735 = vpack.c.b16 %v1831, %v1827
          %v2736 = vpack.c.b16 %v1832, %v1828
          %v2737 = vpack.c.b16 %v1833, %v1829
          %v2738 = vpack.c.b16 %v1834, %v1830
          %v2739 = vpack.c.b16 %v1839, %v1835
          %v2740 = vpack.c.b16 %v1840, %v1836
          %v2741 = vpack.c.b16 %v1841, %v1837
          %v2742 = vpack.c.b16 %v1842, %v1838
          %v2743 = vpack.c.b16 %v1847, %v1843
          %v2744 = vpack.c.b16 %v1848, %v1844
          %v2745 = vpack.c.b16 %v1849, %v1845
          %v2746 = vpack.c.b16 %v1850, %v1846
          %v2747 = vpack.c.b16 %v1855, %v1851
          %v2748 = vpack.c.b16 %v1856, %v1852
          %v2749 = vpack.c.b16 %v1857, %v1853
          %v2750 = vpack.c.b16 %v1858, %v1854
          %v2751 = vpack.c.b16 %v1863, %v1859
          %v2752 = vpack.c.b16 %v1864, %v1860
          %v2753 = vpack.c.b16 %v1865, %v1861
          %v2754 = vpack.c.b16 %v1866, %v1862
          %v2755 = vpack.c.b16 %v1871, %v1867
          %v2756 = vpack.c.b16 %v1872, %v1868
          %v2757 = vpack.c.b16 %v1873, %v1869
          %v2758 = vpack.c.b16 %v1874, %v1870
          %v2759 = vpack.c.b16 %v1879, %v1875
          %v2760 = vpack.c.b16 %v1880, %v1876
          %v2761 = vpack.c.b16 %v1881, %v1877
          %v2762 = vpack.c.b16 %v1882, %v1878
          %v2763 = vpack.c.b16 %v1887, %v1883
          %v2764 = vpack.c.b16 %v1888, %v1884
          %v2765 = vpack.c.b16 %v1889, %v1885
          %v2766 = vpack.c.b16 %v1890, %v1886
          %v2767 = vpack.c.b16 %v1895, %v1891
          %v2768 = vpack.c.b16 %v1896, %v1892
          %v2769 = vpack.c.b16 %v1897, %v1893
          %v2770 = vpack.c.b16 %v1898, %v1894
          %v2771 = vpack.c.b16 %v1903, %v1899
          %v2772 = vpack.c.b16 %v1904, %v1900
          %v2773 = vpack.c.b16 %v1905, %v1901
          %v2774 = vpack.c.b16 %v1906, %v1902
          %v2775 = vpack.c.b16 %v1911, %v1907
          %v2776 = vpack.c.b16 %v1912, %v1908
          %v2777 = vpack.c.b16 %v1913, %v1909
          %v2778 = vpack.c.b16 %v1914, %v1910
          %v2779 = vpack.c.b16 %v1919, %v1915
          %v2780 = vpack.c.b16 %v1920, %v1916
          %v2781 = vpack.c.b16 %v1921, %v1917
          %v2782 = vpack.c.b16 %v1922, %v1918
          %v2783 = vpack.c.b16 %v1927, %v1923
          %v2784 = vpack.c.b16 %v1928, %v1924
          %v2785 = vpack.c.b16 %v1929, %v1925
          %v2786 = vpack.c.b16 %v1930, %v1926
          %v2787 = vpack.c.b16 %v1935, %v1931
          %v2788 = vpack.c.b16 %v1936, %v1932
          %v2789 = vpack.c.b16 %v1937, %v1933
          %v2790 = vpack.c.b16 %v1938, %v1934
          %v2791 = vpack.c.b16 %v1943, %v1939
          %v2792 = vpack.c.b16 %v1944, %v1940
          %v2793 = vpack.c.b16 %v1945, %v1941
          %v2794 = vpack.c.b16 %v1946, %v1942
          %v2795 = vpack.c.b16 %v1951, %v1947
          %v2796 = vpack.c.b16 %v1952, %v1948
          %v2797 = vpack.c.b16 %v1953, %v1949
          %v2798 = vpack.c.b16 %v1954, %v1950
          %v2799 = vpack.c.b16 %v1959, %v1955
          %v2800 = vpack.c.b16 %v1960, %v1956
          %v2801 = vpack.c.b16 %v1961, %v1957
          %v2802 = vpack.c.b16 %v1962, %v1958
          %v2803 = vpack.c.b16 %v1967, %v1963
          %v2804 = vpack.c.b16 %v1968, %v1964
          %v2805 = vpack.c.b16 %v1969, %v1965
          %v2806 = vpack.c.b16 %v1970, %v1966
          %v2807 = vpack.c.b16 %v1975, %v1971
          %v2808 = vpack.c.b16 %v1976, %v1972
          %v2809 = vpack.c.b16 %v1977, %v1973
          %v2810 = vpack.c.b16 %v1978, %v1974
          %v2811 = vpack.c.b16 %v1983, %v1979
          %v2812 = vpack.c.b16 %v1984, %v1980
          %v2813 = vpack.c.b16 %v1985, %v1981
          %v2814 = vpack.c.b16 %v1986, %v1982
          %v2815 = vpack.c.b16 %v1991, %v1987
          %v2816 = vpack.c.b16 %v1992, %v1988
          %v2817 = vpack.c.b16 %v1993, %v1989
          %v2818 = vpack.c.b16 %v1994, %v1990
          %v2819 = vpack.c.b16 %v1999, %v1995
          %v2820 = vpack.c.b16 %v2000, %v1996
          %v2821 = vpack.c.b16 %v2001, %v1997
          %v2822 = vpack.c.b16 %v2002, %v1998
          %v2823 = vpack.c.b16 %v2007, %v2003
          %v2824 = vpack.c.b16 %v2008, %v2004
          %v2825 = vpack.c.b16 %v2009, %v2005
          %v2826 = vpack.c.b16 %v2010, %v2006
          %v2827 = vpack.c.b16 %v2015, %v2011
          %v2828 = vpack.c.b16 %v2016, %v2012
          %v2829 = vpack.c.b16 %v2017, %v2013
          %v2830 = vpack.c.b16 %v2018, %v2014
          %v2831 = vpack.c.b16 %v2023, %v2019
          %v2832 = vpack.c.b16 %v2024, %v2020
          %v2833 = vpack.c.b16 %v2025, %v2021
          %v2834 = vpack.c.b16 %v2026, %v2022
          %v2835 = vpack.c.b16 %v2031, %v2027
          %v2836 = vpack.c.b16 %v2032, %v2028
          %v2837 = vpack.c.b16 %v2033, %v2029
          %v2838 = vpack.c.b16 %v2034, %v2030
          %v2839 = vpack.c.b16 %v2039, %v2035
          %v2840 = vpack.c.b16 %v2040, %v2036
          %v2841 = vpack.c.b16 %v2041, %v2037
          %v2842 = vpack.c.b16 %v2042, %v2038
          %v2843 = vpack.c.b16 %v2047, %v2043
          %v2844 = vpack.c.b16 %v2048, %v2044
          %v2845 = vpack.c.b16 %v2049, %v2045
          %v2846 = vpack.c.b16 %v2050, %v2046
          %v2847 = vpack.c.b16 %v2055, %v2051
          %v2848 = vpack.c.b16 %v2056, %v2052
          %v2849 = vpack.c.b16 %v2057, %v2053
          %v2850 = vpack.c.b16 %v2058, %v2054
          %v2851 = vpack.c.b16 %v2063, %v2059
          %v2852 = vpack.c.b16 %v2064, %v2060
          %v2853 = vpack.c.b16 %v2065, %v2061
          %v2854 = vpack.c.b16 %v2066, %v2062
          %v2855 = vpack.c.b16 %v2071, %v2067
          %v2856 = vpack.c.b16 %v2072, %v2068
          %v2857 = vpack.c.b16 %v2073, %v2069
          %v2858 = vpack.c.b16 %v2074, %v2070
          %v2859 = vpack.c.b16 %v2079, %v2075
          %v2860 = vpack.c.b16 %v2080, %v2076
          %v2861 = vpack.c.b16 %v2081, %v2077
          %v2862 = vpack.c.b16 %v2082, %v2078
          %v2863 = vpack.c.b16 %v2087, %v2083
          %v2864 = vpack.c.b16 %v2088, %v2084
          %v2865 = vpack.c.b16 %v2089, %v2085
          %v2866 = vpack.c.b16 %v2090, %v2086
          %v2867 = vpack.c.b16 %v2095, %v2091
          %v2868 = vpack.c.b16 %v2096, %v2092
          %v2869 = vpack.c.b16 %v2097, %v2093
          %v2870 = vpack.c.b16 %v2098, %v2094
          %v2871 = vpack.c.b16 %v2103, %v2099
          %v2872 = vpack.c.b16 %v2104, %v2100
          %v2873 = vpack.c.b16 %v2105, %v2101
          %v2874 = vpack.c.b16 %v2106, %v2102
          %v2875 = vpack.c.b16 %v2111, %v2107
          %v2876 = vpack.c.b16 %v2112, %v2108
          %v2877 = vpack.c.b16 %v2113, %v2109
          %v2878 = vpack.c.b16 %v2114, %v2110
          %v2879 = vpack.c.b16 %v2119, %v2115
          %v2880 = vpack.c.b16 %v2120, %v2116
          %v2881 = vpack.c.b16 %v2121, %v2117
          %v2882 = vpack.c.b16 %v2122, %v2118
          %v2883 = vpack.c.b16 %v2127, %v2123
          %v2884 = vpack.c.b16 %v2128, %v2124
          %v2885 = vpack.c.b16 %v2129, %v2125
          %v2886 = vpack.c.b16 %v2130, %v2126
          %v2887 = vpack.c.b16 %v2135, %v2131
          %v2888 = vpack.c.b16 %v2136, %v2132
          %v2889 = vpack.c.b16 %v2137, %v2133
          %v2890 = vpack.c.b16 %v2138, %v2134
          %v2891 = vpack.c.b16 %v2143, %v2139
          %v2892 = vpack.c.b16 %v2144, %v2140
          %v2893 = vpack.c.b16 %v2145, %v2141
          %v2894 = vpack.c.b16 %v2146, %v2142
          %v2895 = vpack.c.b16 %v2151, %v2147
          %v2896 = vpack.c.b16 %v2152, %v2148
          %v2897 = vpack.c.b16 %v2153, %v2149
          %v2898 = vpack.c.b16 %v2154, %v2150
          %v2899 = vpack.c.b16 %v2159, %v2155
          %v2900 = vpack.c.b16 %v2160, %v2156
          %v2901 = vpack.c.b16 %v2161, %v2157
          %v2902 = vpack.c.b16 %v2162, %v2158
          %v2903 = vpack.c.b16 %v2167, %v2163
          %v2904 = vpack.c.b16 %v2168, %v2164
          %v2905 = vpack.c.b16 %v2169, %v2165
          %v2906 = vpack.c.b16 %v2170, %v2166
          %v2907 = vpack.c.b16 %v2175, %v2171
          %v2908 = vpack.c.b16 %v2176, %v2172
          %v2909 = vpack.c.b16 %v2177, %v2173
          %v2910 = vpack.c.b16 %v2178, %v2174
          %v2911 = vpack.c.b16 %v2183, %v2179
          %v2912 = vpack.c.b16 %v2184, %v2180
          %v2913 = vpack.c.b16 %v2185, %v2181
          %v2914 = vpack.c.b16 %v2186, %v2182
          %v2915 = vpack.c.b16 %v2191, %v2187
          %v2916 = vpack.c.b16 %v2192, %v2188
          %v2917 = vpack.c.b16 %v2193, %v2189
          %v2918 = vpack.c.b16 %v2194, %v2190
          %v2919 = vpack.c.b16 %v2199, %v2195
          %v2920 = vpack.c.b16 %v2200, %v2196
          %v2921 = vpack.c.b16 %v2201, %v2197
          %v2922 = vpack.c.b16 %v2202, %v2198
          %v2923 = vpack.c.b16 %v2207, %v2203
          %v2924 = vpack.c.b16 %v2208, %v2204
          %v2925 = vpack.c.b16 %v2209, %v2205
          %v2926 = vpack.c.b16 %v2210, %v2206
          %v2927 = vpack.c.b16 %v2215, %v2211
          %v2928 = vpack.c.b16 %v2216, %v2212
          %v2929 = vpack.c.b16 %v2217, %v2213
          %v2930 = vpack.c.b16 %v2218, %v2214
          %v2931 = vpack.c.b16 %v2223, %v2219
          %v2932 = vpack.c.b16 %v2224, %v2220
          %v2933 = vpack.c.b16 %v2225, %v2221
          %v2934 = vpack.c.b16 %v2226, %v2222
          %v2935 = vpack.c.b16 %v2231, %v2227
          %v2936 = vpack.c.b16 %v2232, %v2228
          %v2937 = vpack.c.b16 %v2233, %v2229
          %v2938 = vpack.c.b16 %v2234, %v2230
          %v2939 = vpack.c.b16 %v2239, %v2235
          %v2940 = vpack.c.b16 %v2240, %v2236
          %v2941 = vpack.c.b16 %v2241, %v2237
          %v2942 = vpack.c.b16 %v2242, %v2238
          %v2943 = vpack.c.b16 %v2247, %v2243
          %v2944 = vpack.c.b16 %v2248, %v2244
          %v2945 = vpack.c.b16 %v2249, %v2245
          %v2946 = vpack.c.b16 %v2250, %v2246
          %v2947 = vpack.c.b16 %v2255, %v2251
          %v2948 = vpack.c.b16 %v2256, %v2252
          %v2949 = vpack.c.b16 %v2257, %v2253
          %v2950 = vpack.c.b16 %v2258, %v2254
          %v2951 = vpack.c.b16 %v2263, %v2259
          %v2952 = vpack.c.b16 %v2264, %v2260
          %v2953 = vpack.c.b16 %v2265, %v2261
          %v2954 = vpack.c.b16 %v2266, %v2262
          %v2955 = vpack.c.b16 %v2271, %v2267
          %v2956 = vpack.c.b16 %v2272, %v2268
          %v2957 = vpack.c.b16 %v2273, %v2269
          %v2958 = vpack.c.b16 %v2274, %v2270
          %v2959 = vpack.c.b16 %v2279, %v2275
          %v2960 = vpack.c.b16 %v2280, %v2276
          %v2961 = vpack.c.b16 %v2281, %v2277
          %v2962 = vpack.c.b16 %v2282, %v2278
          %v2963 = vpack.c.b16 %v2287, %v2283
          %v2964 = vpack.c.b16 %v2288, %v2284
          %v2965 = vpack.c.b16 %v2289, %v2285
          %v2966 = vpack.c.b16 %v2290, %v2286
          %v2967 = vpack.c.b16 %v2295, %v2291
          %v2968 = vpack.c.b16 %v2296, %v2292
          %v2969 = vpack.c.b16 %v2297, %v2293
          %v2970 = vpack.c.b16 %v2298, %v2294
          %v2971 = vpack.c.b16 %v2303, %v2299
          %v2972 = vpack.c.b16 %v2304, %v2300
          %v2973 = vpack.c.b16 %v2305, %v2301
          %v2974 = vpack.c.b16 %v2306, %v2302
          %v2975 = vpack.c.b16 %v2311, %v2307
          %v2976 = vpack.c.b16 %v2312, %v2308
          %v2977 = vpack.c.b16 %v2313, %v2309
          %v2978 = vpack.c.b16 %v2314, %v2310
          %v2979 = vpack.c.b16 %v2319, %v2315
          %v2980 = vpack.c.b16 %v2320, %v2316
          %v2981 = vpack.c.b16 %v2321, %v2317
          %v2982 = vpack.c.b16 %v2322, %v2318
          %v2983 = vpack.c.b16 %v2327, %v2323
          %v2984 = vpack.c.b16 %v2328, %v2324
          %v2985 = vpack.c.b16 %v2329, %v2325
          %v2986 = vpack.c.b16 %v2330, %v2326
          %v2987 = vpack.c.b16 %v2335, %v2331
          %v2988 = vpack.c.b16 %v2336, %v2332
          %v2989 = vpack.c.b16 %v2337, %v2333
          %v2990 = vpack.c.b16 %v2338, %v2334
          %v2991 = vpack.c.b16 %v2343, %v2339
          %v2992 = vpack.c.b16 %v2344, %v2340
          %v2993 = vpack.c.b16 %v2345, %v2341
          %v2994 = vpack.c.b16 %v2346, %v2342
          %v2995 = vpack.c.b16 %v2351, %v2347
          %v2996 = vpack.c.b16 %v2352, %v2348
          %v2997 = vpack.c.b16 %v2353, %v2349
          %v2998 = vpack.c.b16 %v2354, %v2350
          %v2999 = vpack.c.b16 %v2359, %v2355
          %v3000 = vpack.c.b16 %v2360, %v2356
          %v3001 = vpack.c.b16 %v2361, %v2357
          %v3002 = vpack.c.b16 %v2362, %v2358
          %v3003 = vpack.c.b16 %v2367, %v2363
          %v3004 = vpack.c.b16 %v2368, %v2364
          %v3005 = vpack.c.b16 %v2369, %v2365
          %v3006 = vpack.c.b16 %v2370, %v2366
          %v3007 = vpack.c.b16 %v2375, %v2371
          %v3008 = vpack.c.b16 %v2376, %v2372
          %v3009 = vpack.c.b16 %v2377, %v2373
          %v3010 = vpack.c.b16 %v2378, %v2374
          %v3011 = vpack.c.b16 %v2383, %v2379
          %v3012 = vpack.c.b16 %v2384, %v2380
          %v3013 = vpack.c.b16 %v2385, %v2381
          %v3014 = vpack.c.b16 %v2386, %v2382
          %v3015 = vpack.c.b16 %v2391, %v2387
          %v3016 = vpack.c.b16 %v2392, %v2388
          %v3017 = vpack.c.b16 %v2393, %v2389
          %v3018 = vpack.c.b16 %v2394, %v2390
          %v3019 = vpack.c.b16 %v2399, %v2395
          %v3020 = vpack.c.b16 %v2400, %v2396
          %v3021 = vpack.c.b16 %v2401, %v2397
          %v3022 = vpack.c.b16 %v2402, %v2398
          %v3023 = vpack.c.b16 %v2407, %v2403
          %v3024 = vpack.c.b16 %v2408, %v2404
          %v3025 = vpack.c.b16 %v2409, %v2405
          %v3026 = vpack.c.b16 %v2410, %v2406
          %v3027 = vpack.c.b16 %v2415, %v2411
          %v3028 = vpack.c.b16 %v2416, %v2412
          %v3029 = vpack.c.b16 %v2417, %v2413
          %v3030 = vpack.c.b16 %v2418, %v2414
          %v3031 = vpack.c.b16 %v2423, %v2419
          %v3032 = vpack.c.b16 %v2424, %v2420
          %v3033 = vpack.c.b16 %v2425, %v2421
          %v3034 = vpack.c.b16 %v2426, %v2422
          %v3035 = vpack.c.b16 %v2431, %v2427
          %v3036 = vpack.c.b16 %v2432, %v2428
          %v3037 = vpack.c.b16 %v2433, %v2429
          %v3038 = vpack.c.b16 %v2434, %v2430
          %v3039 = vpack.c.b16 %v2439, %v2435
          %v3040 = vpack.c.b16 %v2440, %v2436
          %v3041 = vpack.c.b16 %v2441, %v2437
          %v3042 = vpack.c.b16 %v2442, %v2438
          %v3043 = vpack.c.b16 %v2447, %v2443
          %v3044 = vpack.c.b16 %v2448, %v2444
          %v3045 = vpack.c.b16 %v2449, %v2445
          %v3046 = vpack.c.b16 %v2450, %v2446
          %v3047 = vpack.c.b16 %v2455, %v2451
          %v3048 = vpack.c.b16 %v2456, %v2452
          %v3049 = vpack.c.b16 %v2457, %v2453
          %v3050 = vpack.c.b16 %v2458, %v2454
          %v3051 = vpack.c.b16 %v2463, %v2459
          %v3052 = vpack.c.b16 %v2464, %v2460
          %v3053 = vpack.c.b16 %v2465, %v2461
          %v3054 = vpack.c.b16 %v2466, %v2462
          %v3055 = vpack.c.b16 %v2471, %v2467
          %v3056 = vpack.c.b16 %v2472, %v2468
          %v3057 = vpack.c.b16 %v2473, %v2469
          %v3058 = vpack.c.b16 %v2474, %v2470
          %v3059 = vpack.c.b16 %v2479, %v2475
          %v3060 = vpack.c.b16 %v2480, %v2476
          %v3061 = vpack.c.b16 %v2481, %v2477
          %v3062 = vpack.c.b16 %v2482, %v2478
          %v3063 = vpack.c.b16 %v2487, %v2483
          %v3064 = vpack.c.b16 %v2488, %v2484
          %v3065 = vpack.c.b16 %v2489, %v2485
          %v3066 = vpack.c.b16 %v2490, %v2486
          %v3067 = vpack.c.b16 %v2495, %v2491
          %v3068 = vpack.c.b16 %v2496, %v2492
          %v3069 = vpack.c.b16 %v2497, %v2493
          %v3070 = vpack.c.b16 %v2498, %v2494
          %v3071 = vpack.c.b16 %v2503, %v2499
          %v3072 = vpack.c.b16 %v2504, %v2500
          %v3073 = vpack.c.b16 %v2505, %v2501
          %v3074 = vpack.c.b16 %v2506, %v2502
          %v3075 = vpack.c.b16 %v2511, %v2507
          %v3076 = vpack.c.b16 %v2512, %v2508
          %v3077 = vpack.c.b16 %v2513, %v2509
          %v3078 = vpack.c.b16 %v2514, %v2510
          %v3079 = vpack.c.b16 %v2519, %v2515
          %v3080 = vpack.c.b16 %v2520, %v2516
          %v3081 = vpack.c.b16 %v2521, %v2517
          %v3082 = vpack.c.b16 %v2522, %v2518
          %v3083 = vpack.c.b16 %v2527, %v2523
          %v3084 = vpack.c.b16 %v2528, %v2524
          %v3085 = vpack.c.b16 %v2529, %v2525
          %v3086 = vpack.c.b16 %v2530, %v2526
          %v3087 = vpack.c.b16 %v2535, %v2531
          %v3088 = vpack.c.b16 %v2536, %v2532
          %v3089 = vpack.c.b16 %v2537, %v2533
          %v3090 = vpack.c.b16 %v2538, %v2534
          %v3091 = vpack.c.b16 %v2543, %v2539
          %v3092 = vpack.c.b16 %v2544, %v2540
          %v3093 = vpack.c.b16 %v2545, %v2541
          %v3094 = vpack.c.b16 %v2546, %v2542
          %v3095 = vpack.c.b16 %v2551, %v2547
          %v3096 = vpack.c.b16 %v2552, %v2548
          %v3097 = vpack.c.b16 %v2553, %v2549
          %v3098 = vpack.c.b16 %v2554, %v2550
          %v3099 = vpack.c.b16 %v2559, %v2555
          %v3100 = vpack.c.b16 %v2560, %v2556
          %v3101 = vpack.c.b16 %v2561, %v2557
          %v3102 = vpack.c.b16 %v2562, %v2558
          %v3103 = vpack.c.b16 %v2567, %v2563
          %v3104 = vpack.c.b16 %v2568, %v2564
          %v3105 = vpack.c.b16 %v2569, %v2565
          %v3106 = vpack.c.b16 %v2570, %v2566
          %v3107 = vpack.c.b16 %v2575, %v2571
          %v3108 = vpack.c.b16 %v2576, %v2572
          %v3109 = vpack.c.b16 %v2577, %v2573
          %v3110 = vpack.c.b16 %v2578, %v2574
          %v3111 = vpack.c.b16 %v2583, %v2579
          %v3112 = vpack.c.b16 %v2584, %v2580
          %v3113 = vpack.c.b16 %v2585, %v2581
          %v3114 = vpack.c.b16 %v2586, %v2582
          %v3115 = vpack.c.b16 %v2591, %v2587
          %v3116 = vpack.c.b16 %v2592, %v2588
          %v3117 = vpack.c.b16 %v2593, %v2589
          %v3118 = vpack.c.b16 %v2594, %v2590
          %v3119 = vpack.c.b16 %v2599, %v2595
          %v3120 = vpack.c.b16 %v2600, %v2596
          %v3121 = vpack.c.b16 %v2601, %v2597
          %v3122 = vpack.c.b16 %v2602, %v2598
          %v3123 = vpack.c.b16 %v2607, %v2603
          %v3124 = vpack.c.b16 %v2608, %v2604
          %v3125 = vpack.c.b16 %v2609, %v2605
          %v3126 = vpack.c.b16 %v2610, %v2606
          %v3127 = vpack.c.b16 %v2615, %v2611
          %v3128 = vpack.c.b16 %v2616, %v2612
          %v3129 = vpack.c.b16 %v2617, %v2613
          %v3130 = vpack.c.b16 %v2618, %v2614
          %3643 = vmatprep.subr.bf16.mxu0 %v2620
          %3644 = vmatpush1.bf16.msra.mxu0 %v2619
          %3645 = vmatprep.subr.bf16.mxu0 %v2624
          %3646 = vmatpush1.bf16.msra.mxu0 %v2623
          %3647 = vmatprep.subr.bf16.mxu0 %v2628
          %3648 = vmatpush1.bf16.msra.mxu0 %v2627
          %3649 = vmatprep.subr.bf16.mxu0 %v2632
          %3650 = vmatpush1.bf16.msra.mxu0 %v2631
          %3651 = vmatprep.subr.bf16.mxu0 %v2636
          %3652 = vmatpush1.bf16.msra.mxu0 %v2635
          %3653 = vmatprep.subr.bf16.mxu0 %v2640
          %3654 = vmatpush1.bf16.msra.mxu0 %v2639
          %3655 = vmatprep.subr.bf16.mxu0 %v2644
          %3656 = vmatpush1.bf16.msra.mxu0 %v2643
          %3657 = vmatprep.subr.bf16.mxu0 %v2648
          %3658 = vmatpush1.bf16.msra.mxu0 %v2647
          %3659 = vmatprep.subr.bf16.mxu0 %v2652
          %3660 = vmatpush1.bf16.msra.mxu0 %v2651
          %3661 = vmatprep.subr.bf16.mxu0 %v2656
          %3662 = vmatpush1.bf16.msra.mxu0 %v2655
          %3663 = vmatprep.subr.bf16.mxu0 %v2660
          %3664 = vmatpush1.bf16.msra.mxu0 %v2659
          %3665 = vmatprep.subr.bf16.mxu0 %v2664
          %3666 = vmatpush1.bf16.msra.mxu0 %v2663
          %3667 = vmatprep.subr.bf16.mxu0 %v2668
          %3668 = vmatpush1.bf16.msra.mxu0 %v2667
          %3669 = vmatprep.subr.bf16.mxu0 %v2672
          %3670 = vmatpush1.bf16.msra.mxu0 %v2671
          %3671 = vmatprep.subr.bf16.mxu0 %v2676
          %3672 = vmatpush1.bf16.msra.mxu0 %v2675
          %3673 = vmatprep.subr.bf16.mxu0 %v2680
          %3674 = vmatpush1.bf16.msra.mxu0 %v2679
          %3675 = vmatprep.mubr.bf16.mxu0 %v534
          %3676 = vmatmul.mubr.bf16.gmra.mrb[0].mxu0 %v533
          %v3677 = vpop.f32.mrb[0].mxu0
          %v3678 = vadd.f32 %v1066, %v3677
          %v3679 = vpop.f32.mrb[0].mxu0
          %v3680 = vadd.f32 %v1070, %v3679
          %v3681 = vpop.f32.mrb[0].mxu0
          %v3682 = vpop.f32.mrb[0].mxu0
          %3683 = vdwg.mxu0
          %3684 = vmatprep.subr.bf16.mxu0 %v2684
          %3685 = vmatpush1.bf16.msra.mxu0 %v2683
          %3686 = vmatprep.subr.bf16.mxu0 %v2688
          %3687 = vmatpush1.bf16.msra.mxu0 %v2687
          %3688 = vmatprep.subr.bf16.mxu0 %v2692
          %3689 = vmatpush1.bf16.msra.mxu0 %v2691
          %3690 = vmatprep.subr.bf16.mxu0 %v2696
          %3691 = vmatpush1.bf16.msra.mxu0 %v2695
          %3692 = vmatprep.subr.bf16.mxu0 %v2700
          %3693 = vmatpush1.bf16.msra.mxu0 %v2699
          %3694 = vmatprep.subr.bf16.mxu0 %v2704
          %3695 = vmatpush1.bf16.msra.mxu0 %v2703
          %3696 = vmatprep.subr.bf16.mxu0 %v2708
          %3697 = vmatpush1.bf16.msra.mxu0 %v2707
          %3698 = vmatprep.subr.bf16.mxu0 %v2712
          %3699 = vmatpush1.bf16.msra.mxu0 %v2711
          %3700 = vmatprep.subr.bf16.mxu0 %v2716
          %3701 = vmatpush1.bf16.msra.mxu0 %v2715
          %3702 = vmatprep.subr.bf16.mxu0 %v2720
          %3703 = vmatpush1.bf16.msra.mxu0 %v2719
          %3704 = vmatprep.subr.bf16.mxu0 %v2724
          %3705 = vmatpush1.bf16.msra.mxu0 %v2723
          %3706 = vmatprep.subr.bf16.mxu0 %v2728
          %3707 = vmatpush1.bf16.msra.mxu0 %v2727
          %3708 = vmatprep.subr.bf16.mxu0 %v2732
          %3709 = vmatpush1.bf16.msra.mxu0 %v2731
          %3710 = vmatprep.subr.bf16.mxu0 %v2736
          %3711 = vmatpush1.bf16.msra.mxu0 %v2735
          %3712 = vmatprep.subr.bf16.mxu0 %v2740
          %3713 = vmatpush1.bf16.msra.mxu0 %v2739
          %3714 = vmatprep.subr.bf16.mxu0 %v2744
          %3715 = vmatpush1.bf16.msra.mxu0 %v2743
          %3716 = vmatprep.mubr.bf16.mxu0 %v536
          %3717 = vmatmul.mubr.bf16.gmra.mrb[0].mxu0 %v535
          %v3718 = vpop.f32.mrb[0].mxu0
          %v3719 = vadd.f32 %v3678, %v3718
          %v3720 = vpop.f32.mrb[0].mxu0
          %v3721 = vadd.f32 %v3680, %v3720
          %v3722 = vpop.f32.mrb[0].mxu0
          %v3723 = vpop.f32.mrb[0].mxu0
          %3724 = vdwg.mxu0
          %3725 = vmatprep.subr.bf16.mxu0 %v2748
          %3726 = vmatpush1.bf16.msra.mxu0 %v2747
          %3727 = vmatprep.subr.bf16.mxu0 %v2752
          %3728 = vmatpush1.bf16.msra.mxu0 %v2751
          %3729 = vmatprep.subr.bf16.mxu0 %v2756
          %3730 = vmatpush1.bf16.msra.mxu0 %v2755
          %3731 = vmatprep.subr.bf16.mxu0 %v2760
          %3732 = vmatpush1.bf16.msra.mxu0 %v2759
          %3733 = vmatprep.subr.bf16.mxu0 %v2764
          %3734 = vmatpush1.bf16.msra.mxu0 %v2763
          %3735 = vmatprep.subr.bf16.mxu0 %v2768
          %3736 = vmatpush1.bf16.msra.mxu0 %v2767
          %3737 = vmatprep.subr.bf16.mxu0 %v2772
          %3738 = vmatpush1.bf16.msra.mxu0 %v2771
          %3739 = vmatprep.subr.bf16.mxu0 %v2776
          %3740 = vmatpush1.bf16.msra.mxu0 %v2775
          %3741 = vmatprep.subr.bf16.mxu0 %v2780
          %3742 = vmatpush1.bf16.msra.mxu0 %v2779
          %3743 = vmatprep.subr.bf16.mxu0 %v2784
          %3744 = vmatpush1.bf16.msra.mxu0 %v2783
          %3745 = vmatprep.subr.bf16.mxu0 %v2788
          %3746 = vmatpush1.bf16.msra.mxu0 %v2787
          %3747 = vmatprep.subr.bf16.mxu0 %v2792
          %3748 = vmatpush1.bf16.msra.mxu0 %v2791
          %3749 = vmatprep.subr.bf16.mxu0 %v2796
          %3750 = vmatpush1.bf16.msra.mxu0 %v2795
          %3751 = vmatprep.subr.bf16.mxu0 %v2800
          %3752 = vmatpush1.bf16.msra.mxu0 %v2799
          %3753 = vmatprep.subr.bf16.mxu0 %v2804
          %3754 = vmatpush1.bf16.msra.mxu0 %v2803
          %3755 = vmatprep.subr.bf16.mxu0 %v2808
          %3756 = vmatpush1.bf16.msra.mxu0 %v2807
          %3757 = vmatprep.mubr.bf16.mxu0 %v538
          %3758 = vmatmul.mubr.bf16.gmra.mrb[0].mxu0 %v537
          %v3759 = vpop.f32.mrb[0].mxu0
          %v3760 = vadd.f32 %v3719, %v3759
          %v3761 = vpop.f32.mrb[0].mxu0
          %v3762 = vadd.f32 %v3721, %v3761
          %v3763 = vpop.f32.mrb[0].mxu0
          %v3764 = vpop.f32.mrb[0].mxu0
          %3765 = vdwg.mxu0
          %3766 = vmatprep.subr.bf16.mxu0 %v2812
          %3767 = vmatpush1.bf16.msra.mxu0 %v2811
          %3768 = vmatprep.subr.bf16.mxu0 %v2816
          %3769 = vmatpush1.bf16.msra.mxu0 %v2815
          %3770 = vmatprep.subr.bf16.mxu0 %v2820
          %3771 = vmatpush1.bf16.msra.mxu0 %v2819
          %3772 = vmatprep.subr.bf16.mxu0 %v2824
          %3773 = vmatpush1.bf16.msra.mxu0 %v2823
          %3774 = vmatprep.subr.bf16.mxu0 %v2828
          %3775 = vmatpush1.bf16.msra.mxu0 %v2827
          %3776 = vmatprep.subr.bf16.mxu0 %v2832
          %3777 = vmatpush1.bf16.msra.mxu0 %v2831
          %3778 = vmatprep.subr.bf16.mxu0 %v2836
          %3779 = vmatpush1.bf16.msra.mxu0 %v2835
          %3780 = vmatprep.subr.bf16.mxu0 %v2840
          %3781 = vmatpush1.bf16.msra.mxu0 %v2839
          %3782 = vmatprep.subr.bf16.mxu0 %v2844
          %3783 = vmatpush1.bf16.msra.mxu0 %v2843
          %3784 = vmatprep.subr.bf16.mxu0 %v2848
          %3785 = vmatpush1.bf16.msra.mxu0 %v2847
          %3786 = vmatprep.subr.bf16.mxu0 %v2852
          %3787 = vmatpush1.bf16.msra.mxu0 %v2851
          %3788 = vmatprep.subr.bf16.mxu0 %v2856
          %3789 = vmatpush1.bf16.msra.mxu0 %v2855
          %3790 = vmatprep.subr.bf16.mxu0 %v2860
          %3791 = vmatpush1.bf16.msra.mxu0 %v2859
          %3792 = vmatprep.subr.bf16.mxu0 %v2864
          %3793 = vmatpush1.bf16.msra.mxu0 %v2863
          %3794 = vmatprep.subr.bf16.mxu0 %v2868
          %3795 = vmatpush1.bf16.msra.mxu0 %v2867
          %3796 = vmatprep.subr.bf16.mxu0 %v2872
          %3797 = vmatpush1.bf16.msra.mxu0 %v2871
          %3798 = vmatprep.mubr.bf16.mxu0 %v540
          %3799 = vmatmul.mubr.bf16.gmra.mrb[0].mxu0 %v539
          %v3800 = vpop.f32.mrb[0].mxu0
          %v3801 = vadd.f32 %v3760, %v3800
          %v3802 = vpop.f32.mrb[0].mxu0
          %v3803 = vadd.f32 %v3762, %v3802
          %v3804 = vpop.f32.mrb[0].mxu0
          %v3805 = vpop.f32.mrb[0].mxu0
          %3806 = vdwg.mxu0
          %3807 = vmatprep.subr.bf16.mxu0 %v2876
          %3808 = vmatpush1.bf16.msra.mxu0 %v2875
          %3809 = vmatprep.subr.bf16.mxu0 %v2880
          %3810 = vmatpush1.bf16.msra.mxu0 %v2879
          %3811 = vmatprep.subr.bf16.mxu0 %v2884
          %3812 = vmatpush1.bf16.msra.mxu0 %v2883
          %3813 = vmatprep.subr.bf16.mxu0 %v2888
          %3814 = vmatpush1.bf16.msra.mxu0 %v2887
          %3815 = vmatprep.subr.bf16.mxu0 %v2892
          %3816 = vmatpush1.bf16.msra.mxu0 %v2891
          %3817 = vmatprep.subr.bf16.mxu0 %v2896
          %3818 = vmatpush1.bf16.msra.mxu0 %v2895
          %3819 = vmatprep.subr.bf16.mxu0 %v2900
          %3820 = vmatpush1.bf16.msra.mxu0 %v2899
          %3821 = vmatprep.subr.bf16.mxu0 %v2904
          %3822 = vmatpush1.bf16.msra.mxu0 %v2903
          %3823 = vmatprep.subr.bf16.mxu0 %v2908
          %3824 = vmatpush1.bf16.msra.mxu0 %v2907
          %3825 = vmatprep.subr.bf16.mxu0 %v2912
          %3826 = vmatpush1.bf16.msra.mxu0 %v2911
          %3827 = vmatprep.subr.bf16.mxu0 %v2916
          %3828 = vmatpush1.bf16.msra.mxu0 %v2915
          %3829 = vmatprep.subr.bf16.mxu0 %v2920
          %3830 = vmatpush1.bf16.msra.mxu0 %v2919
          %3831 = vmatprep.subr.bf16.mxu0 %v2924
          %3832 = vmatpush1.bf16.msra.mxu0 %v2923
          %3833 = vmatprep.subr.bf16.mxu0 %v2928
          %3834 = vmatpush1.bf16.msra.mxu0 %v2927
          %3835 = vmatprep.subr.bf16.mxu0 %v2932
          %3836 = vmatpush1.bf16.msra.mxu0 %v2931
          %3837 = vmatprep.subr.bf16.mxu0 %v2936
          %3838 = vmatpush1.bf16.msra.mxu0 %v2935
          %3839 = vmatprep.mubr.bf16.mxu0 %v542
          %3840 = vmatmul.mubr.bf16.gmra.mrb[0].mxu0 %v541
          %v3841 = vpop.f32.mrb[0].mxu0
          %v3842 = vadd.f32 %v3801, %v3841
          %v3843 = vpop.f32.mrb[0].mxu0
          %v3844 = vadd.f32 %v3803, %v3843
          %v3845 = vpop.f32.mrb[0].mxu0
          %v3846 = vpop.f32.mrb[0].mxu0
          %3847 = vdwg.mxu0
          %3848 = vmatprep.subr.bf16.mxu0 %v2940
          %3849 = vmatpush1.bf16.msra.mxu0 %v2939
          %3850 = vmatprep.subr.bf16.mxu0 %v2944
          %3851 = vmatpush1.bf16.msra.mxu0 %v2943
          %3852 = vmatprep.subr.bf16.mxu0 %v2948
          %3853 = vmatpush1.bf16.msra.mxu0 %v2947
          %3854 = vmatprep.subr.bf16.mxu0 %v2952
          %3855 = vmatpush1.bf16.msra.mxu0 %v2951
          %3856 = vmatprep.subr.bf16.mxu0 %v2956
          %3857 = vmatpush1.bf16.msra.mxu0 %v2955
          %3858 = vmatprep.subr.bf16.mxu0 %v2960
          %3859 = vmatpush1.bf16.msra.mxu0 %v2959
          %3860 = vmatprep.subr.bf16.mxu0 %v2964
          %3861 = vmatpush1.bf16.msra.mxu0 %v2963
          %3862 = vmatprep.subr.bf16.mxu0 %v2968
          %3863 = vmatpush1.bf16.msra.mxu0 %v2967
          %3864 = vmatprep.subr.bf16.mxu0 %v2972
          %3865 = vmatpush1.bf16.msra.mxu0 %v2971
          %3866 = vmatprep.subr.bf16.mxu0 %v2976
          %3867 = vmatpush1.bf16.msra.mxu0 %v2975
          %3868 = vmatprep.subr.bf16.mxu0 %v2980
          %3869 = vmatpush1.bf16.msra.mxu0 %v2979
          %3870 = vmatprep.subr.bf16.mxu0 %v2984
          %3871 = vmatpush1.bf16.msra.mxu0 %v2983
          %3872 = vmatprep.subr.bf16.mxu0 %v2988
          %3873 = vmatpush1.bf16.msra.mxu0 %v2987
          %3874 = vmatprep.subr.bf16.mxu0 %v2992
          %3875 = vmatpush1.bf16.msra.mxu0 %v2991
          %3876 = vmatprep.subr.bf16.mxu0 %v2996
          %3877 = vmatpush1.bf16.msra.mxu0 %v2995
          %3878 = vmatprep.subr.bf16.mxu0 %v3000
          %3879 = vmatpush1.bf16.msra.mxu0 %v2999
          %3880 = vmatprep.mubr.bf16.mxu0 %v544
          %3881 = vmatmul.mubr.bf16.gmra.mrb[0].mxu0 %v543
          %v3882 = vpop.f32.mrb[0].mxu0
          %v3883 = vadd.f32 %v3842, %v3882
          %v3884 = vpop.f32.mrb[0].mxu0
          %v3885 = vadd.f32 %v3844, %v3884
          %v3886 = vpop.f32.mrb[0].mxu0
          %v3887 = vpop.f32.mrb[0].mxu0
          %3888 = vdwg.mxu0
          %3889 = vmatprep.subr.bf16.mxu0 %v3004
          %3890 = vmatpush1.bf16.msra.mxu0 %v3003
          %3891 = vmatprep.subr.bf16.mxu0 %v3008
          %3892 = vmatpush1.bf16.msra.mxu0 %v3007
          %3893 = vmatprep.subr.bf16.mxu0 %v3012
          %3894 = vmatpush1.bf16.msra.mxu0 %v3011
          %3895 = vmatprep.subr.bf16.mxu0 %v3016
          %3896 = vmatpush1.bf16.msra.mxu0 %v3015
          %3897 = vmatprep.subr.bf16.mxu0 %v3020
          %3898 = vmatpush1.bf16.msra.mxu0 %v3019
          %3899 = vmatprep.subr.bf16.mxu0 %v3024
          %3900 = vmatpush1.bf16.msra.mxu0 %v3023
          %3901 = vmatprep.subr.bf16.mxu0 %v3028
          %3902 = vmatpush1.bf16.msra.mxu0 %v3027
          %3903 = vmatprep.subr.bf16.mxu0 %v3032
          %3904 = vmatpush1.bf16.msra.mxu0 %v3031
          %3905 = vmatprep.subr.bf16.mxu0 %v3036
          %3906 = vmatpush1.bf16.msra.mxu0 %v3035
          %3907 = vmatprep.subr.bf16.mxu0 %v3040
          %3908 = vmatpush1.bf16.msra.mxu0 %v3039
          %3909 = vmatprep.subr.bf16.mxu0 %v3044
          %3910 = vmatpush1.bf16.msra.mxu0 %v3043
          %3911 = vmatprep.subr.bf16.mxu0 %v3048
          %3912 = vmatpush1.bf16.msra.mxu0 %v3047
          %3913 = vmatprep.subr.bf16.mxu0 %v3052
          %3914 = vmatpush1.bf16.msra.mxu0 %v3051
          %3915 = vmatprep.subr.bf16.mxu0 %v3056
          %3916 = vmatpush1.bf16.msra.mxu0 %v3055
          %3917 = vmatprep.subr.bf16.mxu0 %v3060
          %3918 = vmatpush1.bf16.msra.mxu0 %v3059
          %3919 = vmatprep.subr.bf16.mxu0 %v3064
          %3920 = vmatpush1.bf16.msra.mxu0 %v3063
          %3921 = vmatprep.mubr.bf16.mxu0 %v546
          %3922 = vmatmul.mubr.bf16.gmra.mrb[0].mxu0 %v545
          %v3923 = vpop.f32.mrb[0].mxu0
          %v3924 = vadd.f32 %v3883, %v3923
          %v3925 = vpop.f32.mrb[0].mxu0
          %v3926 = vadd.f32 %v3885, %v3925
          %v3927 = vpop.f32.mrb[0].mxu0
          %v3928 = vpop.f32.mrb[0].mxu0
          %3929 = vdwg.mxu0
          %3930 = vmatprep.subr.bf16.mxu0 %v3068
          %3931 = vmatpush1.bf16.msra.mxu0 %v3067
          %3932 = vmatprep.subr.bf16.mxu0 %v3072
          %3933 = vmatpush1.bf16.msra.mxu0 %v3071
          %3934 = vmatprep.subr.bf16.mxu0 %v3076
          %3935 = vmatpush1.bf16.msra.mxu0 %v3075
          %3936 = vmatprep.subr.bf16.mxu0 %v3080
          %3937 = vmatpush1.bf16.msra.mxu0 %v3079
          %3938 = vmatprep.subr.bf16.mxu0 %v3084
          %3939 = vmatpush1.bf16.msra.mxu0 %v3083
          %3940 = vmatprep.subr.bf16.mxu0 %v3088
          %3941 = vmatpush1.bf16.msra.mxu0 %v3087
          %3942 = vmatprep.subr.bf16.mxu0 %v3092
          %3943 = vmatpush1.bf16.msra.mxu0 %v3091
          %3944 = vmatprep.subr.bf16.mxu0 %v3096
          %3945 = vmatpush1.bf16.msra.mxu0 %v3095
          %3946 = vmatprep.subr.bf16.mxu0 %v3100
          %3947 = vmatpush1.bf16.msra.mxu0 %v3099
          %3948 = vmatprep.subr.bf16.mxu0 %v3104
          %3949 = vmatpush1.bf16.msra.mxu0 %v3103
          %3950 = vmatprep.subr.bf16.mxu0 %v3108
          %3951 = vmatpush1.bf16.msra.mxu0 %v3107
          %3952 = vmatprep.subr.bf16.mxu0 %v3112
          %3953 = vmatpush1.bf16.msra.mxu0 %v3111
          %3954 = vmatprep.subr.bf16.mxu0 %v3116
          %3955 = vmatpush1.bf16.msra.mxu0 %v3115
          %3956 = vmatprep.subr.bf16.mxu0 %v3120
          %3957 = vmatpush1.bf16.msra.mxu0 %v3119
          %3958 = vmatprep.subr.bf16.mxu0 %v3124
          %3959 = vmatpush1.bf16.msra.mxu0 %v3123
          %3960 = vmatprep.subr.bf16.mxu0 %v3128
          %3961 = vmatpush1.bf16.msra.mxu0 %v3127
          %3962 = vmatprep.mubr.bf16.mxu0 %v548
          %3963 = vmatmul.mubr.bf16.gmra.mrb[0].mxu0 %v547
          %v3964 = vpop.f32.mrb[0].mxu0
          %v3965 = vadd.f32 %v3924, %v3964
          %v3966 = vpop.f32.mrb[0].mxu0
          %v3967 = vadd.f32 %v3926, %v3966
          %v3968 = vpop.f32.mrb[0].mxu0
          %v3969 = vpop.f32.mrb[0].mxu0
          %3970 = vdwg.mxu0
          %3971 = vmatprep.subr.bf16.mxu0 %v2622
          %3972 = vmatpush1.bf16.msra.mxu0 %v2621
          %3973 = vmatprep.subr.bf16.mxu0 %v2626
          %3974 = vmatpush1.bf16.msra.mxu0 %v2625
          %3975 = vmatprep.subr.bf16.mxu0 %v2630
          %3976 = vmatpush1.bf16.msra.mxu0 %v2629
          %3977 = vmatprep.subr.bf16.mxu0 %v2634
          %3978 = vmatpush1.bf16.msra.mxu0 %v2633
          %3979 = vmatprep.subr.bf16.mxu0 %v2638
          %3980 = vmatpush1.bf16.msra.mxu0 %v2637
          %3981 = vmatprep.subr.bf16.mxu0 %v2642
          %3982 = vmatpush1.bf16.msra.mxu0 %v2641
          %3983 = vmatprep.subr.bf16.mxu0 %v2646
          %3984 = vmatpush1.bf16.msra.mxu0 %v2645
          %3985 = vmatprep.subr.bf16.mxu0 %v2650
          %3986 = vmatpush1.bf16.msra.mxu0 %v2649
          %3987 = vmatprep.subr.bf16.mxu0 %v2654
          %3988 = vmatpush1.bf16.msra.mxu0 %v2653
          %3989 = vmatprep.subr.bf16.mxu0 %v2658
          %3990 = vmatpush1.bf16.msra.mxu0 %v2657
          %3991 = vmatprep.subr.bf16.mxu0 %v2662
          %3992 = vmatpush1.bf16.msra.mxu0 %v2661
          %3993 = vmatprep.subr.bf16.mxu0 %v2666
          %3994 = vmatpush1.bf16.msra.mxu0 %v2665
          %3995 = vmatprep.subr.bf16.mxu0 %v2670
          %3996 = vmatpush1.bf16.msra.mxu0 %v2669
          %3997 = vmatprep.subr.bf16.mxu0 %v2674
          %3998 = vmatpush1.bf16.msra.mxu0 %v2673
          %3999 = vmatprep.subr.bf16.mxu0 %v2678
          %4000 = vmatpush1.bf16.msra.mxu0 %v2677
          %4001 = vmatprep.subr.bf16.mxu0 %v2682
          %4002 = vmatpush1.bf16.msra.mxu0 %v2681
          %4003 = vmatprep.mubr.bf16.mxu0 %v534
          %4004 = vmatmul.mubr.bf16.gmra.mrb[0].mxu0 %v533
          %v4005 = vpop.f32.mrb[0].mxu0
          %v4006 = vadd.f32 %v1074, %v4005
          %v4007 = vpop.f32.mrb[0].mxu0
          %v4008 = vadd.f32 %v1078, %v4007
          %v4009 = vpop.f32.mrb[0].mxu0
          %v4010 = vpop.f32.mrb[0].mxu0
          %4011 = vdwg.mxu0
          %4012 = vmatprep.subr.bf16.mxu0 %v2686
          %4013 = vmatpush1.bf16.msra.mxu0 %v2685
          %4014 = vmatprep.subr.bf16.mxu0 %v2690
          %4015 = vmatpush1.bf16.msra.mxu0 %v2689
          %4016 = vmatprep.subr.bf16.mxu0 %v2694
          %4017 = vmatpush1.bf16.msra.mxu0 %v2693
          %4018 = vmatprep.subr.bf16.mxu0 %v2698
          %4019 = vmatpush1.bf16.msra.mxu0 %v2697
          %4020 = vmatprep.subr.bf16.mxu0 %v2702
          %4021 = vmatpush1.bf16.msra.mxu0 %v2701
          %4022 = vmatprep.subr.bf16.mxu0 %v2706
          %4023 = vmatpush1.bf16.msra.mxu0 %v2705
          %4024 = vmatprep.subr.bf16.mxu0 %v2710
          %4025 = vmatpush1.bf16.msra.mxu0 %v2709
          %4026 = vmatprep.subr.bf16.mxu0 %v2714
          %4027 = vmatpush1.bf16.msra.mxu0 %v2713
          %4028 = vmatprep.subr.bf16.mxu0 %v2718
          %4029 = vmatpush1.bf16.msra.mxu0 %v2717
          %4030 = vmatprep.subr.bf16.mxu0 %v2722
          %4031 = vmatpush1.bf16.msra.mxu0 %v2721
          %4032 = vmatprep.subr.bf16.mxu0 %v2726
          %4033 = vmatpush1.bf16.msra.mxu0 %v2725
          %4034 = vmatprep.subr.bf16.mxu0 %v2730
          %4035 = vmatpush1.bf16.msra.mxu0 %v2729
          %4036 = vmatprep.subr.bf16.mxu0 %v2734
          %4037 = vmatpush1.bf16.msra.mxu0 %v2733
          %4038 = vmatprep.subr.bf16.mxu0 %v2738
          %4039 = vmatpush1.bf16.msra.mxu0 %v2737
          %4040 = vmatprep.subr.bf16.mxu0 %v2742
          %4041 = vmatpush1.bf16.msra.mxu0 %v2741
          %4042 = vmatprep.subr.bf16.mxu0 %v2746
          %4043 = vmatpush1.bf16.msra.mxu0 %v2745
          %4044 = vmatprep.mubr.bf16.mxu0 %v536
          %4045 = vmatmul.mubr.bf16.gmra.mrb[0].mxu0 %v535
          %v4046 = vpop.f32.mrb[0].mxu0
          %v4047 = vadd.f32 %v4006, %v4046
          %v4048 = vpop.f32.mrb[0].mxu0
          %v4049 = vadd.f32 %v4008, %v4048
          %v4050 = vpop.f32.mrb[0].mxu0
          %v4051 = vpop.f32.mrb[0].mxu0
          %4052 = vdwg.mxu0
          %4053 = vmatprep.subr.bf16.mxu0 %v2750
          %4054 = vmatpush1.bf16.msra.mxu0 %v2749
          %4055 = vmatprep.subr.bf16.mxu0 %v2754
          %4056 = vmatpush1.bf16.msra.mxu0 %v2753
          %4057 = vmatprep.subr.bf16.mxu0 %v2758
          %4058 = vmatpush1.bf16.msra.mxu0 %v2757
          %4059 = vmatprep.subr.bf16.mxu0 %v2762
          %4060 = vmatpush1.bf16.msra.mxu0 %v2761
          %4061 = vmatprep.subr.bf16.mxu0 %v2766
          %4062 = vmatpush1.bf16.msra.mxu0 %v2765
          %4063 = vmatprep.subr.bf16.mxu0 %v2770
          %4064 = vmatpush1.bf16.msra.mxu0 %v2769
          %4065 = vmatprep.subr.bf16.mxu0 %v2774
          %4066 = vmatpush1.bf16.msra.mxu0 %v2773
          %4067 = vmatprep.subr.bf16.mxu0 %v2778
          %4068 = vmatpush1.bf16.msra.mxu0 %v2777
          %4069 = vmatprep.subr.bf16.mxu0 %v2782
          %4070 = vmatpush1.bf16.msra.mxu0 %v2781
          %4071 = vmatprep.subr.bf16.mxu0 %v2786
          %4072 = vmatpush1.bf16.msra.mxu0 %v2785
          %4073 = vmatprep.subr.bf16.mxu0 %v2790
          %4074 = vmatpush1.bf16.msra.mxu0 %v2789
          %4075 = vmatprep.subr.bf16.mxu0 %v2794
          %4076 = vmatpush1.bf16.msra.mxu0 %v2793
          %4077 = vmatprep.subr.bf16.mxu0 %v2798
          %4078 = vmatpush1.bf16.msra.mxu0 %v2797
          %4079 = vmatprep.subr.bf16.mxu0 %v2802
          %4080 = vmatpush1.bf16.msra.mxu0 %v2801
          %4081 = vmatprep.subr.bf16.mxu0 %v2806
          %4082 = vmatpush1.bf16.msra.mxu0 %v2805
          %4083 = vmatprep.subr.bf16.mxu0 %v2810
          %4084 = vmatpush1.bf16.msra.mxu0 %v2809
          %4085 = vmatprep.mubr.bf16.mxu0 %v538
          %4086 = vmatmul.mubr.bf16.gmra.mrb[0].mxu0 %v537
          %v4087 = vpop.f32.mrb[0].mxu0
          %v4088 = vadd.f32 %v4047, %v4087
          %v4089 = vpop.f32.mrb[0].mxu0
          %v4090 = vadd.f32 %v4049, %v4089
          %v4091 = vpop.f32.mrb[0].mxu0
          %v4092 = vpop.f32.mrb[0].mxu0
          %4093 = vdwg.mxu0
          %4094 = vmatprep.subr.bf16.mxu0 %v2814
          %4095 = vmatpush1.bf16.msra.mxu0 %v2813
          %4096 = vmatprep.subr.bf16.mxu0 %v2818
          %4097 = vmatpush1.bf16.msra.mxu0 %v2817
          %4098 = vmatprep.subr.bf16.mxu0 %v2822
          %4099 = vmatpush1.bf16.msra.mxu0 %v2821
          %4100 = vmatprep.subr.bf16.mxu0 %v2826
          %4101 = vmatpush1.bf16.msra.mxu0 %v2825
          %4102 = vmatprep.subr.bf16.mxu0 %v2830
          %4103 = vmatpush1.bf16.msra.mxu0 %v2829
          %4104 = vmatprep.subr.bf16.mxu0 %v2834
          %4105 = vmatpush1.bf16.msra.mxu0 %v2833
          %4106 = vmatprep.subr.bf16.mxu0 %v2838
          %4107 = vmatpush1.bf16.msra.mxu0 %v2837
          %4108 = vmatprep.subr.bf16.mxu0 %v2842
          %4109 = vmatpush1.bf16.msra.mxu0 %v2841
          %4110 = vmatprep.subr.bf16.mxu0 %v2846
          %4111 = vmatpush1.bf16.msra.mxu0 %v2845
          %4112 = vmatprep.subr.bf16.mxu0 %v2850
          %4113 = vmatpush1.bf16.msra.mxu0 %v2849
          %4114 = vmatprep.subr.bf16.mxu0 %v2854
          %4115 = vmatpush1.bf16.msra.mxu0 %v2853
          %4116 = vmatprep.subr.bf16.mxu0 %v2858
          %4117 = vmatpush1.bf16.msra.mxu0 %v2857
          %4118 = vmatprep.subr.bf16.mxu0 %v2862
          %4119 = vmatpush1.bf16.msra.mxu0 %v2861
          %4120 = vmatprep.subr.bf16.mxu0 %v2866
          %4121 = vmatpush1.bf16.msra.mxu0 %v2865
          %4122 = vmatprep.subr.bf16.mxu0 %v2870
          %4123 = vmatpush1.bf16.msra.mxu0 %v2869
          %4124 = vmatprep.subr.bf16.mxu0 %v2874
          %4125 = vmatpush1.bf16.msra.mxu0 %v2873
          %4126 = vmatprep.mubr.bf16.mxu0 %v540
          %4127 = vmatmul.mubr.bf16.gmra.mrb[0].mxu0 %v539
          %v4128 = vpop.f32.mrb[0].mxu0
          %v4129 = vadd.f32 %v4088, %v4128
          %v4130 = vpop.f32.mrb[0].mxu0
          %v4131 = vadd.f32 %v4090, %v4130
          %v4132 = vpop.f32.mrb[0].mxu0
          %v4133 = vpop.f32.mrb[0].mxu0
          %4134 = vdwg.mxu0
          %4135 = vmatprep.subr.bf16.mxu0 %v2878
          %4136 = vmatpush1.bf16.msra.mxu0 %v2877
          %4137 = vmatprep.subr.bf16.mxu0 %v2882
          %4138 = vmatpush1.bf16.msra.mxu0 %v2881
          %4139 = vmatprep.subr.bf16.mxu0 %v2886
          %4140 = vmatpush1.bf16.msra.mxu0 %v2885
          %4141 = vmatprep.subr.bf16.mxu0 %v2890
          %4142 = vmatpush1.bf16.msra.mxu0 %v2889
          %4143 = vmatprep.subr.bf16.mxu0 %v2894
          %4144 = vmatpush1.bf16.msra.mxu0 %v2893
          %4145 = vmatprep.subr.bf16.mxu0 %v2898
          %4146 = vmatpush1.bf16.msra.mxu0 %v2897
          %4147 = vmatprep.subr.bf16.mxu0 %v2902
          %4148 = vmatpush1.bf16.msra.mxu0 %v2901
          %4149 = vmatprep.subr.bf16.mxu0 %v2906
          %4150 = vmatpush1.bf16.msra.mxu0 %v2905
          %4151 = vmatprep.subr.bf16.mxu0 %v2910
          %4152 = vmatpush1.bf16.msra.mxu0 %v2909
          %4153 = vmatprep.subr.bf16.mxu0 %v2914
          %4154 = vmatpush1.bf16.msra.mxu0 %v2913
          %4155 = vmatprep.subr.bf16.mxu0 %v2918
          %4156 = vmatpush1.bf16.msra.mxu0 %v2917
          %4157 = vmatprep.subr.bf16.mxu0 %v2922
          %4158 = vmatpush1.bf16.msra.mxu0 %v2921
          %4159 = vmatprep.subr.bf16.mxu0 %v2926
          %4160 = vmatpush1.bf16.msra.mxu0 %v2925
          %4161 = vmatprep.subr.bf16.mxu0 %v2930
          %4162 = vmatpush1.bf16.msra.mxu0 %v2929
          %4163 = vmatprep.subr.bf16.mxu0 %v2934
          %4164 = vmatpush1.bf16.msra.mxu0 %v2933
          %4165 = vmatprep.subr.bf16.mxu0 %v2938
          %4166 = vmatpush1.bf16.msra.mxu0 %v2937
          %4167 = vmatprep.mubr.bf16.mxu0 %v542
          %4168 = vmatmul.mubr.bf16.gmra.mrb[0].mxu0 %v541
          %v4169 = vpop.f32.mrb[0].mxu0
          %v4170 = vadd.f32 %v4129, %v4169
          %v4171 = vpop.f32.mrb[0].mxu0
          %v4172 = vadd.f32 %v4131, %v4171
          %v4173 = vpop.f32.mrb[0].mxu0
          %v4174 = vpop.f32.mrb[0].mxu0
          %4175 = vdwg.mxu0
          %4176 = vmatprep.subr.bf16.mxu0 %v2942
          %4177 = vmatpush1.bf16.msra.mxu0 %v2941
          %4178 = vmatprep.subr.bf16.mxu0 %v2946
          %4179 = vmatpush1.bf16.msra.mxu0 %v2945
          %4180 = vmatprep.subr.bf16.mxu0 %v2950
          %4181 = vmatpush1.bf16.msra.mxu0 %v2949
          %4182 = vmatprep.subr.bf16.mxu0 %v2954
          %4183 = vmatpush1.bf16.msra.mxu0 %v2953
          %4184 = vmatprep.subr.bf16.mxu0 %v2958
          %4185 = vmatpush1.bf16.msra.mxu0 %v2957
          %4186 = vmatprep.subr.bf16.mxu0 %v2962
          %4187 = vmatpush1.bf16.msra.mxu0 %v2961
          %4188 = vmatprep.subr.bf16.mxu0 %v2966
          %4189 = vmatpush1.bf16.msra.mxu0 %v2965
          %4190 = vmatprep.subr.bf16.mxu0 %v2970
          %4191 = vmatpush1.bf16.msra.mxu0 %v2969
          %4192 = vmatprep.subr.bf16.mxu0 %v2974
          %4193 = vmatpush1.bf16.msra.mxu0 %v2973
          %4194 = vmatprep.subr.bf16.mxu0 %v2978
          %4195 = vmatpush1.bf16.msra.mxu0 %v2977
          %4196 = vmatprep.subr.bf16.mxu0 %v2982
          %4197 = vmatpush1.bf16.msra.mxu0 %v2981
          %4198 = vmatprep.subr.bf16.mxu0 %v2986
          %4199 = vmatpush1.bf16.msra.mxu0 %v2985
          %4200 = vmatprep.subr.bf16.mxu0 %v2990
          %4201 = vmatpush1.bf16.msra.mxu0 %v2989
          %4202 = vmatprep.subr.bf16.mxu0 %v2994
          %4203 = vmatpush1.bf16.msra.mxu0 %v2993
          %4204 = vmatprep.subr.bf16.mxu0 %v2998
          %4205 = vmatpush1.bf16.msra.mxu0 %v2997
          %4206 = vmatprep.subr.bf16.mxu0 %v3002
          %4207 = vmatpush1.bf16.msra.mxu0 %v3001
          %4208 = vmatprep.mubr.bf16.mxu0 %v544
          %4209 = vmatmul.mubr.bf16.gmra.mrb[0].mxu0 %v543
          %v4210 = vpop.f32.mrb[0].mxu0
          %v4211 = vadd.f32 %v4170, %v4210
          %v4212 = vpop.f32.mrb[0].mxu0
          %v4213 = vadd.f32 %v4172, %v4212
          %v4214 = vpop.f32.mrb[0].mxu0
          %v4215 = vpop.f32.mrb[0].mxu0
          %4216 = vdwg.mxu0
          %4217 = vmatprep.subr.bf16.mxu0 %v3006
          %4218 = vmatpush1.bf16.msra.mxu0 %v3005
          %4219 = vmatprep.subr.bf16.mxu0 %v3010
          %4220 = vmatpush1.bf16.msra.mxu0 %v3009
          %4221 = vmatprep.subr.bf16.mxu0 %v3014
          %4222 = vmatpush1.bf16.msra.mxu0 %v3013
          %4223 = vmatprep.subr.bf16.mxu0 %v3018
          %4224 = vmatpush1.bf16.msra.mxu0 %v3017
          %4225 = vmatprep.subr.bf16.mxu0 %v3022
          %4226 = vmatpush1.bf16.msra.mxu0 %v3021
          %4227 = vmatprep.subr.bf16.mxu0 %v3026
          %4228 = vmatpush1.bf16.msra.mxu0 %v3025
          %4229 = vmatprep.subr.bf16.mxu0 %v3030
          %4230 = vmatpush1.bf16.msra.mxu0 %v3029
          %4231 = vmatprep.subr.bf16.mxu0 %v3034
          %4232 = vmatpush1.bf16.msra.mxu0 %v3033
          %4233 = vmatprep.subr.bf16.mxu0 %v3038
          %4234 = vmatpush1.bf16.msra.mxu0 %v3037
          %4235 = vmatprep.subr.bf16.mxu0 %v3042
          %4236 = vmatpush1.bf16.msra.mxu0 %v3041
          %4237 = vmatprep.subr.bf16.mxu0 %v3046
          %4238 = vmatpush1.bf16.msra.mxu0 %v3045
          %4239 = vmatprep.subr.bf16.mxu0 %v3050
          %4240 = vmatpush1.bf16.msra.mxu0 %v3049
          %4241 = vmatprep.subr.bf16.mxu0 %v3054
          %4242 = vmatpush1.bf16.msra.mxu0 %v3053
          %4243 = vmatprep.subr.bf16.mxu0 %v3058
          %4244 = vmatpush1.bf16.msra.mxu0 %v3057
          %4245 = vmatprep.subr.bf16.mxu0 %v3062
          %4246 = vmatpush1.bf16.msra.mxu0 %v3061
          %4247 = vmatprep.subr.bf16.mxu0 %v3066
          %4248 = vmatpush1.bf16.msra.mxu0 %v3065
          %4249 = vmatprep.mubr.bf16.mxu0 %v546
          %4250 = vmatmul.mubr.bf16.gmra.mrb[0].mxu0 %v545
          %v4251 = vpop.f32.mrb[0].mxu0
          %v4252 = vadd.f32 %v4211, %v4251
          %v4253 = vpop.f32.mrb[0].mxu0
          %v4254 = vadd.f32 %v4213, %v4253
          %v4255 = vpop.f32.mrb[0].mxu0
          %v4256 = vpop.f32.mrb[0].mxu0
          %4257 = vdwg.mxu0
          %4258 = vmatprep.subr.bf16.mxu0 %v3070
          %4259 = vmatpush1.bf16.msra.mxu0 %v3069
          %4260 = vmatprep.subr.bf16.mxu0 %v3074
          %4261 = vmatpush1.bf16.msra.mxu0 %v3073
          %4262 = vmatprep.subr.bf16.mxu0 %v3078
          %4263 = vmatpush1.bf16.msra.mxu0 %v3077
          %4264 = vmatprep.subr.bf16.mxu0 %v3082
          %4265 = vmatpush1.bf16.msra.mxu0 %v3081
          %4266 = vmatprep.subr.bf16.mxu0 %v3086
          %4267 = vmatpush1.bf16.msra.mxu0 %v3085
          %4268 = vmatprep.subr.bf16.mxu0 %v3090
          %4269 = vmatpush1.bf16.msra.mxu0 %v3089
          %4270 = vmatprep.subr.bf16.mxu0 %v3094
          %4271 = vmatpush1.bf16.msra.mxu0 %v3093
          %4272 = vmatprep.subr.bf16.mxu0 %v3098
          %4273 = vmatpush1.bf16.msra.mxu0 %v3097
          %4274 = vmatprep.subr.bf16.mxu0 %v3102
          %4275 = vmatpush1.bf16.msra.mxu0 %v3101
          %4276 = vmatprep.subr.bf16.mxu0 %v3106
          %4277 = vmatpush1.bf16.msra.mxu0 %v3105
          %4278 = vmatprep.subr.bf16.mxu0 %v3110
          %4279 = vmatpush1.bf16.msra.mxu0 %v3109
          %4280 = vmatprep.subr.bf16.mxu0 %v3114
          %4281 = vmatpush1.bf16.msra.mxu0 %v3113
          %4282 = vmatprep.subr.bf16.mxu0 %v3118
          %4283 = vmatpush1.bf16.msra.mxu0 %v3117
          %4284 = vmatprep.subr.bf16.mxu0 %v3122
          %4285 = vmatpush1.bf16.msra.mxu0 %v3121
          %4286 = vmatprep.subr.bf16.mxu0 %v3126
          %4287 = vmatpush1.bf16.msra.mxu0 %v3125
          %4288 = vmatprep.subr.bf16.mxu0 %v3130
          %4289 = vmatpush1.bf16.msra.mxu0 %v3129
          %4290 = vmatprep.mubr.bf16.mxu0 %v548
          %4291 = vmatmul.mubr.bf16.gmra.mrb[0].mxu0 %v547
          %v4292 = vpop.f32.mrb[0].mxu0
          %v4293 = vadd.f32 %v4252, %v4292
          %v4294 = vpop.f32.mrb[0].mxu0
          %v4295 = vadd.f32 %v4254, %v4294
          %v4296 = vpop.f32.mrb[0].mxu0
          %v4297 = vpop.f32.mrb[0].mxu0
          %4298 = vdwg.mxu0
          %v4299 = vmax.f32 %v3965, 0.0
          %v4300 = vmax.f32 %v3967, 0.0
          %v4301 = vmax.f32 %v4293, 0.0
          %v4302 = vmax.f32 %v4295, 0.0
          %v4303 = vpack.c.bf16 %v4299, %v4299
          %v4304 = vpack.c.bf16 %v4300, %v4300
          %v4305 = vpack.c.bf16 %v4301, %v4301
          %v4306 = vpack.c.bf16 %v4302, %v4302
          %v4307 = vld [vmem:[#allocation7] sm:$0xff]
          %v4308 = vld [vmem:[#allocation7 + $0x8] sm:$0xff]
          %v4309 = vld [vmem:[#allocation7 + $0x10] sm:$0xff]
          %v4310 = vld [vmem:[#allocation7 + $0x18] sm:$0xff]
          %v4311 = vld [vmem:[#allocation7 + $0x20] sm:$0xff]
          %v4312 = vld [vmem:[#allocation7 + $0x28] sm:$0xff]
          %v4313 = vld [vmem:[#allocation7 + $0x30] sm:$0xff]
          %v4314 = vld [vmem:[#allocation7 + $0x38] sm:$0xff]
          %v4315 = vld [vmem:[#allocation7 + $0x40] sm:$0xff]
          %v4316 = vld [vmem:[#allocation7 + $0x48] sm:$0xff]
          %v4317 = vld [vmem:[#allocation7 + $0x50] sm:$0xff]
          %v4318 = vld [vmem:[#allocation7 + $0x58] sm:$0xff]
          %v4319 = vld [vmem:[#allocation7 + $0x60] sm:$0xff]
          %v4320 = vld [vmem:[#allocation7 + $0x68] sm:$0xff]
          %v4321 = vld [vmem:[#allocation7 + $0x70] sm:$0xff]
          %v4322 = vld [vmem:[#allocation7 + $0x78] sm:$0xff]
          %v4323 = vld [vmem:[#allocation7 + $0x80] sm:$0xff]
          %v4324 = vld [vmem:[#allocation7 + $0x88] sm:$0xff]
          %v4325 = vld [vmem:[#allocation7 + $0x90] sm:$0xff]
          %v4326 = vld [vmem:[#allocation7 + $0x98] sm:$0xff]
          %v4327 = vld [vmem:[#allocation7 + $0xa0] sm:$0xff]
          %v4328 = vld [vmem:[#allocation7 + $0xa8] sm:$0xff]
          %v4329 = vld [vmem:[#allocation7 + $0xb0] sm:$0xff]
          %v4330 = vld [vmem:[#allocation7 + $0xb8] sm:$0xff]
          %v4331 = vld [vmem:[#allocation7 + $0xc0] sm:$0xff]
          %v4332 = vld [vmem:[#allocation7 + $0xc8] sm:$0xff]
          %v4333 = vld [vmem:[#allocation7 + $0xd0] sm:$0xff]
          %v4334 = vld [vmem:[#allocation7 + $0xd8] sm:$0xff]
          %v4335 = vld [vmem:[#allocation7 + $0xe0] sm:$0xff]
          %v4336 = vld [vmem:[#allocation7 + $0xe8] sm:$0xff]
          %v4337 = vld [vmem:[#allocation7 + $0xf0] sm:$0xff]
          %v4338 = vld [vmem:[#allocation7 + $0xf8] sm:$0xff]
          %v4339 = vld [vmem:[#allocation7 + $0x100] sm:$0xff]
          %v4340 = vld [vmem:[#allocation7 + $0x108] sm:$0xff]
          %v4341 = vld [vmem:[#allocation7 + $0x110] sm:$0xff]
          %v4342 = vld [vmem:[#allocation7 + $0x118] sm:$0xff]
          %v4343 = vld [vmem:[#allocation7 + $0x120] sm:$0xff]
          %v4344 = vld [vmem:[#allocation7 + $0x128] sm:$0xff]
          %v4345 = vld [vmem:[#allocation7 + $0x130] sm:$0xff]
          %v4346 = vld [vmem:[#allocation7 + $0x138] sm:$0xff]
          %v4347 = vld [vmem:[#allocation7 + $0x140] sm:$0xff]
          %v4348 = vld [vmem:[#allocation7 + $0x148] sm:$0xff]
          %v4349 = vld [vmem:[#allocation7 + $0x150] sm:$0xff]
          %v4350 = vld [vmem:[#allocation7 + $0x158] sm:$0xff]
          %v4351 = vld [vmem:[#allocation7 + $0x160] sm:$0xff]
          %v4352 = vld [vmem:[#allocation7 + $0x168] sm:$0xff]
          %v4353 = vld [vmem:[#allocation7 + $0x170] sm:$0xff]
          %v4354 = vld [vmem:[#allocation7 + $0x178] sm:$0xff]
          %v4355 = vld [vmem:[#allocation7 + $0x180] sm:$0xff]
          %v4356 = vld [vmem:[#allocation7 + $0x188] sm:$0xff]
          %v4357 = vld [vmem:[#allocation7 + $0x190] sm:$0xff]
          %v4358 = vld [vmem:[#allocation7 + $0x198] sm:$0xff]
          %v4359 = vld [vmem:[#allocation7 + $0x1a0] sm:$0xff]
          %v4360 = vld [vmem:[#allocation7 + $0x1a8] sm:$0xff]
          %v4361 = vld [vmem:[#allocation7 + $0x1b0] sm:$0xff]
          %v4362 = vld [vmem:[#allocation7 + $0x1b8] sm:$0xff]
          %v4363 = vld [vmem:[#allocation7 + $0x1c0] sm:$0xff]
          %v4364 = vld [vmem:[#allocation7 + $0x1c8] sm:$0xff]
          %v4365 = vld [vmem:[#allocation7 + $0x1d0] sm:$0xff]
          %v4366 = vld [vmem:[#allocation7 + $0x1d8] sm:$0xff]
          %v4367 = vld [vmem:[#allocation7 + $0x1e0] sm:$0xff]
          %v4368 = vld [vmem:[#allocation7 + $0x1e8] sm:$0xff]
          %v4369 = vld [vmem:[#allocation7 + $0x1f0] sm:$0xff]
          %v4370 = vld [vmem:[#allocation7 + $0x1f8] sm:$0xff]
          %v4371 = vld [vmem:[#allocation7 + $0x200] sm:$0xff]
          %v4372 = vld [vmem:[#allocation7 + $0x208] sm:$0xff]
          %v4373 = vld [vmem:[#allocation7 + $0x210] sm:$0xff]
          %v4374 = vld [vmem:[#allocation7 + $0x218] sm:$0xff]
          %v4375 = vld [vmem:[#allocation7 + $0x220] sm:$0xff]
          %v4376 = vld [vmem:[#allocation7 + $0x228] sm:$0xff]
          %v4377 = vld [vmem:[#allocation7 + $0x230] sm:$0xff]
          %v4378 = vld [vmem:[#allocation7 + $0x238] sm:$0xff]
          %v4379 = vld [vmem:[#allocation7 + $0x240] sm:$0xff]
          %v4380 = vld [vmem:[#allocation7 + $0x248] sm:$0xff]
          %v4381 = vld [vmem:[#allocation7 + $0x250] sm:$0xff]
          %v4382 = vld [vmem:[#allocation7 + $0x258] sm:$0xff]
          %v4383 = vld [vmem:[#allocation7 + $0x260] sm:$0xff]
          %v4384 = vld [vmem:[#allocation7 + $0x268] sm:$0xff]
          %v4385 = vld [vmem:[#allocation7 + $0x270] sm:$0xff]
          %v4386 = vld [vmem:[#allocation7 + $0x278] sm:$0xff]
          %v4387 = vld [vmem:[#allocation7 + $0x280] sm:$0xff]
          %v4388 = vld [vmem:[#allocation7 + $0x288] sm:$0xff]
          %v4389 = vld [vmem:[#allocation7 + $0x290] sm:$0xff]
          %v4390 = vld [vmem:[#allocation7 + $0x298] sm:$0xff]
          %v4391 = vld [vmem:[#allocation7 + $0x2a0] sm:$0xff]
          %v4392 = vld [vmem:[#allocation7 + $0x2a8] sm:$0xff]
          %v4393 = vld [vmem:[#allocation7 + $0x2b0] sm:$0xff]
          %v4394 = vld [vmem:[#allocation7 + $0x2b8] sm:$0xff]
          %v4395 = vld [vmem:[#allocation7 + $0x2c0] sm:$0xff]
          %v4396 = vld [vmem:[#allocation7 + $0x2c8] sm:$0xff]
          %v4397 = vld [vmem:[#allocation7 + $0x2d0] sm:$0xff]
          %v4398 = vld [vmem:[#allocation7 + $0x2d8] sm:$0xff]
          %v4399 = vld [vmem:[#allocation7 + $0x2e0] sm:$0xff]
          %v4400 = vld [vmem:[#allocation7 + $0x2e8] sm:$0xff]
          %v4401 = vld [vmem:[#allocation7 + $0x2f0] sm:$0xff]
          %v4402 = vld [vmem:[#allocation7 + $0x2f8] sm:$0xff]
          %v4403 = vld [vmem:[#allocation7 + $0x300] sm:$0xff]
          %v4404 = vld [vmem:[#allocation7 + $0x308] sm:$0xff]
          %v4405 = vld [vmem:[#allocation7 + $0x310] sm:$0xff]
          %v4406 = vld [vmem:[#allocation7 + $0x318] sm:$0xff]
          %v4407 = vld [vmem:[#allocation7 + $0x320] sm:$0xff]
          %v4408 = vld [vmem:[#allocation7 + $0x328] sm:$0xff]
          %v4409 = vld [vmem:[#allocation7 + $0x330] sm:$0xff]
          %v4410 = vld [vmem:[#allocation7 + $0x338] sm:$0xff]
          %v4411 = vld [vmem:[#allocation7 + $0x340] sm:$0xff]
          %v4412 = vld [vmem:[#allocation7 + $0x348] sm:$0xff]
          %v4413 = vld [vmem:[#allocation7 + $0x350] sm:$0xff]
          %v4414 = vld [vmem:[#allocation7 + $0x358] sm:$0xff]
          %v4415 = vld [vmem:[#allocation7 + $0x360] sm:$0xff]
          %v4416 = vld [vmem:[#allocation7 + $0x368] sm:$0xff]
          %v4417 = vld [vmem:[#allocation7 + $0x370] sm:$0xff]
          %v4418 = vld [vmem:[#allocation7 + $0x378] sm:$0xff]
          %v4419 = vld [vmem:[#allocation7 + $0x380] sm:$0xff]
          %v4420 = vld [vmem:[#allocation7 + $0x388] sm:$0xff]
          %v4421 = vld [vmem:[#allocation7 + $0x390] sm:$0xff]
          %v4422 = vld [vmem:[#allocation7 + $0x398] sm:$0xff]
          %v4423 = vld [vmem:[#allocation7 + $0x3a0] sm:$0xff]
          %v4424 = vld [vmem:[#allocation7 + $0x3a8] sm:$0xff]
          %v4425 = vld [vmem:[#allocation7 + $0x3b0] sm:$0xff]
          %v4426 = vld [vmem:[#allocation7 + $0x3b8] sm:$0xff]
          %v4427 = vld [vmem:[#allocation7 + $0x3c0] sm:$0xff]
          %v4428 = vld [vmem:[#allocation7 + $0x3c8] sm:$0xff]
          %v4429 = vld [vmem:[#allocation7 + $0x3d0] sm:$0xff]
          %v4430 = vld [vmem:[#allocation7 + $0x3d8] sm:$0xff]
          %v4431 = vld [vmem:[#allocation7 + $0x3e0] sm:$0xff]
          %v4432 = vld [vmem:[#allocation7 + $0x3e8] sm:$0xff]
          %v4433 = vld [vmem:[#allocation7 + $0x3f0] sm:$0xff]
          %v4434 = vld [vmem:[#allocation7 + $0x3f8] sm:$0xff]
          %v4435 = vld [vmem:[#allocation8] sm:$0xf]
          %v4437 = vlaneseq
          %v4438 = vshrl.u32 %v4437, 7
          %v4439 = vsub.s32 0, %v4438
          %v4440 = vrot.slane %v4435, %v4439
          %v4441 = vlaneseq
          %v4442 = vshrl.u32 %v4441, 7
          %v4443 = vsub.s32 1, %v4442
          %v4444 = vrot.slane %v4435, %v4443
          %v4445 = vlaneseq
          %v4446 = vshrl.u32 %v4445, 7
          %v4447 = vsub.s32 2, %v4446
          %v4448 = vrot.slane %v4435, %v4447
          %v4449 = vlaneseq
          %v4450 = vshrl.u32 %v4449, 7
          %v4451 = vsub.s32 3, %v4450
          %v4452 = vrot.slane %v4435, %v4451
          %v4585 = vunpack.c.l.b16 %v4307
          %v4586 = vunpack.c.h.b16 %v4307
          %v4587 = vunpack.c.l.b16 %v4308
          %v4588 = vunpack.c.h.b16 %v4308
          %v4589 = vunpack.c.l.b16 %v4309
          %v4590 = vunpack.c.h.b16 %v4309
          %v4591 = vunpack.c.l.b16 %v4310
          %v4592 = vunpack.c.h.b16 %v4310
          %v4593 = vunpack.c.l.b16 %v4311
          %v4594 = vunpack.c.h.b16 %v4311
          %v4595 = vunpack.c.l.b16 %v4312
          %v4596 = vunpack.c.h.b16 %v4312
          %v4597 = vunpack.c.l.b16 %v4313
          %v4598 = vunpack.c.h.b16 %v4313
          %v4599 = vunpack.c.l.b16 %v4314
          %v4600 = vunpack.c.h.b16 %v4314
          %v4601 = vunpack.c.l.b16 %v4315
          %v4602 = vunpack.c.h.b16 %v4315
          %v4603 = vunpack.c.l.b16 %v4316
          %v4604 = vunpack.c.h.b16 %v4316
          %v4605 = vunpack.c.l.b16 %v4317
          %v4606 = vunpack.c.h.b16 %v4317
          %v4607 = vunpack.c.l.b16 %v4318
          %v4608 = vunpack.c.h.b16 %v4318
          %v4609 = vunpack.c.l.b16 %v4319
          %v4610 = vunpack.c.h.b16 %v4319
          %v4611 = vunpack.c.l.b16 %v4320
          %v4612 = vunpack.c.h.b16 %v4320
          %v4613 = vunpack.c.l.b16 %v4321
          %v4614 = vunpack.c.h.b16 %v4321
          %v4615 = vunpack.c.l.b16 %v4322
          %v4616 = vunpack.c.h.b16 %v4322
          %v4617 = vunpack.c.l.b16 %v4323
          %v4618 = vunpack.c.h.b16 %v4323
          %v4619 = vunpack.c.l.b16 %v4324
          %v4620 = vunpack.c.h.b16 %v4324
          %v4621 = vunpack.c.l.b16 %v4325
          %v4622 = vunpack.c.h.b16 %v4325
          %v4623 = vunpack.c.l.b16 %v4326
          %v4624 = vunpack.c.h.b16 %v4326
          %v4625 = vunpack.c.l.b16 %v4327
          %v4626 = vunpack.c.h.b16 %v4327
          %v4627 = vunpack.c.l.b16 %v4328
          %v4628 = vunpack.c.h.b16 %v4328
          %v4629 = vunpack.c.l.b16 %v4329
          %v4630 = vunpack.c.h.b16 %v4329
          %v4631 = vunpack.c.l.b16 %v4330
          %v4632 = vunpack.c.h.b16 %v4330
          %v4633 = vunpack.c.l.b16 %v4331
          %v4634 = vunpack.c.h.b16 %v4331
          %v4635 = vunpack.c.l.b16 %v4332
          %v4636 = vunpack.c.h.b16 %v4332
          %v4637 = vunpack.c.l.b16 %v4333
          %v4638 = vunpack.c.h.b16 %v4333
          %v4639 = vunpack.c.l.b16 %v4334
          %v4640 = vunpack.c.h.b16 %v4334
          %v4641 = vunpack.c.l.b16 %v4335
          %v4642 = vunpack.c.h.b16 %v4335
          %v4643 = vunpack.c.l.b16 %v4336
          %v4644 = vunpack.c.h.b16 %v4336
          %v4645 = vunpack.c.l.b16 %v4337
          %v4646 = vunpack.c.h.b16 %v4337
          %v4647 = vunpack.c.l.b16 %v4338
          %v4648 = vunpack.c.h.b16 %v4338
          %v4649 = vunpack.c.l.b16 %v4339
          %v4650 = vunpack.c.h.b16 %v4339
          %v4651 = vunpack.c.l.b16 %v4340
          %v4652 = vunpack.c.h.b16 %v4340
          %v4653 = vunpack.c.l.b16 %v4341
          %v4654 = vunpack.c.h.b16 %v4341
          %v4655 = vunpack.c.l.b16 %v4342
          %v4656 = vunpack.c.h.b16 %v4342
          %v4657 = vunpack.c.l.b16 %v4343
          %v4658 = vunpack.c.h.b16 %v4343
          %v4659 = vunpack.c.l.b16 %v4344
          %v4660 = vunpack.c.h.b16 %v4344
          %v4661 = vunpack.c.l.b16 %v4345
          %v4662 = vunpack.c.h.b16 %v4345
          %v4663 = vunpack.c.l.b16 %v4346
          %v4664 = vunpack.c.h.b16 %v4346
          %v4665 = vunpack.c.l.b16 %v4347
          %v4666 = vunpack.c.h.b16 %v4347
          %v4667 = vunpack.c.l.b16 %v4348
          %v4668 = vunpack.c.h.b16 %v4348
          %v4669 = vunpack.c.l.b16 %v4349
          %v4670 = vunpack.c.h.b16 %v4349
          %v4671 = vunpack.c.l.b16 %v4350
          %v4672 = vunpack.c.h.b16 %v4350
          %v4673 = vunpack.c.l.b16 %v4351
          %v4674 = vunpack.c.h.b16 %v4351
          %v4675 = vunpack.c.l.b16 %v4352
          %v4676 = vunpack.c.h.b16 %v4352
          %v4677 = vunpack.c.l.b16 %v4353
          %v4678 = vunpack.c.h.b16 %v4353
          %v4679 = vunpack.c.l.b16 %v4354
          %v4680 = vunpack.c.h.b16 %v4354
          %v4681 = vunpack.c.l.b16 %v4355
          %v4682 = vunpack.c.h.b16 %v4355
          %v4683 = vunpack.c.l.b16 %v4356
          %v4684 = vunpack.c.h.b16 %v4356
          %v4685 = vunpack.c.l.b16 %v4357
          %v4686 = vunpack.c.h.b16 %v4357
          %v4687 = vunpack.c.l.b16 %v4358
          %v4688 = vunpack.c.h.b16 %v4358
          %v4689 = vunpack.c.l.b16 %v4359
          %v4690 = vunpack.c.h.b16 %v4359
          %v4691 = vunpack.c.l.b16 %v4360
          %v4692 = vunpack.c.h.b16 %v4360
          %v4693 = vunpack.c.l.b16 %v4361
          %v4694 = vunpack.c.h.b16 %v4361
          %v4695 = vunpack.c.l.b16 %v4362
          %v4696 = vunpack.c.h.b16 %v4362
          %v4697 = vunpack.c.l.b16 %v4363
          %v4698 = vunpack.c.h.b16 %v4363
          %v4699 = vunpack.c.l.b16 %v4364
          %v4700 = vunpack.c.h.b16 %v4364
          %v4701 = vunpack.c.l.b16 %v4365
          %v4702 = vunpack.c.h.b16 %v4365
          %v4703 = vunpack.c.l.b16 %v4366
          %v4704 = vunpack.c.h.b16 %v4366
          %v4705 = vunpack.c.l.b16 %v4367
          %v4706 = vunpack.c.h.b16 %v4367
          %v4707 = vunpack.c.l.b16 %v4368
          %v4708 = vunpack.c.h.b16 %v4368
          %v4709 = vunpack.c.l.b16 %v4369
          %v4710 = vunpack.c.h.b16 %v4369
          %v4711 = vunpack.c.l.b16 %v4370
          %v4712 = vunpack.c.h.b16 %v4370
          %v4713 = vunpack.c.l.b16 %v4371
          %v4714 = vunpack.c.h.b16 %v4371
          %v4715 = vunpack.c.l.b16 %v4372
          %v4716 = vunpack.c.h.b16 %v4372
          %v4717 = vunpack.c.l.b16 %v4373
          %v4718 = vunpack.c.h.b16 %v4373
          %v4719 = vunpack.c.l.b16 %v4374
          %v4720 = vunpack.c.h.b16 %v4374
          %v4721 = vunpack.c.l.b16 %v4375
          %v4722 = vunpack.c.h.b16 %v4375
          %v4723 = vunpack.c.l.b16 %v4376
          %v4724 = vunpack.c.h.b16 %v4376
          %v4725 = vunpack.c.l.b16 %v4377
          %v4726 = vunpack.c.h.b16 %v4377
          %v4727 = vunpack.c.l.b16 %v4378
          %v4728 = vunpack.c.h.b16 %v4378
          %v4729 = vunpack.c.l.b16 %v4379
          %v4730 = vunpack.c.h.b16 %v4379
          %v4731 = vunpack.c.l.b16 %v4380
          %v4732 = vunpack.c.h.b16 %v4380
          %v4733 = vunpack.c.l.b16 %v4381
          %v4734 = vunpack.c.h.b16 %v4381
          %v4735 = vunpack.c.l.b16 %v4382
          %v4736 = vunpack.c.h.b16 %v4382
          %v4737 = vunpack.c.l.b16 %v4383
          %v4738 = vunpack.c.h.b16 %v4383
          %v4739 = vunpack.c.l.b16 %v4384
          %v4740 = vunpack.c.h.b16 %v4384
          %v4741 = vunpack.c.l.b16 %v4385
          %v4742 = vunpack.c.h.b16 %v4385
          %v4743 = vunpack.c.l.b16 %v4386
          %v4744 = vunpack.c.h.b16 %v4386
          %v4745 = vunpack.c.l.b16 %v4387
          %v4746 = vunpack.c.h.b16 %v4387
          %v4747 = vunpack.c.l.b16 %v4388
          %v4748 = vunpack.c.h.b16 %v4388
          %v4749 = vunpack.c.l.b16 %v4389
          %v4750 = vunpack.c.h.b16 %v4389
          %v4751 = vunpack.c.l.b16 %v4390
          %v4752 = vunpack.c.h.b16 %v4390
          %v4753 = vunpack.c.l.b16 %v4391
          %v4754 = vunpack.c.h.b16 %v4391
          %v4755 = vunpack.c.l.b16 %v4392
          %v4756 = vunpack.c.h.b16 %v4392
          %v4757 = vunpack.c.l.b16 %v4393
          %v4758 = vunpack.c.h.b16 %v4393
          %v4759 = vunpack.c.l.b16 %v4394
          %v4760 = vunpack.c.h.b16 %v4394
          %v4761 = vunpack.c.l.b16 %v4395
          %v4762 = vunpack.c.h.b16 %v4395
          %v4763 = vunpack.c.l.b16 %v4396
          %v4764 = vunpack.c.h.b16 %v4396
          %v4765 = vunpack.c.l.b16 %v4397
          %v4766 = vunpack.c.h.b16 %v4397
          %v4767 = vunpack.c.l.b16 %v4398
          %v4768 = vunpack.c.h.b16 %v4398
          %v4769 = vunpack.c.l.b16 %v4399
          %v4770 = vunpack.c.h.b16 %v4399
          %v4771 = vunpack.c.l.b16 %v4400
          %v4772 = vunpack.c.h.b16 %v4400
          %v4773 = vunpack.c.l.b16 %v4401
          %v4774 = vunpack.c.h.b16 %v4401
          %v4775 = vunpack.c.l.b16 %v4402
          %v4776 = vunpack.c.h.b16 %v4402
          %v4777 = vunpack.c.l.b16 %v4403
          %v4778 = vunpack.c.h.b16 %v4403
          %v4779 = vunpack.c.l.b16 %v4404
          %v4780 = vunpack.c.h.b16 %v4404
          %v4781 = vunpack.c.l.b16 %v4405
          %v4782 = vunpack.c.h.b16 %v4405
          %v4783 = vunpack.c.l.b16 %v4406
          %v4784 = vunpack.c.h.b16 %v4406
          %v4785 = vunpack.c.l.b16 %v4407
          %v4786 = vunpack.c.h.b16 %v4407
          %v4787 = vunpack.c.l.b16 %v4408
          %v4788 = vunpack.c.h.b16 %v4408
          %v4789 = vunpack.c.l.b16 %v4409
          %v4790 = vunpack.c.h.b16 %v4409
          %v4791 = vunpack.c.l.b16 %v4410
          %v4792 = vunpack.c.h.b16 %v4410
          %v4793 = vunpack.c.l.b16 %v4411
          %v4794 = vunpack.c.h.b16 %v4411
          %v4795 = vunpack.c.l.b16 %v4412
          %v4796 = vunpack.c.h.b16 %v4412
          %v4797 = vunpack.c.l.b16 %v4413
          %v4798 = vunpack.c.h.b16 %v4413
          %v4799 = vunpack.c.l.b16 %v4414
          %v4800 = vunpack.c.h.b16 %v4414
          %v4801 = vunpack.c.l.b16 %v4415
          %v4802 = vunpack.c.h.b16 %v4415
          %v4803 = vunpack.c.l.b16 %v4416
          %v4804 = vunpack.c.h.b16 %v4416
          %v4805 = vunpack.c.l.b16 %v4417
          %v4806 = vunpack.c.h.b16 %v4417
          %v4807 = vunpack.c.l.b16 %v4418
          %v4808 = vunpack.c.h.b16 %v4418
          %v4809 = vunpack.c.l.b16 %v4419
          %v4810 = vunpack.c.h.b16 %v4419
          %v4811 = vunpack.c.l.b16 %v4420
          %v4812 = vunpack.c.h.b16 %v4420
          %v4813 = vunpack.c.l.b16 %v4421
          %v4814 = vunpack.c.h.b16 %v4421
          %v4815 = vunpack.c.l.b16 %v4422
          %v4816 = vunpack.c.h.b16 %v4422
          %v4817 = vunpack.c.l.b16 %v4423
          %v4818 = vunpack.c.h.b16 %v4423
          %v4819 = vunpack.c.l.b16 %v4424
          %v4820 = vunpack.c.h.b16 %v4424
          %v4821 = vunpack.c.l.b16 %v4425
          %v4822 = vunpack.c.h.b16 %v4425
          %v4823 = vunpack.c.l.b16 %v4426
          %v4824 = vunpack.c.h.b16 %v4426
          %v4825 = vunpack.c.l.b16 %v4427
          %v4826 = vunpack.c.h.b16 %v4427
          %v4827 = vunpack.c.l.b16 %v4428
          %v4828 = vunpack.c.h.b16 %v4428
          %v4829 = vunpack.c.l.b16 %v4429
          %v4830 = vunpack.c.h.b16 %v4429
          %v4831 = vunpack.c.l.b16 %v4430
          %v4832 = vunpack.c.h.b16 %v4430
          %v4833 = vunpack.c.l.b16 %v4431
          %v4834 = vunpack.c.h.b16 %v4431
          %v4835 = vunpack.c.l.b16 %v4432
          %v4836 = vunpack.c.h.b16 %v4432
          %v4837 = vunpack.c.l.b16 %v4433
          %v4838 = vunpack.c.h.b16 %v4433
          %v4839 = vunpack.c.l.b16 %v4434
          %v4840 = vunpack.c.h.b16 %v4434
          %v4841 = vpack.c.b16 %v4589, %v4585
          %v4842 = vpack.c.b16 %v4590, %v4586
          %v4843 = vpack.c.b16 %v4591, %v4587
          %v4844 = vpack.c.b16 %v4592, %v4588
          %v4845 = vpack.c.b16 %v4597, %v4593
          %v4846 = vpack.c.b16 %v4598, %v4594
          %v4847 = vpack.c.b16 %v4599, %v4595
          %v4848 = vpack.c.b16 %v4600, %v4596
          %v4849 = vpack.c.b16 %v4605, %v4601
          %v4850 = vpack.c.b16 %v4606, %v4602
          %v4851 = vpack.c.b16 %v4607, %v4603
          %v4852 = vpack.c.b16 %v4608, %v4604
          %v4853 = vpack.c.b16 %v4613, %v4609
          %v4854 = vpack.c.b16 %v4614, %v4610
          %v4855 = vpack.c.b16 %v4615, %v4611
          %v4856 = vpack.c.b16 %v4616, %v4612
          %v4857 = vpack.c.b16 %v4621, %v4617
          %v4858 = vpack.c.b16 %v4622, %v4618
          %v4859 = vpack.c.b16 %v4623, %v4619
          %v4860 = vpack.c.b16 %v4624, %v4620
          %v4861 = vpack.c.b16 %v4629, %v4625
          %v4862 = vpack.c.b16 %v4630, %v4626
          %v4863 = vpack.c.b16 %v4631, %v4627
          %v4864 = vpack.c.b16 %v4632, %v4628
          %v4865 = vpack.c.b16 %v4637, %v4633
          %v4866 = vpack.c.b16 %v4638, %v4634
          %v4867 = vpack.c.b16 %v4639, %v4635
          %v4868 = vpack.c.b16 %v4640, %v4636
          %v4869 = vpack.c.b16 %v4645, %v4641
          %v4870 = vpack.c.b16 %v4646, %v4642
          %v4871 = vpack.c.b16 %v4647, %v4643
          %v4872 = vpack.c.b16 %v4648, %v4644
          %v4873 = vpack.c.b16 %v4653, %v4649
          %v4874 = vpack.c.b16 %v4654, %v4650
          %v4875 = vpack.c.b16 %v4655, %v4651
          %v4876 = vpack.c.b16 %v4656, %v4652
          %v4877 = vpack.c.b16 %v4661, %v4657
          %v4878 = vpack.c.b16 %v4662, %v4658
          %v4879 = vpack.c.b16 %v4663, %v4659
          %v4880 = vpack.c.b16 %v4664, %v4660
          %v4881 = vpack.c.b16 %v4669, %v4665
          %v4882 = vpack.c.b16 %v4670, %v4666
          %v4883 = vpack.c.b16 %v4671, %v4667
          %v4884 = vpack.c.b16 %v4672, %v4668
          %v4885 = vpack.c.b16 %v4677, %v4673
          %v4886 = vpack.c.b16 %v4678, %v4674
          %v4887 = vpack.c.b16 %v4679, %v4675
          %v4888 = vpack.c.b16 %v4680, %v4676
          %v4889 = vpack.c.b16 %v4685, %v4681
          %v4890 = vpack.c.b16 %v4686, %v4682
          %v4891 = vpack.c.b16 %v4687, %v4683
          %v4892 = vpack.c.b16 %v4688, %v4684
          %v4893 = vpack.c.b16 %v4693, %v4689
          %v4894 = vpack.c.b16 %v4694, %v4690
          %v4895 = vpack.c.b16 %v4695, %v4691
          %v4896 = vpack.c.b16 %v4696, %v4692
          %v4897 = vpack.c.b16 %v4701, %v4697
          %v4898 = vpack.c.b16 %v4702, %v4698
          %v4899 = vpack.c.b16 %v4703, %v4699
          %v4900 = vpack.c.b16 %v4704, %v4700
          %v4901 = vpack.c.b16 %v4709, %v4705
          %v4902 = vpack.c.b16 %v4710, %v4706
          %v4903 = vpack.c.b16 %v4711, %v4707
          %v4904 = vpack.c.b16 %v4712, %v4708
          %v4905 = vpack.c.b16 %v4717, %v4713
          %v4906 = vpack.c.b16 %v4718, %v4714
          %v4907 = vpack.c.b16 %v4719, %v4715
          %v4908 = vpack.c.b16 %v4720, %v4716
          %v4909 = vpack.c.b16 %v4725, %v4721
          %v4910 = vpack.c.b16 %v4726, %v4722
          %v4911 = vpack.c.b16 %v4727, %v4723
          %v4912 = vpack.c.b16 %v4728, %v4724
          %v4913 = vpack.c.b16 %v4733, %v4729
          %v4914 = vpack.c.b16 %v4734, %v4730
          %v4915 = vpack.c.b16 %v4735, %v4731
          %v4916 = vpack.c.b16 %v4736, %v4732
          %v4917 = vpack.c.b16 %v4741, %v4737
          %v4918 = vpack.c.b16 %v4742, %v4738
          %v4919 = vpack.c.b16 %v4743, %v4739
          %v4920 = vpack.c.b16 %v4744, %v4740
          %v4921 = vpack.c.b16 %v4749, %v4745
          %v4922 = vpack.c.b16 %v4750, %v4746
          %v4923 = vpack.c.b16 %v4751, %v4747
          %v4924 = vpack.c.b16 %v4752, %v4748
          %v4925 = vpack.c.b16 %v4757, %v4753
          %v4926 = vpack.c.b16 %v4758, %v4754
          %v4927 = vpack.c.b16 %v4759, %v4755
          %v4928 = vpack.c.b16 %v4760, %v4756
          %v4929 = vpack.c.b16 %v4765, %v4761
          %v4930 = vpack.c.b16 %v4766, %v4762
          %v4931 = vpack.c.b16 %v4767, %v4763
          %v4932 = vpack.c.b16 %v4768, %v4764
          %v4933 = vpack.c.b16 %v4773, %v4769
          %v4934 = vpack.c.b16 %v4774, %v4770
          %v4935 = vpack.c.b16 %v4775, %v4771
          %v4936 = vpack.c.b16 %v4776, %v4772
          %v4937 = vpack.c.b16 %v4781, %v4777
          %v4938 = vpack.c.b16 %v4782, %v4778
          %v4939 = vpack.c.b16 %v4783, %v4779
          %v4940 = vpack.c.b16 %v4784, %v4780
          %v4941 = vpack.c.b16 %v4789, %v4785
          %v4942 = vpack.c.b16 %v4790, %v4786
          %v4943 = vpack.c.b16 %v4791, %v4787
          %v4944 = vpack.c.b16 %v4792, %v4788
          %v4945 = vpack.c.b16 %v4797, %v4793
          %v4946 = vpack.c.b16 %v4798, %v4794
          %v4947 = vpack.c.b16 %v4799, %v4795
          %v4948 = vpack.c.b16 %v4800, %v4796
          %v4949 = vpack.c.b16 %v4805, %v4801
          %v4950 = vpack.c.b16 %v4806, %v4802
          %v4951 = vpack.c.b16 %v4807, %v4803
          %v4952 = vpack.c.b16 %v4808, %v4804
          %v4953 = vpack.c.b16 %v4813, %v4809
          %v4954 = vpack.c.b16 %v4814, %v4810
          %v4955 = vpack.c.b16 %v4815, %v4811
          %v4956 = vpack.c.b16 %v4816, %v4812
          %v4957 = vpack.c.b16 %v4821, %v4817
          %v4958 = vpack.c.b16 %v4822, %v4818
          %v4959 = vpack.c.b16 %v4823, %v4819
          %v4960 = vpack.c.b16 %v4824, %v4820
          %v4961 = vpack.c.b16 %v4829, %v4825
          %v4962 = vpack.c.b16 %v4830, %v4826
          %v4963 = vpack.c.b16 %v4831, %v4827
          %v4964 = vpack.c.b16 %v4832, %v4828
          %v4965 = vpack.c.b16 %v4837, %v4833
          %v4966 = vpack.c.b16 %v4838, %v4834
          %v4967 = vpack.c.b16 %v4839, %v4835
          %v4968 = vpack.c.b16 %v4840, %v4836
          %5097 = vmatprep.subr.bf16.mxu0 %v4842
          %5098 = vmatpush1.bf16.msra.mxu0 %v4841
          %5099 = vmatprep.subr.bf16.mxu0 %v4846
          %5100 = vmatpush1.bf16.msra.mxu0 %v4845
          %5101 = vmatprep.subr.bf16.mxu0 %v4850
          %5102 = vmatpush1.bf16.msra.mxu0 %v4849
          %5103 = vmatprep.subr.bf16.mxu0 %v4854
          %5104 = vmatpush1.bf16.msra.mxu0 %v4853
          %5105 = vmatprep.subr.bf16.mxu0 %v4858
          %5106 = vmatpush1.bf16.msra.mxu0 %v4857
          %5107 = vmatprep.subr.bf16.mxu0 %v4862
          %5108 = vmatpush1.bf16.msra.mxu0 %v4861
          %5109 = vmatprep.subr.bf16.mxu0 %v4866
          %5110 = vmatpush1.bf16.msra.mxu0 %v4865
          %5111 = vmatprep.subr.bf16.mxu0 %v4870
          %5112 = vmatpush1.bf16.msra.mxu0 %v4869
          %5113 = vmatprep.subr.bf16.mxu0 %v4874
          %5114 = vmatpush1.bf16.msra.mxu0 %v4873
          %5115 = vmatprep.subr.bf16.mxu0 %v4878
          %5116 = vmatpush1.bf16.msra.mxu0 %v4877
          %5117 = vmatprep.subr.bf16.mxu0 %v4882
          %5118 = vmatpush1.bf16.msra.mxu0 %v4881
          %5119 = vmatprep.subr.bf16.mxu0 %v4886
          %5120 = vmatpush1.bf16.msra.mxu0 %v4885
          %5121 = vmatprep.subr.bf16.mxu0 %v4890
          %5122 = vmatpush1.bf16.msra.mxu0 %v4889
          %5123 = vmatprep.subr.bf16.mxu0 %v4894
          %5124 = vmatpush1.bf16.msra.mxu0 %v4893
          %5125 = vmatprep.subr.bf16.mxu0 %v4898
          %5126 = vmatpush1.bf16.msra.mxu0 %v4897
          %5127 = vmatprep.subr.bf16.mxu0 %v4902
          %5128 = vmatpush1.bf16.msra.mxu0 %v4901
          %5129 = vmatprep.mubr.bf16.mxu0 %v4304
          %5130 = vmatmul.mubr.bf16.gmra.mrb[0].mxu0 %v4303
          %v5131 = vpop.f32.mrb[0].mxu0
          %v5132 = vadd.f32 %v4440, %v5131
          %v5133 = vpop.f32.mrb[0].mxu0
          %v5134 = vadd.f32 %v4444, %v5133
          %v5135 = vpop.f32.mrb[0].mxu0
          %v5136 = vpop.f32.mrb[0].mxu0
          %5137 = vdwg.mxu0
          %5138 = vmatprep.subr.bf16.mxu0 %v4906
          %5139 = vmatpush1.bf16.msra.mxu0 %v4905
          %5140 = vmatprep.subr.bf16.mxu0 %v4910
          %5141 = vmatpush1.bf16.msra.mxu0 %v4909
          %5142 = vmatprep.subr.bf16.mxu0 %v4914
          %5143 = vmatpush1.bf16.msra.mxu0 %v4913
          %5144 = vmatprep.subr.bf16.mxu0 %v4918
          %5145 = vmatpush1.bf16.msra.mxu0 %v4917
          %5146 = vmatprep.subr.bf16.mxu0 %v4922
          %5147 = vmatpush1.bf16.msra.mxu0 %v4921
          %5148 = vmatprep.subr.bf16.mxu0 %v4926
          %5149 = vmatpush1.bf16.msra.mxu0 %v4925
          %5150 = vmatprep.subr.bf16.mxu0 %v4930
          %5151 = vmatpush1.bf16.msra.mxu0 %v4929
          %5152 = vmatprep.subr.bf16.mxu0 %v4934
          %5153 = vmatpush1.bf16.msra.mxu0 %v4933
          %5154 = vmatprep.subr.bf16.mxu0 %v4938
          %5155 = vmatpush1.bf16.msra.mxu0 %v4937
          %5156 = vmatprep.subr.bf16.mxu0 %v4942
          %5157 = vmatpush1.bf16.msra.mxu0 %v4941
          %5158 = vmatprep.subr.bf16.mxu0 %v4946
          %5159 = vmatpush1.bf16.msra.mxu0 %v4945
          %5160 = vmatprep.subr.bf16.mxu0 %v4950
          %5161 = vmatpush1.bf16.msra.mxu0 %v4949
          %5162 = vmatprep.subr.bf16.mxu0 %v4954
          %5163 = vmatpush1.bf16.msra.mxu0 %v4953
          %5164 = vmatprep.subr.bf16.mxu0 %v4958
          %5165 = vmatpush1.bf16.msra.mxu0 %v4957
          %5166 = vmatprep.subr.bf16.mxu0 %v4962
          %5167 = vmatpush1.bf16.msra.mxu0 %v4961
          %5168 = vmatprep.subr.bf16.mxu0 %v4966
          %5169 = vmatpush1.bf16.msra.mxu0 %v4965
          %5170 = vmatprep.mubr.bf16.mxu0 %v4306
          %5171 = vmatmul.mubr.bf16.gmra.mrb[0].mxu0 %v4305
          %v5172 = vpop.f32.mrb[0].mxu0
          %v5173 = vadd.f32 %v5132, %v5172
          %v5174 = vpop.f32.mrb[0].mxu0
          %v5175 = vadd.f32 %v5134, %v5174
          %v5176 = vpop.f32.mrb[0].mxu0
          %v5177 = vpop.f32.mrb[0].mxu0
          %5178 = vdwg.mxu0
          %5179 = vmatprep.subr.bf16.mxu0 %v4844
          %5180 = vmatpush1.bf16.msra.mxu0 %v4843
          %5181 = vmatprep.subr.bf16.mxu0 %v4848
          %5182 = vmatpush1.bf16.msra.mxu0 %v4847
          %5183 = vmatprep.subr.bf16.mxu0 %v4852
          %5184 = vmatpush1.bf16.msra.mxu0 %v4851
          %5185 = vmatprep.subr.bf16.mxu0 %v4856
          %5186 = vmatpush1.bf16.msra.mxu0 %v4855
          %5187 = vmatprep.subr.bf16.mxu0 %v4860
          %5188 = vmatpush1.bf16.msra.mxu0 %v4859
          %5189 = vmatprep.subr.bf16.mxu0 %v4864
          %5190 = vmatpush1.bf16.msra.mxu0 %v4863
          %5191 = vmatprep.subr.bf16.mxu0 %v4868
          %5192 = vmatpush1.bf16.msra.mxu0 %v4867
          %5193 = vmatprep.subr.bf16.mxu0 %v4872
          %5194 = vmatpush1.bf16.msra.mxu0 %v4871
          %5195 = vmatprep.subr.bf16.mxu0 %v4876
          %5196 = vmatpush1.bf16.msra.mxu0 %v4875
          %5197 = vmatprep.subr.bf16.mxu0 %v4880
          %5198 = vmatpush1.bf16.msra.mxu0 %v4879
          %5199 = vmatprep.subr.bf16.mxu0 %v4884
          %5200 = vmatpush1.bf16.msra.mxu0 %v4883
          %5201 = vmatprep.subr.bf16.mxu0 %v4888
          %5202 = vmatpush1.bf16.msra.mxu0 %v4887
          %5203 = vmatprep.subr.bf16.mxu0 %v4892
          %5204 = vmatpush1.bf16.msra.mxu0 %v4891
          %5205 = vmatprep.subr.bf16.mxu0 %v4896
          %5206 = vmatpush1.bf16.msra.mxu0 %v4895
          %5207 = vmatprep.subr.bf16.mxu0 %v4900
          %5208 = vmatpush1.bf16.msra.mxu0 %v4899
          %5209 = vmatprep.subr.bf16.mxu0 %v4904
          %5210 = vmatpush1.bf16.msra.mxu0 %v4903
          %5211 = vmatprep.mubr.bf16.mxu0 %v4304
          %5212 = vmatmul.mubr.bf16.gmra.mrb[0].mxu0 %v4303
          %v5213 = vpop.f32.mrb[0].mxu0
          %v5214 = vadd.f32 %v4448, %v5213
          %v5215 = vpop.f32.mrb[0].mxu0
          %v5216 = vadd.f32 %v4452, %v5215
          %v5217 = vpop.f32.mrb[0].mxu0
          %v5218 = vpop.f32.mrb[0].mxu0
          %5219 = vdwg.mxu0
          %5220 = vmatprep.subr.bf16.mxu0 %v4908
          %5221 = vmatpush1.bf16.msra.mxu0 %v4907
          %5222 = vmatprep.subr.bf16.mxu0 %v4912
          %5223 = vmatpush1.bf16.msra.mxu0 %v4911
          %5224 = vmatprep.subr.bf16.mxu0 %v4916
          %5225 = vmatpush1.bf16.msra.mxu0 %v4915
          %5226 = vmatprep.subr.bf16.mxu0 %v4920
          %5227 = vmatpush1.bf16.msra.mxu0 %v4919
          %5228 = vmatprep.subr.bf16.mxu0 %v4924
          %5229 = vmatpush1.bf16.msra.mxu0 %v4923
          %5230 = vmatprep.subr.bf16.mxu0 %v4928
          %5231 = vmatpush1.bf16.msra.mxu0 %v4927
          %5232 = vmatprep.subr.bf16.mxu0 %v4932
          %5233 = vmatpush1.bf16.msra.mxu0 %v4931
          %5234 = vmatprep.subr.bf16.mxu0 %v4936
          %5235 = vmatpush1.bf16.msra.mxu0 %v4935
          %5236 = vmatprep.subr.bf16.mxu0 %v4940
          %5237 = vmatpush1.bf16.msra.mxu0 %v4939
          %5238 = vmatprep.subr.bf16.mxu0 %v4944
          %5239 = vmatpush1.bf16.msra.mxu0 %v4943
          %5240 = vmatprep.subr.bf16.mxu0 %v4948
          %5241 = vmatpush1.bf16.msra.mxu0 %v4947
          %5242 = vmatprep.subr.bf16.mxu0 %v4952
          %5243 = vmatpush1.bf16.msra.mxu0 %v4951
          %5244 = vmatprep.subr.bf16.mxu0 %v4956
          %5245 = vmatpush1.bf16.msra.mxu0 %v4955
          %5246 = vmatprep.subr.bf16.mxu0 %v4960
          %5247 = vmatpush1.bf16.msra.mxu0 %v4959
          %5248 = vmatprep.subr.bf16.mxu0 %v4964
          %5249 = vmatpush1.bf16.msra.mxu0 %v4963
          %5250 = vmatprep.subr.bf16.mxu0 %v4968
          %5251 = vmatpush1.bf16.msra.mxu0 %v4967
          %5252 = vmatprep.mubr.bf16.mxu0 %v4306
          %5253 = vmatmul.mubr.bf16.gmra.mrb[0].mxu0 %v4305
          %v5254 = vpop.f32.mrb[0].mxu0
          %v5255 = vadd.f32 %v5214, %v5254
          %v5256 = vpop.f32.mrb[0].mxu0
          %v5257 = vadd.f32 %v5216, %v5256
          %v5258 = vpop.f32.mrb[0].mxu0
          %v5259 = vpop.f32.mrb[0].mxu0
          %5260 = vdwg.mxu0
          %v5261 = vmax.f32 %v5173, 0.0
          %v5262 = vmax.f32 %v5175, 0.0
          %v5263 = vmax.f32 %v5255, 0.0
          %v5264 = vmax.f32 %v5257, 0.0
          %v5265 = vpack.c.bf16 %v5261, %v5261
          %v5266 = vpack.c.bf16 %v5262, %v5262
          %v5267 = vpack.c.bf16 %v5263, %v5263
          %v5268 = vpack.c.bf16 %v5264, %v5264
          %v5269 = vld [vmem:[#allocation10] sm:$0xff]
          %v5270 = vld [vmem:[#allocation10 + $0x8] sm:$0xff]
          %v5271 = vld [vmem:[#allocation10 + $0x10] sm:$0xff]
          %v5272 = vld [vmem:[#allocation10 + $0x18] sm:$0xff]
          %v5273 = vld [vmem:[#allocation10 + $0x20] sm:$0xff]
          %v5274 = vld [vmem:[#allocation10 + $0x28] sm:$0xff]
          %v5275 = vld [vmem:[#allocation10 + $0x30] sm:$0xff]
          %v5276 = vld [vmem:[#allocation10 + $0x38] sm:$0xff]
          %v5277 = vld [vmem:[#allocation10 + $0x40] sm:$0xff]
          %v5278 = vld [vmem:[#allocation10 + $0x48] sm:$0xff]
          %v5279 = vld [vmem:[#allocation10 + $0x50] sm:$0xff]
          %v5280 = vld [vmem:[#allocation10 + $0x58] sm:$0xff]
          %v5281 = vld [vmem:[#allocation10 + $0x60] sm:$0xff]
          %v5282 = vld [vmem:[#allocation10 + $0x68] sm:$0xff]
          %v5283 = vld [vmem:[#allocation10 + $0x70] sm:$0xff]
          %v5284 = vld [vmem:[#allocation10 + $0x78] sm:$0xff]
          %v5285 = vld [vmem:[#allocation10 + $0x80] sm:$0xff]
          %v5286 = vld [vmem:[#allocation10 + $0x88] sm:$0xff]
          %v5287 = vld [vmem:[#allocation10 + $0x90] sm:$0xff]
          %v5288 = vld [vmem:[#allocation10 + $0x98] sm:$0xff]
          %v5289 = vld [vmem:[#allocation10 + $0xa0] sm:$0xff]
          %v5290 = vld [vmem:[#allocation10 + $0xa8] sm:$0xff]
          %v5291 = vld [vmem:[#allocation10 + $0xb0] sm:$0xff]
          %v5292 = vld [vmem:[#allocation10 + $0xb8] sm:$0xff]
          %v5293 = vld [vmem:[#allocation10 + $0xc0] sm:$0xff]
          %v5294 = vld [vmem:[#allocation10 + $0xc8] sm:$0xff]
          %v5295 = vld [vmem:[#allocation10 + $0xd0] sm:$0xff]
          %v5296 = vld [vmem:[#allocation10 + $0xd8] sm:$0xff]
          %v5297 = vld [vmem:[#allocation10 + $0xe0] sm:$0xff]
          %v5298 = vld [vmem:[#allocation10 + $0xe8] sm:$0xff]
          %v5299 = vld [vmem:[#allocation10 + $0xf0] sm:$0xff]
          %v5300 = vld [vmem:[#allocation10 + $0xf8] sm:$0xff]
          %v5301 = vld [vmem:[#allocation10 + $0x100] sm:$0xff]
          %v5302 = vld [vmem:[#allocation10 + $0x108] sm:$0xff]
          %v5303 = vld [vmem:[#allocation10 + $0x110] sm:$0xff]
          %v5304 = vld [vmem:[#allocation10 + $0x118] sm:$0xff]
          %v5305 = vld [vmem:[#allocation10 + $0x120] sm:$0xff]
          %v5306 = vld [vmem:[#allocation10 + $0x128] sm:$0xff]
          %v5307 = vld [vmem:[#allocation10 + $0x130] sm:$0xff]
          %v5308 = vld [vmem:[#allocation10 + $0x138] sm:$0xff]
          %v5309 = vld [vmem:[#allocation10 + $0x140] sm:$0xff]
          %v5310 = vld [vmem:[#allocation10 + $0x148] sm:$0xff]
          %v5311 = vld [vmem:[#allocation10 + $0x150] sm:$0xff]
          %v5312 = vld [vmem:[#allocation10 + $0x158] sm:$0xff]
          %v5313 = vld [vmem:[#allocation10 + $0x160] sm:$0xff]
          %v5314 = vld [vmem:[#allocation10 + $0x168] sm:$0xff]
          %v5315 = vld [vmem:[#allocation10 + $0x170] sm:$0xff]
          %v5316 = vld [vmem:[#allocation10 + $0x178] sm:$0xff]
          %v5317 = vld [vmem:[#allocation10 + $0x180] sm:$0xff]
          %v5318 = vld [vmem:[#allocation10 + $0x188] sm:$0xff]
          %v5319 = vld [vmem:[#allocation10 + $0x190] sm:$0xff]
          %v5320 = vld [vmem:[#allocation10 + $0x198] sm:$0xff]
          %v5321 = vld [vmem:[#allocation10 + $0x1a0] sm:$0xff]
          %v5322 = vld [vmem:[#allocation10 + $0x1a8] sm:$0xff]
          %v5323 = vld [vmem:[#allocation10 + $0x1b0] sm:$0xff]
          %v5324 = vld [vmem:[#allocation10 + $0x1b8] sm:$0xff]
          %v5325 = vld [vmem:[#allocation10 + $0x1c0] sm:$0xff]
          %v5326 = vld [vmem:[#allocation10 + $0x1c8] sm:$0xff]
          %v5327 = vld [vmem:[#allocation10 + $0x1d0] sm:$0xff]
          %v5328 = vld [vmem:[#allocation10 + $0x1d8] sm:$0xff]
          %v5329 = vld [vmem:[#allocation10 + $0x1e0] sm:$0xff]
          %v5330 = vld [vmem:[#allocation10 + $0x1e8] sm:$0xff]
          %v5331 = vld [vmem:[#allocation10 + $0x1f0] sm:$0xff]
          %v5332 = vld [vmem:[#allocation10 + $0x1f8] sm:$0xff]
          %v5333 = vld [vmem:[#allocation10 + $0x200] sm:$0xff]
          %v5334 = vld [vmem:[#allocation10 + $0x208] sm:$0xff]
          %v5335 = vld [vmem:[#allocation10 + $0x210] sm:$0xff]
          %v5336 = vld [vmem:[#allocation10 + $0x218] sm:$0xff]
          %v5337 = vld [vmem:[#allocation10 + $0x220] sm:$0xff]
          %v5338 = vld [vmem:[#allocation10 + $0x228] sm:$0xff]
          %v5339 = vld [vmem:[#allocation10 + $0x230] sm:$0xff]
          %v5340 = vld [vmem:[#allocation10 + $0x238] sm:$0xff]
          %v5341 = vld [vmem:[#allocation10 + $0x240] sm:$0xff]
          %v5342 = vld [vmem:[#allocation10 + $0x248] sm:$0xff]
          %v5343 = vld [vmem:[#allocation10 + $0x250] sm:$0xff]
          %v5344 = vld [vmem:[#allocation10 + $0x258] sm:$0xff]
          %v5345 = vld [vmem:[#allocation10 + $0x260] sm:$0xff]
          %v5346 = vld [vmem:[#allocation10 + $0x268] sm:$0xff]
          %v5347 = vld [vmem:[#allocation10 + $0x270] sm:$0xff]
          %v5348 = vld [vmem:[#allocation10 + $0x278] sm:$0xff]
          %v5349 = vld [vmem:[#allocation10 + $0x280] sm:$0xff]
          %v5350 = vld [vmem:[#allocation10 + $0x288] sm:$0xff]
          %v5351 = vld [vmem:[#allocation10 + $0x290] sm:$0xff]
          %v5352 = vld [vmem:[#allocation10 + $0x298] sm:$0xff]
          %v5353 = vld [vmem:[#allocation10 + $0x2a0] sm:$0xff]
          %v5354 = vld [vmem:[#allocation10 + $0x2a8] sm:$0xff]
          %v5355 = vld [vmem:[#allocation10 + $0x2b0] sm:$0xff]
          %v5356 = vld [vmem:[#allocation10 + $0x2b8] sm:$0xff]
          %v5357 = vld [vmem:[#allocation10 + $0x2c0] sm:$0xff]
          %v5358 = vld [vmem:[#allocation10 + $0x2c8] sm:$0xff]
          %v5359 = vld [vmem:[#allocation10 + $0x2d0] sm:$0xff]
          %v5360 = vld [vmem:[#allocation10 + $0x2d8] sm:$0xff]
          %v5361 = vld [vmem:[#allocation10 + $0x2e0] sm:$0xff]
          %v5362 = vld [vmem:[#allocation10 + $0x2e8] sm:$0xff]
          %v5363 = vld [vmem:[#allocation10 + $0x2f0] sm:$0xff]
          %v5364 = vld [vmem:[#allocation10 + $0x2f8] sm:$0xff]
          %v5365 = vld [vmem:[#allocation10 + $0x300] sm:$0xff]
          %v5366 = vld [vmem:[#allocation10 + $0x308] sm:$0xff]
          %v5367 = vld [vmem:[#allocation10 + $0x310] sm:$0xff]
          %v5368 = vld [vmem:[#allocation10 + $0x318] sm:$0xff]
          %v5369 = vld [vmem:[#allocation10 + $0x320] sm:$0xff]
          %v5370 = vld [vmem:[#allocation10 + $0x328] sm:$0xff]
          %v5371 = vld [vmem:[#allocation10 + $0x330] sm:$0xff]
          %v5372 = vld [vmem:[#allocation10 + $0x338] sm:$0xff]
          %v5373 = vld [vmem:[#allocation10 + $0x340] sm:$0xff]
          %v5374 = vld [vmem:[#allocation10 + $0x348] sm:$0xff]
          %v5375 = vld [vmem:[#allocation10 + $0x350] sm:$0xff]
          %v5376 = vld [vmem:[#allocation10 + $0x358] sm:$0xff]
          %v5377 = vld [vmem:[#allocation10 + $0x360] sm:$0xff]
          %v5378 = vld [vmem:[#allocation10 + $0x368] sm:$0xff]
          %v5379 = vld [vmem:[#allocation10 + $0x370] sm:$0xff]
          %v5380 = vld [vmem:[#allocation10 + $0x378] sm:$0xff]
          %v5381 = vld [vmem:[#allocation10 + $0x380] sm:$0xff]
          %v5382 = vld [vmem:[#allocation10 + $0x388] sm:$0xff]
          %v5383 = vld [vmem:[#allocation10 + $0x390] sm:$0xff]
          %v5384 = vld [vmem:[#allocation10 + $0x398] sm:$0xff]
          %v5385 = vld [vmem:[#allocation10 + $0x3a0] sm:$0xff]
          %v5386 = vld [vmem:[#allocation10 + $0x3a8] sm:$0xff]
          %v5387 = vld [vmem:[#allocation10 + $0x3b0] sm:$0xff]
          %v5388 = vld [vmem:[#allocation10 + $0x3b8] sm:$0xff]
          %v5389 = vld [vmem:[#allocation10 + $0x3c0] sm:$0xff]
          %v5390 = vld [vmem:[#allocation10 + $0x3c8] sm:$0xff]
          %v5391 = vld [vmem:[#allocation10 + $0x3d0] sm:$0xff]
          %v5392 = vld [vmem:[#allocation10 + $0x3d8] sm:$0xff]
          %v5393 = vld [vmem:[#allocation10 + $0x3e0] sm:$0xff]
          %v5394 = vld [vmem:[#allocation10 + $0x3e8] sm:$0xff]
          %v5395 = vld [vmem:[#allocation10 + $0x3f0] sm:$0xff]
          %v5396 = vld [vmem:[#allocation10 + $0x3f8] sm:$0xff]
          %v5397 = vld [vmem:[#allocation10 + $0x400] sm:$0xff]
          %v5398 = vld [vmem:[#allocation10 + $0x408] sm:$0xff]
          %v5399 = vld [vmem:[#allocation10 + $0x410] sm:$0xff]
          %v5400 = vld [vmem:[#allocation10 + $0x418] sm:$0xff]
          %v5401 = vld [vmem:[#allocation10 + $0x420] sm:$0xff]
          %v5402 = vld [vmem:[#allocation10 + $0x428] sm:$0xff]
          %v5403 = vld [vmem:[#allocation10 + $0x430] sm:$0xff]
          %v5404 = vld [vmem:[#allocation10 + $0x438] sm:$0xff]
          %v5405 = vld [vmem:[#allocation10 + $0x440] sm:$0xff]
          %v5406 = vld [vmem:[#allocation10 + $0x448] sm:$0xff]
          %v5407 = vld [vmem:[#allocation10 + $0x450] sm:$0xff]
          %v5408 = vld [vmem:[#allocation10 + $0x458] sm:$0xff]
          %v5409 = vld [vmem:[#allocation10 + $0x460] sm:$0xff]
          %v5410 = vld [vmem:[#allocation10 + $0x468] sm:$0xff]
          %v5411 = vld [vmem:[#allocation10 + $0x470] sm:$0xff]
          %v5412 = vld [vmem:[#allocation10 + $0x478] sm:$0xff]
          %v5413 = vld [vmem:[#allocation10 + $0x480] sm:$0xff]
          %v5414 = vld [vmem:[#allocation10 + $0x488] sm:$0xff]
          %v5415 = vld [vmem:[#allocation10 + $0x490] sm:$0xff]
          %v5416 = vld [vmem:[#allocation10 + $0x498] sm:$0xff]
          %v5417 = vld [vmem:[#allocation10 + $0x4a0] sm:$0xff]
          %v5418 = vld [vmem:[#allocation10 + $0x4a8] sm:$0xff]
          %v5419 = vld [vmem:[#allocation10 + $0x4b0] sm:$0xff]
          %v5420 = vld [vmem:[#allocation10 + $0x4b8] sm:$0xff]
          %v5421 = vld [vmem:[#allocation10 + $0x4c0] sm:$0xff]
          %v5422 = vld [vmem:[#allocation10 + $0x4c8] sm:$0xff]
          %v5423 = vld [vmem:[#allocation10 + $0x4d0] sm:$0xff]
          %v5424 = vld [vmem:[#allocation10 + $0x4d8] sm:$0xff]
          %v5425 = vld [vmem:[#allocation10 + $0x4e0] sm:$0xff]
          %v5426 = vld [vmem:[#allocation10 + $0x4e8] sm:$0xff]
          %v5427 = vld [vmem:[#allocation10 + $0x4f0] sm:$0xff]
          %v5428 = vld [vmem:[#allocation10 + $0x4f8] sm:$0xff]
          %v5429 = vld [vmem:[#allocation10 + $0x500] sm:$0xff]
          %v5430 = vld [vmem:[#allocation10 + $0x508] sm:$0xff]
          %v5431 = vld [vmem:[#allocation10 + $0x510] sm:$0xff]
          %v5432 = vld [vmem:[#allocation10 + $0x518] sm:$0xff]
          %v5433 = vld [vmem:[#allocation10 + $0x520] sm:$0xff]
          %v5434 = vld [vmem:[#allocation10 + $0x528] sm:$0xff]
          %v5435 = vld [vmem:[#allocation10 + $0x530] sm:$0xff]
          %v5436 = vld [vmem:[#allocation10 + $0x538] sm:$0xff]
          %v5437 = vld [vmem:[#allocation10 + $0x540] sm:$0xff]
          %v5438 = vld [vmem:[#allocation10 + $0x548] sm:$0xff]
          %v5439 = vld [vmem:[#allocation10 + $0x550] sm:$0xff]
          %v5440 = vld [vmem:[#allocation10 + $0x558] sm:$0xff]
          %v5441 = vld [vmem:[#allocation10 + $0x560] sm:$0xff]
          %v5442 = vld [vmem:[#allocation10 + $0x568] sm:$0xff]
          %v5443 = vld [vmem:[#allocation10 + $0x570] sm:$0xff]
          %v5444 = vld [vmem:[#allocation10 + $0x578] sm:$0xff]
          %v5445 = vld [vmem:[#allocation10 + $0x580] sm:$0xff]
          %v5446 = vld [vmem:[#allocation10 + $0x588] sm:$0xff]
          %v5447 = vld [vmem:[#allocation10 + $0x590] sm:$0xff]
          %v5448 = vld [vmem:[#allocation10 + $0x598] sm:$0xff]
          %v5449 = vld [vmem:[#allocation10 + $0x5a0] sm:$0xff]
          %v5450 = vld [vmem:[#allocation10 + $0x5a8] sm:$0xff]
          %v5451 = vld [vmem:[#allocation10 + $0x5b0] sm:$0xff]
          %v5452 = vld [vmem:[#allocation10 + $0x5b8] sm:$0xff]
          %v5453 = vld [vmem:[#allocation10 + $0x5c0] sm:$0xff]
          %v5454 = vld [vmem:[#allocation10 + $0x5c8] sm:$0xff]
          %v5455 = vld [vmem:[#allocation10 + $0x5d0] sm:$0xff]
          %v5456 = vld [vmem:[#allocation10 + $0x5d8] sm:$0xff]
          %v5457 = vld [vmem:[#allocation10 + $0x5e0] sm:$0xff]
          %v5458 = vld [vmem:[#allocation10 + $0x5e8] sm:$0xff]
          %v5459 = vld [vmem:[#allocation10 + $0x5f0] sm:$0xff]
          %v5460 = vld [vmem:[#allocation10 + $0x5f8] sm:$0xff]
          %v5461 = vld [vmem:[#allocation10 + $0x600] sm:$0xff]
          %v5462 = vld [vmem:[#allocation10 + $0x608] sm:$0xff]
          %v5463 = vld [vmem:[#allocation10 + $0x610] sm:$0xff]
          %v5464 = vld [vmem:[#allocation10 + $0x618] sm:$0xff]
          %v5465 = vld [vmem:[#allocation10 + $0x620] sm:$0xff]
          %v5466 = vld [vmem:[#allocation10 + $0x628] sm:$0xff]
          %v5467 = vld [vmem:[#allocation10 + $0x630] sm:$0xff]
          %v5468 = vld [vmem:[#allocation10 + $0x638] sm:$0xff]
          %v5469 = vld [vmem:[#allocation10 + $0x640] sm:$0xff]
          %v5470 = vld [vmem:[#allocation10 + $0x648] sm:$0xff]
          %v5471 = vld [vmem:[#allocation10 + $0x650] sm:$0xff]
          %v5472 = vld [vmem:[#allocation10 + $0x658] sm:$0xff]
          %v5473 = vld [vmem:[#allocation10 + $0x660] sm:$0xff]
          %v5474 = vld [vmem:[#allocation10 + $0x668] sm:$0xff]
          %v5475 = vld [vmem:[#allocation10 + $0x670] sm:$0xff]
          %v5476 = vld [vmem:[#allocation10 + $0x678] sm:$0xff]
          %v5477 = vld [vmem:[#allocation10 + $0x680] sm:$0xff]
          %v5478 = vld [vmem:[#allocation10 + $0x688] sm:$0xff]
          %v5479 = vld [vmem:[#allocation10 + $0x690] sm:$0xff]
          %v5480 = vld [vmem:[#allocation10 + $0x698] sm:$0xff]
          %v5481 = vld [vmem:[#allocation10 + $0x6a0] sm:$0xff]
          %v5482 = vld [vmem:[#allocation10 + $0x6a8] sm:$0xff]
          %v5483 = vld [vmem:[#allocation10 + $0x6b0] sm:$0xff]
          %v5484 = vld [vmem:[#allocation10 + $0x6b8] sm:$0xff]
          %v5485 = vld [vmem:[#allocation10 + $0x6c0] sm:$0xff]
          %v5486 = vld [vmem:[#allocation10 + $0x6c8] sm:$0xff]
          %v5487 = vld [vmem:[#allocation10 + $0x6d0] sm:$0xff]
          %v5488 = vld [vmem:[#allocation10 + $0x6d8] sm:$0xff]
          %v5489 = vld [vmem:[#allocation10 + $0x6e0] sm:$0xff]
          %v5490 = vld [vmem:[#allocation10 + $0x6e8] sm:$0xff]
          %v5491 = vld [vmem:[#allocation10 + $0x6f0] sm:$0xff]
          %v5492 = vld [vmem:[#allocation10 + $0x6f8] sm:$0xff]
          %v5493 = vld [vmem:[#allocation10 + $0x700] sm:$0xff]
          %v5494 = vld [vmem:[#allocation10 + $0x708] sm:$0xff]
          %v5495 = vld [vmem:[#allocation10 + $0x710] sm:$0xff]
          %v5496 = vld [vmem:[#allocation10 + $0x718] sm:$0xff]
          %v5497 = vld [vmem:[#allocation10 + $0x720] sm:$0xff]
          %v5498 = vld [vmem:[#allocation10 + $0x728] sm:$0xff]
          %v5499 = vld [vmem:[#allocation10 + $0x730] sm:$0xff]
          %v5500 = vld [vmem:[#allocation10 + $0x738] sm:$0xff]
          %v5501 = vld [vmem:[#allocation10 + $0x740] sm:$0xff]
          %v5502 = vld [vmem:[#allocation10 + $0x748] sm:$0xff]
          %v5503 = vld [vmem:[#allocation10 + $0x750] sm:$0xff]
          %v5504 = vld [vmem:[#allocation10 + $0x758] sm:$0xff]
          %v5505 = vld [vmem:[#allocation10 + $0x760] sm:$0xff]
          %v5506 = vld [vmem:[#allocation10 + $0x768] sm:$0xff]
          %v5507 = vld [vmem:[#allocation10 + $0x770] sm:$0xff]
          %v5508 = vld [vmem:[#allocation10 + $0x778] sm:$0xff]
          %v5509 = vld [vmem:[#allocation10 + $0x780] sm:$0xff]
          %v5510 = vld [vmem:[#allocation10 + $0x788] sm:$0xff]
          %v5511 = vld [vmem:[#allocation10 + $0x790] sm:$0xff]
          %v5512 = vld [vmem:[#allocation10 + $0x798] sm:$0xff]
          %v5513 = vld [vmem:[#allocation10 + $0x7a0] sm:$0xff]
          %v5514 = vld [vmem:[#allocation10 + $0x7a8] sm:$0xff]
          %v5515 = vld [vmem:[#allocation10 + $0x7b0] sm:$0xff]
          %v5516 = vld [vmem:[#allocation10 + $0x7b8] sm:$0xff]
          %v5517 = vld [vmem:[#allocation10 + $0x7c0] sm:$0xff]
          %v5518 = vld [vmem:[#allocation10 + $0x7c8] sm:$0xff]
          %v5519 = vld [vmem:[#allocation10 + $0x7d0] sm:$0xff]
          %v5520 = vld [vmem:[#allocation10 + $0x7d8] sm:$0xff]
          %v5521 = vld [vmem:[#allocation10 + $0x7e0] sm:$0xff]
          %v5522 = vld [vmem:[#allocation10 + $0x7e8] sm:$0xff]
          %v5523 = vld [vmem:[#allocation10 + $0x7f0] sm:$0xff]
          %v5524 = vld [vmem:[#allocation10 + $0x7f8] sm:$0xff]
          %v5525 = vld [vmem:[#allocation10 + $0x800] sm:$0xff]
          %v5526 = vld [vmem:[#allocation10 + $0x808] sm:$0xff]
          %v5527 = vld [vmem:[#allocation10 + $0x810] sm:$0xff]
          %v5528 = vld [vmem:[#allocation10 + $0x818] sm:$0xff]
          %v5529 = vld [vmem:[#allocation10 + $0x820] sm:$0xff]
          %v5530 = vld [vmem:[#allocation10 + $0x828] sm:$0xff]
          %v5531 = vld [vmem:[#allocation10 + $0x830] sm:$0xff]
          %v5532 = vld [vmem:[#allocation10 + $0x838] sm:$0xff]
          %v5533 = vld [vmem:[#allocation10 + $0x840] sm:$0xff]
          %v5534 = vld [vmem:[#allocation10 + $0x848] sm:$0xff]
          %v5535 = vld [vmem:[#allocation10 + $0x850] sm:$0xff]
          %v5536 = vld [vmem:[#allocation10 + $0x858] sm:$0xff]
          %v5537 = vld [vmem:[#allocation10 + $0x860] sm:$0xff]
          %v5538 = vld [vmem:[#allocation10 + $0x868] sm:$0xff]
          %v5539 = vld [vmem:[#allocation10 + $0x870] sm:$0xff]
          %v5540 = vld [vmem:[#allocation10 + $0x878] sm:$0xff]
          %v5541 = vld [vmem:[#allocation10 + $0x880] sm:$0xff]
          %v5542 = vld [vmem:[#allocation10 + $0x888] sm:$0xff]
          %v5543 = vld [vmem:[#allocation10 + $0x890] sm:$0xff]
          %v5544 = vld [vmem:[#allocation10 + $0x898] sm:$0xff]
          %v5545 = vld [vmem:[#allocation10 + $0x8a0] sm:$0xff]
          %v5546 = vld [vmem:[#allocation10 + $0x8a8] sm:$0xff]
          %v5547 = vld [vmem:[#allocation10 + $0x8b0] sm:$0xff]
          %v5548 = vld [vmem:[#allocation10 + $0x8b8] sm:$0xff]
          %v5549 = vld [vmem:[#allocation10 + $0x8c0] sm:$0xff]
          %v5550 = vld [vmem:[#allocation10 + $0x8c8] sm:$0xff]
          %v5551 = vld [vmem:[#allocation10 + $0x8d0] sm:$0xff]
          %v5552 = vld [vmem:[#allocation10 + $0x8d8] sm:$0xff]
          %v5553 = vld [vmem:[#allocation10 + $0x8e0] sm:$0xff]
          %v5554 = vld [vmem:[#allocation10 + $0x8e8] sm:$0xff]
          %v5555 = vld [vmem:[#allocation10 + $0x8f0] sm:$0xff]
          %v5556 = vld [vmem:[#allocation10 + $0x8f8] sm:$0xff]
          %v5557 = vld [vmem:[#allocation10 + $0x900] sm:$0xff]
          %v5558 = vld [vmem:[#allocation10 + $0x908] sm:$0xff]
          %v5559 = vld [vmem:[#allocation10 + $0x910] sm:$0xff]
          %v5560 = vld [vmem:[#allocation10 + $0x918] sm:$0xff]
          %v5561 = vld [vmem:[#allocation10 + $0x920] sm:$0xff]
          %v5562 = vld [vmem:[#allocation10 + $0x928] sm:$0xff]
          %v5563 = vld [vmem:[#allocation10 + $0x930] sm:$0xff]
          %v5564 = vld [vmem:[#allocation10 + $0x938] sm:$0xff]
          %v5565 = vld [vmem:[#allocation10 + $0x940] sm:$0xff]
          %v5566 = vld [vmem:[#allocation10 + $0x948] sm:$0xff]
          %v5567 = vld [vmem:[#allocation10 + $0x950] sm:$0xff]
          %v5568 = vld [vmem:[#allocation10 + $0x958] sm:$0xff]
          %v5569 = vld [vmem:[#allocation10 + $0x960] sm:$0xff]
          %v5570 = vld [vmem:[#allocation10 + $0x968] sm:$0xff]
          %v5571 = vld [vmem:[#allocation10 + $0x970] sm:$0xff]
          %v5572 = vld [vmem:[#allocation10 + $0x978] sm:$0xff]
          %v5573 = vld [vmem:[#allocation10 + $0x980] sm:$0xff]
          %v5574 = vld [vmem:[#allocation10 + $0x988] sm:$0xff]
          %v5575 = vld [vmem:[#allocation10 + $0x990] sm:$0xff]
          %v5576 = vld [vmem:[#allocation10 + $0x998] sm:$0xff]
          %v5577 = vld [vmem:[#allocation10 + $0x9a0] sm:$0xff]
          %v5578 = vld [vmem:[#allocation10 + $0x9a8] sm:$0xff]
          %v5579 = vld [vmem:[#allocation10 + $0x9b0] sm:$0xff]
          %v5580 = vld [vmem:[#allocation10 + $0x9b8] sm:$0xff]
          %v5581 = vld [vmem:[#allocation10 + $0x9c0] sm:$0xff]
          %v5582 = vld [vmem:[#allocation10 + $0x9c8] sm:$0xff]
          %v5583 = vld [vmem:[#allocation10 + $0x9d0] sm:$0xff]
          %v5584 = vld [vmem:[#allocation10 + $0x9d8] sm:$0xff]
          %v5585 = vld [vmem:[#allocation10 + $0x9e0] sm:$0xff]
          %v5586 = vld [vmem:[#allocation10 + $0x9e8] sm:$0xff]
          %v5587 = vld [vmem:[#allocation10 + $0x9f0] sm:$0xff]
          %v5588 = vld [vmem:[#allocation10 + $0x9f8] sm:$0xff]
          %v5589 = vld [vmem:[#allocation10 + $0xa00] sm:$0xff]
          %v5590 = vld [vmem:[#allocation10 + $0xa08] sm:$0xff]
          %v5591 = vld [vmem:[#allocation10 + $0xa10] sm:$0xff]
          %v5592 = vld [vmem:[#allocation10 + $0xa18] sm:$0xff]
          %v5593 = vld [vmem:[#allocation10 + $0xa20] sm:$0xff]
          %v5594 = vld [vmem:[#allocation10 + $0xa28] sm:$0xff]
          %v5595 = vld [vmem:[#allocation10 + $0xa30] sm:$0xff]
          %v5596 = vld [vmem:[#allocation10 + $0xa38] sm:$0xff]
          %v5597 = vld [vmem:[#allocation10 + $0xa40] sm:$0xff]
          %v5598 = vld [vmem:[#allocation10 + $0xa48] sm:$0xff]
          %v5599 = vld [vmem:[#allocation10 + $0xa50] sm:$0xff]
          %v5600 = vld [vmem:[#allocation10 + $0xa58] sm:$0xff]
          %v5601 = vld [vmem:[#allocation10 + $0xa60] sm:$0xff]
          %v5602 = vld [vmem:[#allocation10 + $0xa68] sm:$0xff]
          %v5603 = vld [vmem:[#allocation10 + $0xa70] sm:$0xff]
          %v5604 = vld [vmem:[#allocation10 + $0xa78] sm:$0xff]
          %v5605 = vld [vmem:[#allocation10 + $0xa80] sm:$0xff]
          %v5606 = vld [vmem:[#allocation10 + $0xa88] sm:$0xff]
          %v5607 = vld [vmem:[#allocation10 + $0xa90] sm:$0xff]
          %v5608 = vld [vmem:[#allocation10 + $0xa98] sm:$0xff]
          %v5609 = vld [vmem:[#allocation10 + $0xaa0] sm:$0xff]
          %v5610 = vld [vmem:[#allocation10 + $0xaa8] sm:$0xff]
          %v5611 = vld [vmem:[#allocation10 + $0xab0] sm:$0xff]
          %v5612 = vld [vmem:[#allocation10 + $0xab8] sm:$0xff]
          %v5613 = vld [vmem:[#allocation10 + $0xac0] sm:$0xff]
          %v5614 = vld [vmem:[#allocation10 + $0xac8] sm:$0xff]
          %v5615 = vld [vmem:[#allocation10 + $0xad0] sm:$0xff]
          %v5616 = vld [vmem:[#allocation10 + $0xad8] sm:$0xff]
          %v5617 = vld [vmem:[#allocation10 + $0xae0] sm:$0xff]
          %v5618 = vld [vmem:[#allocation10 + $0xae8] sm:$0xff]
          %v5619 = vld [vmem:[#allocation10 + $0xaf0] sm:$0xff]
          %v5620 = vld [vmem:[#allocation10 + $0xaf8] sm:$0xff]
          %v5621 = vld [vmem:[#allocation10 + $0xb00] sm:$0xff]
          %v5622 = vld [vmem:[#allocation10 + $0xb08] sm:$0xff]
          %v5623 = vld [vmem:[#allocation10 + $0xb10] sm:$0xff]
          %v5624 = vld [vmem:[#allocation10 + $0xb18] sm:$0xff]
          %v5625 = vld [vmem:[#allocation10 + $0xb20] sm:$0xff]
          %v5626 = vld [vmem:[#allocation10 + $0xb28] sm:$0xff]
          %v5627 = vld [vmem:[#allocation10 + $0xb30] sm:$0xff]
          %v5628 = vld [vmem:[#allocation10 + $0xb38] sm:$0xff]
          %v5629 = vld [vmem:[#allocation10 + $0xb40] sm:$0xff]
          %v5630 = vld [vmem:[#allocation10 + $0xb48] sm:$0xff]
          %v5631 = vld [vmem:[#allocation10 + $0xb50] sm:$0xff]
          %v5632 = vld [vmem:[#allocation10 + $0xb58] sm:$0xff]
          %v5633 = vld [vmem:[#allocation10 + $0xb60] sm:$0xff]
          %v5634 = vld [vmem:[#allocation10 + $0xb68] sm:$0xff]
          %v5635 = vld [vmem:[#allocation10 + $0xb70] sm:$0xff]
          %v5636 = vld [vmem:[#allocation10 + $0xb78] sm:$0xff]
          %v5637 = vld [vmem:[#allocation10 + $0xb80] sm:$0xff]
          %v5638 = vld [vmem:[#allocation10 + $0xb88] sm:$0xff]
          %v5639 = vld [vmem:[#allocation10 + $0xb90] sm:$0xff]
          %v5640 = vld [vmem:[#allocation10 + $0xb98] sm:$0xff]
          %v5641 = vld [vmem:[#allocation10 + $0xba0] sm:$0xff]
          %v5642 = vld [vmem:[#allocation10 + $0xba8] sm:$0xff]
          %v5643 = vld [vmem:[#allocation10 + $0xbb0] sm:$0xff]
          %v5644 = vld [vmem:[#allocation10 + $0xbb8] sm:$0xff]
          %v5645 = vld [vmem:[#allocation10 + $0xbc0] sm:$0xff]
          %v5646 = vld [vmem:[#allocation10 + $0xbc8] sm:$0xff]
          %v5647 = vld [vmem:[#allocation10 + $0xbd0] sm:$0xff]
          %v5648 = vld [vmem:[#allocation10 + $0xbd8] sm:$0xff]
          %v5649 = vld [vmem:[#allocation10 + $0xbe0] sm:$0xff]
          %v5650 = vld [vmem:[#allocation10 + $0xbe8] sm:$0xff]
          %v5651 = vld [vmem:[#allocation10 + $0xbf0] sm:$0xff]
          %v5652 = vld [vmem:[#allocation10 + $0xbf8] sm:$0xff]
          %v5653 = vld [vmem:[#allocation10 + $0xc00] sm:$0xff]
          %v5654 = vld [vmem:[#allocation10 + $0xc08] sm:$0xff]
          %v5655 = vld [vmem:[#allocation10 + $0xc10] sm:$0xff]
          %v5656 = vld [vmem:[#allocation10 + $0xc18] sm:$0xff]
          %v5657 = vld [vmem:[#allocation10 + $0xc20] sm:$0xff]
          %v5658 = vld [vmem:[#allocation10 + $0xc28] sm:$0xff]
          %v5659 = vld [vmem:[#allocation10 + $0xc30] sm:$0xff]
          %v5660 = vld [vmem:[#allocation10 + $0xc38] sm:$0xff]
          %v5661 = vld [vmem:[#allocation10 + $0xc40] sm:$0xff]
          %v5662 = vld [vmem:[#allocation10 + $0xc48] sm:$0xff]
          %v5663 = vld [vmem:[#allocation10 + $0xc50] sm:$0xff]
          %v5664 = vld [vmem:[#allocation10 + $0xc58] sm:$0xff]
          %v5665 = vld [vmem:[#allocation10 + $0xc60] sm:$0xff]
          %v5666 = vld [vmem:[#allocation10 + $0xc68] sm:$0xff]
          %v5667 = vld [vmem:[#allocation10 + $0xc70] sm:$0xff]
          %v5668 = vld [vmem:[#allocation10 + $0xc78] sm:$0xff]
          %v5669 = vld [vmem:[#allocation10 + $0xc80] sm:$0xff]
          %v5670 = vld [vmem:[#allocation10 + $0xc88] sm:$0xff]
          %v5671 = vld [vmem:[#allocation10 + $0xc90] sm:$0xff]
          %v5672 = vld [vmem:[#allocation10 + $0xc98] sm:$0xff]
          %v5673 = vld [vmem:[#allocation10 + $0xca0] sm:$0xff]
          %v5674 = vld [vmem:[#allocation10 + $0xca8] sm:$0xff]
          %v5675 = vld [vmem:[#allocation10 + $0xcb0] sm:$0xff]
          %v5676 = vld [vmem:[#allocation10 + $0xcb8] sm:$0xff]
          %v5677 = vld [vmem:[#allocation10 + $0xcc0] sm:$0xff]
          %v5678 = vld [vmem:[#allocation10 + $0xcc8] sm:$0xff]
          %v5679 = vld [vmem:[#allocation10 + $0xcd0] sm:$0xff]
          %v5680 = vld [vmem:[#allocation10 + $0xcd8] sm:$0xff]
          %v5681 = vld [vmem:[#allocation10 + $0xce0] sm:$0xff]
          %v5682 = vld [vmem:[#allocation10 + $0xce8] sm:$0xff]
          %v5683 = vld [vmem:[#allocation10 + $0xcf0] sm:$0xff]
          %v5684 = vld [vmem:[#allocation10 + $0xcf8] sm:$0xff]
          %v5685 = vld [vmem:[#allocation10 + $0xd00] sm:$0xff]
          %v5686 = vld [vmem:[#allocation10 + $0xd08] sm:$0xff]
          %v5687 = vld [vmem:[#allocation10 + $0xd10] sm:$0xff]
          %v5688 = vld [vmem:[#allocation10 + $0xd18] sm:$0xff]
          %v5689 = vld [vmem:[#allocation10 + $0xd20] sm:$0xff]
          %v5690 = vld [vmem:[#allocation10 + $0xd28] sm:$0xff]
          %v5691 = vld [vmem:[#allocation10 + $0xd30] sm:$0xff]
          %v5692 = vld [vmem:[#allocation10 + $0xd38] sm:$0xff]
          %v5693 = vld [vmem:[#allocation10 + $0xd40] sm:$0xff]
          %v5694 = vld [vmem:[#allocation10 + $0xd48] sm:$0xff]
          %v5695 = vld [vmem:[#allocation10 + $0xd50] sm:$0xff]
          %v5696 = vld [vmem:[#allocation10 + $0xd58] sm:$0xff]
          %v5697 = vld [vmem:[#allocation10 + $0xd60] sm:$0xff]
          %v5698 = vld [vmem:[#allocation10 + $0xd68] sm:$0xff]
          %v5699 = vld [vmem:[#allocation10 + $0xd70] sm:$0xff]
          %v5700 = vld [vmem:[#allocation10 + $0xd78] sm:$0xff]
          %v5701 = vld [vmem:[#allocation10 + $0xd80] sm:$0xff]
          %v5702 = vld [vmem:[#allocation10 + $0xd88] sm:$0xff]
          %v5703 = vld [vmem:[#allocation10 + $0xd90] sm:$0xff]
          %v5704 = vld [vmem:[#allocation10 + $0xd98] sm:$0xff]
          %v5705 = vld [vmem:[#allocation10 + $0xda0] sm:$0xff]
          %v5706 = vld [vmem:[#allocation10 + $0xda8] sm:$0xff]
          %v5707 = vld [vmem:[#allocation10 + $0xdb0] sm:$0xff]
          %v5708 = vld [vmem:[#allocation10 + $0xdb8] sm:$0xff]
          %v5709 = vld [vmem:[#allocation10 + $0xdc0] sm:$0xff]
          %v5710 = vld [vmem:[#allocation10 + $0xdc8] sm:$0xff]
          %v5711 = vld [vmem:[#allocation10 + $0xdd0] sm:$0xff]
          %v5712 = vld [vmem:[#allocation10 + $0xdd8] sm:$0xff]
          %v5713 = vld [vmem:[#allocation10 + $0xde0] sm:$0xff]
          %v5714 = vld [vmem:[#allocation10 + $0xde8] sm:$0xff]
          %v5715 = vld [vmem:[#allocation10 + $0xdf0] sm:$0xff]
          %v5716 = vld [vmem:[#allocation10 + $0xdf8] sm:$0xff]
          %v5717 = vld [vmem:[#allocation10 + $0xe00] sm:$0xff]
          %v5718 = vld [vmem:[#allocation10 + $0xe08] sm:$0xff]
          %v5719 = vld [vmem:[#allocation10 + $0xe10] sm:$0xff]
          %v5720 = vld [vmem:[#allocation10 + $0xe18] sm:$0xff]
          %v5721 = vld [vmem:[#allocation10 + $0xe20] sm:$0xff]
          %v5722 = vld [vmem:[#allocation10 + $0xe28] sm:$0xff]
          %v5723 = vld [vmem:[#allocation10 + $0xe30] sm:$0xff]
          %v5724 = vld [vmem:[#allocation10 + $0xe38] sm:$0xff]
          %v5725 = vld [vmem:[#allocation10 + $0xe40] sm:$0xff]
          %v5726 = vld [vmem:[#allocation10 + $0xe48] sm:$0xff]
          %v5727 = vld [vmem:[#allocation10 + $0xe50] sm:$0xff]
          %v5728 = vld [vmem:[#allocation10 + $0xe58] sm:$0xff]
          %v5729 = vld [vmem:[#allocation10 + $0xe60] sm:$0xff]
          %v5730 = vld [vmem:[#allocation10 + $0xe68] sm:$0xff]
          %v5731 = vld [vmem:[#allocation10 + $0xe70] sm:$0xff]
          %v5732 = vld [vmem:[#allocation10 + $0xe78] sm:$0xff]
          %v5733 = vld [vmem:[#allocation10 + $0xe80] sm:$0xff]
          %v5734 = vld [vmem:[#allocation10 + $0xe88] sm:$0xff]
          %v5735 = vld [vmem:[#allocation10 + $0xe90] sm:$0xff]
          %v5736 = vld [vmem:[#allocation10 + $0xe98] sm:$0xff]
          %v5737 = vld [vmem:[#allocation10 + $0xea0] sm:$0xff]
          %v5738 = vld [vmem:[#allocation10 + $0xea8] sm:$0xff]
          %v5739 = vld [vmem:[#allocation10 + $0xeb0] sm:$0xff]
          %v5740 = vld [vmem:[#allocation10 + $0xeb8] sm:$0xff]
          %v5741 = vld [vmem:[#allocation10 + $0xec0] sm:$0xff]
          %v5742 = vld [vmem:[#allocation10 + $0xec8] sm:$0xff]
          %v5743 = vld [vmem:[#allocation10 + $0xed0] sm:$0xff]
          %v5744 = vld [vmem:[#allocation10 + $0xed8] sm:$0xff]
          %v5745 = vld [vmem:[#allocation10 + $0xee0] sm:$0xff]
          %v5746 = vld [vmem:[#allocation10 + $0xee8] sm:$0xff]
          %v5747 = vld [vmem:[#allocation10 + $0xef0] sm:$0xff]
          %v5748 = vld [vmem:[#allocation10 + $0xef8] sm:$0xff]
          %v5749 = vld [vmem:[#allocation10 + $0xf00] sm:$0xff]
          %v5750 = vld [vmem:[#allocation10 + $0xf08] sm:$0xff]
          %v5751 = vld [vmem:[#allocation10 + $0xf10] sm:$0xff]
          %v5752 = vld [vmem:[#allocation10 + $0xf18] sm:$0xff]
          %v5753 = vld [vmem:[#allocation10 + $0xf20] sm:$0xff]
          %v5754 = vld [vmem:[#allocation10 + $0xf28] sm:$0xff]
          %v5755 = vld [vmem:[#allocation10 + $0xf30] sm:$0xff]
          %v5756 = vld [vmem:[#allocation10 + $0xf38] sm:$0xff]
          %v5757 = vld [vmem:[#allocation10 + $0xf40] sm:$0xff]
          %v5758 = vld [vmem:[#allocation10 + $0xf48] sm:$0xff]
          %v5759 = vld [vmem:[#allocation10 + $0xf50] sm:$0xff]
          %v5760 = vld [vmem:[#allocation10 + $0xf58] sm:$0xff]
          %v5761 = vld [vmem:[#allocation10 + $0xf60] sm:$0xff]
          %v5762 = vld [vmem:[#allocation10 + $0xf68] sm:$0xff]
          %v5763 = vld [vmem:[#allocation10 + $0xf70] sm:$0xff]
          %v5764 = vld [vmem:[#allocation10 + $0xf78] sm:$0xff]
          %v5765 = vld [vmem:[#allocation10 + $0xf80] sm:$0xff]
          %v5766 = vld [vmem:[#allocation10 + $0xf88] sm:$0xff]
          %v5767 = vld [vmem:[#allocation10 + $0xf90] sm:$0xff]
          %v5768 = vld [vmem:[#allocation10 + $0xf98] sm:$0xff]
          %v5769 = vld [vmem:[#allocation10 + $0xfa0] sm:$0xff]
          %v5770 = vld [vmem:[#allocation10 + $0xfa8] sm:$0xff]
          %v5771 = vld [vmem:[#allocation10 + $0xfb0] sm:$0xff]
          %v5772 = vld [vmem:[#allocation10 + $0xfb8] sm:$0xff]
          %v5773 = vld [vmem:[#allocation10 + $0xfc0] sm:$0xff]
          %v5774 = vld [vmem:[#allocation10 + $0xfc8] sm:$0xff]
          %v5775 = vld [vmem:[#allocation10 + $0xfd0] sm:$0xff]
          %v5776 = vld [vmem:[#allocation10 + $0xfd8] sm:$0xff]
          %v5777 = vld [vmem:[#allocation10 + $0xfe0] sm:$0xff]
          %v5778 = vld [vmem:[#allocation10 + $0xfe8] sm:$0xff]
          %v5779 = vld [vmem:[#allocation10 + $0xff0] sm:$0xff]
          %v5780 = vld [vmem:[#allocation10 + $0xff8] sm:$0xff]
          %v5781 = vld [vmem:[#allocation11] sm:$0xff]
          %v5782 = vld [vmem:[#allocation11 + $0x8] sm:$0xff]
          %v5785 = vlaneseq
          %v5786 = vshrl.u32 %v5785, 7
          %v5787 = vsub.s32 0, %v5786
          %v5788 = vrot.slane %v5781, %v5787
          %v5789 = vlaneseq
          %v5790 = vshrl.u32 %v5789, 7
          %v5791 = vsub.s32 1, %v5790
          %v5792 = vrot.slane %v5781, %v5791
          %v5793 = vlaneseq
          %v5794 = vshrl.u32 %v5793, 7
          %v5795 = vsub.s32 2, %v5794
          %v5796 = vrot.slane %v5781, %v5795
          %v5797 = vlaneseq
          %v5798 = vshrl.u32 %v5797, 7
          %v5799 = vsub.s32 3, %v5798
          %v5800 = vrot.slane %v5781, %v5799
          %v5801 = vlaneseq
          %v5802 = vshrl.u32 %v5801, 7
          %v5803 = vsub.s32 4, %v5802
          %v5804 = vrot.slane %v5781, %v5803
          %v5805 = vlaneseq
          %v5806 = vshrl.u32 %v5805, 7
          %v5807 = vsub.s32 5, %v5806
          %v5808 = vrot.slane %v5781, %v5807
          %v5809 = vlaneseq
          %v5810 = vshrl.u32 %v5809, 7
          %v5811 = vsub.s32 6, %v5810
          %v5812 = vrot.slane %v5781, %v5811
          %v5813 = vlaneseq
          %v5814 = vshrl.u32 %v5813, 7
          %v5815 = vsub.s32 7, %v5814
          %v5816 = vrot.slane %v5781, %v5815
          %v5817 = vlaneseq
          %v5818 = vshrl.u32 %v5817, 7
          %v5819 = vsub.s32 0, %v5818
          %v5820 = vrot.slane %v5782, %v5819
          %v5821 = vlaneseq
          %v5822 = vshrl.u32 %v5821, 7
          %v5823 = vsub.s32 1, %v5822
          %v5824 = vrot.slane %v5782, %v5823
          %v5825 = vlaneseq
          %v5826 = vshrl.u32 %v5825, 7
          %v5827 = vsub.s32 2, %v5826
          %v5828 = vrot.slane %v5782, %v5827
          %v5829 = vlaneseq
          %v5830 = vshrl.u32 %v5829, 7
          %v5831 = vsub.s32 3, %v5830
          %v5832 = vrot.slane %v5782, %v5831
          %v5833 = vlaneseq
          %v5834 = vshrl.u32 %v5833, 7
          %v5835 = vsub.s32 4, %v5834
          %v5836 = vrot.slane %v5782, %v5835
          %v5837 = vlaneseq
          %v5838 = vshrl.u32 %v5837, 7
          %v5839 = vsub.s32 5, %v5838
          %v5840 = vrot.slane %v5782, %v5839
          %v5841 = vlaneseq
          %v5842 = vshrl.u32 %v5841, 7
          %v5843 = vsub.s32 6, %v5842
          %v5844 = vrot.slane %v5782, %v5843
          %v5845 = vlaneseq
          %v5846 = vshrl.u32 %v5845, 7
          %v5847 = vsub.s32 7, %v5846
          %v5848 = vrot.slane %v5782, %v5847
          %v6377 = vunpack.c.l.b16 %v5269
          %v6378 = vunpack.c.h.b16 %v5269
          %v6379 = vunpack.c.l.b16 %v5270
          %v6380 = vunpack.c.h.b16 %v5270
          %v6381 = vunpack.c.l.b16 %v5271
          %v6382 = vunpack.c.h.b16 %v5271
          %v6383 = vunpack.c.l.b16 %v5272
          %v6384 = vunpack.c.h.b16 %v5272
          %v6385 = vunpack.c.l.b16 %v5273
          %v6386 = vunpack.c.h.b16 %v5273
          %v6387 = vunpack.c.l.b16 %v5274
          %v6388 = vunpack.c.h.b16 %v5274
          %v6389 = vunpack.c.l.b16 %v5275
          %v6390 = vunpack.c.h.b16 %v5275
          %v6391 = vunpack.c.l.b16 %v5276
          %v6392 = vunpack.c.h.b16 %v5276
          %v6393 = vunpack.c.l.b16 %v5277
          %v6394 = vunpack.c.h.b16 %v5277
          %v6395 = vunpack.c.l.b16 %v5278
          %v6396 = vunpack.c.h.b16 %v5278
          %v6397 = vunpack.c.l.b16 %v5279
          %v6398 = vunpack.c.h.b16 %v5279
          %v6399 = vunpack.c.l.b16 %v5280
          %v6400 = vunpack.c.h.b16 %v5280
          %v6401 = vunpack.c.l.b16 %v5281
          %v6402 = vunpack.c.h.b16 %v5281
          %v6403 = vunpack.c.l.b16 %v5282
          %v6404 = vunpack.c.h.b16 %v5282
          %v6405 = vunpack.c.l.b16 %v5283
          %v6406 = vunpack.c.h.b16 %v5283
          %v6407 = vunpack.c.l.b16 %v5284
          %v6408 = vunpack.c.h.b16 %v5284
          %v6409 = vunpack.c.l.b16 %v5285
          %v6410 = vunpack.c.h.b16 %v5285
          %v6411 = vunpack.c.l.b16 %v5286
          %v6412 = vunpack.c.h.b16 %v5286
          %v6413 = vunpack.c.l.b16 %v5287
          %v6414 = vunpack.c.h.b16 %v5287
          %v6415 = vunpack.c.l.b16 %v5288
          %v6416 = vunpack.c.h.b16 %v5288
          %v6417 = vunpack.c.l.b16 %v5289
          %v6418 = vunpack.c.h.b16 %v5289
          %v6419 = vunpack.c.l.b16 %v5290
          %v6420 = vunpack.c.h.b16 %v5290
          %v6421 = vunpack.c.l.b16 %v5291
          %v6422 = vunpack.c.h.b16 %v5291
          %v6423 = vunpack.c.l.b16 %v5292
          %v6424 = vunpack.c.h.b16 %v5292
          %v6425 = vunpack.c.l.b16 %v5293
          %v6426 = vunpack.c.h.b16 %v5293
          %v6427 = vunpack.c.l.b16 %v5294
          %v6428 = vunpack.c.h.b16 %v5294
          %v6429 = vunpack.c.l.b16 %v5295
          %v6430 = vunpack.c.h.b16 %v5295
          %v6431 = vunpack.c.l.b16 %v5296
          %v6432 = vunpack.c.h.b16 %v5296
          %v6433 = vunpack.c.l.b16 %v5297
          %v6434 = vunpack.c.h.b16 %v5297
          %v6435 = vunpack.c.l.b16 %v5298
          %v6436 = vunpack.c.h.b16 %v5298
          %v6437 = vunpack.c.l.b16 %v5299
          %v6438 = vunpack.c.h.b16 %v5299
          %v6439 = vunpack.c.l.b16 %v5300
          %v6440 = vunpack.c.h.b16 %v5300
          %v6441 = vunpack.c.l.b16 %v5301
          %v6442 = vunpack.c.h.b16 %v5301
          %v6443 = vunpack.c.l.b16 %v5302
          %v6444 = vunpack.c.h.b16 %v5302
          %v6445 = vunpack.c.l.b16 %v5303
          %v6446 = vunpack.c.h.b16 %v5303
          %v6447 = vunpack.c.l.b16 %v5304
          %v6448 = vunpack.c.h.b16 %v5304
          %v6449 = vunpack.c.l.b16 %v5305
          %v6450 = vunpack.c.h.b16 %v5305
          %v6451 = vunpack.c.l.b16 %v5306
          %v6452 = vunpack.c.h.b16 %v5306
          %v6453 = vunpack.c.l.b16 %v5307
          %v6454 = vunpack.c.h.b16 %v5307
          %v6455 = vunpack.c.l.b16 %v5308
          %v6456 = vunpack.c.h.b16 %v5308
          %v6457 = vunpack.c.l.b16 %v5309
          %v6458 = vunpack.c.h.b16 %v5309
          %v6459 = vunpack.c.l.b16 %v5310
          %v6460 = vunpack.c.h.b16 %v5310
          %v6461 = vunpack.c.l.b16 %v5311
          %v6462 = vunpack.c.h.b16 %v5311
          %v6463 = vunpack.c.l.b16 %v5312
          %v6464 = vunpack.c.h.b16 %v5312
          %v6465 = vunpack.c.l.b16 %v5313
          %v6466 = vunpack.c.h.b16 %v5313
          %v6467 = vunpack.c.l.b16 %v5314
          %v6468 = vunpack.c.h.b16 %v5314
          %v6469 = vunpack.c.l.b16 %v5315
          %v6470 = vunpack.c.h.b16 %v5315
          %v6471 = vunpack.c.l.b16 %v5316
          %v6472 = vunpack.c.h.b16 %v5316
          %v6473 = vunpack.c.l.b16 %v5317
          %v6474 = vunpack.c.h.b16 %v5317
          %v6475 = vunpack.c.l.b16 %v5318
          %v6476 = vunpack.c.h.b16 %v5318
          %v6477 = vunpack.c.l.b16 %v5319
          %v6478 = vunpack.c.h.b16 %v5319
          %v6479 = vunpack.c.l.b16 %v5320
          %v6480 = vunpack.c.h.b16 %v5320
          %v6481 = vunpack.c.l.b16 %v5321
          %v6482 = vunpack.c.h.b16 %v5321
          %v6483 = vunpack.c.l.b16 %v5322
          %v6484 = vunpack.c.h.b16 %v5322
          %v6485 = vunpack.c.l.b16 %v5323
          %v6486 = vunpack.c.h.b16 %v5323
          %v6487 = vunpack.c.l.b16 %v5324
          %v6488 = vunpack.c.h.b16 %v5324
          %v6489 = vunpack.c.l.b16 %v5325
          %v6490 = vunpack.c.h.b16 %v5325
          %v6491 = vunpack.c.l.b16 %v5326
          %v6492 = vunpack.c.h.b16 %v5326
          %v6493 = vunpack.c.l.b16 %v5327
          %v6494 = vunpack.c.h.b16 %v5327
          %v6495 = vunpack.c.l.b16 %v5328
          %v6496 = vunpack.c.h.b16 %v5328
          %v6497 = vunpack.c.l.b16 %v5329
          %v6498 = vunpack.c.h.b16 %v5329
          %v6499 = vunpack.c.l.b16 %v5330
          %v6500 = vunpack.c.h.b16 %v5330
          %v6501 = vunpack.c.l.b16 %v5331
          %v6502 = vunpack.c.h.b16 %v5331
          %v6503 = vunpack.c.l.b16 %v5332
          %v6504 = vunpack.c.h.b16 %v5332
          %v6505 = vunpack.c.l.b16 %v5333
          %v6506 = vunpack.c.h.b16 %v5333
          %v6507 = vunpack.c.l.b16 %v5334
          %v6508 = vunpack.c.h.b16 %v5334
          %v6509 = vunpack.c.l.b16 %v5335
          %v6510 = vunpack.c.h.b16 %v5335
          %v6511 = vunpack.c.l.b16 %v5336
          %v6512 = vunpack.c.h.b16 %v5336
          %v6513 = vunpack.c.l.b16 %v5337
          %v6514 = vunpack.c.h.b16 %v5337
          %v6515 = vunpack.c.l.b16 %v5338
          %v6516 = vunpack.c.h.b16 %v5338
          %v6517 = vunpack.c.l.b16 %v5339
          %v6518 = vunpack.c.h.b16 %v5339
          %v6519 = vunpack.c.l.b16 %v5340
          %v6520 = vunpack.c.h.b16 %v5340
          %v6521 = vunpack.c.l.b16 %v5341
          %v6522 = vunpack.c.h.b16 %v5341
          %v6523 = vunpack.c.l.b16 %v5342
          %v6524 = vunpack.c.h.b16 %v5342
          %v6525 = vunpack.c.l.b16 %v5343
          %v6526 = vunpack.c.h.b16 %v5343
          %v6527 = vunpack.c.l.b16 %v5344
          %v6528 = vunpack.c.h.b16 %v5344
          %v6529 = vunpack.c.l.b16 %v5345
          %v6530 = vunpack.c.h.b16 %v5345
          %v6531 = vunpack.c.l.b16 %v5346
          %v6532 = vunpack.c.h.b16 %v5346
          %v6533 = vunpack.c.l.b16 %v5347
          %v6534 = vunpack.c.h.b16 %v5347
          %v6535 = vunpack.c.l.b16 %v5348
          %v6536 = vunpack.c.h.b16 %v5348
          %v6537 = vunpack.c.l.b16 %v5349
          %v6538 = vunpack.c.h.b16 %v5349
          %v6539 = vunpack.c.l.b16 %v5350
          %v6540 = vunpack.c.h.b16 %v5350
          %v6541 = vunpack.c.l.b16 %v5351
          %v6542 = vunpack.c.h.b16 %v5351
          %v6543 = vunpack.c.l.b16 %v5352
          %v6544 = vunpack.c.h.b16 %v5352
          %v6545 = vunpack.c.l.b16 %v5353
          %v6546 = vunpack.c.h.b16 %v5353
          %v6547 = vunpack.c.l.b16 %v5354
          %v6548 = vunpack.c.h.b16 %v5354
          %v6549 = vunpack.c.l.b16 %v5355
          %v6550 = vunpack.c.h.b16 %v5355
          %v6551 = vunpack.c.l.b16 %v5356
          %v6552 = vunpack.c.h.b16 %v5356
          %v6553 = vunpack.c.l.b16 %v5357
          %v6554 = vunpack.c.h.b16 %v5357
          %v6555 = vunpack.c.l.b16 %v5358
          %v6556 = vunpack.c.h.b16 %v5358
          %v6557 = vunpack.c.l.b16 %v5359
          %v6558 = vunpack.c.h.b16 %v5359
          %v6559 = vunpack.c.l.b16 %v5360
          %v6560 = vunpack.c.h.b16 %v5360
          %v6561 = vunpack.c.l.b16 %v5361
          %v6562 = vunpack.c.h.b16 %v5361
          %v6563 = vunpack.c.l.b16 %v5362
          %v6564 = vunpack.c.h.b16 %v5362
          %v6565 = vunpack.c.l.b16 %v5363
          %v6566 = vunpack.c.h.b16 %v5363
          %v6567 = vunpack.c.l.b16 %v5364
          %v6568 = vunpack.c.h.b16 %v5364
          %v6569 = vunpack.c.l.b16 %v5365
          %v6570 = vunpack.c.h.b16 %v5365
          %v6571 = vunpack.c.l.b16 %v5366
          %v6572 = vunpack.c.h.b16 %v5366
          %v6573 = vunpack.c.l.b16 %v5367
          %v6574 = vunpack.c.h.b16 %v5367
          %v6575 = vunpack.c.l.b16 %v5368
          %v6576 = vunpack.c.h.b16 %v5368
          %v6577 = vunpack.c.l.b16 %v5369
          %v6578 = vunpack.c.h.b16 %v5369
          %v6579 = vunpack.c.l.b16 %v5370
          %v6580 = vunpack.c.h.b16 %v5370
          %v6581 = vunpack.c.l.b16 %v5371
          %v6582 = vunpack.c.h.b16 %v5371
          %v6583 = vunpack.c.l.b16 %v5372
          %v6584 = vunpack.c.h.b16 %v5372
          %v6585 = vunpack.c.l.b16 %v5373
          %v6586 = vunpack.c.h.b16 %v5373
          %v6587 = vunpack.c.l.b16 %v5374
          %v6588 = vunpack.c.h.b16 %v5374
          %v6589 = vunpack.c.l.b16 %v5375
          %v6590 = vunpack.c.h.b16 %v5375
          %v6591 = vunpack.c.l.b16 %v5376
          %v6592 = vunpack.c.h.b16 %v5376
          %v6593 = vunpack.c.l.b16 %v5377
          %v6594 = vunpack.c.h.b16 %v5377
          %v6595 = vunpack.c.l.b16 %v5378
          %v6596 = vunpack.c.h.b16 %v5378
          %v6597 = vunpack.c.l.b16 %v5379
          %v6598 = vunpack.c.h.b16 %v5379
          %v6599 = vunpack.c.l.b16 %v5380
          %v6600 = vunpack.c.h.b16 %v5380
          %v6601 = vunpack.c.l.b16 %v5381
          %v6602 = vunpack.c.h.b16 %v5381
          %v6603 = vunpack.c.l.b16 %v5382
          %v6604 = vunpack.c.h.b16 %v5382
          %v6605 = vunpack.c.l.b16 %v5383
          %v6606 = vunpack.c.h.b16 %v5383
          %v6607 = vunpack.c.l.b16 %v5384
          %v6608 = vunpack.c.h.b16 %v5384
          %v6609 = vunpack.c.l.b16 %v5385
          %v6610 = vunpack.c.h.b16 %v5385
          %v6611 = vunpack.c.l.b16 %v5386
          %v6612 = vunpack.c.h.b16 %v5386
          %v6613 = vunpack.c.l.b16 %v5387
          %v6614 = vunpack.c.h.b16 %v5387
          %v6615 = vunpack.c.l.b16 %v5388
          %v6616 = vunpack.c.h.b16 %v5388
          %v6617 = vunpack.c.l.b16 %v5389
          %v6618 = vunpack.c.h.b16 %v5389
          %v6619 = vunpack.c.l.b16 %v5390
          %v6620 = vunpack.c.h.b16 %v5390
          %v6621 = vunpack.c.l.b16 %v5391
          %v6622 = vunpack.c.h.b16 %v5391
          %v6623 = vunpack.c.l.b16 %v5392
          %v6624 = vunpack.c.h.b16 %v5392
          %v6625 = vunpack.c.l.b16 %v5393
          %v6626 = vunpack.c.h.b16 %v5393
          %v6627 = vunpack.c.l.b16 %v5394
          %v6628 = vunpack.c.h.b16 %v5394
          %v6629 = vunpack.c.l.b16 %v5395
          %v6630 = vunpack.c.h.b16 %v5395
          %v6631 = vunpack.c.l.b16 %v5396
          %v6632 = vunpack.c.h.b16 %v5396
          %v6633 = vunpack.c.l.b16 %v5397
          %v6634 = vunpack.c.h.b16 %v5397
          %v6635 = vunpack.c.l.b16 %v5398
          %v6636 = vunpack.c.h.b16 %v5398
          %v6637 = vunpack.c.l.b16 %v5399
          %v6638 = vunpack.c.h.b16 %v5399
          %v6639 = vunpack.c.l.b16 %v5400
          %v6640 = vunpack.c.h.b16 %v5400
          %v6641 = vunpack.c.l.b16 %v5401
          %v6642 = vunpack.c.h.b16 %v5401
          %v6643 = vunpack.c.l.b16 %v5402
          %v6644 = vunpack.c.h.b16 %v5402
          %v6645 = vunpack.c.l.b16 %v5403
          %v6646 = vunpack.c.h.b16 %v5403
          %v6647 = vunpack.c.l.b16 %v5404
          %v6648 = vunpack.c.h.b16 %v5404
          %v6649 = vunpack.c.l.b16 %v5405
          %v6650 = vunpack.c.h.b16 %v5405
          %v6651 = vunpack.c.l.b16 %v5406
          %v6652 = vunpack.c.h.b16 %v5406
          %v6653 = vunpack.c.l.b16 %v5407
          %v6654 = vunpack.c.h.b16 %v5407
          %v6655 = vunpack.c.l.b16 %v5408
          %v6656 = vunpack.c.h.b16 %v5408
          %v6657 = vunpack.c.l.b16 %v5409
          %v6658 = vunpack.c.h.b16 %v5409
          %v6659 = vunpack.c.l.b16 %v5410
          %v6660 = vunpack.c.h.b16 %v5410
          %v6661 = vunpack.c.l.b16 %v5411
          %v6662 = vunpack.c.h.b16 %v5411
          %v6663 = vunpack.c.l.b16 %v5412
          %v6664 = vunpack.c.h.b16 %v5412
          %v6665 = vunpack.c.l.b16 %v5413
          %v6666 = vunpack.c.h.b16 %v5413
          %v6667 = vunpack.c.l.b16 %v5414
          %v6668 = vunpack.c.h.b16 %v5414
          %v6669 = vunpack.c.l.b16 %v5415
          %v6670 = vunpack.c.h.b16 %v5415
          %v6671 = vunpack.c.l.b16 %v5416
          %v6672 = vunpack.c.h.b16 %v5416
          %v6673 = vunpack.c.l.b16 %v5417
          %v6674 = vunpack.c.h.b16 %v5417
          %v6675 = vunpack.c.l.b16 %v5418
          %v6676 = vunpack.c.h.b16 %v5418
          %v6677 = vunpack.c.l.b16 %v5419
          %v6678 = vunpack.c.h.b16 %v5419
          %v6679 = vunpack.c.l.b16 %v5420
          %v6680 = vunpack.c.h.b16 %v5420
          %v6681 = vunpack.c.l.b16 %v5421
          %v6682 = vunpack.c.h.b16 %v5421
          %v6683 = vunpack.c.l.b16 %v5422
          %v6684 = vunpack.c.h.b16 %v5422
          %v6685 = vunpack.c.l.b16 %v5423
          %v6686 = vunpack.c.h.b16 %v5423
          %v6687 = vunpack.c.l.b16 %v5424
          %v6688 = vunpack.c.h.b16 %v5424
          %v6689 = vunpack.c.l.b16 %v5425
          %v6690 = vunpack.c.h.b16 %v5425
          %v6691 = vunpack.c.l.b16 %v5426
          %v6692 = vunpack.c.h.b16 %v5426
          %v6693 = vunpack.c.l.b16 %v5427
          %v6694 = vunpack.c.h.b16 %v5427
          %v6695 = vunpack.c.l.b16 %v5428
          %v6696 = vunpack.c.h.b16 %v5428
          %v6697 = vunpack.c.l.b16 %v5429
          %v6698 = vunpack.c.h.b16 %v5429
          %v6699 = vunpack.c.l.b16 %v5430
          %v6700 = vunpack.c.h.b16 %v5430
          %v6701 = vunpack.c.l.b16 %v5431
          %v6702 = vunpack.c.h.b16 %v5431
          %v6703 = vunpack.c.l.b16 %v5432
          %v6704 = vunpack.c.h.b16 %v5432
          %v6705 = vunpack.c.l.b16 %v5433
          %v6706 = vunpack.c.h.b16 %v5433
          %v6707 = vunpack.c.l.b16 %v5434
          %v6708 = vunpack.c.h.b16 %v5434
          %v6709 = vunpack.c.l.b16 %v5435
          %v6710 = vunpack.c.h.b16 %v5435
          %v6711 = vunpack.c.l.b16 %v5436
          %v6712 = vunpack.c.h.b16 %v5436
          %v6713 = vunpack.c.l.b16 %v5437
          %v6714 = vunpack.c.h.b16 %v5437
          %v6715 = vunpack.c.l.b16 %v5438
          %v6716 = vunpack.c.h.b16 %v5438
          %v6717 = vunpack.c.l.b16 %v5439
          %v6718 = vunpack.c.h.b16 %v5439
          %v6719 = vunpack.c.l.b16 %v5440
          %v6720 = vunpack.c.h.b16 %v5440
          %v6721 = vunpack.c.l.b16 %v5441
          %v6722 = vunpack.c.h.b16 %v5441
          %v6723 = vunpack.c.l.b16 %v5442
          %v6724 = vunpack.c.h.b16 %v5442
          %v6725 = vunpack.c.l.b16 %v5443
          %v6726 = vunpack.c.h.b16 %v5443
          %v6727 = vunpack.c.l.b16 %v5444
          %v6728 = vunpack.c.h.b16 %v5444
          %v6729 = vunpack.c.l.b16 %v5445
          %v6730 = vunpack.c.h.b16 %v5445
          %v6731 = vunpack.c.l.b16 %v5446
          %v6732 = vunpack.c.h.b16 %v5446
          %v6733 = vunpack.c.l.b16 %v5447
          %v6734 = vunpack.c.h.b16 %v5447
          %v6735 = vunpack.c.l.b16 %v5448
          %v6736 = vunpack.c.h.b16 %v5448
          %v6737 = vunpack.c.l.b16 %v5449
          %v6738 = vunpack.c.h.b16 %v5449
          %v6739 = vunpack.c.l.b16 %v5450
          %v6740 = vunpack.c.h.b16 %v5450
          %v6741 = vunpack.c.l.b16 %v5451
          %v6742 = vunpack.c.h.b16 %v5451
          %v6743 = vunpack.c.l.b16 %v5452
          %v6744 = vunpack.c.h.b16 %v5452
          %v6745 = vunpack.c.l.b16 %v5453
          %v6746 = vunpack.c.h.b16 %v5453
          %v6747 = vunpack.c.l.b16 %v5454
          %v6748 = vunpack.c.h.b16 %v5454
          %v6749 = vunpack.c.l.b16 %v5455
          %v6750 = vunpack.c.h.b16 %v5455
          %v6751 = vunpack.c.l.b16 %v5456
          %v6752 = vunpack.c.h.b16 %v5456
          %v6753 = vunpack.c.l.b16 %v5457
          %v6754 = vunpack.c.h.b16 %v5457
          %v6755 = vunpack.c.l.b16 %v5458
          %v6756 = vunpack.c.h.b16 %v5458
          %v6757 = vunpack.c.l.b16 %v5459
          %v6758 = vunpack.c.h.b16 %v5459
          %v6759 = vunpack.c.l.b16 %v5460
          %v6760 = vunpack.c.h.b16 %v5460
          %v6761 = vunpack.c.l.b16 %v5461
          %v6762 = vunpack.c.h.b16 %v5461
          %v6763 = vunpack.c.l.b16 %v5462
          %v6764 = vunpack.c.h.b16 %v5462
          %v6765 = vunpack.c.l.b16 %v5463
          %v6766 = vunpack.c.h.b16 %v5463
          %v6767 = vunpack.c.l.b16 %v5464
          %v6768 = vunpack.c.h.b16 %v5464
          %v6769 = vunpack.c.l.b16 %v5465
          %v6770 = vunpack.c.h.b16 %v5465
          %v6771 = vunpack.c.l.b16 %v5466
          %v6772 = vunpack.c.h.b16 %v5466
          %v6773 = vunpack.c.l.b16 %v5467
          %v6774 = vunpack.c.h.b16 %v5467
          %v6775 = vunpack.c.l.b16 %v5468
          %v6776 = vunpack.c.h.b16 %v5468
          %v6777 = vunpack.c.l.b16 %v5469
          %v6778 = vunpack.c.h.b16 %v5469
          %v6779 = vunpack.c.l.b16 %v5470
          %v6780 = vunpack.c.h.b16 %v5470
          %v6781 = vunpack.c.l.b16 %v5471
          %v6782 = vunpack.c.h.b16 %v5471
          %v6783 = vunpack.c.l.b16 %v5472
          %v6784 = vunpack.c.h.b16 %v5472
          %v6785 = vunpack.c.l.b16 %v5473
          %v6786 = vunpack.c.h.b16 %v5473
          %v6787 = vunpack.c.l.b16 %v5474
          %v6788 = vunpack.c.h.b16 %v5474
          %v6789 = vunpack.c.l.b16 %v5475
          %v6790 = vunpack.c.h.b16 %v5475
          %v6791 = vunpack.c.l.b16 %v5476
          %v6792 = vunpack.c.h.b16 %v5476
          %v6793 = vunpack.c.l.b16 %v5477
          %v6794 = vunpack.c.h.b16 %v5477
          %v6795 = vunpack.c.l.b16 %v5478
          %v6796 = vunpack.c.h.b16 %v5478
          %v6797 = vunpack.c.l.b16 %v5479
          %v6798 = vunpack.c.h.b16 %v5479
          %v6799 = vunpack.c.l.b16 %v5480
          %v6800 = vunpack.c.h.b16 %v5480
          %v6801 = vunpack.c.l.b16 %v5481
          %v6802 = vunpack.c.h.b16 %v5481
          %v6803 = vunpack.c.l.b16 %v5482
          %v6804 = vunpack.c.h.b16 %v5482
          %v6805 = vunpack.c.l.b16 %v5483
          %v6806 = vunpack.c.h.b16 %v5483
          %v6807 = vunpack.c.l.b16 %v5484
          %v6808 = vunpack.c.h.b16 %v5484
          %v6809 = vunpack.c.l.b16 %v5485
          %v6810 = vunpack.c.h.b16 %v5485
          %v6811 = vunpack.c.l.b16 %v5486
          %v6812 = vunpack.c.h.b16 %v5486
          %v6813 = vunpack.c.l.b16 %v5487
          %v6814 = vunpack.c.h.b16 %v5487
          %v6815 = vunpack.c.l.b16 %v5488
          %v6816 = vunpack.c.h.b16 %v5488
          %v6817 = vunpack.c.l.b16 %v5489
          %v6818 = vunpack.c.h.b16 %v5489
          %v6819 = vunpack.c.l.b16 %v5490
          %v6820 = vunpack.c.h.b16 %v5490
          %v6821 = vunpack.c.l.b16 %v5491
          %v6822 = vunpack.c.h.b16 %v5491
          %v6823 = vunpack.c.l.b16 %v5492
          %v6824 = vunpack.c.h.b16 %v5492
          %v6825 = vunpack.c.l.b16 %v5493
          %v6826 = vunpack.c.h.b16 %v5493
          %v6827 = vunpack.c.l.b16 %v5494
          %v6828 = vunpack.c.h.b16 %v5494
          %v6829 = vunpack.c.l.b16 %v5495
          %v6830 = vunpack.c.h.b16 %v5495
          %v6831 = vunpack.c.l.b16 %v5496
          %v6832 = vunpack.c.h.b16 %v5496
          %v6833 = vunpack.c.l.b16 %v5497
          %v6834 = vunpack.c.h.b16 %v5497
          %v6835 = vunpack.c.l.b16 %v5498
          %v6836 = vunpack.c.h.b16 %v5498
          %v6837 = vunpack.c.l.b16 %v5499
          %v6838 = vunpack.c.h.b16 %v5499
          %v6839 = vunpack.c.l.b16 %v5500
          %v6840 = vunpack.c.h.b16 %v5500
          %v6841 = vunpack.c.l.b16 %v5501
          %v6842 = vunpack.c.h.b16 %v5501
          %v6843 = vunpack.c.l.b16 %v5502
          %v6844 = vunpack.c.h.b16 %v5502
          %v6845 = vunpack.c.l.b16 %v5503
          %v6846 = vunpack.c.h.b16 %v5503
          %v6847 = vunpack.c.l.b16 %v5504
          %v6848 = vunpack.c.h.b16 %v5504
          %v6849 = vunpack.c.l.b16 %v5505
          %v6850 = vunpack.c.h.b16 %v5505
          %v6851 = vunpack.c.l.b16 %v5506
          %v6852 = vunpack.c.h.b16 %v5506
          %v6853 = vunpack.c.l.b16 %v5507
          %v6854 = vunpack.c.h.b16 %v5507
          %v6855 = vunpack.c.l.b16 %v5508
          %v6856 = vunpack.c.h.b16 %v5508
          %v6857 = vunpack.c.l.b16 %v5509
          %v6858 = vunpack.c.h.b16 %v5509
          %v6859 = vunpack.c.l.b16 %v5510
          %v6860 = vunpack.c.h.b16 %v5510
          %v6861 = vunpack.c.l.b16 %v5511
          %v6862 = vunpack.c.h.b16 %v5511
          %v6863 = vunpack.c.l.b16 %v5512
          %v6864 = vunpack.c.h.b16 %v5512
          %v6865 = vunpack.c.l.b16 %v5513
          %v6866 = vunpack.c.h.b16 %v5513
          %v6867 = vunpack.c.l.b16 %v5514
          %v6868 = vunpack.c.h.b16 %v5514
          %v6869 = vunpack.c.l.b16 %v5515
          %v6870 = vunpack.c.h.b16 %v5515
          %v6871 = vunpack.c.l.b16 %v5516
          %v6872 = vunpack.c.h.b16 %v5516
          %v6873 = vunpack.c.l.b16 %v5517
          %v6874 = vunpack.c.h.b16 %v5517
          %v6875 = vunpack.c.l.b16 %v5518
          %v6876 = vunpack.c.h.b16 %v5518
          %v6877 = vunpack.c.l.b16 %v5519
          %v6878 = vunpack.c.h.b16 %v5519
          %v6879 = vunpack.c.l.b16 %v5520
          %v6880 = vunpack.c.h.b16 %v5520
          %v6881 = vunpack.c.l.b16 %v5521
          %v6882 = vunpack.c.h.b16 %v5521
          %v6883 = vunpack.c.l.b16 %v5522
          %v6884 = vunpack.c.h.b16 %v5522
          %v6885 = vunpack.c.l.b16 %v5523
          %v6886 = vunpack.c.h.b16 %v5523
          %v6887 = vunpack.c.l.b16 %v5524
          %v6888 = vunpack.c.h.b16 %v5524
          %v6889 = vunpack.c.l.b16 %v5525
          %v6890 = vunpack.c.h.b16 %v5525
          %v6891 = vunpack.c.l.b16 %v5526
          %v6892 = vunpack.c.h.b16 %v5526
          %v6893 = vunpack.c.l.b16 %v5527
          %v6894 = vunpack.c.h.b16 %v5527
          %v6895 = vunpack.c.l.b16 %v5528
          %v6896 = vunpack.c.h.b16 %v5528
          %v6897 = vunpack.c.l.b16 %v5529
          %v6898 = vunpack.c.h.b16 %v5529
          %v6899 = vunpack.c.l.b16 %v5530
          %v6900 = vunpack.c.h.b16 %v5530
          %v6901 = vunpack.c.l.b16 %v5531
          %v6902 = vunpack.c.h.b16 %v5531
          %v6903 = vunpack.c.l.b16 %v5532
          %v6904 = vunpack.c.h.b16 %v5532
          %v6905 = vunpack.c.l.b16 %v5533
          %v6906 = vunpack.c.h.b16 %v5533
          %v6907 = vunpack.c.l.b16 %v5534
          %v6908 = vunpack.c.h.b16 %v5534
          %v6909 = vunpack.c.l.b16 %v5535
          %v6910 = vunpack.c.h.b16 %v5535
          %v6911 = vunpack.c.l.b16 %v5536
          %v6912 = vunpack.c.h.b16 %v5536
          %v6913 = vunpack.c.l.b16 %v5537
          %v6914 = vunpack.c.h.b16 %v5537
          %v6915 = vunpack.c.l.b16 %v5538
          %v6916 = vunpack.c.h.b16 %v5538
          %v6917 = vunpack.c.l.b16 %v5539
          %v6918 = vunpack.c.h.b16 %v5539
          %v6919 = vunpack.c.l.b16 %v5540
          %v6920 = vunpack.c.h.b16 %v5540
          %v6921 = vunpack.c.l.b16 %v5541
          %v6922 = vunpack.c.h.b16 %v5541
          %v6923 = vunpack.c.l.b16 %v5542
          %v6924 = vunpack.c.h.b16 %v5542
          %v6925 = vunpack.c.l.b16 %v5543
          %v6926 = vunpack.c.h.b16 %v5543
          %v6927 = vunpack.c.l.b16 %v5544
          %v6928 = vunpack.c.h.b16 %v5544
          %v6929 = vunpack.c.l.b16 %v5545
          %v6930 = vunpack.c.h.b16 %v5545
          %v6931 = vunpack.c.l.b16 %v5546
          %v6932 = vunpack.c.h.b16 %v5546
          %v6933 = vunpack.c.l.b16 %v5547
          %v6934 = vunpack.c.h.b16 %v5547
          %v6935 = vunpack.c.l.b16 %v5548
          %v6936 = vunpack.c.h.b16 %v5548
          %v6937 = vunpack.c.l.b16 %v5549
          %v6938 = vunpack.c.h.b16 %v5549
          %v6939 = vunpack.c.l.b16 %v5550
          %v6940 = vunpack.c.h.b16 %v5550
          %v6941 = vunpack.c.l.b16 %v5551
          %v6942 = vunpack.c.h.b16 %v5551
          %v6943 = vunpack.c.l.b16 %v5552
          %v6944 = vunpack.c.h.b16 %v5552
          %v6945 = vunpack.c.l.b16 %v5553
          %v6946 = vunpack.c.h.b16 %v5553
          %v6947 = vunpack.c.l.b16 %v5554
          %v6948 = vunpack.c.h.b16 %v5554
          %v6949 = vunpack.c.l.b16 %v5555
          %v6950 = vunpack.c.h.b16 %v5555
          %v6951 = vunpack.c.l.b16 %v5556
          %v6952 = vunpack.c.h.b16 %v5556
          %v6953 = vunpack.c.l.b16 %v5557
          %v6954 = vunpack.c.h.b16 %v5557
          %v6955 = vunpack.c.l.b16 %v5558
          %v6956 = vunpack.c.h.b16 %v5558
          %v6957 = vunpack.c.l.b16 %v5559
          %v6958 = vunpack.c.h.b16 %v5559
          %v6959 = vunpack.c.l.b16 %v5560
          %v6960 = vunpack.c.h.b16 %v5560
          %v6961 = vunpack.c.l.b16 %v5561
          %v6962 = vunpack.c.h.b16 %v5561
          %v6963 = vunpack.c.l.b16 %v5562
          %v6964 = vunpack.c.h.b16 %v5562
          %v6965 = vunpack.c.l.b16 %v5563
          %v6966 = vunpack.c.h.b16 %v5563
          %v6967 = vunpack.c.l.b16 %v5564
          %v6968 = vunpack.c.h.b16 %v5564
          %v6969 = vunpack.c.l.b16 %v5565
          %v6970 = vunpack.c.h.b16 %v5565
          %v6971 = vunpack.c.l.b16 %v5566
          %v6972 = vunpack.c.h.b16 %v5566
          %v6973 = vunpack.c.l.b16 %v5567
          %v6974 = vunpack.c.h.b16 %v5567
          %v6975 = vunpack.c.l.b16 %v5568
          %v6976 = vunpack.c.h.b16 %v5568
          %v6977 = vunpack.c.l.b16 %v5569
          %v6978 = vunpack.c.h.b16 %v5569
          %v6979 = vunpack.c.l.b16 %v5570
          %v6980 = vunpack.c.h.b16 %v5570
          %v6981 = vunpack.c.l.b16 %v5571
          %v6982 = vunpack.c.h.b16 %v5571
          %v6983 = vunpack.c.l.b16 %v5572
          %v6984 = vunpack.c.h.b16 %v5572
          %v6985 = vunpack.c.l.b16 %v5573
          %v6986 = vunpack.c.h.b16 %v5573
          %v6987 = vunpack.c.l.b16 %v5574
          %v6988 = vunpack.c.h.b16 %v5574
          %v6989 = vunpack.c.l.b16 %v5575
          %v6990 = vunpack.c.h.b16 %v5575
          %v6991 = vunpack.c.l.b16 %v5576
          %v6992 = vunpack.c.h.b16 %v5576
          %v6993 = vunpack.c.l.b16 %v5577
          %v6994 = vunpack.c.h.b16 %v5577
          %v6995 = vunpack.c.l.b16 %v5578
          %v6996 = vunpack.c.h.b16 %v5578
          %v6997 = vunpack.c.l.b16 %v5579
          %v6998 = vunpack.c.h.b16 %v5579
          %v6999 = vunpack.c.l.b16 %v5580
          %v7000 = vunpack.c.h.b16 %v5580
          %v7001 = vunpack.c.l.b16 %v5581
          %v7002 = vunpack.c.h.b16 %v5581
          %v7003 = vunpack.c.l.b16 %v5582
          %v7004 = vunpack.c.h.b16 %v5582
          %v7005 = vunpack.c.l.b16 %v5583
          %v7006 = vunpack.c.h.b16 %v5583
          %v7007 = vunpack.c.l.b16 %v5584
          %v7008 = vunpack.c.h.b16 %v5584
          %v7009 = vunpack.c.l.b16 %v5585
          %v7010 = vunpack.c.h.b16 %v5585
          %v7011 = vunpack.c.l.b16 %v5586
          %v7012 = vunpack.c.h.b16 %v5586
          %v7013 = vunpack.c.l.b16 %v5587
          %v7014 = vunpack.c.h.b16 %v5587
          %v7015 = vunpack.c.l.b16 %v5588
          %v7016 = vunpack.c.h.b16 %v5588
          %v7017 = vunpack.c.l.b16 %v5589
          %v7018 = vunpack.c.h.b16 %v5589
          %v7019 = vunpack.c.l.b16 %v5590
          %v7020 = vunpack.c.h.b16 %v5590
          %v7021 = vunpack.c.l.b16 %v5591
          %v7022 = vunpack.c.h.b16 %v5591
          %v7023 = vunpack.c.l.b16 %v5592
          %v7024 = vunpack.c.h.b16 %v5592
          %v7025 = vunpack.c.l.b16 %v5593
          %v7026 = vunpack.c.h.b16 %v5593
          %v7027 = vunpack.c.l.b16 %v5594
          %v7028 = vunpack.c.h.b16 %v5594
          %v7029 = vunpack.c.l.b16 %v5595
          %v7030 = vunpack.c.h.b16 %v5595
          %v7031 = vunpack.c.l.b16 %v5596
          %v7032 = vunpack.c.h.b16 %v5596
          %v7033 = vunpack.c.l.b16 %v5597
          %v7034 = vunpack.c.h.b16 %v5597
          %v7035 = vunpack.c.l.b16 %v5598
          %v7036 = vunpack.c.h.b16 %v5598
          %v7037 = vunpack.c.l.b16 %v5599
          %v7038 = vunpack.c.h.b16 %v5599
          %v7039 = vunpack.c.l.b16 %v5600
          %v7040 = vunpack.c.h.b16 %v5600
          %v7041 = vunpack.c.l.b16 %v5601
          %v7042 = vunpack.c.h.b16 %v5601
          %v7043 = vunpack.c.l.b16 %v5602
          %v7044 = vunpack.c.h.b16 %v5602
          %v7045 = vunpack.c.l.b16 %v5603
          %v7046 = vunpack.c.h.b16 %v5603
          %v7047 = vunpack.c.l.b16 %v5604
          %v7048 = vunpack.c.h.b16 %v5604
          %v7049 = vunpack.c.l.b16 %v5605
          %v7050 = vunpack.c.h.b16 %v5605
          %v7051 = vunpack.c.l.b16 %v5606
          %v7052 = vunpack.c.h.b16 %v5606
          %v7053 = vunpack.c.l.b16 %v5607
          %v7054 = vunpack.c.h.b16 %v5607
          %v7055 = vunpack.c.l.b16 %v5608
          %v7056 = vunpack.c.h.b16 %v5608
          %v7057 = vunpack.c.l.b16 %v5609
          %v7058 = vunpack.c.h.b16 %v5609
          %v7059 = vunpack.c.l.b16 %v5610
          %v7060 = vunpack.c.h.b16 %v5610
          %v7061 = vunpack.c.l.b16 %v5611
          %v7062 = vunpack.c.h.b16 %v5611
          %v7063 = vunpack.c.l.b16 %v5612
          %v7064 = vunpack.c.h.b16 %v5612
          %v7065 = vunpack.c.l.b16 %v5613
          %v7066 = vunpack.c.h.b16 %v5613
          %v7067 = vunpack.c.l.b16 %v5614
          %v7068 = vunpack.c.h.b16 %v5614
          %v7069 = vunpack.c.l.b16 %v5615
          %v7070 = vunpack.c.h.b16 %v5615
          %v7071 = vunpack.c.l.b16 %v5616
          %v7072 = vunpack.c.h.b16 %v5616
          %v7073 = vunpack.c.l.b16 %v5617
          %v7074 = vunpack.c.h.b16 %v5617
          %v7075 = vunpack.c.l.b16 %v5618
          %v7076 = vunpack.c.h.b16 %v5618
          %v7077 = vunpack.c.l.b16 %v5619
          %v7078 = vunpack.c.h.b16 %v5619
          %v7079 = vunpack.c.l.b16 %v5620
          %v7080 = vunpack.c.h.b16 %v5620
          %v7081 = vunpack.c.l.b16 %v5621
          %v7082 = vunpack.c.h.b16 %v5621
          %v7083 = vunpack.c.l.b16 %v5622
          %v7084 = vunpack.c.h.b16 %v5622
          %v7085 = vunpack.c.l.b16 %v5623
          %v7086 = vunpack.c.h.b16 %v5623
          %v7087 = vunpack.c.l.b16 %v5624
          %v7088 = vunpack.c.h.b16 %v5624
          %v7089 = vunpack.c.l.b16 %v5625
          %v7090 = vunpack.c.h.b16 %v5625
          %v7091 = vunpack.c.l.b16 %v5626
          %v7092 = vunpack.c.h.b16 %v5626
          %v7093 = vunpack.c.l.b16 %v5627
          %v7094 = vunpack.c.h.b16 %v5627
          %v7095 = vunpack.c.l.b16 %v5628
          %v7096 = vunpack.c.h.b16 %v5628
          %v7097 = vunpack.c.l.b16 %v5629
          %v7098 = vunpack.c.h.b16 %v5629
          %v7099 = vunpack.c.l.b16 %v5630
          %v7100 = vunpack.c.h.b16 %v5630
          %v7101 = vunpack.c.l.b16 %v5631
          %v7102 = vunpack.c.h.b16 %v5631
          %v7103 = vunpack.c.l.b16 %v5632
          %v7104 = vunpack.c.h.b16 %v5632
          %v7105 = vunpack.c.l.b16 %v5633
          %v7106 = vunpack.c.h.b16 %v5633
          %v7107 = vunpack.c.l.b16 %v5634
          %v7108 = vunpack.c.h.b16 %v5634
          %v7109 = vunpack.c.l.b16 %v5635
          %v7110 = vunpack.c.h.b16 %v5635
          %v7111 = vunpack.c.l.b16 %v5636
          %v7112 = vunpack.c.h.b16 %v5636
          %v7113 = vunpack.c.l.b16 %v5637
          %v7114 = vunpack.c.h.b16 %v5637
          %v7115 = vunpack.c.l.b16 %v5638
          %v7116 = vunpack.c.h.b16 %v5638
          %v7117 = vunpack.c.l.b16 %v5639
          %v7118 = vunpack.c.h.b16 %v5639
          %v7119 = vunpack.c.l.b16 %v5640
          %v7120 = vunpack.c.h.b16 %v5640
          %v7121 = vunpack.c.l.b16 %v5641
          %v7122 = vunpack.c.h.b16 %v5641
          %v7123 = vunpack.c.l.b16 %v5642
          %v7124 = vunpack.c.h.b16 %v5642
          %v7125 = vunpack.c.l.b16 %v5643
          %v7126 = vunpack.c.h.b16 %v5643
          %v7127 = vunpack.c.l.b16 %v5644
          %v7128 = vunpack.c.h.b16 %v5644
          %v7129 = vunpack.c.l.b16 %v5645
          %v7130 = vunpack.c.h.b16 %v5645
          %v7131 = vunpack.c.l.b16 %v5646
          %v7132 = vunpack.c.h.b16 %v5646
          %v7133 = vunpack.c.l.b16 %v5647
          %v7134 = vunpack.c.h.b16 %v5647
          %v7135 = vunpack.c.l.b16 %v5648
          %v7136 = vunpack.c.h.b16 %v5648
          %v7137 = vunpack.c.l.b16 %v5649
          %v7138 = vunpack.c.h.b16 %v5649
          %v7139 = vunpack.c.l.b16 %v5650
          %v7140 = vunpack.c.h.b16 %v5650
          %v7141 = vunpack.c.l.b16 %v5651
          %v7142 = vunpack.c.h.b16 %v5651
          %v7143 = vunpack.c.l.b16 %v5652
          %v7144 = vunpack.c.h.b16 %v5652
          %v7145 = vunpack.c.l.b16 %v5653
          %v7146 = vunpack.c.h.b16 %v5653
          %v7147 = vunpack.c.l.b16 %v5654
          %v7148 = vunpack.c.h.b16 %v5654
          %v7149 = vunpack.c.l.b16 %v5655
          %v7150 = vunpack.c.h.b16 %v5655
          %v7151 = vunpack.c.l.b16 %v5656
          %v7152 = vunpack.c.h.b16 %v5656
          %v7153 = vunpack.c.l.b16 %v5657
          %v7154 = vunpack.c.h.b16 %v5657
          %v7155 = vunpack.c.l.b16 %v5658
          %v7156 = vunpack.c.h.b16 %v5658
          %v7157 = vunpack.c.l.b16 %v5659
          %v7158 = vunpack.c.h.b16 %v5659
          %v7159 = vunpack.c.l.b16 %v5660
          %v7160 = vunpack.c.h.b16 %v5660
          %v7161 = vunpack.c.l.b16 %v5661
          %v7162 = vunpack.c.h.b16 %v5661
          %v7163 = vunpack.c.l.b16 %v5662
          %v7164 = vunpack.c.h.b16 %v5662
          %v7165 = vunpack.c.l.b16 %v5663
          %v7166 = vunpack.c.h.b16 %v5663
          %v7167 = vunpack.c.l.b16 %v5664
          %v7168 = vunpack.c.h.b16 %v5664
          %v7169 = vunpack.c.l.b16 %v5665
          %v7170 = vunpack.c.h.b16 %v5665
          %v7171 = vunpack.c.l.b16 %v5666
          %v7172 = vunpack.c.h.b16 %v5666
          %v7173 = vunpack.c.l.b16 %v5667
          %v7174 = vunpack.c.h.b16 %v5667
          %v7175 = vunpack.c.l.b16 %v5668
          %v7176 = vunpack.c.h.b16 %v5668
          %v7177 = vunpack.c.l.b16 %v5669
          %v7178 = vunpack.c.h.b16 %v5669
          %v7179 = vunpack.c.l.b16 %v5670
          %v7180 = vunpack.c.h.b16 %v5670
          %v7181 = vunpack.c.l.b16 %v5671
          %v7182 = vunpack.c.h.b16 %v5671
          %v7183 = vunpack.c.l.b16 %v5672
          %v7184 = vunpack.c.h.b16 %v5672
          %v7185 = vunpack.c.l.b16 %v5673
          %v7186 = vunpack.c.h.b16 %v5673
          %v7187 = vunpack.c.l.b16 %v5674
          %v7188 = vunpack.c.h.b16 %v5674
          %v7189 = vunpack.c.l.b16 %v5675
          %v7190 = vunpack.c.h.b16 %v5675
          %v7191 = vunpack.c.l.b16 %v5676
          %v7192 = vunpack.c.h.b16 %v5676
          %v7193 = vunpack.c.l.b16 %v5677
          %v7194 = vunpack.c.h.b16 %v5677
          %v7195 = vunpack.c.l.b16 %v5678
          %v7196 = vunpack.c.h.b16 %v5678
          %v7197 = vunpack.c.l.b16 %v5679
          %v7198 = vunpack.c.h.b16 %v5679
          %v7199 = vunpack.c.l.b16 %v5680
          %v7200 = vunpack.c.h.b16 %v5680
          %v7201 = vunpack.c.l.b16 %v5681
          %v7202 = vunpack.c.h.b16 %v5681
          %v7203 = vunpack.c.l.b16 %v5682
          %v7204 = vunpack.c.h.b16 %v5682
          %v7205 = vunpack.c.l.b16 %v5683
          %v7206 = vunpack.c.h.b16 %v5683
          %v7207 = vunpack.c.l.b16 %v5684
          %v7208 = vunpack.c.h.b16 %v5684
          %v7209 = vunpack.c.l.b16 %v5685
          %v7210 = vunpack.c.h.b16 %v5685
          %v7211 = vunpack.c.l.b16 %v5686
          %v7212 = vunpack.c.h.b16 %v5686
          %v7213 = vunpack.c.l.b16 %v5687
          %v7214 = vunpack.c.h.b16 %v5687
          %v7215 = vunpack.c.l.b16 %v5688
          %v7216 = vunpack.c.h.b16 %v5688
          %v7217 = vunpack.c.l.b16 %v5689
          %v7218 = vunpack.c.h.b16 %v5689
          %v7219 = vunpack.c.l.b16 %v5690
          %v7220 = vunpack.c.h.b16 %v5690
          %v7221 = vunpack.c.l.b16 %v5691
          %v7222 = vunpack.c.h.b16 %v5691
          %v7223 = vunpack.c.l.b16 %v5692
          %v7224 = vunpack.c.h.b16 %v5692
          %v7225 = vunpack.c.l.b16 %v5693
          %v7226 = vunpack.c.h.b16 %v5693
          %v7227 = vunpack.c.l.b16 %v5694
          %v7228 = vunpack.c.h.b16 %v5694
          %v7229 = vunpack.c.l.b16 %v5695
          %v7230 = vunpack.c.h.b16 %v5695
          %v7231 = vunpack.c.l.b16 %v5696
          %v7232 = vunpack.c.h.b16 %v5696
          %v7233 = vunpack.c.l.b16 %v5697
          %v7234 = vunpack.c.h.b16 %v5697
          %v7235 = vunpack.c.l.b16 %v5698
          %v7236 = vunpack.c.h.b16 %v5698
          %v7237 = vunpack.c.l.b16 %v5699
          %v7238 = vunpack.c.h.b16 %v5699
          %v7239 = vunpack.c.l.b16 %v5700
          %v7240 = vunpack.c.h.b16 %v5700
          %v7241 = vunpack.c.l.b16 %v5701
          %v7242 = vunpack.c.h.b16 %v5701
          %v7243 = vunpack.c.l.b16 %v5702
          %v7244 = vunpack.c.h.b16 %v5702
          %v7245 = vunpack.c.l.b16 %v5703
          %v7246 = vunpack.c.h.b16 %v5703
          %v7247 = vunpack.c.l.b16 %v5704
          %v7248 = vunpack.c.h.b16 %v5704
          %v7249 = vunpack.c.l.b16 %v5705
          %v7250 = vunpack.c.h.b16 %v5705
          %v7251 = vunpack.c.l.b16 %v5706
          %v7252 = vunpack.c.h.b16 %v5706
          %v7253 = vunpack.c.l.b16 %v5707
          %v7254 = vunpack.c.h.b16 %v5707
          %v7255 = vunpack.c.l.b16 %v5708
          %v7256 = vunpack.c.h.b16 %v5708
          %v7257 = vunpack.c.l.b16 %v5709
          %v7258 = vunpack.c.h.b16 %v5709
          %v7259 = vunpack.c.l.b16 %v5710
          %v7260 = vunpack.c.h.b16 %v5710
          %v7261 = vunpack.c.l.b16 %v5711
          %v7262 = vunpack.c.h.b16 %v5711
          %v7263 = vunpack.c.l.b16 %v5712
          %v7264 = vunpack.c.h.b16 %v5712
          %v7265 = vunpack.c.l.b16 %v5713
          %v7266 = vunpack.c.h.b16 %v5713
          %v7267 = vunpack.c.l.b16 %v5714
          %v7268 = vunpack.c.h.b16 %v5714
          %v7269 = vunpack.c.l.b16 %v5715
          %v7270 = vunpack.c.h.b16 %v5715
          %v7271 = vunpack.c.l.b16 %v5716
          %v7272 = vunpack.c.h.b16 %v5716
          %v7273 = vunpack.c.l.b16 %v5717
          %v7274 = vunpack.c.h.b16 %v5717
          %v7275 = vunpack.c.l.b16 %v5718
          %v7276 = vunpack.c.h.b16 %v5718
          %v7277 = vunpack.c.l.b16 %v5719
          %v7278 = vunpack.c.h.b16 %v5719
          %v7279 = vunpack.c.l.b16 %v5720
          %v7280 = vunpack.c.h.b16 %v5720
          %v7281 = vunpack.c.l.b16 %v5721
          %v7282 = vunpack.c.h.b16 %v5721
          %v7283 = vunpack.c.l.b16 %v5722
          %v7284 = vunpack.c.h.b16 %v5722
          %v7285 = vunpack.c.l.b16 %v5723
          %v7286 = vunpack.c.h.b16 %v5723
          %v7287 = vunpack.c.l.b16 %v5724
          %v7288 = vunpack.c.h.b16 %v5724
          %v7289 = vunpack.c.l.b16 %v5725
          %v7290 = vunpack.c.h.b16 %v5725
          %v7291 = vunpack.c.l.b16 %v5726
          %v7292 = vunpack.c.h.b16 %v5726
          %v7293 = vunpack.c.l.b16 %v5727
          %v7294 = vunpack.c.h.b16 %v5727
          %v7295 = vunpack.c.l.b16 %v5728
          %v7296 = vunpack.c.h.b16 %v5728
          %v7297 = vunpack.c.l.b16 %v5729
          %v7298 = vunpack.c.h.b16 %v5729
          %v7299 = vunpack.c.l.b16 %v5730
          %v7300 = vunpack.c.h.b16 %v5730
          %v7301 = vunpack.c.l.b16 %v5731
          %v7302 = vunpack.c.h.b16 %v5731
          %v7303 = vunpack.c.l.b16 %v5732
          %v7304 = vunpack.c.h.b16 %v5732
          %v7305 = vunpack.c.l.b16 %v5733
          %v7306 = vunpack.c.h.b16 %v5733
          %v7307 = vunpack.c.l.b16 %v5734
          %v7308 = vunpack.c.h.b16 %v5734
          %v7309 = vunpack.c.l.b16 %v5735
          %v7310 = vunpack.c.h.b16 %v5735
          %v7311 = vunpack.c.l.b16 %v5736
          %v7312 = vunpack.c.h.b16 %v5736
          %v7313 = vunpack.c.l.b16 %v5737
          %v7314 = vunpack.c.h.b16 %v5737
          %v7315 = vunpack.c.l.b16 %v5738
          %v7316 = vunpack.c.h.b16 %v5738
          %v7317 = vunpack.c.l.b16 %v5739
          %v7318 = vunpack.c.h.b16 %v5739
          %v7319 = vunpack.c.l.b16 %v5740
          %v7320 = vunpack.c.h.b16 %v5740
          %v7321 = vunpack.c.l.b16 %v5741
          %v7322 = vunpack.c.h.b16 %v5741
          %v7323 = vunpack.c.l.b16 %v5742
          %v7324 = vunpack.c.h.b16 %v5742
          %v7325 = vunpack.c.l.b16 %v5743
          %v7326 = vunpack.c.h.b16 %v5743
          %v7327 = vunpack.c.l.b16 %v5744
          %v7328 = vunpack.c.h.b16 %v5744
          %v7329 = vunpack.c.l.b16 %v5745
          %v7330 = vunpack.c.h.b16 %v5745
          %v7331 = vunpack.c.l.b16 %v5746
          %v7332 = vunpack.c.h.b16 %v5746
          %v7333 = vunpack.c.l.b16 %v5747
          %v7334 = vunpack.c.h.b16 %v5747
          %v7335 = vunpack.c.l.b16 %v5748
          %v7336 = vunpack.c.h.b16 %v5748
          %v7337 = vunpack.c.l.b16 %v5749
          %v7338 = vunpack.c.h.b16 %v5749
          %v7339 = vunpack.c.l.b16 %v5750
          %v7340 = vunpack.c.h.b16 %v5750
          %v7341 = vunpack.c.l.b16 %v5751
          %v7342 = vunpack.c.h.b16 %v5751
          %v7343 = vunpack.c.l.b16 %v5752
          %v7344 = vunpack.c.h.b16 %v5752
          %v7345 = vunpack.c.l.b16 %v5753
          %v7346 = vunpack.c.h.b16 %v5753
          %v7347 = vunpack.c.l.b16 %v5754
          %v7348 = vunpack.c.h.b16 %v5754
          %v7349 = vunpack.c.l.b16 %v5755
          %v7350 = vunpack.c.h.b16 %v5755
          %v7351 = vunpack.c.l.b16 %v5756
          %v7352 = vunpack.c.h.b16 %v5756
          %v7353 = vunpack.c.l.b16 %v5757
          %v7354 = vunpack.c.h.b16 %v5757
          %v7355 = vunpack.c.l.b16 %v5758
          %v7356 = vunpack.c.h.b16 %v5758
          %v7357 = vunpack.c.l.b16 %v5759
          %v7358 = vunpack.c.h.b16 %v5759
          %v7359 = vunpack.c.l.b16 %v5760
          %v7360 = vunpack.c.h.b16 %v5760
          %v7361 = vunpack.c.l.b16 %v5761
          %v7362 = vunpack.c.h.b16 %v5761
          %v7363 = vunpack.c.l.b16 %v5762
          %v7364 = vunpack.c.h.b16 %v5762
          %v7365 = vunpack.c.l.b16 %v5763
          %v7366 = vunpack.c.h.b16 %v5763
          %v7367 = vunpack.c.l.b16 %v5764
          %v7368 = vunpack.c.h.b16 %v5764
          %v7369 = vunpack.c.l.b16 %v5765
          %v7370 = vunpack.c.h.b16 %v5765
          %v7371 = vunpack.c.l.b16 %v5766
          %v7372 = vunpack.c.h.b16 %v5766
          %v7373 = vunpack.c.l.b16 %v5767
          %v7374 = vunpack.c.h.b16 %v5767
          %v7375 = vunpack.c.l.b16 %v5768
          %v7376 = vunpack.c.h.b16 %v5768
          %v7377 = vunpack.c.l.b16 %v5769
          %v7378 = vunpack.c.h.b16 %v5769
          %v7379 = vunpack.c.l.b16 %v5770
          %v7380 = vunpack.c.h.b16 %v5770
          %v7381 = vunpack.c.l.b16 %v5771
          %v7382 = vunpack.c.h.b16 %v5771
          %v7383 = vunpack.c.l.b16 %v5772
          %v7384 = vunpack.c.h.b16 %v5772
          %v7385 = vunpack.c.l.b16 %v5773
          %v7386 = vunpack.c.h.b16 %v5773
          %v7387 = vunpack.c.l.b16 %v5774
          %v7388 = vunpack.c.h.b16 %v5774
          %v7389 = vunpack.c.l.b16 %v5775
          %v7390 = vunpack.c.h.b16 %v5775
          %v7391 = vunpack.c.l.b16 %v5776
          %v7392 = vunpack.c.h.b16 %v5776
          %v7393 = vunpack.c.l.b16 %v5777
          %v7394 = vunpack.c.h.b16 %v5777
          %v7395 = vunpack.c.l.b16 %v5778
          %v7396 = vunpack.c.h.b16 %v5778
          %v7397 = vunpack.c.l.b16 %v5779
          %v7398 = vunpack.c.h.b16 %v5779
          %v7399 = vunpack.c.l.b16 %v5780
          %v7400 = vunpack.c.h.b16 %v5780
          %v7401 = vpack.c.b16 %v6393, %v6377
          %v7402 = vpack.c.b16 %v6394, %v6378
          %v7403 = vpack.c.b16 %v6395, %v6379
          %v7404 = vpack.c.b16 %v6396, %v6380
          %v7405 = vpack.c.b16 %v6397, %v6381
          %v7406 = vpack.c.b16 %v6398, %v6382
          %v7407 = vpack.c.b16 %v6399, %v6383
          %v7408 = vpack.c.b16 %v6400, %v6384
          %v7409 = vpack.c.b16 %v6401, %v6385
          %v7410 = vpack.c.b16 %v6402, %v6386
          %v7411 = vpack.c.b16 %v6403, %v6387
          %v7412 = vpack.c.b16 %v6404, %v6388
          %v7413 = vpack.c.b16 %v6405, %v6389
          %v7414 = vpack.c.b16 %v6406, %v6390
          %v7415 = vpack.c.b16 %v6407, %v6391
          %v7416 = vpack.c.b16 %v6408, %v6392
          %v7417 = vpack.c.b16 %v6425, %v6409
          %v7418 = vpack.c.b16 %v6426, %v6410
          %v7419 = vpack.c.b16 %v6427, %v6411
          %v7420 = vpack.c.b16 %v6428, %v6412
          %v7421 = vpack.c.b16 %v6429, %v6413
          %v7422 = vpack.c.b16 %v6430, %v6414
          %v7423 = vpack.c.b16 %v6431, %v6415
          %v7424 = vpack.c.b16 %v6432, %v6416
          %v7425 = vpack.c.b16 %v6433, %v6417
          %v7426 = vpack.c.b16 %v6434, %v6418
          %v7427 = vpack.c.b16 %v6435, %v6419
          %v7428 = vpack.c.b16 %v6436, %v6420
          %v7429 = vpack.c.b16 %v6437, %v6421
          %v7430 = vpack.c.b16 %v6438, %v6422
          %v7431 = vpack.c.b16 %v6439, %v6423
          %v7432 = vpack.c.b16 %v6440, %v6424
          %v7433 = vpack.c.b16 %v6457, %v6441
          %v7434 = vpack.c.b16 %v6458, %v6442
          %v7435 = vpack.c.b16 %v6459, %v6443
          %v7436 = vpack.c.b16 %v6460, %v6444
          %v7437 = vpack.c.b16 %v6461, %v6445
          %v7438 = vpack.c.b16 %v6462, %v6446
          %v7439 = vpack.c.b16 %v6463, %v6447
          %v7440 = vpack.c.b16 %v6464, %v6448
          %v7441 = vpack.c.b16 %v6465, %v6449
          %v7442 = vpack.c.b16 %v6466, %v6450
          %v7443 = vpack.c.b16 %v6467, %v6451
          %v7444 = vpack.c.b16 %v6468, %v6452
          %v7445 = vpack.c.b16 %v6469, %v6453
          %v7446 = vpack.c.b16 %v6470, %v6454
          %v7447 = vpack.c.b16 %v6471, %v6455
          %v7448 = vpack.c.b16 %v6472, %v6456
          %v7449 = vpack.c.b16 %v6489, %v6473
          %v7450 = vpack.c.b16 %v6490, %v6474
          %v7451 = vpack.c.b16 %v6491, %v6475
          %v7452 = vpack.c.b16 %v6492, %v6476
          %v7453 = vpack.c.b16 %v6493, %v6477
          %v7454 = vpack.c.b16 %v6494, %v6478
          %v7455 = vpack.c.b16 %v6495, %v6479
          %v7456 = vpack.c.b16 %v6496, %v6480
          %v7457 = vpack.c.b16 %v6497, %v6481
          %v7458 = vpack.c.b16 %v6498, %v6482
          %v7459 = vpack.c.b16 %v6499, %v6483
          %v7460 = vpack.c.b16 %v6500, %v6484
          %v7461 = vpack.c.b16 %v6501, %v6485
          %v7462 = vpack.c.b16 %v6502, %v6486
          %v7463 = vpack.c.b16 %v6503, %v6487
          %v7464 = vpack.c.b16 %v6504, %v6488
          %v7465 = vpack.c.b16 %v6521, %v6505
          %v7466 = vpack.c.b16 %v6522, %v6506
          %v7467 = vpack.c.b16 %v6523, %v6507
          %v7468 = vpack.c.b16 %v6524, %v6508
          %v7469 = vpack.c.b16 %v6525, %v6509
          %v7470 = vpack.c.b16 %v6526, %v6510
          %v7471 = vpack.c.b16 %v6527, %v6511
          %v7472 = vpack.c.b16 %v6528, %v6512
          %v7473 = vpack.c.b16 %v6529, %v6513
          %v7474 = vpack.c.b16 %v6530, %v6514
          %v7475 = vpack.c.b16 %v6531, %v6515
          %v7476 = vpack.c.b16 %v6532, %v6516
          %v7477 = vpack.c.b16 %v6533, %v6517
          %v7478 = vpack.c.b16 %v6534, %v6518
          %v7479 = vpack.c.b16 %v6535, %v6519
          %v7480 = vpack.c.b16 %v6536, %v6520
          %v7481 = vpack.c.b16 %v6553, %v6537
          %v7482 = vpack.c.b16 %v6554, %v6538
          %v7483 = vpack.c.b16 %v6555, %v6539
          %v7484 = vpack.c.b16 %v6556, %v6540
          %v7485 = vpack.c.b16 %v6557, %v6541
          %v7486 = vpack.c.b16 %v6558, %v6542
          %v7487 = vpack.c.b16 %v6559, %v6543
          %v7488 = vpack.c.b16 %v6560, %v6544
          %v7489 = vpack.c.b16 %v6561, %v6545
          %v7490 = vpack.c.b16 %v6562, %v6546
          %v7491 = vpack.c.b16 %v6563, %v6547
          %v7492 = vpack.c.b16 %v6564, %v6548
          %v7493 = vpack.c.b16 %v6565, %v6549
          %v7494 = vpack.c.b16 %v6566, %v6550
          %v7495 = vpack.c.b16 %v6567, %v6551
          %v7496 = vpack.c.b16 %v6568, %v6552
          %v7497 = vpack.c.b16 %v6585, %v6569
          %v7498 = vpack.c.b16 %v6586, %v6570
          %v7499 = vpack.c.b16 %v6587, %v6571
          %v7500 = vpack.c.b16 %v6588, %v6572
          %v7501 = vpack.c.b16 %v6589, %v6573
          %v7502 = vpack.c.b16 %v6590, %v6574
          %v7503 = vpack.c.b16 %v6591, %v6575
          %v7504 = vpack.c.b16 %v6592, %v6576
          %v7505 = vpack.c.b16 %v6593, %v6577
          %v7506 = vpack.c.b16 %v6594, %v6578
          %v7507 = vpack.c.b16 %v6595, %v6579
          %v7508 = vpack.c.b16 %v6596, %v6580
          %v7509 = vpack.c.b16 %v6597, %v6581
          %v7510 = vpack.c.b16 %v6598, %v6582
          %v7511 = vpack.c.b16 %v6599, %v6583
          %v7512 = vpack.c.b16 %v6600, %v6584
          %v7513 = vpack.c.b16 %v6617, %v6601
          %v7514 = vpack.c.b16 %v6618, %v6602
          %v7515 = vpack.c.b16 %v6619, %v6603
          %v7516 = vpack.c.b16 %v6620, %v6604
          %v7517 = vpack.c.b16 %v6621, %v6605
          %v7518 = vpack.c.b16 %v6622, %v6606
          %v7519 = vpack.c.b16 %v6623, %v6607
          %v7520 = vpack.c.b16 %v6624, %v6608
          %v7521 = vpack.c.b16 %v6625, %v6609
          %v7522 = vpack.c.b16 %v6626, %v6610
          %v7523 = vpack.c.b16 %v6627, %v6611
          %v7524 = vpack.c.b16 %v6628, %v6612
          %v7525 = vpack.c.b16 %v6629, %v6613
          %v7526 = vpack.c.b16 %v6630, %v6614
          %v7527 = vpack.c.b16 %v6631, %v6615
          %v7528 = vpack.c.b16 %v6632, %v6616
          %v7529 = vpack.c.b16 %v6649, %v6633
          %v7530 = vpack.c.b16 %v6650, %v6634
          %v7531 = vpack.c.b16 %v6651, %v6635
          %v7532 = vpack.c.b16 %v6652, %v6636
          %v7533 = vpack.c.b16 %v6653, %v6637
          %v7534 = vpack.c.b16 %v6654, %v6638
          %v7535 = vpack.c.b16 %v6655, %v6639
          %v7536 = vpack.c.b16 %v6656, %v6640
          %v7537 = vpack.c.b16 %v6657, %v6641
          %v7538 = vpack.c.b16 %v6658, %v6642
          %v7539 = vpack.c.b16 %v6659, %v6643
          %v7540 = vpack.c.b16 %v6660, %v6644
          %v7541 = vpack.c.b16 %v6661, %v6645
          %v7542 = vpack.c.b16 %v6662, %v6646
          %v7543 = vpack.c.b16 %v6663, %v6647
          %v7544 = vpack.c.b16 %v6664, %v6648
          %v7545 = vpack.c.b16 %v6681, %v6665
          %v7546 = vpack.c.b16 %v6682, %v6666
          %v7547 = vpack.c.b16 %v6683, %v6667
          %v7548 = vpack.c.b16 %v6684, %v6668
          %v7549 = vpack.c.b16 %v6685, %v6669
          %v7550 = vpack.c.b16 %v6686, %v6670
          %v7551 = vpack.c.b16 %v6687, %v6671
          %v7552 = vpack.c.b16 %v6688, %v6672
          %v7553 = vpack.c.b16 %v6689, %v6673
          %v7554 = vpack.c.b16 %v6690, %v6674
          %v7555 = vpack.c.b16 %v6691, %v6675
          %v7556 = vpack.c.b16 %v6692, %v6676
          %v7557 = vpack.c.b16 %v6693, %v6677
          %v7558 = vpack.c.b16 %v6694, %v6678
          %v7559 = vpack.c.b16 %v6695, %v6679
          %v7560 = vpack.c.b16 %v6696, %v6680
          %v7561 = vpack.c.b16 %v6713, %v6697
          %v7562 = vpack.c.b16 %v6714, %v6698
          %v7563 = vpack.c.b16 %v6715, %v6699
          %v7564 = vpack.c.b16 %v6716, %v6700
          %v7565 = vpack.c.b16 %v6717, %v6701
          %v7566 = vpack.c.b16 %v6718, %v6702
          %v7567 = vpack.c.b16 %v6719, %v6703
          %v7568 = vpack.c.b16 %v6720, %v6704
          %v7569 = vpack.c.b16 %v6721, %v6705
          %v7570 = vpack.c.b16 %v6722, %v6706
          %v7571 = vpack.c.b16 %v6723, %v6707
          %v7572 = vpack.c.b16 %v6724, %v6708
          %v7573 = vpack.c.b16 %v6725, %v6709
          %v7574 = vpack.c.b16 %v6726, %v6710
          %v7575 = vpack.c.b16 %v6727, %v6711
          %v7576 = vpack.c.b16 %v6728, %v6712
          %v7577 = vpack.c.b16 %v6745, %v6729
          %v7578 = vpack.c.b16 %v6746, %v6730
          %v7579 = vpack.c.b16 %v6747, %v6731
          %v7580 = vpack.c.b16 %v6748, %v6732
          %v7581 = vpack.c.b16 %v6749, %v6733
          %v7582 = vpack.c.b16 %v6750, %v6734
          %v7583 = vpack.c.b16 %v6751, %v6735
          %v7584 = vpack.c.b16 %v6752, %v6736
          %v7585 = vpack.c.b16 %v6753, %v6737
          %v7586 = vpack.c.b16 %v6754, %v6738
          %v7587 = vpack.c.b16 %v6755, %v6739
          %v7588 = vpack.c.b16 %v6756, %v6740
          %v7589 = vpack.c.b16 %v6757, %v6741
          %v7590 = vpack.c.b16 %v6758, %v6742
          %v7591 = vpack.c.b16 %v6759, %v6743
          %v7592 = vpack.c.b16 %v6760, %v6744
          %v7593 = vpack.c.b16 %v6777, %v6761
          %v7594 = vpack.c.b16 %v6778, %v6762
          %v7595 = vpack.c.b16 %v6779, %v6763
          %v7596 = vpack.c.b16 %v6780, %v6764
          %v7597 = vpack.c.b16 %v6781, %v6765
          %v7598 = vpack.c.b16 %v6782, %v6766
          %v7599 = vpack.c.b16 %v6783, %v6767
          %v7600 = vpack.c.b16 %v6784, %v6768
          %v7601 = vpack.c.b16 %v6785, %v6769
          %v7602 = vpack.c.b16 %v6786, %v6770
          %v7603 = vpack.c.b16 %v6787, %v6771
          %v7604 = vpack.c.b16 %v6788, %v6772
          %v7605 = vpack.c.b16 %v6789, %v6773
          %v7606 = vpack.c.b16 %v6790, %v6774
          %v7607 = vpack.c.b16 %v6791, %v6775
          %v7608 = vpack.c.b16 %v6792, %v6776
          %v7609 = vpack.c.b16 %v6809, %v6793
          %v7610 = vpack.c.b16 %v6810, %v6794
          %v7611 = vpack.c.b16 %v6811, %v6795
          %v7612 = vpack.c.b16 %v6812, %v6796
          %v7613 = vpack.c.b16 %v6813, %v6797
          %v7614 = vpack.c.b16 %v6814, %v6798
          %v7615 = vpack.c.b16 %v6815, %v6799
          %v7616 = vpack.c.b16 %v6816, %v6800
          %v7617 = vpack.c.b16 %v6817, %v6801
          %v7618 = vpack.c.b16 %v6818, %v6802
          %v7619 = vpack.c.b16 %v6819, %v6803
          %v7620 = vpack.c.b16 %v6820, %v6804
          %v7621 = vpack.c.b16 %v6821, %v6805
          %v7622 = vpack.c.b16 %v6822, %v6806
          %v7623 = vpack.c.b16 %v6823, %v6807
          %v7624 = vpack.c.b16 %v6824, %v6808
          %v7625 = vpack.c.b16 %v6841, %v6825
          %v7626 = vpack.c.b16 %v6842, %v6826
          %v7627 = vpack.c.b16 %v6843, %v6827
          %v7628 = vpack.c.b16 %v6844, %v6828
          %v7629 = vpack.c.b16 %v6845, %v6829
          %v7630 = vpack.c.b16 %v6846, %v6830
          %v7631 = vpack.c.b16 %v6847, %v6831
          %v7632 = vpack.c.b16 %v6848, %v6832
          %v7633 = vpack.c.b16 %v6849, %v6833
          %v7634 = vpack.c.b16 %v6850, %v6834
          %v7635 = vpack.c.b16 %v6851, %v6835
          %v7636 = vpack.c.b16 %v6852, %v6836
          %v7637 = vpack.c.b16 %v6853, %v6837
          %v7638 = vpack.c.b16 %v6854, %v6838
          %v7639 = vpack.c.b16 %v6855, %v6839
          %v7640 = vpack.c.b16 %v6856, %v6840
          %v7641 = vpack.c.b16 %v6873, %v6857
          %v7642 = vpack.c.b16 %v6874, %v6858
          %v7643 = vpack.c.b16 %v6875, %v6859
          %v7644 = vpack.c.b16 %v6876, %v6860
          %v7645 = vpack.c.b16 %v6877, %v6861
          %v7646 = vpack.c.b16 %v6878, %v6862
          %v7647 = vpack.c.b16 %v6879, %v6863
          %v7648 = vpack.c.b16 %v6880, %v6864
          %v7649 = vpack.c.b16 %v6881, %v6865
          %v7650 = vpack.c.b16 %v6882, %v6866
          %v7651 = vpack.c.b16 %v6883, %v6867
          %v7652 = vpack.c.b16 %v6884, %v6868
          %v7653 = vpack.c.b16 %v6885, %v6869
          %v7654 = vpack.c.b16 %v6886, %v6870
          %v7655 = vpack.c.b16 %v6887, %v6871
          %v7656 = vpack.c.b16 %v6888, %v6872
          %v7657 = vpack.c.b16 %v6905, %v6889
          %v7658 = vpack.c.b16 %v6906, %v6890
          %v7659 = vpack.c.b16 %v6907, %v6891
          %v7660 = vpack.c.b16 %v6908, %v6892
          %v7661 = vpack.c.b16 %v6909, %v6893
          %v7662 = vpack.c.b16 %v6910, %v6894
          %v7663 = vpack.c.b16 %v6911, %v6895
          %v7664 = vpack.c.b16 %v6912, %v6896
          %v7665 = vpack.c.b16 %v6913, %v6897
          %v7666 = vpack.c.b16 %v6914, %v6898
          %v7667 = vpack.c.b16 %v6915, %v6899
          %v7668 = vpack.c.b16 %v6916, %v6900
          %v7669 = vpack.c.b16 %v6917, %v6901
          %v7670 = vpack.c.b16 %v6918, %v6902
          %v7671 = vpack.c.b16 %v6919, %v6903
          %v7672 = vpack.c.b16 %v6920, %v6904
          %v7673 = vpack.c.b16 %v6937, %v6921
          %v7674 = vpack.c.b16 %v6938, %v6922
          %v7675 = vpack.c.b16 %v6939, %v6923
          %v7676 = vpack.c.b16 %v6940, %v6924
          %v7677 = vpack.c.b16 %v6941, %v6925
          %v7678 = vpack.c.b16 %v6942, %v6926
          %v7679 = vpack.c.b16 %v6943, %v6927
          %v7680 = vpack.c.b16 %v6944, %v6928
          %v7681 = vpack.c.b16 %v6945, %v6929
          %v7682 = vpack.c.b16 %v6946, %v6930
          %v7683 = vpack.c.b16 %v6947, %v6931
          %v7684 = vpack.c.b16 %v6948, %v6932
          %v7685 = vpack.c.b16 %v6949, %v6933
          %v7686 = vpack.c.b16 %v6950, %v6934
          %v7687 = vpack.c.b16 %v6951, %v6935
          %v7688 = vpack.c.b16 %v6952, %v6936
          %v7689 = vpack.c.b16 %v6969, %v6953
          %v7690 = vpack.c.b16 %v6970, %v6954
          %v7691 = vpack.c.b16 %v6971, %v6955
          %v7692 = vpack.c.b16 %v6972, %v6956
          %v7693 = vpack.c.b16 %v6973, %v6957
          %v7694 = vpack.c.b16 %v6974, %v6958
          %v7695 = vpack.c.b16 %v6975, %v6959
          %v7696 = vpack.c.b16 %v6976, %v6960
          %v7697 = vpack.c.b16 %v6977, %v6961
          %v7698 = vpack.c.b16 %v6978, %v6962
          %v7699 = vpack.c.b16 %v6979, %v6963
          %v7700 = vpack.c.b16 %v6980, %v6964
          %v7701 = vpack.c.b16 %v6981, %v6965
          %v7702 = vpack.c.b16 %v6982, %v6966
          %v7703 = vpack.c.b16 %v6983, %v6967
          %v7704 = vpack.c.b16 %v6984, %v6968
          %v7705 = vpack.c.b16 %v7001, %v6985
          %v7706 = vpack.c.b16 %v7002, %v6986
          %v7707 = vpack.c.b16 %v7003, %v6987
          %v7708 = vpack.c.b16 %v7004, %v6988
          %v7709 = vpack.c.b16 %v7005, %v6989
          %v7710 = vpack.c.b16 %v7006, %v6990
          %v7711 = vpack.c.b16 %v7007, %v6991
          %v7712 = vpack.c.b16 %v7008, %v6992
          %v7713 = vpack.c.b16 %v7009, %v6993
          %v7714 = vpack.c.b16 %v7010, %v6994
          %v7715 = vpack.c.b16 %v7011, %v6995
          %v7716 = vpack.c.b16 %v7012, %v6996
          %v7717 = vpack.c.b16 %v7013, %v6997
          %v7718 = vpack.c.b16 %v7014, %v6998
          %v7719 = vpack.c.b16 %v7015, %v6999
          %v7720 = vpack.c.b16 %v7016, %v7000
          %v7721 = vpack.c.b16 %v7033, %v7017
          %v7722 = vpack.c.b16 %v7034, %v7018
          %v7723 = vpack.c.b16 %v7035, %v7019
          %v7724 = vpack.c.b16 %v7036, %v7020
          %v7725 = vpack.c.b16 %v7037, %v7021
          %v7726 = vpack.c.b16 %v7038, %v7022
          %v7727 = vpack.c.b16 %v7039, %v7023
          %v7728 = vpack.c.b16 %v7040, %v7024
          %v7729 = vpack.c.b16 %v7041, %v7025
          %v7730 = vpack.c.b16 %v7042, %v7026
          %v7731 = vpack.c.b16 %v7043, %v7027
          %v7732 = vpack.c.b16 %v7044, %v7028
          %v7733 = vpack.c.b16 %v7045, %v7029
          %v7734 = vpack.c.b16 %v7046, %v7030
          %v7735 = vpack.c.b16 %v7047, %v7031
          %v7736 = vpack.c.b16 %v7048, %v7032
          %v7737 = vpack.c.b16 %v7065, %v7049
          %v7738 = vpack.c.b16 %v7066, %v7050
          %v7739 = vpack.c.b16 %v7067, %v7051
          %v7740 = vpack.c.b16 %v7068, %v7052
          %v7741 = vpack.c.b16 %v7069, %v7053
          %v7742 = vpack.c.b16 %v7070, %v7054
          %v7743 = vpack.c.b16 %v7071, %v7055
          %v7744 = vpack.c.b16 %v7072, %v7056
          %v7745 = vpack.c.b16 %v7073, %v7057
          %v7746 = vpack.c.b16 %v7074, %v7058
          %v7747 = vpack.c.b16 %v7075, %v7059
          %v7748 = vpack.c.b16 %v7076, %v7060
          %v7749 = vpack.c.b16 %v7077, %v7061
          %v7750 = vpack.c.b16 %v7078, %v7062
          %v7751 = vpack.c.b16 %v7079, %v7063
          %v7752 = vpack.c.b16 %v7080, %v7064
          %v7753 = vpack.c.b16 %v7097, %v7081
          %v7754 = vpack.c.b16 %v7098, %v7082
          %v7755 = vpack.c.b16 %v7099, %v7083
          %v7756 = vpack.c.b16 %v7100, %v7084
          %v7757 = vpack.c.b16 %v7101, %v7085
          %v7758 = vpack.c.b16 %v7102, %v7086
          %v7759 = vpack.c.b16 %v7103, %v7087
          %v7760 = vpack.c.b16 %v7104, %v7088
          %v7761 = vpack.c.b16 %v7105, %v7089
          %v7762 = vpack.c.b16 %v7106, %v7090
          %v7763 = vpack.c.b16 %v7107, %v7091
          %v7764 = vpack.c.b16 %v7108, %v7092
          %v7765 = vpack.c.b16 %v7109, %v7093
          %v7766 = vpack.c.b16 %v7110, %v7094
          %v7767 = vpack.c.b16 %v7111, %v7095
          %v7768 = vpack.c.b16 %v7112, %v7096
          %v7769 = vpack.c.b16 %v7129, %v7113
          %v7770 = vpack.c.b16 %v7130, %v7114
          %v7771 = vpack.c.b16 %v7131, %v7115
          %v7772 = vpack.c.b16 %v7132, %v7116
          %v7773 = vpack.c.b16 %v7133, %v7117
          %v7774 = vpack.c.b16 %v7134, %v7118
          %v7775 = vpack.c.b16 %v7135, %v7119
          %v7776 = vpack.c.b16 %v7136, %v7120
          %v7777 = vpack.c.b16 %v7137, %v7121
          %v7778 = vpack.c.b16 %v7138, %v7122
          %v7779 = vpack.c.b16 %v7139, %v7123
          %v7780 = vpack.c.b16 %v7140, %v7124
          %v7781 = vpack.c.b16 %v7141, %v7125
          %v7782 = vpack.c.b16 %v7142, %v7126
          %v7783 = vpack.c.b16 %v7143, %v7127
          %v7784 = vpack.c.b16 %v7144, %v7128
          %v7785 = vpack.c.b16 %v7161, %v7145
          %v7786 = vpack.c.b16 %v7162, %v7146
          %v7787 = vpack.c.b16 %v7163, %v7147
          %v7788 = vpack.c.b16 %v7164, %v7148
          %v7789 = vpack.c.b16 %v7165, %v7149
          %v7790 = vpack.c.b16 %v7166, %v7150
          %v7791 = vpack.c.b16 %v7167, %v7151
          %v7792 = vpack.c.b16 %v7168, %v7152
          %v7793 = vpack.c.b16 %v7169, %v7153
          %v7794 = vpack.c.b16 %v7170, %v7154
          %v7795 = vpack.c.b16 %v7171, %v7155
          %v7796 = vpack.c.b16 %v7172, %v7156
          %v7797 = vpack.c.b16 %v7173, %v7157
          %v7798 = vpack.c.b16 %v7174, %v7158
          %v7799 = vpack.c.b16 %v7175, %v7159
          %v7800 = vpack.c.b16 %v7176, %v7160
          %v7801 = vpack.c.b16 %v7193, %v7177
          %v7802 = vpack.c.b16 %v7194, %v7178
          %v7803 = vpack.c.b16 %v7195, %v7179
          %v7804 = vpack.c.b16 %v7196, %v7180
          %v7805 = vpack.c.b16 %v7197, %v7181
          %v7806 = vpack.c.b16 %v7198, %v7182
          %v7807 = vpack.c.b16 %v7199, %v7183
          %v7808 = vpack.c.b16 %v7200, %v7184
          %v7809 = vpack.c.b16 %v7201, %v7185
          %v7810 = vpack.c.b16 %v7202, %v7186
          %v7811 = vpack.c.b16 %v7203, %v7187
          %v7812 = vpack.c.b16 %v7204, %v7188
          %v7813 = vpack.c.b16 %v7205, %v7189
          %v7814 = vpack.c.b16 %v7206, %v7190
          %v7815 = vpack.c.b16 %v7207, %v7191
          %v7816 = vpack.c.b16 %v7208, %v7192
          %v7817 = vpack.c.b16 %v7225, %v7209
          %v7818 = vpack.c.b16 %v7226, %v7210
          %v7819 = vpack.c.b16 %v7227, %v7211
          %v7820 = vpack.c.b16 %v7228, %v7212
          %v7821 = vpack.c.b16 %v7229, %v7213
          %v7822 = vpack.c.b16 %v7230, %v7214
          %v7823 = vpack.c.b16 %v7231, %v7215
          %v7824 = vpack.c.b16 %v7232, %v7216
          %v7825 = vpack.c.b16 %v7233, %v7217
          %v7826 = vpack.c.b16 %v7234, %v7218
          %v7827 = vpack.c.b16 %v7235, %v7219
          %v7828 = vpack.c.b16 %v7236, %v7220
          %v7829 = vpack.c.b16 %v7237, %v7221
          %v7830 = vpack.c.b16 %v7238, %v7222
          %v7831 = vpack.c.b16 %v7239, %v7223
          %v7832 = vpack.c.b16 %v7240, %v7224
          %v7833 = vpack.c.b16 %v7257, %v7241
          %v7834 = vpack.c.b16 %v7258, %v7242
          %v7835 = vpack.c.b16 %v7259, %v7243
          %v7836 = vpack.c.b16 %v7260, %v7244
          %v7837 = vpack.c.b16 %v7261, %v7245
          %v7838 = vpack.c.b16 %v7262, %v7246
          %v7839 = vpack.c.b16 %v7263, %v7247
          %v7840 = vpack.c.b16 %v7264, %v7248
          %v7841 = vpack.c.b16 %v7265, %v7249
          %v7842 = vpack.c.b16 %v7266, %v7250
          %v7843 = vpack.c.b16 %v7267, %v7251
          %v7844 = vpack.c.b16 %v7268, %v7252
          %v7845 = vpack.c.b16 %v7269, %v7253
          %v7846 = vpack.c.b16 %v7270, %v7254
          %v7847 = vpack.c.b16 %v7271, %v7255
          %v7848 = vpack.c.b16 %v7272, %v7256
          %v7849 = vpack.c.b16 %v7289, %v7273
          %v7850 = vpack.c.b16 %v7290, %v7274
          %v7851 = vpack.c.b16 %v7291, %v7275
          %v7852 = vpack.c.b16 %v7292, %v7276
          %v7853 = vpack.c.b16 %v7293, %v7277
          %v7854 = vpack.c.b16 %v7294, %v7278
          %v7855 = vpack.c.b16 %v7295, %v7279
          %v7856 = vpack.c.b16 %v7296, %v7280
          %v7857 = vpack.c.b16 %v7297, %v7281
          %v7858 = vpack.c.b16 %v7298, %v7282
          %v7859 = vpack.c.b16 %v7299, %v7283
          %v7860 = vpack.c.b16 %v7300, %v7284
          %v7861 = vpack.c.b16 %v7301, %v7285
          %v7862 = vpack.c.b16 %v7302, %v7286
          %v7863 = vpack.c.b16 %v7303, %v7287
          %v7864 = vpack.c.b16 %v7304, %v7288
          %v7865 = vpack.c.b16 %v7321, %v7305
          %v7866 = vpack.c.b16 %v7322, %v7306
          %v7867 = vpack.c.b16 %v7323, %v7307
          %v7868 = vpack.c.b16 %v7324, %v7308
          %v7869 = vpack.c.b16 %v7325, %v7309
          %v7870 = vpack.c.b16 %v7326, %v7310
          %v7871 = vpack.c.b16 %v7327, %v7311
          %v7872 = vpack.c.b16 %v7328, %v7312
          %v7873 = vpack.c.b16 %v7329, %v7313
          %v7874 = vpack.c.b16 %v7330, %v7314
          %v7875 = vpack.c.b16 %v7331, %v7315
          %v7876 = vpack.c.b16 %v7332, %v7316
          %v7877 = vpack.c.b16 %v7333, %v7317
          %v7878 = vpack.c.b16 %v7334, %v7318
          %v7879 = vpack.c.b16 %v7335, %v7319
          %v7880 = vpack.c.b16 %v7336, %v7320
          %v7881 = vpack.c.b16 %v7353, %v7337
          %v7882 = vpack.c.b16 %v7354, %v7338
          %v7883 = vpack.c.b16 %v7355, %v7339
          %v7884 = vpack.c.b16 %v7356, %v7340
          %v7885 = vpack.c.b16 %v7357, %v7341
          %v7886 = vpack.c.b16 %v7358, %v7342
          %v7887 = vpack.c.b16 %v7359, %v7343
          %v7888 = vpack.c.b16 %v7360, %v7344
          %v7889 = vpack.c.b16 %v7361, %v7345
          %v7890 = vpack.c.b16 %v7362, %v7346
          %v7891 = vpack.c.b16 %v7363, %v7347
          %v7892 = vpack.c.b16 %v7364, %v7348
          %v7893 = vpack.c.b16 %v7365, %v7349
          %v7894 = vpack.c.b16 %v7366, %v7350
          %v7895 = vpack.c.b16 %v7367, %v7351
          %v7896 = vpack.c.b16 %v7368, %v7352
          %v7897 = vpack.c.b16 %v7385, %v7369
          %v7898 = vpack.c.b16 %v7386, %v7370
          %v7899 = vpack.c.b16 %v7387, %v7371
          %v7900 = vpack.c.b16 %v7388, %v7372
          %v7901 = vpack.c.b16 %v7389, %v7373
          %v7902 = vpack.c.b16 %v7390, %v7374
          %v7903 = vpack.c.b16 %v7391, %v7375
          %v7904 = vpack.c.b16 %v7392, %v7376
          %v7905 = vpack.c.b16 %v7393, %v7377
          %v7906 = vpack.c.b16 %v7394, %v7378
          %v7907 = vpack.c.b16 %v7395, %v7379
          %v7908 = vpack.c.b16 %v7396, %v7380
          %v7909 = vpack.c.b16 %v7397, %v7381
          %v7910 = vpack.c.b16 %v7398, %v7382
          %v7911 = vpack.c.b16 %v7399, %v7383
          %v7912 = vpack.c.b16 %v7400, %v7384
          %8425 = vmatprep.subr.bf16.mxu0 %v7402
          %8426 = vmatpush1.bf16.msra.mxu0 %v7401
          %8427 = vmatprep.subr.bf16.mxu0 %v7418
          %8428 = vmatpush1.bf16.msra.mxu0 %v7417
          %8429 = vmatprep.subr.bf16.mxu0 %v7434
          %8430 = vmatpush1.bf16.msra.mxu0 %v7433
          %8431 = vmatprep.subr.bf16.mxu0 %v7450
          %8432 = vmatpush1.bf16.msra.mxu0 %v7449
          %8433 = vmatprep.subr.bf16.mxu0 %v7466
          %8434 = vmatpush1.bf16.msra.mxu0 %v7465
          %8435 = vmatprep.subr.bf16.mxu0 %v7482
          %8436 = vmatpush1.bf16.msra.mxu0 %v7481
          %8437 = vmatprep.subr.bf16.mxu0 %v7498
          %8438 = vmatpush1.bf16.msra.mxu0 %v7497
          %8439 = vmatprep.subr.bf16.mxu0 %v7514
          %8440 = vmatpush1.bf16.msra.mxu0 %v7513
          %8441 = vmatprep.subr.bf16.mxu0 %v7530
          %8442 = vmatpush1.bf16.msra.mxu0 %v7529
          %8443 = vmatprep.subr.bf16.mxu0 %v7546
          %8444 = vmatpush1.bf16.msra.mxu0 %v7545
          %8445 = vmatprep.subr.bf16.mxu0 %v7562
          %8446 = vmatpush1.bf16.msra.mxu0 %v7561
          %8447 = vmatprep.subr.bf16.mxu0 %v7578
          %8448 = vmatpush1.bf16.msra.mxu0 %v7577
          %8449 = vmatprep.subr.bf16.mxu0 %v7594
          %8450 = vmatpush1.bf16.msra.mxu0 %v7593
          %8451 = vmatprep.subr.bf16.mxu0 %v7610
          %8452 = vmatpush1.bf16.msra.mxu0 %v7609
          %8453 = vmatprep.subr.bf16.mxu0 %v7626
          %8454 = vmatpush1.bf16.msra.mxu0 %v7625
          %8455 = vmatprep.subr.bf16.mxu0 %v7642
          %8456 = vmatpush1.bf16.msra.mxu0 %v7641
          %8457 = vmatprep.mubr.bf16.mxu0 %v5266
          %8458 = vmatmul.mubr.bf16.gmra.mrb[0].mxu0 %v5265
          %v8459 = vpop.f32.mrb[0].mxu0
          %v8460 = vadd.f32 %v5788, %v8459
          %v8461 = vpop.f32.mrb[0].mxu0
          %v8462 = vadd.f32 %v5792, %v8461
          %v8463 = vpop.f32.mrb[0].mxu0
          %v8464 = vpop.f32.mrb[0].mxu0
          %8465 = vdwg.mxu0
          %8466 = vmatprep.subr.bf16.mxu0 %v7658
          %8467 = vmatpush1.bf16.msra.mxu0 %v7657
          %8468 = vmatprep.subr.bf16.mxu0 %v7674
          %8469 = vmatpush1.bf16.msra.mxu0 %v7673
          %8470 = vmatprep.subr.bf16.mxu0 %v7690
          %8471 = vmatpush1.bf16.msra.mxu0 %v7689
          %8472 = vmatprep.subr.bf16.mxu0 %v7706
          %8473 = vmatpush1.bf16.msra.mxu0 %v7705
          %8474 = vmatprep.subr.bf16.mxu0 %v7722
          %8475 = vmatpush1.bf16.msra.mxu0 %v7721
          %8476 = vmatprep.subr.bf16.mxu0 %v7738
          %8477 = vmatpush1.bf16.msra.mxu0 %v7737
          %8478 = vmatprep.subr.bf16.mxu0 %v7754
          %8479 = vmatpush1.bf16.msra.mxu0 %v7753
          %8480 = vmatprep.subr.bf16.mxu0 %v7770
          %8481 = vmatpush1.bf16.msra.mxu0 %v7769
          %8482 = vmatprep.subr.bf16.mxu0 %v7786
          %8483 = vmatpush1.bf16.msra.mxu0 %v7785
          %8484 = vmatprep.subr.bf16.mxu0 %v7802
          %8485 = vmatpush1.bf16.msra.mxu0 %v7801
          %8486 = vmatprep.subr.bf16.mxu0 %v7818
          %8487 = vmatpush1.bf16.msra.mxu0 %v7817
          %8488 = vmatprep.subr.bf16.mxu0 %v7834
          %8489 = vmatpush1.bf16.msra.mxu0 %v7833
          %8490 = vmatprep.subr.bf16.mxu0 %v7850
          %8491 = vmatpush1.bf16.msra.mxu0 %v7849
          %8492 = vmatprep.subr.bf16.mxu0 %v7866
          %8493 = vmatpush1.bf16.msra.mxu0 %v7865
          %8494 = vmatprep.subr.bf16.mxu0 %v7882
          %8495 = vmatpush1.bf16.msra.mxu0 %v7881
          %8496 = vmatprep.subr.bf16.mxu0 %v7898
          %8497 = vmatpush1.bf16.msra.mxu0 %v7897
          %8498 = vmatprep.mubr.bf16.mxu0 %v5268
          %8499 = vmatmul.mubr.bf16.gmra.mrb[0].mxu0 %v5267
          %v8500 = vpop.f32.mrb[0].mxu0
          %v8501 = vadd.f32 %v8460, %v8500
          %v8502 = vpop.f32.mrb[0].mxu0
          %v8503 = vadd.f32 %v8462, %v8502
          %v8504 = vpop.f32.mrb[0].mxu0
          %v8505 = vpop.f32.mrb[0].mxu0
          %8506 = vdwg.mxu0
          %8507 = vmatprep.subr.bf16.mxu0 %v7404
          %8508 = vmatpush1.bf16.msra.mxu0 %v7403
          %8509 = vmatprep.subr.bf16.mxu0 %v7420
          %8510 = vmatpush1.bf16.msra.mxu0 %v7419
          %8511 = vmatprep.subr.bf16.mxu0 %v7436
          %8512 = vmatpush1.bf16.msra.mxu0 %v7435
          %8513 = vmatprep.subr.bf16.mxu0 %v7452
          %8514 = vmatpush1.bf16.msra.mxu0 %v7451
          %8515 = vmatprep.subr.bf16.mxu0 %v7468
          %8516 = vmatpush1.bf16.msra.mxu0 %v7467
          %8517 = vmatprep.subr.bf16.mxu0 %v7484
          %8518 = vmatpush1.bf16.msra.mxu0 %v7483
          %8519 = vmatprep.subr.bf16.mxu0 %v7500
          %8520 = vmatpush1.bf16.msra.mxu0 %v7499
          %8521 = vmatprep.subr.bf16.mxu0 %v7516
          %8522 = vmatpush1.bf16.msra.mxu0 %v7515
          %8523 = vmatprep.subr.bf16.mxu0 %v7532
          %8524 = vmatpush1.bf16.msra.mxu0 %v7531
          %8525 = vmatprep.subr.bf16.mxu0 %v7548
          %8526 = vmatpush1.bf16.msra.mxu0 %v7547
          %8527 = vmatprep.subr.bf16.mxu0 %v7564
          %8528 = vmatpush1.bf16.msra.mxu0 %v7563
          %8529 = vmatprep.subr.bf16.mxu0 %v7580
          %8530 = vmatpush1.bf16.msra.mxu0 %v7579
          %8531 = vmatprep.subr.bf16.mxu0 %v7596
          %8532 = vmatpush1.bf16.msra.mxu0 %v7595
          %8533 = vmatprep.subr.bf16.mxu0 %v7612
          %8534 = vmatpush1.bf16.msra.mxu0 %v7611
          %8535 = vmatprep.subr.bf16.mxu0 %v7628
          %8536 = vmatpush1.bf16.msra.mxu0 %v7627
          %8537 = vmatprep.subr.bf16.mxu0 %v7644
          %8538 = vmatpush1.bf16.msra.mxu0 %v7643
          %8539 = vmatprep.mubr.bf16.mxu0 %v5266
          %8540 = vmatmul.mubr.bf16.gmra.mrb[0].mxu0 %v5265
          %v8541 = vpop.f32.mrb[0].mxu0
          %v8542 = vadd.f32 %v5796, %v8541
          %v8543 = vpop.f32.mrb[0].mxu0
          %v8544 = vadd.f32 %v5800, %v8543
          %v8545 = vpop.f32.mrb[0].mxu0
          %v8546 = vpop.f32.mrb[0].mxu0
          %8547 = vdwg.mxu0
          %8548 = vmatprep.subr.bf16.mxu0 %v7660
          %8549 = vmatpush1.bf16.msra.mxu0 %v7659
          %8550 = vmatprep.subr.bf16.mxu0 %v7676
          %8551 = vmatpush1.bf16.msra.mxu0 %v7675
          %8552 = vmatprep.subr.bf16.mxu0 %v7692
          %8553 = vmatpush1.bf16.msra.mxu0 %v7691
          %8554 = vmatprep.subr.bf16.mxu0 %v7708
          %8555 = vmatpush1.bf16.msra.mxu0 %v7707
          %8556 = vmatprep.subr.bf16.mxu0 %v7724
          %8557 = vmatpush1.bf16.msra.mxu0 %v7723
          %8558 = vmatprep.subr.bf16.mxu0 %v7740
          %8559 = vmatpush1.bf16.msra.mxu0 %v7739
          %8560 = vmatprep.subr.bf16.mxu0 %v7756
          %8561 = vmatpush1.bf16.msra.mxu0 %v7755
          %8562 = vmatprep.subr.bf16.mxu0 %v7772
          %8563 = vmatpush1.bf16.msra.mxu0 %v7771
          %8564 = vmatprep.subr.bf16.mxu0 %v7788
          %8565 = vmatpush1.bf16.msra.mxu0 %v7787
          %8566 = vmatprep.subr.bf16.mxu0 %v7804
          %8567 = vmatpush1.bf16.msra.mxu0 %v7803
          %8568 = vmatprep.subr.bf16.mxu0 %v7820
          %8569 = vmatpush1.bf16.msra.mxu0 %v7819
          %8570 = vmatprep.subr.bf16.mxu0 %v7836
          %8571 = vmatpush1.bf16.msra.mxu0 %v7835
          %8572 = vmatprep.subr.bf16.mxu0 %v7852
          %8573 = vmatpush1.bf16.msra.mxu0 %v7851
          %8574 = vmatprep.subr.bf16.mxu0 %v7868
          %8575 = vmatpush1.bf16.msra.mxu0 %v7867
          %8576 = vmatprep.subr.bf16.mxu0 %v7884
          %8577 = vmatpush1.bf16.msra.mxu0 %v7883
          %8578 = vmatprep.subr.bf16.mxu0 %v7900
          %8579 = vmatpush1.bf16.msra.mxu0 %v7899
          %8580 = vmatprep.mubr.bf16.mxu0 %v5268
          %8581 = vmatmul.mubr.bf16.gmra.mrb[0].mxu0 %v5267
          %v8582 = vpop.f32.mrb[0].mxu0
          %v8583 = vadd.f32 %v8542, %v8582
          %v8584 = vpop.f32.mrb[0].mxu0
          %v8585 = vadd.f32 %v8544, %v8584
          %v8586 = vpop.f32.mrb[0].mxu0
          %v8587 = vpop.f32.mrb[0].mxu0
          %8588 = vdwg.mxu0
          %8589 = vmatprep.subr.bf16.mxu0 %v7406
          %8590 = vmatpush1.bf16.msra.mxu0 %v7405
          %8591 = vmatprep.subr.bf16.mxu0 %v7422
          %8592 = vmatpush1.bf16.msra.mxu0 %v7421
          %8593 = vmatprep.subr.bf16.mxu0 %v7438
          %8594 = vmatpush1.bf16.msra.mxu0 %v7437
          %8595 = vmatprep.subr.bf16.mxu0 %v7454
          %8596 = vmatpush1.bf16.msra.mxu0 %v7453
          %8597 = vmatprep.subr.bf16.mxu0 %v7470
          %8598 = vmatpush1.bf16.msra.mxu0 %v7469
          %8599 = vmatprep.subr.bf16.mxu0 %v7486
          %8600 = vmatpush1.bf16.msra.mxu0 %v7485
          %8601 = vmatprep.subr.bf16.mxu0 %v7502
          %8602 = vmatpush1.bf16.msra.mxu0 %v7501
          %8603 = vmatprep.subr.bf16.mxu0 %v7518
          %8604 = vmatpush1.bf16.msra.mxu0 %v7517
          %8605 = vmatprep.subr.bf16.mxu0 %v7534
          %8606 = vmatpush1.bf16.msra.mxu0 %v7533
          %8607 = vmatprep.subr.bf16.mxu0 %v7550
          %8608 = vmatpush1.bf16.msra.mxu0 %v7549
          %8609 = vmatprep.subr.bf16.mxu0 %v7566
          %8610 = vmatpush1.bf16.msra.mxu0 %v7565
          %8611 = vmatprep.subr.bf16.mxu0 %v7582
          %8612 = vmatpush1.bf16.msra.mxu0 %v7581
          %8613 = vmatprep.subr.bf16.mxu0 %v7598
          %8614 = vmatpush1.bf16.msra.mxu0 %v7597
          %8615 = vmatprep.subr.bf16.mxu0 %v7614
          %8616 = vmatpush1.bf16.msra.mxu0 %v7613
          %8617 = vmatprep.subr.bf16.mxu0 %v7630
          %8618 = vmatpush1.bf16.msra.mxu0 %v7629
          %8619 = vmatprep.subr.bf16.mxu0 %v7646
          %8620 = vmatpush1.bf16.msra.mxu0 %v7645
          %8621 = vmatprep.mubr.bf16.mxu0 %v5266
          %8622 = vmatmul.mubr.bf16.gmra.mrb[0].mxu0 %v5265
          %v8623 = vpop.f32.mrb[0].mxu0
          %v8624 = vadd.f32 %v5804, %v8623
          %v8625 = vpop.f32.mrb[0].mxu0
          %v8626 = vadd.f32 %v5808, %v8625
          %v8627 = vpop.f32.mrb[0].mxu0
          %v8628 = vpop.f32.mrb[0].mxu0
          %8629 = vdwg.mxu0
          %8630 = vmatprep.subr.bf16.mxu0 %v7662
          %8631 = vmatpush1.bf16.msra.mxu0 %v7661
          %8632 = vmatprep.subr.bf16.mxu0 %v7678
          %8633 = vmatpush1.bf16.msra.mxu0 %v7677
          %8634 = vmatprep.subr.bf16.mxu0 %v7694
          %8635 = vmatpush1.bf16.msra.mxu0 %v7693
          %8636 = vmatprep.subr.bf16.mxu0 %v7710
          %8637 = vmatpush1.bf16.msra.mxu0 %v7709
          %8638 = vmatprep.subr.bf16.mxu0 %v7726
          %8639 = vmatpush1.bf16.msra.mxu0 %v7725
          %8640 = vmatprep.subr.bf16.mxu0 %v7742
          %8641 = vmatpush1.bf16.msra.mxu0 %v7741
          %8642 = vmatprep.subr.bf16.mxu0 %v7758
          %8643 = vmatpush1.bf16.msra.mxu0 %v7757
          %8644 = vmatprep.subr.bf16.mxu0 %v7774
          %8645 = vmatpush1.bf16.msra.mxu0 %v7773
          %8646 = vmatprep.subr.bf16.mxu0 %v7790
          %8647 = vmatpush1.bf16.msra.mxu0 %v7789
          %8648 = vmatprep.subr.bf16.mxu0 %v7806
          %8649 = vmatpush1.bf16.msra.mxu0 %v7805
          %8650 = vmatprep.subr.bf16.mxu0 %v7822
          %8651 = vmatpush1.bf16.msra.mxu0 %v7821
          %8652 = vmatprep.subr.bf16.mxu0 %v7838
          %8653 = vmatpush1.bf16.msra.mxu0 %v7837
          %8654 = vmatprep.subr.bf16.mxu0 %v7854
          %8655 = vmatpush1.bf16.msra.mxu0 %v7853
          %8656 = vmatprep.subr.bf16.mxu0 %v7870
          %8657 = vmatpush1.bf16.msra.mxu0 %v7869
          %8658 = vmatprep.subr.bf16.mxu0 %v7886
          %8659 = vmatpush1.bf16.msra.mxu0 %v7885
          %8660 = vmatprep.subr.bf16.mxu0 %v7902
          %8661 = vmatpush1.bf16.msra.mxu0 %v7901
          %8662 = vmatprep.mubr.bf16.mxu0 %v5268
          %8663 = vmatmul.mubr.bf16.gmra.mrb[0].mxu0 %v5267
          %v8664 = vpop.f32.mrb[0].mxu0
          %v8665 = vadd.f32 %v8624, %v8664
          %v8666 = vpop.f32.mrb[0].mxu0
          %v8667 = vadd.f32 %v8626, %v8666
          %v8668 = vpop.f32.mrb[0].mxu0
          %v8669 = vpop.f32.mrb[0].mxu0
          %8670 = vdwg.mxu0
          %8671 = vmatprep.subr.bf16.mxu0 %v7408
          %8672 = vmatpush1.bf16.msra.mxu0 %v7407
          %8673 = vmatprep.subr.bf16.mxu0 %v7424
          %8674 = vmatpush1.bf16.msra.mxu0 %v7423
          %8675 = vmatprep.subr.bf16.mxu0 %v7440
          %8676 = vmatpush1.bf16.msra.mxu0 %v7439
          %8677 = vmatprep.subr.bf16.mxu0 %v7456
          %8678 = vmatpush1.bf16.msra.mxu0 %v7455
          %8679 = vmatprep.subr.bf16.mxu0 %v7472
          %8680 = vmatpush1.bf16.msra.mxu0 %v7471
          %8681 = vmatprep.subr.bf16.mxu0 %v7488
          %8682 = vmatpush1.bf16.msra.mxu0 %v7487
          %8683 = vmatprep.subr.bf16.mxu0 %v7504
          %8684 = vmatpush1.bf16.msra.mxu0 %v7503
          %8685 = vmatprep.subr.bf16.mxu0 %v7520
          %8686 = vmatpush1.bf16.msra.mxu0 %v7519
          %8687 = vmatprep.subr.bf16.mxu0 %v7536
          %8688 = vmatpush1.bf16.msra.mxu0 %v7535
          %8689 = vmatprep.subr.bf16.mxu0 %v7552
          %8690 = vmatpush1.bf16.msra.mxu0 %v7551
          %8691 = vmatprep.subr.bf16.mxu0 %v7568
          %8692 = vmatpush1.bf16.msra.mxu0 %v7567
          %8693 = vmatprep.subr.bf16.mxu0 %v7584
          %8694 = vmatpush1.bf16.msra.mxu0 %v7583
          %8695 = vmatprep.subr.bf16.mxu0 %v7600
          %8696 = vmatpush1.bf16.msra.mxu0 %v7599
          %8697 = vmatprep.subr.bf16.mxu0 %v7616
          %8698 = vmatpush1.bf16.msra.mxu0 %v7615
          %8699 = vmatprep.subr.bf16.mxu0 %v7632
          %8700 = vmatpush1.bf16.msra.mxu0 %v7631
          %8701 = vmatprep.subr.bf16.mxu0 %v7648
          %8702 = vmatpush1.bf16.msra.mxu0 %v7647
          %8703 = vmatprep.mubr.bf16.mxu0 %v5266
          %8704 = vmatmul.mubr.bf16.gmra.mrb[0].mxu0 %v5265
          %v8705 = vpop.f32.mrb[0].mxu0
          %v8706 = vadd.f32 %v5812, %v8705
          %v8707 = vpop.f32.mrb[0].mxu0
          %v8708 = vadd.f32 %v5816, %v8707
          %v8709 = vpop.f32.mrb[0].mxu0
          %v8710 = vpop.f32.mrb[0].mxu0
          %8711 = vdwg.mxu0
          %8712 = vmatprep.subr.bf16.mxu0 %v7664
          %8713 = vmatpush1.bf16.msra.mxu0 %v7663
          %8714 = vmatprep.subr.bf16.mxu0 %v7680
          %8715 = vmatpush1.bf16.msra.mxu0 %v7679
          %8716 = vmatprep.subr.bf16.mxu0 %v7696
          %8717 = vmatpush1.bf16.msra.mxu0 %v7695
          %8718 = vmatprep.subr.bf16.mxu0 %v7712
          %8719 = vmatpush1.bf16.msra.mxu0 %v7711
          %8720 = vmatprep.subr.bf16.mxu0 %v7728
          %8721 = vmatpush1.bf16.msra.mxu0 %v7727
          %8722 = vmatprep.subr.bf16.mxu0 %v7744
          %8723 = vmatpush1.bf16.msra.mxu0 %v7743
          %8724 = vmatprep.subr.bf16.mxu0 %v7760
          %8725 = vmatpush1.bf16.msra.mxu0 %v7759
          %8726 = vmatprep.subr.bf16.mxu0 %v7776
          %8727 = vmatpush1.bf16.msra.mxu0 %v7775
          %8728 = vmatprep.subr.bf16.mxu0 %v7792
          %8729 = vmatpush1.bf16.msra.mxu0 %v7791
          %8730 = vmatprep.subr.bf16.mxu0 %v7808
          %8731 = vmatpush1.bf16.msra.mxu0 %v7807
          %8732 = vmatprep.subr.bf16.mxu0 %v7824
          %8733 = vmatpush1.bf16.msra.mxu0 %v7823
          %8734 = vmatprep.subr.bf16.mxu0 %v7840
          %8735 = vmatpush1.bf16.msra.mxu0 %v7839
          %8736 = vmatprep.subr.bf16.mxu0 %v7856
          %8737 = vmatpush1.bf16.msra.mxu0 %v7855
          %8738 = vmatprep.subr.bf16.mxu0 %v7872
          %8739 = vmatpush1.bf16.msra.mxu0 %v7871
          %8740 = vmatprep.subr.bf16.mxu0 %v7888
          %8741 = vmatpush1.bf16.msra.mxu0 %v7887
          %8742 = vmatprep.subr.bf16.mxu0 %v7904
          %8743 = vmatpush1.bf16.msra.mxu0 %v7903
          %8744 = vmatprep.mubr.bf16.mxu0 %v5268
          %8745 = vmatmul.mubr.bf16.gmra.mrb[0].mxu0 %v5267
          %v8746 = vpop.f32.mrb[0].mxu0
          %v8747 = vadd.f32 %v8706, %v8746
          %v8748 = vpop.f32.mrb[0].mxu0
          %v8749 = vadd.f32 %v8708, %v8748
          %v8750 = vpop.f32.mrb[0].mxu0
          %v8751 = vpop.f32.mrb[0].mxu0
          %8752 = vdwg.mxu0
          %8753 = vmatprep.subr.bf16.mxu0 %v7410
          %8754 = vmatpush1.bf16.msra.mxu0 %v7409
          %8755 = vmatprep.subr.bf16.mxu0 %v7426
          %8756 = vmatpush1.bf16.msra.mxu0 %v7425
          %8757 = vmatprep.subr.bf16.mxu0 %v7442
          %8758 = vmatpush1.bf16.msra.mxu0 %v7441
          %8759 = vmatprep.subr.bf16.mxu0 %v7458
          %8760 = vmatpush1.bf16.msra.mxu0 %v7457
          %8761 = vmatprep.subr.bf16.mxu0 %v7474
          %8762 = vmatpush1.bf16.msra.mxu0 %v7473
          %8763 = vmatprep.subr.bf16.mxu0 %v7490
          %8764 = vmatpush1.bf16.msra.mxu0 %v7489
          %8765 = vmatprep.subr.bf16.mxu0 %v7506
          %8766 = vmatpush1.bf16.msra.mxu0 %v7505
          %8767 = vmatprep.subr.bf16.mxu0 %v7522
          %8768 = vmatpush1.bf16.msra.mxu0 %v7521
          %8769 = vmatprep.subr.bf16.mxu0 %v7538
          %8770 = vmatpush1.bf16.msra.mxu0 %v7537
          %8771 = vmatprep.subr.bf16.mxu0 %v7554
          %8772 = vmatpush1.bf16.msra.mxu0 %v7553
          %8773 = vmatprep.subr.bf16.mxu0 %v7570
          %8774 = vmatpush1.bf16.msra.mxu0 %v7569
          %8775 = vmatprep.subr.bf16.mxu0 %v7586
          %8776 = vmatpush1.bf16.msra.mxu0 %v7585
          %8777 = vmatprep.subr.bf16.mxu0 %v7602
          %8778 = vmatpush1.bf16.msra.mxu0 %v7601
          %8779 = vmatprep.subr.bf16.mxu0 %v7618
          %8780 = vmatpush1.bf16.msra.mxu0 %v7617
          %8781 = vmatprep.subr.bf16.mxu0 %v7634
          %8782 = vmatpush1.bf16.msra.mxu0 %v7633
          %8783 = vmatprep.subr.bf16.mxu0 %v7650
          %8784 = vmatpush1.bf16.msra.mxu0 %v7649
          %8785 = vmatprep.mubr.bf16.mxu0 %v5266
          %8786 = vmatmul.mubr.bf16.gmra.mrb[0].mxu0 %v5265
          %v8787 = vpop.f32.mrb[0].mxu0
          %v8788 = vadd.f32 %v5820, %v8787
          %v8789 = vpop.f32.mrb[0].mxu0
          %v8790 = vadd.f32 %v5824, %v8789
          %v8791 = vpop.f32.mrb[0].mxu0
          %v8792 = vpop.f32.mrb[0].mxu0
          %8793 = vdwg.mxu0
          %8794 = vmatprep.subr.bf16.mxu0 %v7666
          %8795 = vmatpush1.bf16.msra.mxu0 %v7665
          %8796 = vmatprep.subr.bf16.mxu0 %v7682
          %8797 = vmatpush1.bf16.msra.mxu0 %v7681
          %8798 = vmatprep.subr.bf16.mxu0 %v7698
          %8799 = vmatpush1.bf16.msra.mxu0 %v7697
          %8800 = vmatprep.subr.bf16.mxu0 %v7714
          %8801 = vmatpush1.bf16.msra.mxu0 %v7713
          %8802 = vmatprep.subr.bf16.mxu0 %v7730
          %8803 = vmatpush1.bf16.msra.mxu0 %v7729
          %8804 = vmatprep.subr.bf16.mxu0 %v7746
          %8805 = vmatpush1.bf16.msra.mxu0 %v7745
          %8806 = vmatprep.subr.bf16.mxu0 %v7762
          %8807 = vmatpush1.bf16.msra.mxu0 %v7761
          %8808 = vmatprep.subr.bf16.mxu0 %v7778
          %8809 = vmatpush1.bf16.msra.mxu0 %v7777
          %8810 = vmatprep.subr.bf16.mxu0 %v7794
          %8811 = vmatpush1.bf16.msra.mxu0 %v7793
          %8812 = vmatprep.subr.bf16.mxu0 %v7810
          %8813 = vmatpush1.bf16.msra.mxu0 %v7809
          %8814 = vmatprep.subr.bf16.mxu0 %v7826
          %8815 = vmatpush1.bf16.msra.mxu0 %v7825
          %8816 = vmatprep.subr.bf16.mxu0 %v7842
          %8817 = vmatpush1.bf16.msra.mxu0 %v7841
          %8818 = vmatprep.subr.bf16.mxu0 %v7858
          %8819 = vmatpush1.bf16.msra.mxu0 %v7857
          %8820 = vmatprep.subr.bf16.mxu0 %v7874
          %8821 = vmatpush1.bf16.msra.mxu0 %v7873
          %8822 = vmatprep.subr.bf16.mxu0 %v7890
          %8823 = vmatpush1.bf16.msra.mxu0 %v7889
          %8824 = vmatprep.subr.bf16.mxu0 %v7906
          %8825 = vmatpush1.bf16.msra.mxu0 %v7905
          %8826 = vmatprep.mubr.bf16.mxu0 %v5268
          %8827 = vmatmul.mubr.bf16.gmra.mrb[0].mxu0 %v5267
          %v8828 = vpop.f32.mrb[0].mxu0
          %v8829 = vadd.f32 %v8788, %v8828
          %v8830 = vpop.f32.mrb[0].mxu0
          %v8831 = vadd.f32 %v8790, %v8830
          %v8832 = vpop.f32.mrb[0].mxu0
          %v8833 = vpop.f32.mrb[0].mxu0
          %8834 = vdwg.mxu0
          %8835 = vmatprep.subr.bf16.mxu0 %v7412
          %8836 = vmatpush1.bf16.msra.mxu0 %v7411
          %8837 = vmatprep.subr.bf16.mxu0 %v7428
          %8838 = vmatpush1.bf16.msra.mxu0 %v7427
          %8839 = vmatprep.subr.bf16.mxu0 %v7444
          %8840 = vmatpush1.bf16.msra.mxu0 %v7443
          %8841 = vmatprep.subr.bf16.mxu0 %v7460
          %8842 = vmatpush1.bf16.msra.mxu0 %v7459
          %8843 = vmatprep.subr.bf16.mxu0 %v7476
          %8844 = vmatpush1.bf16.msra.mxu0 %v7475
          %8845 = vmatprep.subr.bf16.mxu0 %v7492
          %8846 = vmatpush1.bf16.msra.mxu0 %v7491
          %8847 = vmatprep.subr.bf16.mxu0 %v7508
          %8848 = vmatpush1.bf16.msra.mxu0 %v7507
          %8849 = vmatprep.subr.bf16.mxu0 %v7524
          %8850 = vmatpush1.bf16.msra.mxu0 %v7523
          %8851 = vmatprep.subr.bf16.mxu0 %v7540
          %8852 = vmatpush1.bf16.msra.mxu0 %v7539
          %8853 = vmatprep.subr.bf16.mxu0 %v7556
          %8854 = vmatpush1.bf16.msra.mxu0 %v7555
          %8855 = vmatprep.subr.bf16.mxu0 %v7572
          %8856 = vmatpush1.bf16.msra.mxu0 %v7571
          %8857 = vmatprep.subr.bf16.mxu0 %v7588
          %8858 = vmatpush1.bf16.msra.mxu0 %v7587
          %8859 = vmatprep.subr.bf16.mxu0 %v7604
          %8860 = vmatpush1.bf16.msra.mxu0 %v7603
          %8861 = vmatprep.subr.bf16.mxu0 %v7620
          %8862 = vmatpush1.bf16.msra.mxu0 %v7619
          %8863 = vmatprep.subr.bf16.mxu0 %v7636
          %8864 = vmatpush1.bf16.msra.mxu0 %v7635
          %8865 = vmatprep.subr.bf16.mxu0 %v7652
          %8866 = vmatpush1.bf16.msra.mxu0 %v7651
          %8867 = vmatprep.mubr.bf16.mxu0 %v5266
          %8868 = vmatmul.mubr.bf16.gmra.mrb[0].mxu0 %v5265
          %v8869 = vpop.f32.mrb[0].mxu0
          %v8870 = vadd.f32 %v5828, %v8869
          %v8871 = vpop.f32.mrb[0].mxu0
          %v8872 = vadd.f32 %v5832, %v8871
          %v8873 = vpop.f32.mrb[0].mxu0
          %v8874 = vpop.f32.mrb[0].mxu0
          %8875 = vdwg.mxu0
          %8876 = vmatprep.subr.bf16.mxu0 %v7668
          %8877 = vmatpush1.bf16.msra.mxu0 %v7667
          %8878 = vmatprep.subr.bf16.mxu0 %v7684
          %8879 = vmatpush1.bf16.msra.mxu0 %v7683
          %8880 = vmatprep.subr.bf16.mxu0 %v7700
          %8881 = vmatpush1.bf16.msra.mxu0 %v7699
          %8882 = vmatprep.subr.bf16.mxu0 %v7716
          %8883 = vmatpush1.bf16.msra.mxu0 %v7715
          %8884 = vmatprep.subr.bf16.mxu0 %v7732
          %8885 = vmatpush1.bf16.msra.mxu0 %v7731
          %8886 = vmatprep.subr.bf16.mxu0 %v7748
          %8887 = vmatpush1.bf16.msra.mxu0 %v7747
          %8888 = vmatprep.subr.bf16.mxu0 %v7764
          %8889 = vmatpush1.bf16.msra.mxu0 %v7763
          %8890 = vmatprep.subr.bf16.mxu0 %v7780
          %8891 = vmatpush1.bf16.msra.mxu0 %v7779
          %8892 = vmatprep.subr.bf16.mxu0 %v7796
          %8893 = vmatpush1.bf16.msra.mxu0 %v7795
          %8894 = vmatprep.subr.bf16.mxu0 %v7812
          %8895 = vmatpush1.bf16.msra.mxu0 %v7811
          %8896 = vmatprep.subr.bf16.mxu0 %v7828
          %8897 = vmatpush1.bf16.msra.mxu0 %v7827
          %8898 = vmatprep.subr.bf16.mxu0 %v7844
          %8899 = vmatpush1.bf16.msra.mxu0 %v7843
          %8900 = vmatprep.subr.bf16.mxu0 %v7860
          %8901 = vmatpush1.bf16.msra.mxu0 %v7859
          %8902 = vmatprep.subr.bf16.mxu0 %v7876
          %8903 = vmatpush1.bf16.msra.mxu0 %v7875
          %8904 = vmatprep.subr.bf16.mxu0 %v7892
          %8905 = vmatpush1.bf16.msra.mxu0 %v7891
          %8906 = vmatprep.subr.bf16.mxu0 %v7908
          %8907 = vmatpush1.bf16.msra.mxu0 %v7907
          %8908 = vmatprep.mubr.bf16.mxu0 %v5268
          %8909 = vmatmul.mubr.bf16.gmra.mrb[0].mxu0 %v5267
          %v8910 = vpop.f32.mrb[0].mxu0
          %v8911 = vadd.f32 %v8870, %v8910
          %v8912 = vpop.f32.mrb[0].mxu0
          %v8913 = vadd.f32 %v8872, %v8912
          %v8914 = vpop.f32.mrb[0].mxu0
          %v8915 = vpop.f32.mrb[0].mxu0
          %8916 = vdwg.mxu0
          %8917 = vmatprep.subr.bf16.mxu0 %v7414
          %8918 = vmatpush1.bf16.msra.mxu0 %v7413
          %8919 = vmatprep.subr.bf16.mxu0 %v7430
          %8920 = vmatpush1.bf16.msra.mxu0 %v7429
          %8921 = vmatprep.subr.bf16.mxu0 %v7446
          %8922 = vmatpush1.bf16.msra.mxu0 %v7445
          %8923 = vmatprep.subr.bf16.mxu0 %v7462
          %8924 = vmatpush1.bf16.msra.mxu0 %v7461
          %8925 = vmatprep.subr.bf16.mxu0 %v7478
          %8926 = vmatpush1.bf16.msra.mxu0 %v7477
          %8927 = vmatprep.subr.bf16.mxu0 %v7494
          %8928 = vmatpush1.bf16.msra.mxu0 %v7493
          %8929 = vmatprep.subr.bf16.mxu0 %v7510
          %8930 = vmatpush1.bf16.msra.mxu0 %v7509
          %8931 = vmatprep.subr.bf16.mxu0 %v7526
          %8932 = vmatpush1.bf16.msra.mxu0 %v7525
          %8933 = vmatprep.subr.bf16.mxu0 %v7542
          %8934 = vmatpush1.bf16.msra.mxu0 %v7541
          %8935 = vmatprep.subr.bf16.mxu0 %v7558
          %8936 = vmatpush1.bf16.msra.mxu0 %v7557
          %8937 = vmatprep.subr.bf16.mxu0 %v7574
          %8938 = vmatpush1.bf16.msra.mxu0 %v7573
          %8939 = vmatprep.subr.bf16.mxu0 %v7590
          %8940 = vmatpush1.bf16.msra.mxu0 %v7589
          %8941 = vmatprep.subr.bf16.mxu0 %v7606
          %8942 = vmatpush1.bf16.msra.mxu0 %v7605
          %8943 = vmatprep.subr.bf16.mxu0 %v7622
          %8944 = vmatpush1.bf16.msra.mxu0 %v7621
          %8945 = vmatprep.subr.bf16.mxu0 %v7638
          %8946 = vmatpush1.bf16.msra.mxu0 %v7637
          %8947 = vmatprep.subr.bf16.mxu0 %v7654
          %8948 = vmatpush1.bf16.msra.mxu0 %v7653
          %8949 = vmatprep.mubr.bf16.mxu0 %v5266
          %8950 = vmatmul.mubr.bf16.gmra.mrb[0].mxu0 %v5265
          %v8951 = vpop.f32.mrb[0].mxu0
          %v8952 = vadd.f32 %v5836, %v8951
          %v8953 = vpop.f32.mrb[0].mxu0
          %v8954 = vadd.f32 %v5840, %v8953
          %v8955 = vpop.f32.mrb[0].mxu0
          %v8956 = vpop.f32.mrb[0].mxu0
          %8957 = vdwg.mxu0
          %8958 = vmatprep.subr.bf16.mxu0 %v7670
          %8959 = vmatpush1.bf16.msra.mxu0 %v7669
          %8960 = vmatprep.subr.bf16.mxu0 %v7686
          %8961 = vmatpush1.bf16.msra.mxu0 %v7685
          %8962 = vmatprep.subr.bf16.mxu0 %v7702
          %8963 = vmatpush1.bf16.msra.mxu0 %v7701
          %8964 = vmatprep.subr.bf16.mxu0 %v7718
          %8965 = vmatpush1.bf16.msra.mxu0 %v7717
          %8966 = vmatprep.subr.bf16.mxu0 %v7734
          %8967 = vmatpush1.bf16.msra.mxu0 %v7733
          %8968 = vmatprep.subr.bf16.mxu0 %v7750
          %8969 = vmatpush1.bf16.msra.mxu0 %v7749
          %8970 = vmatprep.subr.bf16.mxu0 %v7766
          %8971 = vmatpush1.bf16.msra.mxu0 %v7765
          %8972 = vmatprep.subr.bf16.mxu0 %v7782
          %8973 = vmatpush1.bf16.msra.mxu0 %v7781
          %8974 = vmatprep.subr.bf16.mxu0 %v7798
          %8975 = vmatpush1.bf16.msra.mxu0 %v7797
          %8976 = vmatprep.subr.bf16.mxu0 %v7814
          %8977 = vmatpush1.bf16.msra.mxu0 %v7813
          %8978 = vmatprep.subr.bf16.mxu0 %v7830
          %8979 = vmatpush1.bf16.msra.mxu0 %v7829
          %8980 = vmatprep.subr.bf16.mxu0 %v7846
          %8981 = vmatpush1.bf16.msra.mxu0 %v7845
          %8982 = vmatprep.subr.bf16.mxu0 %v7862
          %8983 = vmatpush1.bf16.msra.mxu0 %v7861
          %8984 = vmatprep.subr.bf16.mxu0 %v7878
          %8985 = vmatpush1.bf16.msra.mxu0 %v7877
          %8986 = vmatprep.subr.bf16.mxu0 %v7894
          %8987 = vmatpush1.bf16.msra.mxu0 %v7893
          %8988 = vmatprep.subr.bf16.mxu0 %v7910
          %8989 = vmatpush1.bf16.msra.mxu0 %v7909
          %8990 = vmatprep.mubr.bf16.mxu0 %v5268
          %8991 = vmatmul.mubr.bf16.gmra.mrb[0].mxu0 %v5267
          %v8992 = vpop.f32.mrb[0].mxu0
          %v8993 = vadd.f32 %v8952, %v8992
          %v8994 = vpop.f32.mrb[0].mxu0
          %v8995 = vadd.f32 %v8954, %v8994
          %v8996 = vpop.f32.mrb[0].mxu0
          %v8997 = vpop.f32.mrb[0].mxu0
          %8998 = vdwg.mxu0
          %8999 = vmatprep.subr.bf16.mxu0 %v7416
          %9000 = vmatpush1.bf16.msra.mxu0 %v7415
          %9001 = vmatprep.subr.bf16.mxu0 %v7432
          %9002 = vmatpush1.bf16.msra.mxu0 %v7431
          %9003 = vmatprep.subr.bf16.mxu0 %v7448
          %9004 = vmatpush1.bf16.msra.mxu0 %v7447
          %9005 = vmatprep.subr.bf16.mxu0 %v7464
          %9006 = vmatpush1.bf16.msra.mxu0 %v7463
          %9007 = vmatprep.subr.bf16.mxu0 %v7480
          %9008 = vmatpush1.bf16.msra.mxu0 %v7479
          %9009 = vmatprep.subr.bf16.mxu0 %v7496
          %9010 = vmatpush1.bf16.msra.mxu0 %v7495
          %9011 = vmatprep.subr.bf16.mxu0 %v7512
          %9012 = vmatpush1.bf16.msra.mxu0 %v7511
          %9013 = vmatprep.subr.bf16.mxu0 %v7528
          %9014 = vmatpush1.bf16.msra.mxu0 %v7527
          %9015 = vmatprep.subr.bf16.mxu0 %v7544
          %9016 = vmatpush1.bf16.msra.mxu0 %v7543
          %9017 = vmatprep.subr.bf16.mxu0 %v7560
          %9018 = vmatpush1.bf16.msra.mxu0 %v7559
          %9019 = vmatprep.subr.bf16.mxu0 %v7576
          %9020 = vmatpush1.bf16.msra.mxu0 %v7575
          %9021 = vmatprep.subr.bf16.mxu0 %v7592
          %9022 = vmatpush1.bf16.msra.mxu0 %v7591
          %9023 = vmatprep.subr.bf16.mxu0 %v7608
          %9024 = vmatpush1.bf16.msra.mxu0 %v7607
          %9025 = vmatprep.subr.bf16.mxu0 %v7624
          %9026 = vmatpush1.bf16.msra.mxu0 %v7623
          %9027 = vmatprep.subr.bf16.mxu0 %v7640
          %9028 = vmatpush1.bf16.msra.mxu0 %v7639
          %9029 = vmatprep.subr.bf16.mxu0 %v7656
          %9030 = vmatpush1.bf16.msra.mxu0 %v7655
          %9031 = vmatprep.mubr.bf16.mxu0 %v5266
          %9032 = vmatmul.mubr.bf16.gmra.mrb[0].mxu0 %v5265
          %v9033 = vpop.f32.mrb[0].mxu0
          %v9034 = vadd.f32 %v5844, %v9033
          %v9035 = vpop.f32.mrb[0].mxu0
          %v9036 = vadd.f32 %v5848, %v9035
          %v9037 = vpop.f32.mrb[0].mxu0
          %v9038 = vpop.f32.mrb[0].mxu0
          %9039 = vdwg.mxu0
          %9040 = vmatprep.subr.bf16.mxu0 %v7672
          %9041 = vmatpush1.bf16.msra.mxu0 %v7671
          %9042 = vmatprep.subr.bf16.mxu0 %v7688
          %9043 = vmatpush1.bf16.msra.mxu0 %v7687
          %9044 = vmatprep.subr.bf16.mxu0 %v7704
          %9045 = vmatpush1.bf16.msra.mxu0 %v7703
          %9046 = vmatprep.subr.bf16.mxu0 %v7720
          %9047 = vmatpush1.bf16.msra.mxu0 %v7719
          %9048 = vmatprep.subr.bf16.mxu0 %v7736
          %9049 = vmatpush1.bf16.msra.mxu0 %v7735
          %9050 = vmatprep.subr.bf16.mxu0 %v7752
          %9051 = vmatpush1.bf16.msra.mxu0 %v7751
          %9052 = vmatprep.subr.bf16.mxu0 %v7768
          %9053 = vmatpush1.bf16.msra.mxu0 %v7767
          %9054 = vmatprep.subr.bf16.mxu0 %v7784
          %9055 = vmatpush1.bf16.msra.mxu0 %v7783
          %9056 = vmatprep.subr.bf16.mxu0 %v7800
          %9057 = vmatpush1.bf16.msra.mxu0 %v7799
          %9058 = vmatprep.subr.bf16.mxu0 %v7816
          %9059 = vmatpush1.bf16.msra.mxu0 %v7815
          %9060 = vmatprep.subr.bf16.mxu0 %v7832
          %9061 = vmatpush1.bf16.msra.mxu0 %v7831
          %9062 = vmatprep.subr.bf16.mxu0 %v7848
          %9063 = vmatpush1.bf16.msra.mxu0 %v7847
          %9064 = vmatprep.subr.bf16.mxu0 %v7864
          %9065 = vmatpush1.bf16.msra.mxu0 %v7863
          %9066 = vmatprep.subr.bf16.mxu0 %v7880
          %9067 = vmatpush1.bf16.msra.mxu0 %v7879
          %9068 = vmatprep.subr.bf16.mxu0 %v7896
          %9069 = vmatpush1.bf16.msra.mxu0 %v7895
          %9070 = vmatprep.subr.bf16.mxu0 %v7912
          %9071 = vmatpush1.bf16.msra.mxu0 %v7911
          %9072 = vmatprep.mubr.bf16.mxu0 %v5268
          %9073 = vmatmul.mubr.bf16.gmra.mrb[0].mxu0 %v5267
          %v9074 = vpop.f32.mrb[0].mxu0
          %v9075 = vadd.f32 %v9034, %v9074
          %v9076 = vpop.f32.mrb[0].mxu0
          %v9077 = vadd.f32 %v9036, %v9076
          %v9078 = vpop.f32.mrb[0].mxu0
          %v9079 = vpop.f32.mrb[0].mxu0
          %9080 = vdwg.mxu0
          %v9081 = vmax.f32 %v8501, 0.0
          %v9082 = vmax.f32 %v8503, 0.0
          %v9083 = vmax.f32 %v8583, 0.0
          %v9084 = vmax.f32 %v8585, 0.0
          %v9085 = vmax.f32 %v8665, 0.0
          %v9086 = vmax.f32 %v8667, 0.0
          %v9087 = vmax.f32 %v8747, 0.0
          %v9088 = vmax.f32 %v8749, 0.0
          %v9089 = vmax.f32 %v8829, 0.0
          %v9090 = vmax.f32 %v8831, 0.0
          %v9091 = vmax.f32 %v8911, 0.0
          %v9092 = vmax.f32 %v8913, 0.0
          %v9093 = vmax.f32 %v8993, 0.0
          %v9094 = vmax.f32 %v8995, 0.0
          %v9095 = vmax.f32 %v9075, 0.0
          %v9096 = vmax.f32 %v9077, 0.0
          %v9097 = vpack.c.bf16 %v9081, %v9081
          %v9098 = vpack.c.bf16 %v9082, %v9082
          %v9099 = vpack.c.bf16 %v9083, %v9083
          %v9100 = vpack.c.bf16 %v9084, %v9084
          %v9101 = vpack.c.bf16 %v9085, %v9085
          %v9102 = vpack.c.bf16 %v9086, %v9086
          %v9103 = vpack.c.bf16 %v9087, %v9087
          %v9104 = vpack.c.bf16 %v9088, %v9088
          %v9105 = vpack.c.bf16 %v9089, %v9089
          %v9106 = vpack.c.bf16 %v9090, %v9090
          %v9107 = vpack.c.bf16 %v9091, %v9091
          %v9108 = vpack.c.bf16 %v9092, %v9092
          %v9109 = vpack.c.bf16 %v9093, %v9093
          %v9110 = vpack.c.bf16 %v9094, %v9094
          %v9111 = vpack.c.bf16 %v9095, %v9095
          %v9112 = vpack.c.bf16 %v9096, %v9096
          %v9129 = vunpack.c.l.b16 %v9097
          %v9130 = vunpack.c.l.b16 %v9098
          %v9131 = vunpack.c.l.b16 %v9099
          %v9132 = vunpack.c.l.b16 %v9100
          %v9133 = vunpack.c.l.b16 %v9101
          %v9134 = vunpack.c.l.b16 %v9102
          %v9135 = vunpack.c.l.b16 %v9103
          %v9136 = vunpack.c.l.b16 %v9104
          %v9137 = vunpack.c.l.b16 %v9105
          %v9138 = vunpack.c.l.b16 %v9106
          %v9139 = vunpack.c.l.b16 %v9107
          %v9140 = vunpack.c.l.b16 %v9108
          %v9141 = vunpack.c.l.b16 %v9109
          %v9142 = vunpack.c.l.b16 %v9110
          %v9143 = vunpack.c.l.b16 %v9111
          %v9144 = vunpack.c.l.b16 %v9112
          %v9145 = vpack.c.b16 %v9130, %v9129
          %v9146 = vpack.c.b16 %v9132, %v9131
          %v9147 = vpack.c.b16 %v9134, %v9133
          %v9148 = vpack.c.b16 %v9136, %v9135
          %v9149 = vpack.c.b16 %v9138, %v9137
          %v9150 = vpack.c.b16 %v9140, %v9139
          %v9151 = vpack.c.b16 %v9142, %v9141
          %v9152 = vpack.c.b16 %v9144, %v9143
          %s9161 = sshra.s32 %s512, 3
          %s9162 = sand.u32 %s512, 7
          %s9163 = smul.u32 %s9161, 16
          %s9164 = smul.addr %s9163, 4
          %s9165 = scalar_lea.vmem [#allocation2], %s9164
          %9166 = vst [vmem:[%s9165] sm:$0xff] %v9145
          %9167 = vst [vmem:[%s9165 + $0x8] sm:$0xff] %v9146
          %9168 = vst [vmem:[%s9165 + $0x10] sm:$0xff] %v9147
          %9169 = vst [vmem:[%s9165 + $0x18] sm:$0xff] %v9148
          %9170 = vst [vmem:[%s9165 + $0x20] sm:$0xff] %v9149
          %9171 = vst [vmem:[%s9165 + $0x28] sm:$0xff] %v9150
          %9172 = vst [vmem:[%s9165 + $0x30] sm:$0xff] %v9151
          %9173 = vst [vmem:[%s9165 + $0x38] sm:$0xff] %v9152
        $region92: #{one_step_net_forward.1} parent=55 // pred_fallthru
          _
        %s9174 = sshra.s32 %s512, 3
        %s9175 = sand.u32 %s512, 7
        %s9176 = smul.u32 %s9174, 16
        %s9177 = smul.addr %s9176, 4
        %s9178 = scalar_lea.vmem [#allocation2], %s9177
        %v9179 = vld [vmem:[%s9178] sm:$0xff]
        %v9180 = vld [vmem:[%s9178 + $0x8] sm:$0xff]
        %v9181 = vld [vmem:[%s9178 + $0x10] sm:$0xff]
        %v9182 = vld [vmem:[%s9178 + $0x18] sm:$0xff]
        %v9183 = vld [vmem:[%s9178 + $0x20] sm:$0xff]
        %v9184 = vld [vmem:[%s9178 + $0x28] sm:$0xff]
        %v9185 = vld [vmem:[%s9178 + $0x30] sm:$0xff]
        %v9186 = vld [vmem:[%s9178 + $0x38] sm:$0xff]
        %v9187 = vld [vmem:[%s437] sm:$0xff]
        %v9188 = vld [vmem:[%s437 + $0x8] sm:$0xff]
        %v9189 = vld [vmem:[%s437 + $0x10] sm:$0xff]
        %v9190 = vld [vmem:[%s437 + $0x18] sm:$0xff]
        %v9191 = vld [vmem:[%s437 + $0x20] sm:$0xff]
        %v9192 = vld [vmem:[%s437 + $0x28] sm:$0xff]
        %v9193 = vld [vmem:[%s437 + $0x30] sm:$0xff]
        %v9194 = vld [vmem:[%s437 + $0x38] sm:$0xff]
        %v9195 = vld [vmem:[%s437 + $0x40] sm:$0xff]
        %v9196 = vld [vmem:[%s437 + $0x48] sm:$0xff]
        %v9197 = vld [vmem:[%s437 + $0x50] sm:$0xff]
        %v9198 = vld [vmem:[%s437 + $0x58] sm:$0xff]
        %v9199 = vld [vmem:[%s437 + $0x60] sm:$0xff]
        %v9200 = vld [vmem:[%s437 + $0x68] sm:$0xff]
        %v9201 = vld [vmem:[%s437 + $0x70] sm:$0xff]
        %v9202 = vld [vmem:[%s437 + $0x78] sm:$0xff]
        %v9203 = vld [vmem:[%s437 + $0x80] sm:$0xff]
        %v9204 = vld [vmem:[%s437 + $0x88] sm:$0xff]
        %v9205 = vld [vmem:[%s437 + $0x90] sm:$0xff]
        %v9206 = vld [vmem:[%s437 + $0x98] sm:$0xff]
        %v9207 = vld [vmem:[%s437 + $0xa0] sm:$0xff]
        %v9208 = vld [vmem:[%s437 + $0xa8] sm:$0xff]
        %v9209 = vld [vmem:[%s437 + $0xb0] sm:$0xff]
        %v9210 = vld [vmem:[%s437 + $0xb8] sm:$0xff]
        %v9211 = vld [vmem:[%s437 + $0xc0] sm:$0xff]
        %v9212 = vld [vmem:[%s437 + $0xc8] sm:$0xff]
        %v9213 = vld [vmem:[%s437 + $0xd0] sm:$0xff]
        %v9214 = vld [vmem:[%s437 + $0xd8] sm:$0xff]
        %v9215 = vld [vmem:[%s437 + $0xe0] sm:$0xff]
        %v9216 = vld [vmem:[%s437 + $0xe8] sm:$0xff]
        %v9217 = vld [vmem:[%s437 + $0xf0] sm:$0xff]
        %v9218 = vld [vmem:[%s437 + $0xf8] sm:$0xff]
        %v9219 = vld [vmem:[%s437 + $0x100] sm:$0xff]
        %v9220 = vld [vmem:[%s437 + $0x108] sm:$0xff]
        %v9221 = vld [vmem:[%s437 + $0x110] sm:$0xff]
        %v9222 = vld [vmem:[%s437 + $0x118] sm:$0xff]
        %v9223 = vld [vmem:[%s437 + $0x120] sm:$0xff]
        %v9224 = vld [vmem:[%s437 + $0x128] sm:$0xff]
        %v9225 = vld [vmem:[%s437 + $0x130] sm:$0xff]
        %v9226 = vld [vmem:[%s437 + $0x138] sm:$0xff]
        %v9227 = vld [vmem:[%s437 + $0x140] sm:$0xff]
        %v9228 = vld [vmem:[%s437 + $0x148] sm:$0xff]
        %v9229 = vld [vmem:[%s437 + $0x150] sm:$0xff]
        %v9230 = vld [vmem:[%s437 + $0x158] sm:$0xff]
        %v9231 = vld [vmem:[%s437 + $0x160] sm:$0xff]
        %v9232 = vld [vmem:[%s437 + $0x168] sm:$0xff]
        %v9233 = vld [vmem:[%s437 + $0x170] sm:$0xff]
        %v9234 = vld [vmem:[%s437 + $0x178] sm:$0xff]
        %v9235 = vld [vmem:[%s437 + $0x180] sm:$0xff]
        %v9236 = vld [vmem:[%s437 + $0x188] sm:$0xff]
        %v9237 = vld [vmem:[%s437 + $0x190] sm:$0xff]
        %v9238 = vld [vmem:[%s437 + $0x198] sm:$0xff]
        %v9239 = vld [vmem:[%s437 + $0x1a0] sm:$0xff]
        %v9240 = vld [vmem:[%s437 + $0x1a8] sm:$0xff]
        %v9241 = vld [vmem:[%s437 + $0x1b0] sm:$0xff]
        %v9242 = vld [vmem:[%s437 + $0x1b8] sm:$0xff]
        %v9243 = vld [vmem:[%s437 + $0x1c0] sm:$0xff]
        %v9244 = vld [vmem:[%s437 + $0x1c8] sm:$0xff]
        %v9245 = vld [vmem:[%s437 + $0x1d0] sm:$0xff]
        %v9246 = vld [vmem:[%s437 + $0x1d8] sm:$0xff]
        %v9247 = vld [vmem:[%s437 + $0x1e0] sm:$0xff]
        %v9248 = vld [vmem:[%s437 + $0x1e8] sm:$0xff]
        %v9249 = vld [vmem:[%s437 + $0x1f0] sm:$0xff]
        %v9250 = vld [vmem:[%s437 + $0x1f8] sm:$0xff]
        %v9251 = vld [vmem:[%s437 + $0x200] sm:$0xff]
        %v9252 = vld [vmem:[%s437 + $0x208] sm:$0xff]
        %v9253 = vld [vmem:[%s437 + $0x210] sm:$0xff]
        %v9254 = vld [vmem:[%s437 + $0x218] sm:$0xff]
        %v9255 = vld [vmem:[%s437 + $0x220] sm:$0xff]
        %v9256 = vld [vmem:[%s437 + $0x228] sm:$0xff]
        %v9257 = vld [vmem:[%s437 + $0x230] sm:$0xff]
        %v9258 = vld [vmem:[%s437 + $0x238] sm:$0xff]
        %v9259 = vld [vmem:[%s437 + $0x240] sm:$0xff]
        %v9260 = vld [vmem:[%s437 + $0x248] sm:$0xff]
        %v9261 = vld [vmem:[%s437 + $0x250] sm:$0xff]
        %v9262 = vld [vmem:[%s437 + $0x258] sm:$0xff]
        %v9263 = vld [vmem:[%s437 + $0x260] sm:$0xff]
        %v9264 = vld [vmem:[%s437 + $0x268] sm:$0xff]
        %v9265 = vld [vmem:[%s437 + $0x270] sm:$0xff]
        %v9266 = vld [vmem:[%s437 + $0x278] sm:$0xff]
        %v9267 = vld [vmem:[%s437 + $0x280] sm:$0xff]
        %v9268 = vld [vmem:[%s437 + $0x288] sm:$0xff]
        %v9269 = vld [vmem:[%s437 + $0x290] sm:$0xff]
        %v9270 = vld [vmem:[%s437 + $0x298] sm:$0xff]
        %v9271 = vld [vmem:[%s437 + $0x2a0] sm:$0xff]
        %v9272 = vld [vmem:[%s437 + $0x2a8] sm:$0xff]
        %v9273 = vld [vmem:[%s437 + $0x2b0] sm:$0xff]
        %v9274 = vld [vmem:[%s437 + $0x2b8] sm:$0xff]
        %v9275 = vld [vmem:[%s437 + $0x2c0] sm:$0xff]
        %v9276 = vld [vmem:[%s437 + $0x2c8] sm:$0xff]
        %v9277 = vld [vmem:[%s437 + $0x2d0] sm:$0xff]
        %v9278 = vld [vmem:[%s437 + $0x2d8] sm:$0xff]
        %v9279 = vld [vmem:[%s437 + $0x2e0] sm:$0xff]
        %v9280 = vld [vmem:[%s437 + $0x2e8] sm:$0xff]
        %v9281 = vld [vmem:[%s437 + $0x2f0] sm:$0xff]
        %v9282 = vld [vmem:[%s437 + $0x2f8] sm:$0xff]
        %v9283 = vld [vmem:[%s437 + $0x300] sm:$0xff]
        %v9284 = vld [vmem:[%s437 + $0x308] sm:$0xff]
        %v9285 = vld [vmem:[%s437 + $0x310] sm:$0xff]
        %v9286 = vld [vmem:[%s437 + $0x318] sm:$0xff]
        %v9287 = vld [vmem:[%s437 + $0x320] sm:$0xff]
        %v9288 = vld [vmem:[%s437 + $0x328] sm:$0xff]
        %v9289 = vld [vmem:[%s437 + $0x330] sm:$0xff]
        %v9290 = vld [vmem:[%s437 + $0x338] sm:$0xff]
        %v9291 = vld [vmem:[%s437 + $0x340] sm:$0xff]
        %v9292 = vld [vmem:[%s437 + $0x348] sm:$0xff]
        %v9293 = vld [vmem:[%s437 + $0x350] sm:$0xff]
        %v9294 = vld [vmem:[%s437 + $0x358] sm:$0xff]
        %v9295 = vld [vmem:[%s437 + $0x360] sm:$0xff]
        %v9296 = vld [vmem:[%s437 + $0x368] sm:$0xff]
        %v9297 = vld [vmem:[%s437 + $0x370] sm:$0xff]
        %v9298 = vld [vmem:[%s437 + $0x378] sm:$0xff]
        %v9299 = vld [vmem:[%s437 + $0x380] sm:$0xff]
        %v9300 = vld [vmem:[%s437 + $0x388] sm:$0xff]
        %v9301 = vld [vmem:[%s437 + $0x390] sm:$0xff]
        %v9302 = vld [vmem:[%s437 + $0x398] sm:$0xff]
        %v9303 = vld [vmem:[%s437 + $0x3a0] sm:$0xff]
        %v9304 = vld [vmem:[%s437 + $0x3a8] sm:$0xff]
        %v9305 = vld [vmem:[%s437 + $0x3b0] sm:$0xff]
        %v9306 = vld [vmem:[%s437 + $0x3b8] sm:$0xff]
        %v9307 = vld [vmem:[%s437 + $0x3c0] sm:$0xff]
        %v9308 = vld [vmem:[%s437 + $0x3c8] sm:$0xff]
        %v9309 = vld [vmem:[%s437 + $0x3d0] sm:$0xff]
        %v9310 = vld [vmem:[%s437 + $0x3d8] sm:$0xff]
        %v9311 = vld [vmem:[%s437 + $0x3e0] sm:$0xff]
        %v9312 = vld [vmem:[%s437 + $0x3e8] sm:$0xff]
        %v9313 = vld [vmem:[%s437 + $0x3f0] sm:$0xff]
        %v9314 = vld [vmem:[%s437 + $0x3f8] sm:$0xff]
        %v9315 = vld [vmem:[%s437 + $0x400] sm:$0xff]
        %v9316 = vld [vmem:[%s437 + $0x408] sm:$0xff]
        %v9317 = vld [vmem:[%s437 + $0x410] sm:$0xff]
        %v9318 = vld [vmem:[%s437 + $0x418] sm:$0xff]
        %v9319 = vld [vmem:[%s437 + $0x420] sm:$0xff]
        %v9320 = vld [vmem:[%s437 + $0x428] sm:$0xff]
        %v9321 = vld [vmem:[%s437 + $0x430] sm:$0xff]
        %v9322 = vld [vmem:[%s437 + $0x438] sm:$0xff]
        %v9323 = vld [vmem:[%s437 + $0x440] sm:$0xff]
        %v9324 = vld [vmem:[%s437 + $0x448] sm:$0xff]
        %v9325 = vld [vmem:[%s437 + $0x450] sm:$0xff]
        %v9326 = vld [vmem:[%s437 + $0x458] sm:$0xff]
        %v9327 = vld [vmem:[%s437 + $0x460] sm:$0xff]
        %v9328 = vld [vmem:[%s437 + $0x468] sm:$0xff]
        %v9329 = vld [vmem:[%s437 + $0x470] sm:$0xff]
        %v9330 = vld [vmem:[%s437 + $0x478] sm:$0xff]
        %v9331 = vld [vmem:[%s437 + $0x480] sm:$0xff]
        %v9332 = vld [vmem:[%s437 + $0x488] sm:$0xff]
        %v9333 = vld [vmem:[%s437 + $0x490] sm:$0xff]
        %v9334 = vld [vmem:[%s437 + $0x498] sm:$0xff]
        %v9335 = vld [vmem:[%s437 + $0x4a0] sm:$0xff]
        %v9336 = vld [vmem:[%s437 + $0x4a8] sm:$0xff]
        %v9337 = vld [vmem:[%s437 + $0x4b0] sm:$0xff]
        %v9338 = vld [vmem:[%s437 + $0x4b8] sm:$0xff]
        %v9339 = vld [vmem:[%s437 + $0x4c0] sm:$0xff]
        %v9340 = vld [vmem:[%s437 + $0x4c8] sm:$0xff]
        %v9341 = vld [vmem:[%s437 + $0x4d0] sm:$0xff]
        %v9342 = vld [vmem:[%s437 + $0x4d8] sm:$0xff]
        %v9343 = vld [vmem:[%s437 + $0x4e0] sm:$0xff]
        %v9344 = vld [vmem:[%s437 + $0x4e8] sm:$0xff]
        %v9345 = vld [vmem:[%s437 + $0x4f0] sm:$0xff]
        %v9346 = vld [vmem:[%s437 + $0x4f8] sm:$0xff]
        %v9347 = vld [vmem:[%s437 + $0x500] sm:$0xff]
        %v9348 = vld [vmem:[%s437 + $0x508] sm:$0xff]
        %v9349 = vld [vmem:[%s437 + $0x510] sm:$0xff]
        %v9350 = vld [vmem:[%s437 + $0x518] sm:$0xff]
        %v9351 = vld [vmem:[%s437 + $0x520] sm:$0xff]
        %v9352 = vld [vmem:[%s437 + $0x528] sm:$0xff]
        %v9353 = vld [vmem:[%s437 + $0x530] sm:$0xff]
        %v9354 = vld [vmem:[%s437 + $0x538] sm:$0xff]
        %v9355 = vld [vmem:[%s437 + $0x540] sm:$0xff]
        %v9356 = vld [vmem:[%s437 + $0x548] sm:$0xff]
        %v9357 = vld [vmem:[%s437 + $0x550] sm:$0xff]
        %v9358 = vld [vmem:[%s437 + $0x558] sm:$0xff]
        %v9359 = vld [vmem:[%s437 + $0x560] sm:$0xff]
        %v9360 = vld [vmem:[%s437 + $0x568] sm:$0xff]
        %v9361 = vld [vmem:[%s437 + $0x570] sm:$0xff]
        %v9362 = vld [vmem:[%s437 + $0x578] sm:$0xff]
        %v9363 = vld [vmem:[%s437 + $0x580] sm:$0xff]
        %v9364 = vld [vmem:[%s437 + $0x588] sm:$0xff]
        %v9365 = vld [vmem:[%s437 + $0x590] sm:$0xff]
        %v9366 = vld [vmem:[%s437 + $0x598] sm:$0xff]
        %v9367 = vld [vmem:[%s437 + $0x5a0] sm:$0xff]
        %v9368 = vld [vmem:[%s437 + $0x5a8] sm:$0xff]
        %v9369 = vld [vmem:[%s437 + $0x5b0] sm:$0xff]
        %v9370 = vld [vmem:[%s437 + $0x5b8] sm:$0xff]
        %v9371 = vld [vmem:[%s437 + $0x5c0] sm:$0xff]
        %v9372 = vld [vmem:[%s437 + $0x5c8] sm:$0xff]
        %v9373 = vld [vmem:[%s437 + $0x5d0] sm:$0xff]
        %v9374 = vld [vmem:[%s437 + $0x5d8] sm:$0xff]
        %v9375 = vld [vmem:[%s437 + $0x5e0] sm:$0xff]
        %v9376 = vld [vmem:[%s437 + $0x5e8] sm:$0xff]
        %v9377 = vld [vmem:[%s437 + $0x5f0] sm:$0xff]
        %v9378 = vld [vmem:[%s437 + $0x5f8] sm:$0xff]
        %v9379 = vld [vmem:[%s437 + $0x600] sm:$0xff]
        %v9380 = vld [vmem:[%s437 + $0x608] sm:$0xff]
        %v9381 = vld [vmem:[%s437 + $0x610] sm:$0xff]
        %v9382 = vld [vmem:[%s437 + $0x618] sm:$0xff]
        %v9383 = vld [vmem:[%s437 + $0x620] sm:$0xff]
        %v9384 = vld [vmem:[%s437 + $0x628] sm:$0xff]
        %v9385 = vld [vmem:[%s437 + $0x630] sm:$0xff]
        %v9386 = vld [vmem:[%s437 + $0x638] sm:$0xff]
        %v9387 = vld [vmem:[%s437 + $0x640] sm:$0xff]
        %v9388 = vld [vmem:[%s437 + $0x648] sm:$0xff]
        %v9389 = vld [vmem:[%s437 + $0x650] sm:$0xff]
        %v9390 = vld [vmem:[%s437 + $0x658] sm:$0xff]
        %v9391 = vld [vmem:[%s437 + $0x660] sm:$0xff]
        %v9392 = vld [vmem:[%s437 + $0x668] sm:$0xff]
        %v9393 = vld [vmem:[%s437 + $0x670] sm:$0xff]
        %v9394 = vld [vmem:[%s437 + $0x678] sm:$0xff]
        %v9395 = vld [vmem:[%s437 + $0x680] sm:$0xff]
        %v9396 = vld [vmem:[%s437 + $0x688] sm:$0xff]
        %v9397 = vld [vmem:[%s437 + $0x690] sm:$0xff]
        %v9398 = vld [vmem:[%s437 + $0x698] sm:$0xff]
        %v9399 = vld [vmem:[%s437 + $0x6a0] sm:$0xff]
        %v9400 = vld [vmem:[%s437 + $0x6a8] sm:$0xff]
        %v9401 = vld [vmem:[%s437 + $0x6b0] sm:$0xff]
        %v9402 = vld [vmem:[%s437 + $0x6b8] sm:$0xff]
        %v9403 = vld [vmem:[%s437 + $0x6c0] sm:$0xff]
        %v9404 = vld [vmem:[%s437 + $0x6c8] sm:$0xff]
        %v9405 = vld [vmem:[%s437 + $0x6d0] sm:$0xff]
        %v9406 = vld [vmem:[%s437 + $0x6d8] sm:$0xff]
        %v9407 = vld [vmem:[%s437 + $0x6e0] sm:$0xff]
        %v9408 = vld [vmem:[%s437 + $0x6e8] sm:$0xff]
        %v9409 = vld [vmem:[%s437 + $0x6f0] sm:$0xff]
        %v9410 = vld [vmem:[%s437 + $0x6f8] sm:$0xff]
        %v9411 = vld [vmem:[%s437 + $0x700] sm:$0xff]
        %v9412 = vld [vmem:[%s437 + $0x708] sm:$0xff]
        %v9413 = vld [vmem:[%s437 + $0x710] sm:$0xff]
        %v9414 = vld [vmem:[%s437 + $0x718] sm:$0xff]
        %v9415 = vld [vmem:[%s437 + $0x720] sm:$0xff]
        %v9416 = vld [vmem:[%s437 + $0x728] sm:$0xff]
        %v9417 = vld [vmem:[%s437 + $0x730] sm:$0xff]
        %v9418 = vld [vmem:[%s437 + $0x738] sm:$0xff]
        %v9419 = vld [vmem:[%s437 + $0x740] sm:$0xff]
        %v9420 = vld [vmem:[%s437 + $0x748] sm:$0xff]
        %v9421 = vld [vmem:[%s437 + $0x750] sm:$0xff]
        %v9422 = vld [vmem:[%s437 + $0x758] sm:$0xff]
        %v9423 = vld [vmem:[%s437 + $0x760] sm:$0xff]
        %v9424 = vld [vmem:[%s437 + $0x768] sm:$0xff]
        %v9425 = vld [vmem:[%s437 + $0x770] sm:$0xff]
        %v9426 = vld [vmem:[%s437 + $0x778] sm:$0xff]
        %v9427 = vld [vmem:[%s437 + $0x780] sm:$0xff]
        %v9428 = vld [vmem:[%s437 + $0x788] sm:$0xff]
        %v9429 = vld [vmem:[%s437 + $0x790] sm:$0xff]
        %v9430 = vld [vmem:[%s437 + $0x798] sm:$0xff]
        %v9431 = vld [vmem:[%s437 + $0x7a0] sm:$0xff]
        %v9432 = vld [vmem:[%s437 + $0x7a8] sm:$0xff]
        %v9433 = vld [vmem:[%s437 + $0x7b0] sm:$0xff]
        %v9434 = vld [vmem:[%s437 + $0x7b8] sm:$0xff]
        %v9435 = vld [vmem:[%s437 + $0x7c0] sm:$0xff]
        %v9436 = vld [vmem:[%s437 + $0x7c8] sm:$0xff]
        %v9437 = vld [vmem:[%s437 + $0x7d0] sm:$0xff]
        %v9438 = vld [vmem:[%s437 + $0x7d8] sm:$0xff]
        %v9439 = vld [vmem:[%s437 + $0x7e0] sm:$0xff]
        %v9440 = vld [vmem:[%s437 + $0x7e8] sm:$0xff]
        %v9441 = vld [vmem:[%s437 + $0x7f0] sm:$0xff]
        %v9442 = vld [vmem:[%s437 + $0x7f8] sm:$0xff]
        %v9443 = vld [vmem:[%s437 + $0x800] sm:$0xff]
        %v9444 = vld [vmem:[%s437 + $0x808] sm:$0xff]
        %v9445 = vld [vmem:[%s437 + $0x810] sm:$0xff]
        %v9446 = vld [vmem:[%s437 + $0x818] sm:$0xff]
        %v9447 = vld [vmem:[%s437 + $0x820] sm:$0xff]
        %v9448 = vld [vmem:[%s437 + $0x828] sm:$0xff]
        %v9449 = vld [vmem:[%s437 + $0x830] sm:$0xff]
        %v9450 = vld [vmem:[%s437 + $0x838] sm:$0xff]
        %v9451 = vld [vmem:[%s437 + $0x840] sm:$0xff]
        %v9452 = vld [vmem:[%s437 + $0x848] sm:$0xff]
        %v9453 = vld [vmem:[%s437 + $0x850] sm:$0xff]
        %v9454 = vld [vmem:[%s437 + $0x858] sm:$0xff]
        %v9455 = vld [vmem:[%s437 + $0x860] sm:$0xff]
        %v9456 = vld [vmem:[%s437 + $0x868] sm:$0xff]
        %v9457 = vld [vmem:[%s437 + $0x870] sm:$0xff]
        %v9458 = vld [vmem:[%s437 + $0x878] sm:$0xff]
        %v9459 = vld [vmem:[%s437 + $0x880] sm:$0xff]
        %v9460 = vld [vmem:[%s437 + $0x888] sm:$0xff]
        %v9461 = vld [vmem:[%s437 + $0x890] sm:$0xff]
        %v9462 = vld [vmem:[%s437 + $0x898] sm:$0xff]
        %v9463 = vld [vmem:[%s437 + $0x8a0] sm:$0xff]
        %v9464 = vld [vmem:[%s437 + $0x8a8] sm:$0xff]
        %v9465 = vld [vmem:[%s437 + $0x8b0] sm:$0xff]
        %v9466 = vld [vmem:[%s437 + $0x8b8] sm:$0xff]
        %v9467 = vld [vmem:[%s437 + $0x8c0] sm:$0xff]
        %v9468 = vld [vmem:[%s437 + $0x8c8] sm:$0xff]
        %v9469 = vld [vmem:[%s437 + $0x8d0] sm:$0xff]
        %v9470 = vld [vmem:[%s437 + $0x8d8] sm:$0xff]
        %v9471 = vld [vmem:[%s437 + $0x8e0] sm:$0xff]
        %v9472 = vld [vmem:[%s437 + $0x8e8] sm:$0xff]
        %v9473 = vld [vmem:[%s437 + $0x8f0] sm:$0xff]
        %v9474 = vld [vmem:[%s437 + $0x8f8] sm:$0xff]
        %v9475 = vld [vmem:[%s437 + $0x900] sm:$0xff]
        %v9476 = vld [vmem:[%s437 + $0x908] sm:$0xff]
        %v9477 = vld [vmem:[%s437 + $0x910] sm:$0xff]
        %v9478 = vld [vmem:[%s437 + $0x918] sm:$0xff]
        %v9479 = vld [vmem:[%s437 + $0x920] sm:$0xff]
        %v9480 = vld [vmem:[%s437 + $0x928] sm:$0xff]
        %v9481 = vld [vmem:[%s437 + $0x930] sm:$0xff]
        %v9482 = vld [vmem:[%s437 + $0x938] sm:$0xff]
        %v9483 = vld [vmem:[%s437 + $0x940] sm:$0xff]
        %v9484 = vld [vmem:[%s437 + $0x948] sm:$0xff]
        %v9485 = vld [vmem:[%s437 + $0x950] sm:$0xff]
        %v9486 = vld [vmem:[%s437 + $0x958] sm:$0xff]
        %v9487 = vld [vmem:[%s437 + $0x960] sm:$0xff]
        %v9488 = vld [vmem:[%s437 + $0x968] sm:$0xff]
        %v9489 = vld [vmem:[%s437 + $0x970] sm:$0xff]
        %v9490 = vld [vmem:[%s437 + $0x978] sm:$0xff]
        %v9491 = vld [vmem:[%s437 + $0x980] sm:$0xff]
        %v9492 = vld [vmem:[%s437 + $0x988] sm:$0xff]
        %v9493 = vld [vmem:[%s437 + $0x990] sm:$0xff]
        %v9494 = vld [vmem:[%s437 + $0x998] sm:$0xff]
        %v9495 = vld [vmem:[%s437 + $0x9a0] sm:$0xff]
        %v9496 = vld [vmem:[%s437 + $0x9a8] sm:$0xff]
        %v9497 = vld [vmem:[%s437 + $0x9b0] sm:$0xff]
        %v9498 = vld [vmem:[%s437 + $0x9b8] sm:$0xff]
        %v9499 = vld [vmem:[%s437 + $0x9c0] sm:$0xff]
        %v9500 = vld [vmem:[%s437 + $0x9c8] sm:$0xff]
        %v9501 = vld [vmem:[%s437 + $0x9d0] sm:$0xff]
        %v9502 = vld [vmem:[%s437 + $0x9d8] sm:$0xff]
        %v9503 = vld [vmem:[%s437 + $0x9e0] sm:$0xff]
        %v9504 = vld [vmem:[%s437 + $0x9e8] sm:$0xff]
        %v9505 = vld [vmem:[%s437 + $0x9f0] sm:$0xff]
        %v9506 = vld [vmem:[%s437 + $0x9f8] sm:$0xff]
        %v9507 = vld [vmem:[%s437 + $0xa00] sm:$0xff]
        %v9508 = vld [vmem:[%s437 + $0xa08] sm:$0xff]
        %v9509 = vld [vmem:[%s437 + $0xa10] sm:$0xff]
        %v9510 = vld [vmem:[%s437 + $0xa18] sm:$0xff]
        %v9511 = vld [vmem:[%s437 + $0xa20] sm:$0xff]
        %v9512 = vld [vmem:[%s437 + $0xa28] sm:$0xff]
        %v9513 = vld [vmem:[%s437 + $0xa30] sm:$0xff]
        %v9514 = vld [vmem:[%s437 + $0xa38] sm:$0xff]
        %v9515 = vld [vmem:[%s437 + $0xa40] sm:$0xff]
        %v9516 = vld [vmem:[%s437 + $0xa48] sm:$0xff]
        %v9517 = vld [vmem:[%s437 + $0xa50] sm:$0xff]
        %v9518 = vld [vmem:[%s437 + $0xa58] sm:$0xff]
        %v9519 = vld [vmem:[%s437 + $0xa60] sm:$0xff]
        %v9520 = vld [vmem:[%s437 + $0xa68] sm:$0xff]
        %v9521 = vld [vmem:[%s437 + $0xa70] sm:$0xff]
        %v9522 = vld [vmem:[%s437 + $0xa78] sm:$0xff]
        %v9523 = vld [vmem:[%s437 + $0xa80] sm:$0xff]
        %v9524 = vld [vmem:[%s437 + $0xa88] sm:$0xff]
        %v9525 = vld [vmem:[%s437 + $0xa90] sm:$0xff]
        %v9526 = vld [vmem:[%s437 + $0xa98] sm:$0xff]
        %v9527 = vld [vmem:[%s437 + $0xaa0] sm:$0xff]
        %v9528 = vld [vmem:[%s437 + $0xaa8] sm:$0xff]
        %v9529 = vld [vmem:[%s437 + $0xab0] sm:$0xff]
        %v9530 = vld [vmem:[%s437 + $0xab8] sm:$0xff]
        %v9531 = vld [vmem:[%s437 + $0xac0] sm:$0xff]
        %v9532 = vld [vmem:[%s437 + $0xac8] sm:$0xff]
        %v9533 = vld [vmem:[%s437 + $0xad0] sm:$0xff]
        %v9534 = vld [vmem:[%s437 + $0xad8] sm:$0xff]
        %v9535 = vld [vmem:[%s437 + $0xae0] sm:$0xff]
        %v9536 = vld [vmem:[%s437 + $0xae8] sm:$0xff]
        %v9537 = vld [vmem:[%s437 + $0xaf0] sm:$0xff]
        %v9538 = vld [vmem:[%s437 + $0xaf8] sm:$0xff]
        %v9539 = vld [vmem:[%s437 + $0xb00] sm:$0xff]
        %v9540 = vld [vmem:[%s437 + $0xb08] sm:$0xff]
        %v9541 = vld [vmem:[%s437 + $0xb10] sm:$0xff]
        %v9542 = vld [vmem:[%s437 + $0xb18] sm:$0xff]
        %v9543 = vld [vmem:[%s437 + $0xb20] sm:$0xff]
        %v9544 = vld [vmem:[%s437 + $0xb28] sm:$0xff]
        %v9545 = vld [vmem:[%s437 + $0xb30] sm:$0xff]
        %v9546 = vld [vmem:[%s437 + $0xb38] sm:$0xff]
        %v9547 = vld [vmem:[%s437 + $0xb40] sm:$0xff]
        %v9548 = vld [vmem:[%s437 + $0xb48] sm:$0xff]
        %v9549 = vld [vmem:[%s437 + $0xb50] sm:$0xff]
        %v9550 = vld [vmem:[%s437 + $0xb58] sm:$0xff]
        %v9551 = vld [vmem:[%s437 + $0xb60] sm:$0xff]
        %v9552 = vld [vmem:[%s437 + $0xb68] sm:$0xff]
        %v9553 = vld [vmem:[%s437 + $0xb70] sm:$0xff]
        %v9554 = vld [vmem:[%s437 + $0xb78] sm:$0xff]
        %v9555 = vld [vmem:[%s437 + $0xb80] sm:$0xff]
        %v9556 = vld [vmem:[%s437 + $0xb88] sm:$0xff]
        %v9557 = vld [vmem:[%s437 + $0xb90] sm:$0xff]
        %v9558 = vld [vmem:[%s437 + $0xb98] sm:$0xff]
        %v9559 = vld [vmem:[%s437 + $0xba0] sm:$0xff]
        %v9560 = vld [vmem:[%s437 + $0xba8] sm:$0xff]
        %v9561 = vld [vmem:[%s437 + $0xbb0] sm:$0xff]
        %v9562 = vld [vmem:[%s437 + $0xbb8] sm:$0xff]
        %v9563 = vld [vmem:[%s437 + $0xbc0] sm:$0xff]
        %v9564 = vld [vmem:[%s437 + $0xbc8] sm:$0xff]
        %v9565 = vld [vmem:[%s437 + $0xbd0] sm:$0xff]
        %v9566 = vld [vmem:[%s437 + $0xbd8] sm:$0xff]
        %v9567 = vld [vmem:[%s437 + $0xbe0] sm:$0xff]
        %v9568 = vld [vmem:[%s437 + $0xbe8] sm:$0xff]
        %v9569 = vld [vmem:[%s437 + $0xbf0] sm:$0xff]
        %v9570 = vld [vmem:[%s437 + $0xbf8] sm:$0xff]
        %v9571 = vld [vmem:[%s437 + $0xc00] sm:$0xff]
        %v9572 = vld [vmem:[%s437 + $0xc08] sm:$0xff]
        %v9573 = vld [vmem:[%s437 + $0xc10] sm:$0xff]
        %v9574 = vld [vmem:[%s437 + $0xc18] sm:$0xff]
        %v9575 = vld [vmem:[%s437 + $0xc20] sm:$0xff]
        %v9576 = vld [vmem:[%s437 + $0xc28] sm:$0xff]
        %v9577 = vld [vmem:[%s437 + $0xc30] sm:$0xff]
        %v9578 = vld [vmem:[%s437 + $0xc38] sm:$0xff]
        %v9579 = vld [vmem:[%s437 + $0xc40] sm:$0xff]
        %v9580 = vld [vmem:[%s437 + $0xc48] sm:$0xff]
        %v9581 = vld [vmem:[%s437 + $0xc50] sm:$0xff]
        %v9582 = vld [vmem:[%s437 + $0xc58] sm:$0xff]
        %v9583 = vld [vmem:[%s437 + $0xc60] sm:$0xff]
        %v9584 = vld [vmem:[%s437 + $0xc68] sm:$0xff]
        %v9585 = vld [vmem:[%s437 + $0xc70] sm:$0xff]
        %v9586 = vld [vmem:[%s437 + $0xc78] sm:$0xff]
        %v9587 = vld [vmem:[%s437 + $0xc80] sm:$0xff]
        %v9588 = vld [vmem:[%s437 + $0xc88] sm:$0xff]
        %v9589 = vld [vmem:[%s437 + $0xc90] sm:$0xff]
        %v9590 = vld [vmem:[%s437 + $0xc98] sm:$0xff]
        %v9591 = vld [vmem:[%s437 + $0xca0] sm:$0xff]
        %v9592 = vld [vmem:[%s437 + $0xca8] sm:$0xff]
        %v9593 = vld [vmem:[%s437 + $0xcb0] sm:$0xff]
        %v9594 = vld [vmem:[%s437 + $0xcb8] sm:$0xff]
        %v9595 = vld [vmem:[%s437 + $0xcc0] sm:$0xff]
        %v9596 = vld [vmem:[%s437 + $0xcc8] sm:$0xff]
        %v9597 = vld [vmem:[%s437 + $0xcd0] sm:$0xff]
        %v9598 = vld [vmem:[%s437 + $0xcd8] sm:$0xff]
        %v9599 = vld [vmem:[%s437 + $0xce0] sm:$0xff]
        %v9600 = vld [vmem:[%s437 + $0xce8] sm:$0xff]
        %v9601 = vld [vmem:[%s437 + $0xcf0] sm:$0xff]
        %v9602 = vld [vmem:[%s437 + $0xcf8] sm:$0xff]
        %v9603 = vld [vmem:[%s437 + $0xd00] sm:$0xff]
        %v9604 = vld [vmem:[%s437 + $0xd08] sm:$0xff]
        %v9605 = vld [vmem:[%s437 + $0xd10] sm:$0xff]
        %v9606 = vld [vmem:[%s437 + $0xd18] sm:$0xff]
        %v9607 = vld [vmem:[%s437 + $0xd20] sm:$0xff]
        %v9608 = vld [vmem:[%s437 + $0xd28] sm:$0xff]
        %v9609 = vld [vmem:[%s437 + $0xd30] sm:$0xff]
        %v9610 = vld [vmem:[%s437 + $0xd38] sm:$0xff]
        %v9611 = vld [vmem:[%s437 + $0xd40] sm:$0xff]
        %v9612 = vld [vmem:[%s437 + $0xd48] sm:$0xff]
        %v9613 = vld [vmem:[%s437 + $0xd50] sm:$0xff]
        %v9614 = vld [vmem:[%s437 + $0xd58] sm:$0xff]
        %v9615 = vld [vmem:[%s437 + $0xd60] sm:$0xff]
        %v9616 = vld [vmem:[%s437 + $0xd68] sm:$0xff]
        %v9617 = vld [vmem:[%s437 + $0xd70] sm:$0xff]
        %v9618 = vld [vmem:[%s437 + $0xd78] sm:$0xff]
        %v9619 = vld [vmem:[%s437 + $0xd80] sm:$0xff]
        %v9620 = vld [vmem:[%s437 + $0xd88] sm:$0xff]
        %v9621 = vld [vmem:[%s437 + $0xd90] sm:$0xff]
        %v9622 = vld [vmem:[%s437 + $0xd98] sm:$0xff]
        %v9623 = vld [vmem:[%s437 + $0xda0] sm:$0xff]
        %v9624 = vld [vmem:[%s437 + $0xda8] sm:$0xff]
        %v9625 = vld [vmem:[%s437 + $0xdb0] sm:$0xff]
        %v9626 = vld [vmem:[%s437 + $0xdb8] sm:$0xff]
        %v9627 = vld [vmem:[%s437 + $0xdc0] sm:$0xff]
        %v9628 = vld [vmem:[%s437 + $0xdc8] sm:$0xff]
        %v9629 = vld [vmem:[%s437 + $0xdd0] sm:$0xff]
        %v9630 = vld [vmem:[%s437 + $0xdd8] sm:$0xff]
        %v9631 = vld [vmem:[%s437 + $0xde0] sm:$0xff]
        %v9632 = vld [vmem:[%s437 + $0xde8] sm:$0xff]
        %v9633 = vld [vmem:[%s437 + $0xdf0] sm:$0xff]
        %v9634 = vld [vmem:[%s437 + $0xdf8] sm:$0xff]
        %v9635 = vld [vmem:[%s437 + $0xe00] sm:$0xff]
        %v9636 = vld [vmem:[%s437 + $0xe08] sm:$0xff]
        %v9637 = vld [vmem:[%s437 + $0xe10] sm:$0xff]
        %v9638 = vld [vmem:[%s437 + $0xe18] sm:$0xff]
        %v9639 = vld [vmem:[%s437 + $0xe20] sm:$0xff]
        %v9640 = vld [vmem:[%s437 + $0xe28] sm:$0xff]
        %v9641 = vld [vmem:[%s437 + $0xe30] sm:$0xff]
        %v9642 = vld [vmem:[%s437 + $0xe38] sm:$0xff]
        %v9643 = vld [vmem:[%s437 + $0xe40] sm:$0xff]
        %v9644 = vld [vmem:[%s437 + $0xe48] sm:$0xff]
        %v9645 = vld [vmem:[%s437 + $0xe50] sm:$0xff]
        %v9646 = vld [vmem:[%s437 + $0xe58] sm:$0xff]
        %v9647 = vld [vmem:[%s437 + $0xe60] sm:$0xff]
        %v9648 = vld [vmem:[%s437 + $0xe68] sm:$0xff]
        %v9649 = vld [vmem:[%s437 + $0xe70] sm:$0xff]
        %v9650 = vld [vmem:[%s437 + $0xe78] sm:$0xff]
        %v9651 = vld [vmem:[%s437 + $0xe80] sm:$0xff]
        %v9652 = vld [vmem:[%s437 + $0xe88] sm:$0xff]
        %v9653 = vld [vmem:[%s437 + $0xe90] sm:$0xff]
        %v9654 = vld [vmem:[%s437 + $0xe98] sm:$0xff]
        %v9655 = vld [vmem:[%s437 + $0xea0] sm:$0xff]
        %v9656 = vld [vmem:[%s437 + $0xea8] sm:$0xff]
        %v9657 = vld [vmem:[%s437 + $0xeb0] sm:$0xff]
        %v9658 = vld [vmem:[%s437 + $0xeb8] sm:$0xff]
        %v9659 = vld [vmem:[%s437 + $0xec0] sm:$0xff]
        %v9660 = vld [vmem:[%s437 + $0xec8] sm:$0xff]
        %v9661 = vld [vmem:[%s437 + $0xed0] sm:$0xff]
        %v9662 = vld [vmem:[%s437 + $0xed8] sm:$0xff]
        %v9663 = vld [vmem:[%s437 + $0xee0] sm:$0xff]
        %v9664 = vld [vmem:[%s437 + $0xee8] sm:$0xff]
        %v9665 = vld [vmem:[%s437 + $0xef0] sm:$0xff]
        %v9666 = vld [vmem:[%s437 + $0xef8] sm:$0xff]
        %v9667 = vld [vmem:[%s437 + $0xf00] sm:$0xff]
        %v9668 = vld [vmem:[%s437 + $0xf08] sm:$0xff]
        %v9669 = vld [vmem:[%s437 + $0xf10] sm:$0xff]
        %v9670 = vld [vmem:[%s437 + $0xf18] sm:$0xff]
        %v9671 = vld [vmem:[%s437 + $0xf20] sm:$0xff]
        %v9672 = vld [vmem:[%s437 + $0xf28] sm:$0xff]
        %v9673 = vld [vmem:[%s437 + $0xf30] sm:$0xff]
        %v9674 = vld [vmem:[%s437 + $0xf38] sm:$0xff]
        %v9675 = vld [vmem:[%s437 + $0xf40] sm:$0xff]
        %v9676 = vld [vmem:[%s437 + $0xf48] sm:$0xff]
        %v9677 = vld [vmem:[%s437 + $0xf50] sm:$0xff]
        %v9678 = vld [vmem:[%s437 + $0xf58] sm:$0xff]
        %v9679 = vld [vmem:[%s437 + $0xf60] sm:$0xff]
        %v9680 = vld [vmem:[%s437 + $0xf68] sm:$0xff]
        %v9681 = vld [vmem:[%s437 + $0xf70] sm:$0xff]
        %v9682 = vld [vmem:[%s437 + $0xf78] sm:$0xff]
        %v9683 = vld [vmem:[%s437 + $0xf80] sm:$0xff]
        %v9684 = vld [vmem:[%s437 + $0xf88] sm:$0xff]
        %v9685 = vld [vmem:[%s437 + $0xf90] sm:$0xff]
        %v9686 = vld [vmem:[%s437 + $0xf98] sm:$0xff]
        %v9687 = vld [vmem:[%s437 + $0xfa0] sm:$0xff]
        %v9688 = vld [vmem:[%s437 + $0xfa8] sm:$0xff]
        %v9689 = vld [vmem:[%s437 + $0xfb0] sm:$0xff]
        %v9690 = vld [vmem:[%s437 + $0xfb8] sm:$0xff]
        %v9691 = vld [vmem:[%s437 + $0xfc0] sm:$0xff]
        %v9692 = vld [vmem:[%s437 + $0xfc8] sm:$0xff]
        %v9693 = vld [vmem:[%s437 + $0xfd0] sm:$0xff]
        %v9694 = vld [vmem:[%s437 + $0xfd8] sm:$0xff]
        %v9695 = vld [vmem:[%s437 + $0xfe0] sm:$0xff]
        %v9696 = vld [vmem:[%s437 + $0xfe8] sm:$0xff]
        %v9697 = vld [vmem:[%s437 + $0xff0] sm:$0xff]
        %v9698 = vld [vmem:[%s437 + $0xff8] sm:$0xff]
        %v9699 = vld [vmem:[%s446] sm:$0xf]
        %v9701 = vlaneseq
        %v9702 = vshrl.u32 %v9701, 7
        %v9703 = vsub.s32 0, %v9702
        %v9704 = vrot.slane %v9699, %v9703
        %v9705 = vlaneseq
        %v9706 = vshrl.u32 %v9705, 7
        %v9707 = vsub.s32 1, %v9706
        %v9708 = vrot.slane %v9699, %v9707
        %v9709 = vlaneseq
        %v9710 = vshrl.u32 %v9709, 7
        %v9711 = vsub.s32 2, %v9710
        %v9712 = vrot.slane %v9699, %v9711
        %v9713 = vlaneseq
        %v9714 = vshrl.u32 %v9713, 7
        %v9715 = vsub.s32 3, %v9714
        %v9716 = vrot.slane %v9699, %v9715
        %v9729 = vunpack.c.l.b16 %v9179
        %v9730 = vunpack.c.h.b16 %v9179
        %v9731 = vunpack.c.l.b16 %v9180
        %v9732 = vunpack.c.h.b16 %v9180
        %v9733 = vunpack.c.l.b16 %v9181
        %v9734 = vunpack.c.h.b16 %v9181
        %v9735 = vunpack.c.l.b16 %v9182
        %v9736 = vunpack.c.h.b16 %v9182
        %v9737 = vunpack.c.l.b16 %v9183
        %v9738 = vunpack.c.h.b16 %v9183
        %v9739 = vunpack.c.l.b16 %v9184
        %v9740 = vunpack.c.h.b16 %v9184
        %v9741 = vunpack.c.l.b16 %v9185
        %v9742 = vunpack.c.h.b16 %v9185
        %v9743 = vunpack.c.l.b16 %v9186
        %v9744 = vunpack.c.h.b16 %v9186
        %v9745 = vpack.c.b16 %v9729, %v9729
        %v9746 = vpack.c.b16 %v9730, %v9730
        %v9747 = vpack.c.b16 %v9731, %v9731
        %v9748 = vpack.c.b16 %v9732, %v9732
        %v9749 = vpack.c.b16 %v9733, %v9733
        %v9750 = vpack.c.b16 %v9734, %v9734
        %v9751 = vpack.c.b16 %v9735, %v9735
        %v9752 = vpack.c.b16 %v9736, %v9736
        %v9753 = vpack.c.b16 %v9737, %v9737
        %v9754 = vpack.c.b16 %v9738, %v9738
        %v9755 = vpack.c.b16 %v9739, %v9739
        %v9756 = vpack.c.b16 %v9740, %v9740
        %v9757 = vpack.c.b16 %v9741, %v9741
        %v9758 = vpack.c.b16 %v9742, %v9742
        %v9759 = vpack.c.b16 %v9743, %v9743
        %v9760 = vpack.c.b16 %v9744, %v9744
        %v10289 = vunpack.c.l.b16 %v9187
        %v10290 = vunpack.c.h.b16 %v9187
        %v10291 = vunpack.c.l.b16 %v9188
        %v10292 = vunpack.c.h.b16 %v9188
        %v10293 = vunpack.c.l.b16 %v9189
        %v10294 = vunpack.c.h.b16 %v9189
        %v10295 = vunpack.c.l.b16 %v9190
        %v10296 = vunpack.c.h.b16 %v9190
        %v10297 = vunpack.c.l.b16 %v9191
        %v10298 = vunpack.c.h.b16 %v9191
        %v10299 = vunpack.c.l.b16 %v9192
        %v10300 = vunpack.c.h.b16 %v9192
        %v10301 = vunpack.c.l.b16 %v9193
        %v10302 = vunpack.c.h.b16 %v9193
        %v10303 = vunpack.c.l.b16 %v9194
        %v10304 = vunpack.c.h.b16 %v9194
        %v10305 = vunpack.c.l.b16 %v9195
        %v10306 = vunpack.c.h.b16 %v9195
        %v10307 = vunpack.c.l.b16 %v9196
        %v10308 = vunpack.c.h.b16 %v9196
        %v10309 = vunpack.c.l.b16 %v9197
        %v10310 = vunpack.c.h.b16 %v9197
        %v10311 = vunpack.c.l.b16 %v9198
        %v10312 = vunpack.c.h.b16 %v9198
        %v10313 = vunpack.c.l.b16 %v9199
        %v10314 = vunpack.c.h.b16 %v9199
        %v10315 = vunpack.c.l.b16 %v9200
        %v10316 = vunpack.c.h.b16 %v9200
        %v10317 = vunpack.c.l.b16 %v9201
        %v10318 = vunpack.c.h.b16 %v9201
        %v10319 = vunpack.c.l.b16 %v9202
        %v10320 = vunpack.c.h.b16 %v9202
        %v10321 = vunpack.c.l.b16 %v9203
        %v10322 = vunpack.c.h.b16 %v9203
        %v10323 = vunpack.c.l.b16 %v9204
        %v10324 = vunpack.c.h.b16 %v9204
        %v10325 = vunpack.c.l.b16 %v9205
        %v10326 = vunpack.c.h.b16 %v9205
        %v10327 = vunpack.c.l.b16 %v9206
        %v10328 = vunpack.c.h.b16 %v9206
        %v10329 = vunpack.c.l.b16 %v9207
        %v10330 = vunpack.c.h.b16 %v9207
        %v10331 = vunpack.c.l.b16 %v9208
        %v10332 = vunpack.c.h.b16 %v9208
        %v10333 = vunpack.c.l.b16 %v9209
        %v10334 = vunpack.c.h.b16 %v9209
        %v10335 = vunpack.c.l.b16 %v9210
        %v10336 = vunpack.c.h.b16 %v9210
        %v10337 = vunpack.c.l.b16 %v9211
        %v10338 = vunpack.c.h.b16 %v9211
        %v10339 = vunpack.c.l.b16 %v9212
        %v10340 = vunpack.c.h.b16 %v9212
        %v10341 = vunpack.c.l.b16 %v9213
        %v10342 = vunpack.c.h.b16 %v9213
        %v10343 = vunpack.c.l.b16 %v9214
        %v10344 = vunpack.c.h.b16 %v9214
        %v10345 = vunpack.c.l.b16 %v9215
        %v10346 = vunpack.c.h.b16 %v9215
        %v10347 = vunpack.c.l.b16 %v9216
        %v10348 = vunpack.c.h.b16 %v9216
        %v10349 = vunpack.c.l.b16 %v9217
        %v10350 = vunpack.c.h.b16 %v9217
        %v10351 = vunpack.c.l.b16 %v9218
        %v10352 = vunpack.c.h.b16 %v9218
        %v10353 = vunpack.c.l.b16 %v9219
        %v10354 = vunpack.c.h.b16 %v9219
        %v10355 = vunpack.c.l.b16 %v9220
        %v10356 = vunpack.c.h.b16 %v9220
        %v10357 = vunpack.c.l.b16 %v9221
        %v10358 = vunpack.c.h.b16 %v9221
        %v10359 = vunpack.c.l.b16 %v9222
        %v10360 = vunpack.c.h.b16 %v9222
        %v10361 = vunpack.c.l.b16 %v9223
        %v10362 = vunpack.c.h.b16 %v9223
        %v10363 = vunpack.c.l.b16 %v9224
        %v10364 = vunpack.c.h.b16 %v9224
        %v10365 = vunpack.c.l.b16 %v9225
        %v10366 = vunpack.c.h.b16 %v9225
        %v10367 = vunpack.c.l.b16 %v9226
        %v10368 = vunpack.c.h.b16 %v9226
        %v10369 = vunpack.c.l.b16 %v9227
        %v10370 = vunpack.c.h.b16 %v9227
        %v10371 = vunpack.c.l.b16 %v9228
        %v10372 = vunpack.c.h.b16 %v9228
        %v10373 = vunpack.c.l.b16 %v9229
        %v10374 = vunpack.c.h.b16 %v9229
        %v10375 = vunpack.c.l.b16 %v9230
        %v10376 = vunpack.c.h.b16 %v9230
        %v10377 = vunpack.c.l.b16 %v9231
        %v10378 = vunpack.c.h.b16 %v9231
        %v10379 = vunpack.c.l.b16 %v9232
        %v10380 = vunpack.c.h.b16 %v9232
        %v10381 = vunpack.c.l.b16 %v9233
        %v10382 = vunpack.c.h.b16 %v9233
        %v10383 = vunpack.c.l.b16 %v9234
        %v10384 = vunpack.c.h.b16 %v9234
        %v10385 = vunpack.c.l.b16 %v9235
        %v10386 = vunpack.c.h.b16 %v9235
        %v10387 = vunpack.c.l.b16 %v9236
        %v10388 = vunpack.c.h.b16 %v9236
        %v10389 = vunpack.c.l.b16 %v9237
        %v10390 = vunpack.c.h.b16 %v9237
        %v10391 = vunpack.c.l.b16 %v9238
        %v10392 = vunpack.c.h.b16 %v9238
        %v10393 = vunpack.c.l.b16 %v9239
        %v10394 = vunpack.c.h.b16 %v9239
        %v10395 = vunpack.c.l.b16 %v9240
        %v10396 = vunpack.c.h.b16 %v9240
        %v10397 = vunpack.c.l.b16 %v9241
        %v10398 = vunpack.c.h.b16 %v9241
        %v10399 = vunpack.c.l.b16 %v9242
        %v10400 = vunpack.c.h.b16 %v9242
        %v10401 = vunpack.c.l.b16 %v9243
        %v10402 = vunpack.c.h.b16 %v9243
        %v10403 = vunpack.c.l.b16 %v9244
        %v10404 = vunpack.c.h.b16 %v9244
        %v10405 = vunpack.c.l.b16 %v9245
        %v10406 = vunpack.c.h.b16 %v9245
        %v10407 = vunpack.c.l.b16 %v9246
        %v10408 = vunpack.c.h.b16 %v9246
        %v10409 = vunpack.c.l.b16 %v9247
        %v10410 = vunpack.c.h.b16 %v9247
        %v10411 = vunpack.c.l.b16 %v9248
        %v10412 = vunpack.c.h.b16 %v9248
        %v10413 = vunpack.c.l.b16 %v9249
        %v10414 = vunpack.c.h.b16 %v9249
        %v10415 = vunpack.c.l.b16 %v9250
        %v10416 = vunpack.c.h.b16 %v9250
        %v10417 = vunpack.c.l.b16 %v9251
        %v10418 = vunpack.c.h.b16 %v9251
        %v10419 = vunpack.c.l.b16 %v9252
        %v10420 = vunpack.c.h.b16 %v9252
        %v10421 = vunpack.c.l.b16 %v9253
        %v10422 = vunpack.c.h.b16 %v9253
        %v10423 = vunpack.c.l.b16 %v9254
        %v10424 = vunpack.c.h.b16 %v9254
        %v10425 = vunpack.c.l.b16 %v9255
        %v10426 = vunpack.c.h.b16 %v9255
        %v10427 = vunpack.c.l.b16 %v9256
        %v10428 = vunpack.c.h.b16 %v9256
        %v10429 = vunpack.c.l.b16 %v9257
        %v10430 = vunpack.c.h.b16 %v9257
        %v10431 = vunpack.c.l.b16 %v9258
        %v10432 = vunpack.c.h.b16 %v9258
        %v10433 = vunpack.c.l.b16 %v9259
        %v10434 = vunpack.c.h.b16 %v9259
        %v10435 = vunpack.c.l.b16 %v9260
        %v10436 = vunpack.c.h.b16 %v9260
        %v10437 = vunpack.c.l.b16 %v9261
        %v10438 = vunpack.c.h.b16 %v9261
        %v10439 = vunpack.c.l.b16 %v9262
        %v10440 = vunpack.c.h.b16 %v9262
        %v10441 = vunpack.c.l.b16 %v9263
        %v10442 = vunpack.c.h.b16 %v9263
        %v10443 = vunpack.c.l.b16 %v9264
        %v10444 = vunpack.c.h.b16 %v9264
        %v10445 = vunpack.c.l.b16 %v9265
        %v10446 = vunpack.c.h.b16 %v9265
        %v10447 = vunpack.c.l.b16 %v9266
        %v10448 = vunpack.c.h.b16 %v9266
        %v10449 = vunpack.c.l.b16 %v9267
        %v10450 = vunpack.c.h.b16 %v9267
        %v10451 = vunpack.c.l.b16 %v9268
        %v10452 = vunpack.c.h.b16 %v9268
        %v10453 = vunpack.c.l.b16 %v9269
        %v10454 = vunpack.c.h.b16 %v9269
        %v10455 = vunpack.c.l.b16 %v9270
        %v10456 = vunpack.c.h.b16 %v9270
        %v10457 = vunpack.c.l.b16 %v9271
        %v10458 = vunpack.c.h.b16 %v9271
        %v10459 = vunpack.c.l.b16 %v9272
        %v10460 = vunpack.c.h.b16 %v9272
        %v10461 = vunpack.c.l.b16 %v9273
        %v10462 = vunpack.c.h.b16 %v9273
        %v10463 = vunpack.c.l.b16 %v9274
        %v10464 = vunpack.c.h.b16 %v9274
        %v10465 = vunpack.c.l.b16 %v9275
        %v10466 = vunpack.c.h.b16 %v9275
        %v10467 = vunpack.c.l.b16 %v9276
        %v10468 = vunpack.c.h.b16 %v9276
        %v10469 = vunpack.c.l.b16 %v9277
        %v10470 = vunpack.c.h.b16 %v9277
        %v10471 = vunpack.c.l.b16 %v9278
        %v10472 = vunpack.c.h.b16 %v9278
        %v10473 = vunpack.c.l.b16 %v9279
        %v10474 = vunpack.c.h.b16 %v9279
        %v10475 = vunpack.c.l.b16 %v9280
        %v10476 = vunpack.c.h.b16 %v9280
        %v10477 = vunpack.c.l.b16 %v9281
        %v10478 = vunpack.c.h.b16 %v9281
        %v10479 = vunpack.c.l.b16 %v9282
        %v10480 = vunpack.c.h.b16 %v9282
        %v10481 = vunpack.c.l.b16 %v9283
        %v10482 = vunpack.c.h.b16 %v9283
        %v10483 = vunpack.c.l.b16 %v9284
        %v10484 = vunpack.c.h.b16 %v9284
        %v10485 = vunpack.c.l.b16 %v9285
        %v10486 = vunpack.c.h.b16 %v9285
        %v10487 = vunpack.c.l.b16 %v9286
        %v10488 = vunpack.c.h.b16 %v9286
        %v10489 = vunpack.c.l.b16 %v9287
        %v10490 = vunpack.c.h.b16 %v9287
        %v10491 = vunpack.c.l.b16 %v9288
        %v10492 = vunpack.c.h.b16 %v9288
        %v10493 = vunpack.c.l.b16 %v9289
        %v10494 = vunpack.c.h.b16 %v9289
        %v10495 = vunpack.c.l.b16 %v9290
        %v10496 = vunpack.c.h.b16 %v9290
        %v10497 = vunpack.c.l.b16 %v9291
        %v10498 = vunpack.c.h.b16 %v9291
        %v10499 = vunpack.c.l.b16 %v9292
        %v10500 = vunpack.c.h.b16 %v9292
        %v10501 = vunpack.c.l.b16 %v9293
        %v10502 = vunpack.c.h.b16 %v9293
        %v10503 = vunpack.c.l.b16 %v9294
        %v10504 = vunpack.c.h.b16 %v9294
        %v10505 = vunpack.c.l.b16 %v9295
        %v10506 = vunpack.c.h.b16 %v9295
        %v10507 = vunpack.c.l.b16 %v9296
        %v10508 = vunpack.c.h.b16 %v9296
        %v10509 = vunpack.c.l.b16 %v9297
        %v10510 = vunpack.c.h.b16 %v9297
        %v10511 = vunpack.c.l.b16 %v9298
        %v10512 = vunpack.c.h.b16 %v9298
        %v10513 = vunpack.c.l.b16 %v9299
        %v10514 = vunpack.c.h.b16 %v9299
        %v10515 = vunpack.c.l.b16 %v9300
        %v10516 = vunpack.c.h.b16 %v9300
        %v10517 = vunpack.c.l.b16 %v9301
        %v10518 = vunpack.c.h.b16 %v9301
        %v10519 = vunpack.c.l.b16 %v9302
        %v10520 = vunpack.c.h.b16 %v9302
        %v10521 = vunpack.c.l.b16 %v9303
        %v10522 = vunpack.c.h.b16 %v9303
        %v10523 = vunpack.c.l.b16 %v9304
        %v10524 = vunpack.c.h.b16 %v9304
        %v10525 = vunpack.c.l.b16 %v9305
        %v10526 = vunpack.c.h.b16 %v9305
        %v10527 = vunpack.c.l.b16 %v9306
        %v10528 = vunpack.c.h.b16 %v9306
        %v10529 = vunpack.c.l.b16 %v9307
        %v10530 = vunpack.c.h.b16 %v9307
        %v10531 = vunpack.c.l.b16 %v9308
        %v10532 = vunpack.c.h.b16 %v9308
        %v10533 = vunpack.c.l.b16 %v9309
        %v10534 = vunpack.c.h.b16 %v9309
        %v10535 = vunpack.c.l.b16 %v9310
        %v10536 = vunpack.c.h.b16 %v9310
        %v10537 = vunpack.c.l.b16 %v9311
        %v10538 = vunpack.c.h.b16 %v9311
        %v10539 = vunpack.c.l.b16 %v9312
        %v10540 = vunpack.c.h.b16 %v9312
        %v10541 = vunpack.c.l.b16 %v9313
        %v10542 = vunpack.c.h.b16 %v9313
        %v10543 = vunpack.c.l.b16 %v9314
        %v10544 = vunpack.c.h.b16 %v9314
        %v10545 = vunpack.c.l.b16 %v9315
        %v10546 = vunpack.c.h.b16 %v9315
        %v10547 = vunpack.c.l.b16 %v9316
        %v10548 = vunpack.c.h.b16 %v9316
        %v10549 = vunpack.c.l.b16 %v9317
        %v10550 = vunpack.c.h.b16 %v9317
        %v10551 = vunpack.c.l.b16 %v9318
        %v10552 = vunpack.c.h.b16 %v9318
        %v10553 = vunpack.c.l.b16 %v9319
        %v10554 = vunpack.c.h.b16 %v9319
        %v10555 = vunpack.c.l.b16 %v9320
        %v10556 = vunpack.c.h.b16 %v9320
        %v10557 = vunpack.c.l.b16 %v9321
        %v10558 = vunpack.c.h.b16 %v9321
        %v10559 = vunpack.c.l.b16 %v9322
        %v10560 = vunpack.c.h.b16 %v9322
        %v10561 = vunpack.c.l.b16 %v9323
        %v10562 = vunpack.c.h.b16 %v9323
        %v10563 = vunpack.c.l.b16 %v9324
        %v10564 = vunpack.c.h.b16 %v9324
        %v10565 = vunpack.c.l.b16 %v9325
        %v10566 = vunpack.c.h.b16 %v9325
        %v10567 = vunpack.c.l.b16 %v9326
        %v10568 = vunpack.c.h.b16 %v9326
        %v10569 = vunpack.c.l.b16 %v9327
        %v10570 = vunpack.c.h.b16 %v9327
        %v10571 = vunpack.c.l.b16 %v9328
        %v10572 = vunpack.c.h.b16 %v9328
        %v10573 = vunpack.c.l.b16 %v9329
        %v10574 = vunpack.c.h.b16 %v9329
        %v10575 = vunpack.c.l.b16 %v9330
        %v10576 = vunpack.c.h.b16 %v9330
        %v10577 = vunpack.c.l.b16 %v9331
        %v10578 = vunpack.c.h.b16 %v9331
        %v10579 = vunpack.c.l.b16 %v9332
        %v10580 = vunpack.c.h.b16 %v9332
        %v10581 = vunpack.c.l.b16 %v9333
        %v10582 = vunpack.c.h.b16 %v9333
        %v10583 = vunpack.c.l.b16 %v9334
        %v10584 = vunpack.c.h.b16 %v9334
        %v10585 = vunpack.c.l.b16 %v9335
        %v10586 = vunpack.c.h.b16 %v9335
        %v10587 = vunpack.c.l.b16 %v9336
        %v10588 = vunpack.c.h.b16 %v9336
        %v10589 = vunpack.c.l.b16 %v9337
        %v10590 = vunpack.c.h.b16 %v9337
        %v10591 = vunpack.c.l.b16 %v9338
        %v10592 = vunpack.c.h.b16 %v9338
        %v10593 = vunpack.c.l.b16 %v9339
        %v10594 = vunpack.c.h.b16 %v9339
        %v10595 = vunpack.c.l.b16 %v9340
        %v10596 = vunpack.c.h.b16 %v9340
        %v10597 = vunpack.c.l.b16 %v9341
        %v10598 = vunpack.c.h.b16 %v9341
        %v10599 = vunpack.c.l.b16 %v9342
        %v10600 = vunpack.c.h.b16 %v9342
        %v10601 = vunpack.c.l.b16 %v9343
        %v10602 = vunpack.c.h.b16 %v9343
        %v10603 = vunpack.c.l.b16 %v9344
        %v10604 = vunpack.c.h.b16 %v9344
        %v10605 = vunpack.c.l.b16 %v9345
        %v10606 = vunpack.c.h.b16 %v9345
        %v10607 = vunpack.c.l.b16 %v9346
        %v10608 = vunpack.c.h.b16 %v9346
        %v10609 = vunpack.c.l.b16 %v9347
        %v10610 = vunpack.c.h.b16 %v9347
        %v10611 = vunpack.c.l.b16 %v9348
        %v10612 = vunpack.c.h.b16 %v9348
        %v10613 = vunpack.c.l.b16 %v9349
        %v10614 = vunpack.c.h.b16 %v9349
        %v10615 = vunpack.c.l.b16 %v9350
        %v10616 = vunpack.c.h.b16 %v9350
        %v10617 = vunpack.c.l.b16 %v9351
        %v10618 = vunpack.c.h.b16 %v9351
        %v10619 = vunpack.c.l.b16 %v9352
        %v10620 = vunpack.c.h.b16 %v9352
        %v10621 = vunpack.c.l.b16 %v9353
        %v10622 = vunpack.c.h.b16 %v9353
        %v10623 = vunpack.c.l.b16 %v9354
        %v10624 = vunpack.c.h.b16 %v9354
        %v10625 = vunpack.c.l.b16 %v9355
        %v10626 = vunpack.c.h.b16 %v9355
        %v10627 = vunpack.c.l.b16 %v9356
        %v10628 = vunpack.c.h.b16 %v9356
        %v10629 = vunpack.c.l.b16 %v9357
        %v10630 = vunpack.c.h.b16 %v9357
        %v10631 = vunpack.c.l.b16 %v9358
        %v10632 = vunpack.c.h.b16 %v9358
        %v10633 = vunpack.c.l.b16 %v9359
        %v10634 = vunpack.c.h.b16 %v9359
        %v10635 = vunpack.c.l.b16 %v9360
        %v10636 = vunpack.c.h.b16 %v9360
        %v10637 = vunpack.c.l.b16 %v9361
        %v10638 = vunpack.c.h.b16 %v9361
        %v10639 = vunpack.c.l.b16 %v9362
        %v10640 = vunpack.c.h.b16 %v9362
        %v10641 = vunpack.c.l.b16 %v9363
        %v10642 = vunpack.c.h.b16 %v9363
        %v10643 = vunpack.c.l.b16 %v9364
        %v10644 = vunpack.c.h.b16 %v9364
        %v10645 = vunpack.c.l.b16 %v9365
        %v10646 = vunpack.c.h.b16 %v9365
        %v10647 = vunpack.c.l.b16 %v9366
        %v10648 = vunpack.c.h.b16 %v9366
        %v10649 = vunpack.c.l.b16 %v9367
        %v10650 = vunpack.c.h.b16 %v9367
        %v10651 = vunpack.c.l.b16 %v9368
        %v10652 = vunpack.c.h.b16 %v9368
        %v10653 = vunpack.c.l.b16 %v9369
        %v10654 = vunpack.c.h.b16 %v9369
        %v10655 = vunpack.c.l.b16 %v9370
        %v10656 = vunpack.c.h.b16 %v9370
        %v10657 = vunpack.c.l.b16 %v9371
        %v10658 = vunpack.c.h.b16 %v9371
        %v10659 = vunpack.c.l.b16 %v9372
        %v10660 = vunpack.c.h.b16 %v9372
        %v10661 = vunpack.c.l.b16 %v9373
        %v10662 = vunpack.c.h.b16 %v9373
        %v10663 = vunpack.c.l.b16 %v9374
        %v10664 = vunpack.c.h.b16 %v9374
        %v10665 = vunpack.c.l.b16 %v9375
        %v10666 = vunpack.c.h.b16 %v9375
        %v10667 = vunpack.c.l.b16 %v9376
        %v10668 = vunpack.c.h.b16 %v9376
        %v10669 = vunpack.c.l.b16 %v9377
        %v10670 = vunpack.c.h.b16 %v9377
        %v10671 = vunpack.c.l.b16 %v9378
        %v10672 = vunpack.c.h.b16 %v9378
        %v10673 = vunpack.c.l.b16 %v9379
        %v10674 = vunpack.c.h.b16 %v9379
        %v10675 = vunpack.c.l.b16 %v9380
        %v10676 = vunpack.c.h.b16 %v9380
        %v10677 = vunpack.c.l.b16 %v9381
        %v10678 = vunpack.c.h.b16 %v9381
        %v10679 = vunpack.c.l.b16 %v9382
        %v10680 = vunpack.c.h.b16 %v9382
        %v10681 = vunpack.c.l.b16 %v9383
        %v10682 = vunpack.c.h.b16 %v9383
        %v10683 = vunpack.c.l.b16 %v9384
        %v10684 = vunpack.c.h.b16 %v9384
        %v10685 = vunpack.c.l.b16 %v9385
        %v10686 = vunpack.c.h.b16 %v9385
        %v10687 = vunpack.c.l.b16 %v9386
        %v10688 = vunpack.c.h.b16 %v9386
        %v10689 = vunpack.c.l.b16 %v9387
        %v10690 = vunpack.c.h.b16 %v9387
        %v10691 = vunpack.c.l.b16 %v9388
        %v10692 = vunpack.c.h.b16 %v9388
        %v10693 = vunpack.c.l.b16 %v9389
        %v10694 = vunpack.c.h.b16 %v9389
        %v10695 = vunpack.c.l.b16 %v9390
        %v10696 = vunpack.c.h.b16 %v9390
        %v10697 = vunpack.c.l.b16 %v9391
        %v10698 = vunpack.c.h.b16 %v9391
        %v10699 = vunpack.c.l.b16 %v9392
        %v10700 = vunpack.c.h.b16 %v9392
        %v10701 = vunpack.c.l.b16 %v9393
        %v10702 = vunpack.c.h.b16 %v9393
        %v10703 = vunpack.c.l.b16 %v9394
        %v10704 = vunpack.c.h.b16 %v9394
        %v10705 = vunpack.c.l.b16 %v9395
        %v10706 = vunpack.c.h.b16 %v9395
        %v10707 = vunpack.c.l.b16 %v9396
        %v10708 = vunpack.c.h.b16 %v9396
        %v10709 = vunpack.c.l.b16 %v9397
        %v10710 = vunpack.c.h.b16 %v9397
        %v10711 = vunpack.c.l.b16 %v9398
        %v10712 = vunpack.c.h.b16 %v9398
        %v10713 = vunpack.c.l.b16 %v9399
        %v10714 = vunpack.c.h.b16 %v9399
        %v10715 = vunpack.c.l.b16 %v9400
        %v10716 = vunpack.c.h.b16 %v9400
        %v10717 = vunpack.c.l.b16 %v9401
        %v10718 = vunpack.c.h.b16 %v9401
        %v10719 = vunpack.c.l.b16 %v9402
        %v10720 = vunpack.c.h.b16 %v9402
        %v10721 = vunpack.c.l.b16 %v9403
        %v10722 = vunpack.c.h.b16 %v9403
        %v10723 = vunpack.c.l.b16 %v9404
        %v10724 = vunpack.c.h.b16 %v9404
        %v10725 = vunpack.c.l.b16 %v9405
        %v10726 = vunpack.c.h.b16 %v9405
        %v10727 = vunpack.c.l.b16 %v9406
        %v10728 = vunpack.c.h.b16 %v9406
        %v10729 = vunpack.c.l.b16 %v9407
        %v10730 = vunpack.c.h.b16 %v9407
        %v10731 = vunpack.c.l.b16 %v9408
        %v10732 = vunpack.c.h.b16 %v9408
        %v10733 = vunpack.c.l.b16 %v9409
        %v10734 = vunpack.c.h.b16 %v9409
        %v10735 = vunpack.c.l.b16 %v9410
        %v10736 = vunpack.c.h.b16 %v9410
        %v10737 = vunpack.c.l.b16 %v9411
        %v10738 = vunpack.c.h.b16 %v9411
        %v10739 = vunpack.c.l.b16 %v9412
        %v10740 = vunpack.c.h.b16 %v9412
        %v10741 = vunpack.c.l.b16 %v9413
        %v10742 = vunpack.c.h.b16 %v9413
        %v10743 = vunpack.c.l.b16 %v9414
        %v10744 = vunpack.c.h.b16 %v9414
        %v10745 = vunpack.c.l.b16 %v9415
        %v10746 = vunpack.c.h.b16 %v9415
        %v10747 = vunpack.c.l.b16 %v9416
        %v10748 = vunpack.c.h.b16 %v9416
        %v10749 = vunpack.c.l.b16 %v9417
        %v10750 = vunpack.c.h.b16 %v9417
        %v10751 = vunpack.c.l.b16 %v9418
        %v10752 = vunpack.c.h.b16 %v9418
        %v10753 = vunpack.c.l.b16 %v9419
        %v10754 = vunpack.c.h.b16 %v9419
        %v10755 = vunpack.c.l.b16 %v9420
        %v10756 = vunpack.c.h.b16 %v9420
        %v10757 = vunpack.c.l.b16 %v9421
        %v10758 = vunpack.c.h.b16 %v9421
        %v10759 = vunpack.c.l.b16 %v9422
        %v10760 = vunpack.c.h.b16 %v9422
        %v10761 = vunpack.c.l.b16 %v9423
        %v10762 = vunpack.c.h.b16 %v9423
        %v10763 = vunpack.c.l.b16 %v9424
        %v10764 = vunpack.c.h.b16 %v9424
        %v10765 = vunpack.c.l.b16 %v9425
        %v10766 = vunpack.c.h.b16 %v9425
        %v10767 = vunpack.c.l.b16 %v9426
        %v10768 = vunpack.c.h.b16 %v9426
        %v10769 = vunpack.c.l.b16 %v9427
        %v10770 = vunpack.c.h.b16 %v9427
        %v10771 = vunpack.c.l.b16 %v9428
        %v10772 = vunpack.c.h.b16 %v9428
        %v10773 = vunpack.c.l.b16 %v9429
        %v10774 = vunpack.c.h.b16 %v9429
        %v10775 = vunpack.c.l.b16 %v9430
        %v10776 = vunpack.c.h.b16 %v9430
        %v10777 = vunpack.c.l.b16 %v9431
        %v10778 = vunpack.c.h.b16 %v9431
        %v10779 = vunpack.c.l.b16 %v9432
        %v10780 = vunpack.c.h.b16 %v9432
        %v10781 = vunpack.c.l.b16 %v9433
        %v10782 = vunpack.c.h.b16 %v9433
        %v10783 = vunpack.c.l.b16 %v9434
        %v10784 = vunpack.c.h.b16 %v9434
        %v10785 = vunpack.c.l.b16 %v9435
        %v10786 = vunpack.c.h.b16 %v9435
        %v10787 = vunpack.c.l.b16 %v9436
        %v10788 = vunpack.c.h.b16 %v9436
        %v10789 = vunpack.c.l.b16 %v9437
        %v10790 = vunpack.c.h.b16 %v9437
        %v10791 = vunpack.c.l.b16 %v9438
        %v10792 = vunpack.c.h.b16 %v9438
        %v10793 = vunpack.c.l.b16 %v9439
        %v10794 = vunpack.c.h.b16 %v9439
        %v10795 = vunpack.c.l.b16 %v9440
        %v10796 = vunpack.c.h.b16 %v9440
        %v10797 = vunpack.c.l.b16 %v9441
        %v10798 = vunpack.c.h.b16 %v9441
        %v10799 = vunpack.c.l.b16 %v9442
        %v10800 = vunpack.c.h.b16 %v9442
        %v10801 = vunpack.c.l.b16 %v9443
        %v10802 = vunpack.c.h.b16 %v9443
        %v10803 = vunpack.c.l.b16 %v9444
        %v10804 = vunpack.c.h.b16 %v9444
        %v10805 = vunpack.c.l.b16 %v9445
        %v10806 = vunpack.c.h.b16 %v9445
        %v10807 = vunpack.c.l.b16 %v9446
        %v10808 = vunpack.c.h.b16 %v9446
        %v10809 = vunpack.c.l.b16 %v9447
        %v10810 = vunpack.c.h.b16 %v9447
        %v10811 = vunpack.c.l.b16 %v9448
        %v10812 = vunpack.c.h.b16 %v9448
        %v10813 = vunpack.c.l.b16 %v9449
        %v10814 = vunpack.c.h.b16 %v9449
        %v10815 = vunpack.c.l.b16 %v9450
        %v10816 = vunpack.c.h.b16 %v9450
        %v10817 = vunpack.c.l.b16 %v9451
        %v10818 = vunpack.c.h.b16 %v9451
        %v10819 = vunpack.c.l.b16 %v9452
        %v10820 = vunpack.c.h.b16 %v9452
        %v10821 = vunpack.c.l.b16 %v9453
        %v10822 = vunpack.c.h.b16 %v9453
        %v10823 = vunpack.c.l.b16 %v9454
        %v10824 = vunpack.c.h.b16 %v9454
        %v10825 = vunpack.c.l.b16 %v9455
        %v10826 = vunpack.c.h.b16 %v9455
        %v10827 = vunpack.c.l.b16 %v9456
        %v10828 = vunpack.c.h.b16 %v9456
        %v10829 = vunpack.c.l.b16 %v9457
        %v10830 = vunpack.c.h.b16 %v9457
        %v10831 = vunpack.c.l.b16 %v9458
        %v10832 = vunpack.c.h.b16 %v9458
        %v10833 = vunpack.c.l.b16 %v9459
        %v10834 = vunpack.c.h.b16 %v9459
        %v10835 = vunpack.c.l.b16 %v9460
        %v10836 = vunpack.c.h.b16 %v9460
        %v10837 = vunpack.c.l.b16 %v9461
        %v10838 = vunpack.c.h.b16 %v9461
        %v10839 = vunpack.c.l.b16 %v9462
        %v10840 = vunpack.c.h.b16 %v9462
        %v10841 = vunpack.c.l.b16 %v9463
        %v10842 = vunpack.c.h.b16 %v9463
        %v10843 = vunpack.c.l.b16 %v9464
        %v10844 = vunpack.c.h.b16 %v9464
        %v10845 = vunpack.c.l.b16 %v9465
        %v10846 = vunpack.c.h.b16 %v9465
        %v10847 = vunpack.c.l.b16 %v9466
        %v10848 = vunpack.c.h.b16 %v9466
        %v10849 = vunpack.c.l.b16 %v9467
        %v10850 = vunpack.c.h.b16 %v9467
        %v10851 = vunpack.c.l.b16 %v9468
        %v10852 = vunpack.c.h.b16 %v9468
        %v10853 = vunpack.c.l.b16 %v9469
        %v10854 = vunpack.c.h.b16 %v9469
        %v10855 = vunpack.c.l.b16 %v9470
        %v10856 = vunpack.c.h.b16 %v9470
        %v10857 = vunpack.c.l.b16 %v9471
        %v10858 = vunpack.c.h.b16 %v9471
        %v10859 = vunpack.c.l.b16 %v9472
        %v10860 = vunpack.c.h.b16 %v9472
        %v10861 = vunpack.c.l.b16 %v9473
        %v10862 = vunpack.c.h.b16 %v9473
        %v10863 = vunpack.c.l.b16 %v9474
        %v10864 = vunpack.c.h.b16 %v9474
        %v10865 = vunpack.c.l.b16 %v9475
        %v10866 = vunpack.c.h.b16 %v9475
        %v10867 = vunpack.c.l.b16 %v9476
        %v10868 = vunpack.c.h.b16 %v9476
        %v10869 = vunpack.c.l.b16 %v9477
        %v10870 = vunpack.c.h.b16 %v9477
        %v10871 = vunpack.c.l.b16 %v9478
        %v10872 = vunpack.c.h.b16 %v9478
        %v10873 = vunpack.c.l.b16 %v9479
        %v10874 = vunpack.c.h.b16 %v9479
        %v10875 = vunpack.c.l.b16 %v9480
        %v10876 = vunpack.c.h.b16 %v9480
        %v10877 = vunpack.c.l.b16 %v9481
        %v10878 = vunpack.c.h.b16 %v9481
        %v10879 = vunpack.c.l.b16 %v9482
        %v10880 = vunpack.c.h.b16 %v9482
        %v10881 = vunpack.c.l.b16 %v9483
        %v10882 = vunpack.c.h.b16 %v9483
        %v10883 = vunpack.c.l.b16 %v9484
        %v10884 = vunpack.c.h.b16 %v9484
        %v10885 = vunpack.c.l.b16 %v9485
        %v10886 = vunpack.c.h.b16 %v9485
        %v10887 = vunpack.c.l.b16 %v9486
        %v10888 = vunpack.c.h.b16 %v9486
        %v10889 = vunpack.c.l.b16 %v9487
        %v10890 = vunpack.c.h.b16 %v9487
        %v10891 = vunpack.c.l.b16 %v9488
        %v10892 = vunpack.c.h.b16 %v9488
        %v10893 = vunpack.c.l.b16 %v9489
        %v10894 = vunpack.c.h.b16 %v9489
        %v10895 = vunpack.c.l.b16 %v9490
        %v10896 = vunpack.c.h.b16 %v9490
        %v10897 = vunpack.c.l.b16 %v9491
        %v10898 = vunpack.c.h.b16 %v9491
        %v10899 = vunpack.c.l.b16 %v9492
        %v10900 = vunpack.c.h.b16 %v9492
        %v10901 = vunpack.c.l.b16 %v9493
        %v10902 = vunpack.c.h.b16 %v9493
        %v10903 = vunpack.c.l.b16 %v9494
        %v10904 = vunpack.c.h.b16 %v9494
        %v10905 = vunpack.c.l.b16 %v9495
        %v10906 = vunpack.c.h.b16 %v9495
        %v10907 = vunpack.c.l.b16 %v9496
        %v10908 = vunpack.c.h.b16 %v9496
        %v10909 = vunpack.c.l.b16 %v9497
        %v10910 = vunpack.c.h.b16 %v9497
        %v10911 = vunpack.c.l.b16 %v9498
        %v10912 = vunpack.c.h.b16 %v9498
        %v10913 = vunpack.c.l.b16 %v9499
        %v10914 = vunpack.c.h.b16 %v9499
        %v10915 = vunpack.c.l.b16 %v9500
        %v10916 = vunpack.c.h.b16 %v9500
        %v10917 = vunpack.c.l.b16 %v9501
        %v10918 = vunpack.c.h.b16 %v9501
        %v10919 = vunpack.c.l.b16 %v9502
        %v10920 = vunpack.c.h.b16 %v9502
        %v10921 = vunpack.c.l.b16 %v9503
        %v10922 = vunpack.c.h.b16 %v9503
        %v10923 = vunpack.c.l.b16 %v9504
        %v10924 = vunpack.c.h.b16 %v9504
        %v10925 = vunpack.c.l.b16 %v9505
        %v10926 = vunpack.c.h.b16 %v9505
        %v10927 = vunpack.c.l.b16 %v9506
        %v10928 = vunpack.c.h.b16 %v9506
        %v10929 = vunpack.c.l.b16 %v9507
        %v10930 = vunpack.c.h.b16 %v9507
        %v10931 = vunpack.c.l.b16 %v9508
        %v10932 = vunpack.c.h.b16 %v9508
        %v10933 = vunpack.c.l.b16 %v9509
        %v10934 = vunpack.c.h.b16 %v9509
        %v10935 = vunpack.c.l.b16 %v9510
        %v10936 = vunpack.c.h.b16 %v9510
        %v10937 = vunpack.c.l.b16 %v9511
        %v10938 = vunpack.c.h.b16 %v9511
        %v10939 = vunpack.c.l.b16 %v9512
        %v10940 = vunpack.c.h.b16 %v9512
        %v10941 = vunpack.c.l.b16 %v9513
        %v10942 = vunpack.c.h.b16 %v9513
        %v10943 = vunpack.c.l.b16 %v9514
        %v10944 = vunpack.c.h.b16 %v9514
        %v10945 = vunpack.c.l.b16 %v9515
        %v10946 = vunpack.c.h.b16 %v9515
        %v10947 = vunpack.c.l.b16 %v9516
        %v10948 = vunpack.c.h.b16 %v9516
        %v10949 = vunpack.c.l.b16 %v9517
        %v10950 = vunpack.c.h.b16 %v9517
        %v10951 = vunpack.c.l.b16 %v9518
        %v10952 = vunpack.c.h.b16 %v9518
        %v10953 = vunpack.c.l.b16 %v9519
        %v10954 = vunpack.c.h.b16 %v9519
        %v10955 = vunpack.c.l.b16 %v9520
        %v10956 = vunpack.c.h.b16 %v9520
        %v10957 = vunpack.c.l.b16 %v9521
        %v10958 = vunpack.c.h.b16 %v9521
        %v10959 = vunpack.c.l.b16 %v9522
        %v10960 = vunpack.c.h.b16 %v9522
        %v10961 = vunpack.c.l.b16 %v9523
        %v10962 = vunpack.c.h.b16 %v9523
        %v10963 = vunpack.c.l.b16 %v9524
        %v10964 = vunpack.c.h.b16 %v9524
        %v10965 = vunpack.c.l.b16 %v9525
        %v10966 = vunpack.c.h.b16 %v9525
        %v10967 = vunpack.c.l.b16 %v9526
        %v10968 = vunpack.c.h.b16 %v9526
        %v10969 = vunpack.c.l.b16 %v9527
        %v10970 = vunpack.c.h.b16 %v9527
        %v10971 = vunpack.c.l.b16 %v9528
        %v10972 = vunpack.c.h.b16 %v9528
        %v10973 = vunpack.c.l.b16 %v9529
        %v10974 = vunpack.c.h.b16 %v9529
        %v10975 = vunpack.c.l.b16 %v9530
        %v10976 = vunpack.c.h.b16 %v9530
        %v10977 = vunpack.c.l.b16 %v9531
        %v10978 = vunpack.c.h.b16 %v9531
        %v10979 = vunpack.c.l.b16 %v9532
        %v10980 = vunpack.c.h.b16 %v9532
        %v10981 = vunpack.c.l.b16 %v9533
        %v10982 = vunpack.c.h.b16 %v9533
        %v10983 = vunpack.c.l.b16 %v9534
        %v10984 = vunpack.c.h.b16 %v9534
        %v10985 = vunpack.c.l.b16 %v9535
        %v10986 = vunpack.c.h.b16 %v9535
        %v10987 = vunpack.c.l.b16 %v9536
        %v10988 = vunpack.c.h.b16 %v9536
        %v10989 = vunpack.c.l.b16 %v9537
        %v10990 = vunpack.c.h.b16 %v9537
        %v10991 = vunpack.c.l.b16 %v9538
        %v10992 = vunpack.c.h.b16 %v9538
        %v10993 = vunpack.c.l.b16 %v9539
        %v10994 = vunpack.c.h.b16 %v9539
        %v10995 = vunpack.c.l.b16 %v9540
        %v10996 = vunpack.c.h.b16 %v9540
        %v10997 = vunpack.c.l.b16 %v9541
        %v10998 = vunpack.c.h.b16 %v9541
        %v10999 = vunpack.c.l.b16 %v9542
        %v11000 = vunpack.c.h.b16 %v9542
        %v11001 = vunpack.c.l.b16 %v9543
        %v11002 = vunpack.c.h.b16 %v9543
        %v11003 = vunpack.c.l.b16 %v9544
        %v11004 = vunpack.c.h.b16 %v9544
        %v11005 = vunpack.c.l.b16 %v9545
        %v11006 = vunpack.c.h.b16 %v9545
        %v11007 = vunpack.c.l.b16 %v9546
        %v11008 = vunpack.c.h.b16 %v9546
        %v11009 = vunpack.c.l.b16 %v9547
        %v11010 = vunpack.c.h.b16 %v9547
        %v11011 = vunpack.c.l.b16 %v9548
        %v11012 = vunpack.c.h.b16 %v9548
        %v11013 = vunpack.c.l.b16 %v9549
        %v11014 = vunpack.c.h.b16 %v9549
        %v11015 = vunpack.c.l.b16 %v9550
        %v11016 = vunpack.c.h.b16 %v9550
        %v11017 = vunpack.c.l.b16 %v9551
        %v11018 = vunpack.c.h.b16 %v9551
        %v11019 = vunpack.c.l.b16 %v9552
        %v11020 = vunpack.c.h.b16 %v9552
        %v11021 = vunpack.c.l.b16 %v9553
        %v11022 = vunpack.c.h.b16 %v9553
        %v11023 = vunpack.c.l.b16 %v9554
        %v11024 = vunpack.c.h.b16 %v9554
        %v11025 = vunpack.c.l.b16 %v9555
        %v11026 = vunpack.c.h.b16 %v9555
        %v11027 = vunpack.c.l.b16 %v9556
        %v11028 = vunpack.c.h.b16 %v9556
        %v11029 = vunpack.c.l.b16 %v9557
        %v11030 = vunpack.c.h.b16 %v9557
        %v11031 = vunpack.c.l.b16 %v9558
        %v11032 = vunpack.c.h.b16 %v9558
        %v11033 = vunpack.c.l.b16 %v9559
        %v11034 = vunpack.c.h.b16 %v9559
        %v11035 = vunpack.c.l.b16 %v9560
        %v11036 = vunpack.c.h.b16 %v9560
        %v11037 = vunpack.c.l.b16 %v9561
        %v11038 = vunpack.c.h.b16 %v9561
        %v11039 = vunpack.c.l.b16 %v9562
        %v11040 = vunpack.c.h.b16 %v9562
        %v11041 = vunpack.c.l.b16 %v9563
        %v11042 = vunpack.c.h.b16 %v9563
        %v11043 = vunpack.c.l.b16 %v9564
        %v11044 = vunpack.c.h.b16 %v9564
        %v11045 = vunpack.c.l.b16 %v9565
        %v11046 = vunpack.c.h.b16 %v9565
        %v11047 = vunpack.c.l.b16 %v9566
        %v11048 = vunpack.c.h.b16 %v9566
        %v11049 = vunpack.c.l.b16 %v9567
        %v11050 = vunpack.c.h.b16 %v9567
        %v11051 = vunpack.c.l.b16 %v9568
        %v11052 = vunpack.c.h.b16 %v9568
        %v11053 = vunpack.c.l.b16 %v9569
        %v11054 = vunpack.c.h.b16 %v9569
        %v11055 = vunpack.c.l.b16 %v9570
        %v11056 = vunpack.c.h.b16 %v9570
        %v11057 = vunpack.c.l.b16 %v9571
        %v11058 = vunpack.c.h.b16 %v9571
        %v11059 = vunpack.c.l.b16 %v9572
        %v11060 = vunpack.c.h.b16 %v9572
        %v11061 = vunpack.c.l.b16 %v9573
        %v11062 = vunpack.c.h.b16 %v9573
        %v11063 = vunpack.c.l.b16 %v9574
        %v11064 = vunpack.c.h.b16 %v9574
        %v11065 = vunpack.c.l.b16 %v9575
        %v11066 = vunpack.c.h.b16 %v9575
        %v11067 = vunpack.c.l.b16 %v9576
        %v11068 = vunpack.c.h.b16 %v9576
        %v11069 = vunpack.c.l.b16 %v9577
        %v11070 = vunpack.c.h.b16 %v9577
        %v11071 = vunpack.c.l.b16 %v9578
        %v11072 = vunpack.c.h.b16 %v9578
        %v11073 = vunpack.c.l.b16 %v9579
        %v11074 = vunpack.c.h.b16 %v9579
        %v11075 = vunpack.c.l.b16 %v9580
        %v11076 = vunpack.c.h.b16 %v9580
        %v11077 = vunpack.c.l.b16 %v9581
        %v11078 = vunpack.c.h.b16 %v9581
        %v11079 = vunpack.c.l.b16 %v9582
        %v11080 = vunpack.c.h.b16 %v9582
        %v11081 = vunpack.c.l.b16 %v9583
        %v11082 = vunpack.c.h.b16 %v9583
        %v11083 = vunpack.c.l.b16 %v9584
        %v11084 = vunpack.c.h.b16 %v9584
        %v11085 = vunpack.c.l.b16 %v9585
        %v11086 = vunpack.c.h.b16 %v9585
        %v11087 = vunpack.c.l.b16 %v9586
        %v11088 = vunpack.c.h.b16 %v9586
        %v11089 = vunpack.c.l.b16 %v9587
        %v11090 = vunpack.c.h.b16 %v9587
        %v11091 = vunpack.c.l.b16 %v9588
        %v11092 = vunpack.c.h.b16 %v9588
        %v11093 = vunpack.c.l.b16 %v9589
        %v11094 = vunpack.c.h.b16 %v9589
        %v11095 = vunpack.c.l.b16 %v9590
        %v11096 = vunpack.c.h.b16 %v9590
        %v11097 = vunpack.c.l.b16 %v9591
        %v11098 = vunpack.c.h.b16 %v9591
        %v11099 = vunpack.c.l.b16 %v9592
        %v11100 = vunpack.c.h.b16 %v9592
        %v11101 = vunpack.c.l.b16 %v9593
        %v11102 = vunpack.c.h.b16 %v9593
        %v11103 = vunpack.c.l.b16 %v9594
        %v11104 = vunpack.c.h.b16 %v9594
        %v11105 = vunpack.c.l.b16 %v9595
        %v11106 = vunpack.c.h.b16 %v9595
        %v11107 = vunpack.c.l.b16 %v9596
        %v11108 = vunpack.c.h.b16 %v9596
        %v11109 = vunpack.c.l.b16 %v9597
        %v11110 = vunpack.c.h.b16 %v9597
        %v11111 = vunpack.c.l.b16 %v9598
        %v11112 = vunpack.c.h.b16 %v9598
        %v11113 = vunpack.c.l.b16 %v9599
        %v11114 = vunpack.c.h.b16 %v9599
        %v11115 = vunpack.c.l.b16 %v9600
        %v11116 = vunpack.c.h.b16 %v9600
        %v11117 = vunpack.c.l.b16 %v9601
        %v11118 = vunpack.c.h.b16 %v9601
        %v11119 = vunpack.c.l.b16 %v9602
        %v11120 = vunpack.c.h.b16 %v9602
        %v11121 = vunpack.c.l.b16 %v9603
        %v11122 = vunpack.c.h.b16 %v9603
        %v11123 = vunpack.c.l.b16 %v9604
        %v11124 = vunpack.c.h.b16 %v9604
        %v11125 = vunpack.c.l.b16 %v9605
        %v11126 = vunpack.c.h.b16 %v9605
        %v11127 = vunpack.c.l.b16 %v9606
        %v11128 = vunpack.c.h.b16 %v9606
        %v11129 = vunpack.c.l.b16 %v9607
        %v11130 = vunpack.c.h.b16 %v9607
        %v11131 = vunpack.c.l.b16 %v9608
        %v11132 = vunpack.c.h.b16 %v9608
        %v11133 = vunpack.c.l.b16 %v9609
        %v11134 = vunpack.c.h.b16 %v9609
        %v11135 = vunpack.c.l.b16 %v9610
        %v11136 = vunpack.c.h.b16 %v9610
        %v11137 = vunpack.c.l.b16 %v9611
        %v11138 = vunpack.c.h.b16 %v9611
        %v11139 = vunpack.c.l.b16 %v9612
        %v11140 = vunpack.c.h.b16 %v9612
        %v11141 = vunpack.c.l.b16 %v9613
        %v11142 = vunpack.c.h.b16 %v9613
        %v11143 = vunpack.c.l.b16 %v9614
        %v11144 = vunpack.c.h.b16 %v9614
        %v11145 = vunpack.c.l.b16 %v9615
        %v11146 = vunpack.c.h.b16 %v9615
        %v11147 = vunpack.c.l.b16 %v9616
        %v11148 = vunpack.c.h.b16 %v9616
        %v11149 = vunpack.c.l.b16 %v9617
        %v11150 = vunpack.c.h.b16 %v9617
        %v11151 = vunpack.c.l.b16 %v9618
        %v11152 = vunpack.c.h.b16 %v9618
        %v11153 = vunpack.c.l.b16 %v9619
        %v11154 = vunpack.c.h.b16 %v9619
        %v11155 = vunpack.c.l.b16 %v9620
        %v11156 = vunpack.c.h.b16 %v9620
        %v11157 = vunpack.c.l.b16 %v9621
        %v11158 = vunpack.c.h.b16 %v9621
        %v11159 = vunpack.c.l.b16 %v9622
        %v11160 = vunpack.c.h.b16 %v9622
        %v11161 = vunpack.c.l.b16 %v9623
        %v11162 = vunpack.c.h.b16 %v9623
        %v11163 = vunpack.c.l.b16 %v9624
        %v11164 = vunpack.c.h.b16 %v9624
        %v11165 = vunpack.c.l.b16 %v9625
        %v11166 = vunpack.c.h.b16 %v9625
        %v11167 = vunpack.c.l.b16 %v9626
        %v11168 = vunpack.c.h.b16 %v9626
        %v11169 = vunpack.c.l.b16 %v9627
        %v11170 = vunpack.c.h.b16 %v9627
        %v11171 = vunpack.c.l.b16 %v9628
        %v11172 = vunpack.c.h.b16 %v9628
        %v11173 = vunpack.c.l.b16 %v9629
        %v11174 = vunpack.c.h.b16 %v9629
        %v11175 = vunpack.c.l.b16 %v9630
        %v11176 = vunpack.c.h.b16 %v9630
        %v11177 = vunpack.c.l.b16 %v9631
        %v11178 = vunpack.c.h.b16 %v9631
        %v11179 = vunpack.c.l.b16 %v9632
        %v11180 = vunpack.c.h.b16 %v9632
        %v11181 = vunpack.c.l.b16 %v9633
        %v11182 = vunpack.c.h.b16 %v9633
        %v11183 = vunpack.c.l.b16 %v9634
        %v11184 = vunpack.c.h.b16 %v9634
        %v11185 = vunpack.c.l.b16 %v9635
        %v11186 = vunpack.c.h.b16 %v9635
        %v11187 = vunpack.c.l.b16 %v9636
        %v11188 = vunpack.c.h.b16 %v9636
        %v11189 = vunpack.c.l.b16 %v9637
        %v11190 = vunpack.c.h.b16 %v9637
        %v11191 = vunpack.c.l.b16 %v9638
        %v11192 = vunpack.c.h.b16 %v9638
        %v11193 = vunpack.c.l.b16 %v9639
        %v11194 = vunpack.c.h.b16 %v9639
        %v11195 = vunpack.c.l.b16 %v9640
        %v11196 = vunpack.c.h.b16 %v9640
        %v11197 = vunpack.c.l.b16 %v9641
        %v11198 = vunpack.c.h.b16 %v9641
        %v11199 = vunpack.c.l.b16 %v9642
        %v11200 = vunpack.c.h.b16 %v9642
        %v11201 = vunpack.c.l.b16 %v9643
        %v11202 = vunpack.c.h.b16 %v9643
        %v11203 = vunpack.c.l.b16 %v9644
        %v11204 = vunpack.c.h.b16 %v9644
        %v11205 = vunpack.c.l.b16 %v9645
        %v11206 = vunpack.c.h.b16 %v9645
        %v11207 = vunpack.c.l.b16 %v9646
        %v11208 = vunpack.c.h.b16 %v9646
        %v11209 = vunpack.c.l.b16 %v9647
        %v11210 = vunpack.c.h.b16 %v9647
        %v11211 = vunpack.c.l.b16 %v9648
        %v11212 = vunpack.c.h.b16 %v9648
        %v11213 = vunpack.c.l.b16 %v9649
        %v11214 = vunpack.c.h.b16 %v9649
        %v11215 = vunpack.c.l.b16 %v9650
        %v11216 = vunpack.c.h.b16 %v9650
        %v11217 = vunpack.c.l.b16 %v9651
        %v11218 = vunpack.c.h.b16 %v9651
        %v11219 = vunpack.c.l.b16 %v9652
        %v11220 = vunpack.c.h.b16 %v9652
        %v11221 = vunpack.c.l.b16 %v9653
        %v11222 = vunpack.c.h.b16 %v9653
        %v11223 = vunpack.c.l.b16 %v9654
        %v11224 = vunpack.c.h.b16 %v9654
        %v11225 = vunpack.c.l.b16 %v9655
        %v11226 = vunpack.c.h.b16 %v9655
        %v11227 = vunpack.c.l.b16 %v9656
        %v11228 = vunpack.c.h.b16 %v9656
        %v11229 = vunpack.c.l.b16 %v9657
        %v11230 = vunpack.c.h.b16 %v9657
        %v11231 = vunpack.c.l.b16 %v9658
        %v11232 = vunpack.c.h.b16 %v9658
        %v11233 = vunpack.c.l.b16 %v9659
        %v11234 = vunpack.c.h.b16 %v9659
        %v11235 = vunpack.c.l.b16 %v9660
        %v11236 = vunpack.c.h.b16 %v9660
        %v11237 = vunpack.c.l.b16 %v9661
        %v11238 = vunpack.c.h.b16 %v9661
        %v11239 = vunpack.c.l.b16 %v9662
        %v11240 = vunpack.c.h.b16 %v9662
        %v11241 = vunpack.c.l.b16 %v9663
        %v11242 = vunpack.c.h.b16 %v9663
        %v11243 = vunpack.c.l.b16 %v9664
        %v11244 = vunpack.c.h.b16 %v9664
        %v11245 = vunpack.c.l.b16 %v9665
        %v11246 = vunpack.c.h.b16 %v9665
        %v11247 = vunpack.c.l.b16 %v9666
        %v11248 = vunpack.c.h.b16 %v9666
        %v11249 = vunpack.c.l.b16 %v9667
        %v11250 = vunpack.c.h.b16 %v9667
        %v11251 = vunpack.c.l.b16 %v9668
        %v11252 = vunpack.c.h.b16 %v9668
        %v11253 = vunpack.c.l.b16 %v9669
        %v11254 = vunpack.c.h.b16 %v9669
        %v11255 = vunpack.c.l.b16 %v9670
        %v11256 = vunpack.c.h.b16 %v9670
        %v11257 = vunpack.c.l.b16 %v9671
        %v11258 = vunpack.c.h.b16 %v9671
        %v11259 = vunpack.c.l.b16 %v9672
        %v11260 = vunpack.c.h.b16 %v9672
        %v11261 = vunpack.c.l.b16 %v9673
        %v11262 = vunpack.c.h.b16 %v9673
        %v11263 = vunpack.c.l.b16 %v9674
        %v11264 = vunpack.c.h.b16 %v9674
        %v11265 = vunpack.c.l.b16 %v9675
        %v11266 = vunpack.c.h.b16 %v9675
        %v11267 = vunpack.c.l.b16 %v9676
        %v11268 = vunpack.c.h.b16 %v9676
        %v11269 = vunpack.c.l.b16 %v9677
        %v11270 = vunpack.c.h.b16 %v9677
        %v11271 = vunpack.c.l.b16 %v9678
        %v11272 = vunpack.c.h.b16 %v9678
        %v11273 = vunpack.c.l.b16 %v9679
        %v11274 = vunpack.c.h.b16 %v9679
        %v11275 = vunpack.c.l.b16 %v9680
        %v11276 = vunpack.c.h.b16 %v9680
        %v11277 = vunpack.c.l.b16 %v9681
        %v11278 = vunpack.c.h.b16 %v9681
        %v11279 = vunpack.c.l.b16 %v9682
        %v11280 = vunpack.c.h.b16 %v9682
        %v11281 = vunpack.c.l.b16 %v9683
        %v11282 = vunpack.c.h.b16 %v9683
        %v11283 = vunpack.c.l.b16 %v9684
        %v11284 = vunpack.c.h.b16 %v9684
        %v11285 = vunpack.c.l.b16 %v9685
        %v11286 = vunpack.c.h.b16 %v9685
        %v11287 = vunpack.c.l.b16 %v9686
        %v11288 = vunpack.c.h.b16 %v9686
        %v11289 = vunpack.c.l.b16 %v9687
        %v11290 = vunpack.c.h.b16 %v9687
        %v11291 = vunpack.c.l.b16 %v9688
        %v11292 = vunpack.c.h.b16 %v9688
        %v11293 = vunpack.c.l.b16 %v9689
        %v11294 = vunpack.c.h.b16 %v9689
        %v11295 = vunpack.c.l.b16 %v9690
        %v11296 = vunpack.c.h.b16 %v9690
        %v11297 = vunpack.c.l.b16 %v9691
        %v11298 = vunpack.c.h.b16 %v9691
        %v11299 = vunpack.c.l.b16 %v9692
        %v11300 = vunpack.c.h.b16 %v9692
        %v11301 = vunpack.c.l.b16 %v9693
        %v11302 = vunpack.c.h.b16 %v9693
        %v11303 = vunpack.c.l.b16 %v9694
        %v11304 = vunpack.c.h.b16 %v9694
        %v11305 = vunpack.c.l.b16 %v9695
        %v11306 = vunpack.c.h.b16 %v9695
        %v11307 = vunpack.c.l.b16 %v9696
        %v11308 = vunpack.c.h.b16 %v9696
        %v11309 = vunpack.c.l.b16 %v9697
        %v11310 = vunpack.c.h.b16 %v9697
        %v11311 = vunpack.c.l.b16 %v9698
        %v11312 = vunpack.c.h.b16 %v9698
        %v11313 = vpack.c.b16 %v10293, %v10289
        %v11314 = vpack.c.b16 %v10294, %v10290
        %v11315 = vpack.c.b16 %v10295, %v10291
        %v11316 = vpack.c.b16 %v10296, %v10292
        %v11317 = vpack.c.b16 %v10301, %v10297
        %v11318 = vpack.c.b16 %v10302, %v10298
        %v11319 = vpack.c.b16 %v10303, %v10299
        %v11320 = vpack.c.b16 %v10304, %v10300
        %v11321 = vpack.c.b16 %v10309, %v10305
        %v11322 = vpack.c.b16 %v10310, %v10306
        %v11323 = vpack.c.b16 %v10311, %v10307
        %v11324 = vpack.c.b16 %v10312, %v10308
        %v11325 = vpack.c.b16 %v10317, %v10313
        %v11326 = vpack.c.b16 %v10318, %v10314
        %v11327 = vpack.c.b16 %v10319, %v10315
        %v11328 = vpack.c.b16 %v10320, %v10316
        %v11329 = vpack.c.b16 %v10325, %v10321
        %v11330 = vpack.c.b16 %v10326, %v10322
        %v11331 = vpack.c.b16 %v10327, %v10323
        %v11332 = vpack.c.b16 %v10328, %v10324
        %v11333 = vpack.c.b16 %v10333, %v10329
        %v11334 = vpack.c.b16 %v10334, %v10330
        %v11335 = vpack.c.b16 %v10335, %v10331
        %v11336 = vpack.c.b16 %v10336, %v10332
        %v11337 = vpack.c.b16 %v10341, %v10337
        %v11338 = vpack.c.b16 %v10342, %v10338
        %v11339 = vpack.c.b16 %v10343, %v10339
        %v11340 = vpack.c.b16 %v10344, %v10340
        %v11341 = vpack.c.b16 %v10349, %v10345
        %v11342 = vpack.c.b16 %v10350, %v10346
        %v11343 = vpack.c.b16 %v10351, %v10347
        %v11344 = vpack.c.b16 %v10352, %v10348
        %v11345 = vpack.c.b16 %v10357, %v10353
        %v11346 = vpack.c.b16 %v10358, %v10354
        %v11347 = vpack.c.b16 %v10359, %v10355
        %v11348 = vpack.c.b16 %v10360, %v10356
        %v11349 = vpack.c.b16 %v10365, %v10361
        %v11350 = vpack.c.b16 %v10366, %v10362
        %v11351 = vpack.c.b16 %v10367, %v10363
        %v11352 = vpack.c.b16 %v10368, %v10364
        %v11353 = vpack.c.b16 %v10373, %v10369
        %v11354 = vpack.c.b16 %v10374, %v10370
        %v11355 = vpack.c.b16 %v10375, %v10371
        %v11356 = vpack.c.b16 %v10376, %v10372
        %v11357 = vpack.c.b16 %v10381, %v10377
        %v11358 = vpack.c.b16 %v10382, %v10378
        %v11359 = vpack.c.b16 %v10383, %v10379
        %v11360 = vpack.c.b16 %v10384, %v10380
        %v11361 = vpack.c.b16 %v10389, %v10385
        %v11362 = vpack.c.b16 %v10390, %v10386
        %v11363 = vpack.c.b16 %v10391, %v10387
        %v11364 = vpack.c.b16 %v10392, %v10388
        %v11365 = vpack.c.b16 %v10397, %v10393
        %v11366 = vpack.c.b16 %v10398, %v10394
        %v11367 = vpack.c.b16 %v10399, %v10395
        %v11368 = vpack.c.b16 %v10400, %v10396
        %v11369 = vpack.c.b16 %v10405, %v10401
        %v11370 = vpack.c.b16 %v10406, %v10402
        %v11371 = vpack.c.b16 %v10407, %v10403
        %v11372 = vpack.c.b16 %v10408, %v10404
        %v11373 = vpack.c.b16 %v10413, %v10409
        %v11374 = vpack.c.b16 %v10414, %v10410
        %v11375 = vpack.c.b16 %v10415, %v10411
        %v11376 = vpack.c.b16 %v10416, %v10412
        %v11377 = vpack.c.b16 %v10421, %v10417
        %v11378 = vpack.c.b16 %v10422, %v10418
        %v11379 = vpack.c.b16 %v10423, %v10419
        %v11380 = vpack.c.b16 %v10424, %v10420
        %v11381 = vpack.c.b16 %v10429, %v10425
        %v11382 = vpack.c.b16 %v10430, %v10426
        %v11383 = vpack.c.b16 %v10431, %v10427
        %v11384 = vpack.c.b16 %v10432, %v10428
        %v11385 = vpack.c.b16 %v10437, %v10433
        %v11386 = vpack.c.b16 %v10438, %v10434
        %v11387 = vpack.c.b16 %v10439, %v10435
        %v11388 = vpack.c.b16 %v10440, %v10436
        %v11389 = vpack.c.b16 %v10445, %v10441
        %v11390 = vpack.c.b16 %v10446, %v10442
        %v11391 = vpack.c.b16 %v10447, %v10443
        %v11392 = vpack.c.b16 %v10448, %v10444
        %v11393 = vpack.c.b16 %v10453, %v10449
        %v11394 = vpack.c.b16 %v10454, %v10450
        %v11395 = vpack.c.b16 %v10455, %v10451
        %v11396 = vpack.c.b16 %v10456, %v10452
        %v11397 = vpack.c.b16 %v10461, %v10457
        %v11398 = vpack.c.b16 %v10462, %v10458
        %v11399 = vpack.c.b16 %v10463, %v10459
        %v11400 = vpack.c.b16 %v10464, %v10460
        %v11401 = vpack.c.b16 %v10469, %v10465
        %v11402 = vpack.c.b16 %v10470, %v10466
        %v11403 = vpack.c.b16 %v10471, %v10467
        %v11404 = vpack.c.b16 %v10472, %v10468
        %v11405 = vpack.c.b16 %v10477, %v10473
        %v11406 = vpack.c.b16 %v10478, %v10474
        %v11407 = vpack.c.b16 %v10479, %v10475
        %v11408 = vpack.c.b16 %v10480, %v10476
        %v11409 = vpack.c.b16 %v10485, %v10481
        %v11410 = vpack.c.b16 %v10486, %v10482
        %v11411 = vpack.c.b16 %v10487, %v10483
        %v11412 = vpack.c.b16 %v10488, %v10484
        %v11413 = vpack.c.b16 %v10493, %v10489
        %v11414 = vpack.c.b16 %v10494, %v10490
        %v11415 = vpack.c.b16 %v10495, %v10491
        %v11416 = vpack.c.b16 %v10496, %v10492
        %v11417 = vpack.c.b16 %v10501, %v10497
        %v11418 = vpack.c.b16 %v10502, %v10498
        %v11419 = vpack.c.b16 %v10503, %v10499
        %v11420 = vpack.c.b16 %v10504, %v10500
        %v11421 = vpack.c.b16 %v10509, %v10505
        %v11422 = vpack.c.b16 %v10510, %v10506
        %v11423 = vpack.c.b16 %v10511, %v10507
        %v11424 = vpack.c.b16 %v10512, %v10508
        %v11425 = vpack.c.b16 %v10517, %v10513
        %v11426 = vpack.c.b16 %v10518, %v10514
        %v11427 = vpack.c.b16 %v10519, %v10515
        %v11428 = vpack.c.b16 %v10520, %v10516
        %v11429 = vpack.c.b16 %v10525, %v10521
        %v11430 = vpack.c.b16 %v10526, %v10522
        %v11431 = vpack.c.b16 %v10527, %v10523
        %v11432 = vpack.c.b16 %v10528, %v10524
        %v11433 = vpack.c.b16 %v10533, %v10529
        %v11434 = vpack.c.b16 %v10534, %v10530
        %v11435 = vpack.c.b16 %v10535, %v10531
        %v11436 = vpack.c.b16 %v10536, %v10532
        %v11437 = vpack.c.b16 %v10541, %v10537
        %v11438 = vpack.c.b16 %v10542, %v10538
        %v11439 = vpack.c.b16 %v10543, %v10539
        %v11440 = vpack.c.b16 %v10544, %v10540
        %v11441 = vpack.c.b16 %v10549, %v10545
        %v11442 = vpack.c.b16 %v10550, %v10546
        %v11443 = vpack.c.b16 %v10551, %v10547
        %v11444 = vpack.c.b16 %v10552, %v10548
        %v11445 = vpack.c.b16 %v10557, %v10553
        %v11446 = vpack.c.b16 %v10558, %v10554
        %v11447 = vpack.c.b16 %v10559, %v10555
        %v11448 = vpack.c.b16 %v10560, %v10556
        %v11449 = vpack.c.b16 %v10565, %v10561
        %v11450 = vpack.c.b16 %v10566, %v10562
        %v11451 = vpack.c.b16 %v10567, %v10563
        %v11452 = vpack.c.b16 %v10568, %v10564
        %v11453 = vpack.c.b16 %v10573, %v10569
        %v11454 = vpack.c.b16 %v10574, %v10570
        %v11455 = vpack.c.b16 %v10575, %v10571
        %v11456 = vpack.c.b16 %v10576, %v10572
        %v11457 = vpack.c.b16 %v10581, %v10577
        %v11458 = vpack.c.b16 %v10582, %v10578
        %v11459 = vpack.c.b16 %v10583, %v10579
        %v11460 = vpack.c.b16 %v10584, %v10580
        %v11461 = vpack.c.b16 %v10589, %v10585
        %v11462 = vpack.c.b16 %v10590, %v10586
        %v11463 = vpack.c.b16 %v10591, %v10587
        %v11464 = vpack.c.b16 %v10592, %v10588
        %v11465 = vpack.c.b16 %v10597, %v10593
        %v11466 = vpack.c.b16 %v10598, %v10594
        %v11467 = vpack.c.b16 %v10599, %v10595
        %v11468 = vpack.c.b16 %v10600, %v10596
        %v11469 = vpack.c.b16 %v10605, %v10601
        %v11470 = vpack.c.b16 %v10606, %v10602
        %v11471 = vpack.c.b16 %v10607, %v10603
        %v11472 = vpack.c.b16 %v10608, %v10604
        %v11473 = vpack.c.b16 %v10613, %v10609
        %v11474 = vpack.c.b16 %v10614, %v10610
        %v11475 = vpack.c.b16 %v10615, %v10611
        %v11476 = vpack.c.b16 %v10616, %v10612
        %v11477 = vpack.c.b16 %v10621, %v10617
        %v11478 = vpack.c.b16 %v10622, %v10618
        %v11479 = vpack.c.b16 %v10623, %v10619
        %v11480 = vpack.c.b16 %v10624, %v10620
        %v11481 = vpack.c.b16 %v10629, %v10625
        %v11482 = vpack.c.b16 %v10630, %v10626
        %v11483 = vpack.c.b16 %v10631, %v10627
        %v11484 = vpack.c.b16 %v10632, %v10628
        %v11485 = vpack.c.b16 %v10637, %v10633
        %v11486 = vpack.c.b16 %v10638, %v10634
        %v11487 = vpack.c.b16 %v10639, %v10635
        %v11488 = vpack.c.b16 %v10640, %v10636
        %v11489 = vpack.c.b16 %v10645, %v10641
        %v11490 = vpack.c.b16 %v10646, %v10642
        %v11491 = vpack.c.b16 %v10647, %v10643
        %v11492 = vpack.c.b16 %v10648, %v10644
        %v11493 = vpack.c.b16 %v10653, %v10649
        %v11494 = vpack.c.b16 %v10654, %v10650
        %v11495 = vpack.c.b16 %v10655, %v10651
        %v11496 = vpack.c.b16 %v10656, %v10652
        %v11497 = vpack.c.b16 %v10661, %v10657
        %v11498 = vpack.c.b16 %v10662, %v10658
        %v11499 = vpack.c.b16 %v10663, %v10659
        %v11500 = vpack.c.b16 %v10664, %v10660
        %v11501 = vpack.c.b16 %v10669, %v10665
        %v11502 = vpack.c.b16 %v10670, %v10666
        %v11503 = vpack.c.b16 %v10671, %v10667
        %v11504 = vpack.c.b16 %v10672, %v10668
        %v11505 = vpack.c.b16 %v10677, %v10673
        %v11506 = vpack.c.b16 %v10678, %v10674
        %v11507 = vpack.c.b16 %v10679, %v10675
        %v11508 = vpack.c.b16 %v10680, %v10676
        %v11509 = vpack.c.b16 %v10685, %v10681
        %v11510 = vpack.c.b16 %v10686, %v10682
        %v11511 = vpack.c.b16 %v10687, %v10683
        %v11512 = vpack.c.b16 %v10688, %v10684
        %v11513 = vpack.c.b16 %v10693, %v10689
        %v11514 = vpack.c.b16 %v10694, %v10690
        %v11515 = vpack.c.b16 %v10695, %v10691
        %v11516 = vpack.c.b16 %v10696, %v10692
        %v11517 = vpack.c.b16 %v10701, %v10697
        %v11518 = vpack.c.b16 %v10702, %v10698
        %v11519 = vpack.c.b16 %v10703, %v10699
        %v11520 = vpack.c.b16 %v10704, %v10700
        %v11521 = vpack.c.b16 %v10709, %v10705
        %v11522 = vpack.c.b16 %v10710, %v10706
        %v11523 = vpack.c.b16 %v10711, %v10707
        %v11524 = vpack.c.b16 %v10712, %v10708
        %v11525 = vpack.c.b16 %v10717, %v10713
        %v11526 = vpack.c.b16 %v10718, %v10714
        %v11527 = vpack.c.b16 %v10719, %v10715
        %v11528 = vpack.c.b16 %v10720, %v10716
        %v11529 = vpack.c.b16 %v10725, %v10721
        %v11530 = vpack.c.b16 %v10726, %v10722
        %v11531 = vpack.c.b16 %v10727, %v10723
        %v11532 = vpack.c.b16 %v10728, %v10724
        %v11533 = vpack.c.b16 %v10733, %v10729
        %v11534 = vpack.c.b16 %v10734, %v10730
        %v11535 = vpack.c.b16 %v10735, %v10731
        %v11536 = vpack.c.b16 %v10736, %v10732
        %v11537 = vpack.c.b16 %v10741, %v10737
        %v11538 = vpack.c.b16 %v10742, %v10738
        %v11539 = vpack.c.b16 %v10743, %v10739
        %v11540 = vpack.c.b16 %v10744, %v10740
        %v11541 = vpack.c.b16 %v10749, %v10745
        %v11542 = vpack.c.b16 %v10750, %v10746
        %v11543 = vpack.c.b16 %v10751, %v10747
        %v11544 = vpack.c.b16 %v10752, %v10748
        %v11545 = vpack.c.b16 %v10757, %v10753
        %v11546 = vpack.c.b16 %v10758, %v10754
        %v11547 = vpack.c.b16 %v10759, %v10755
        %v11548 = vpack.c.b16 %v10760, %v10756
        %v11549 = vpack.c.b16 %v10765, %v10761
        %v11550 = vpack.c.b16 %v10766, %v10762
        %v11551 = vpack.c.b16 %v10767, %v10763
        %v11552 = vpack.c.b16 %v10768, %v10764
        %v11553 = vpack.c.b16 %v10773, %v10769
        %v11554 = vpack.c.b16 %v10774, %v10770
        %v11555 = vpack.c.b16 %v10775, %v10771
        %v11556 = vpack.c.b16 %v10776, %v10772
        %v11557 = vpack.c.b16 %v10781, %v10777
        %v11558 = vpack.c.b16 %v10782, %v10778
        %v11559 = vpack.c.b16 %v10783, %v10779
        %v11560 = vpack.c.b16 %v10784, %v10780
        %v11561 = vpack.c.b16 %v10789, %v10785
        %v11562 = vpack.c.b16 %v10790, %v10786
        %v11563 = vpack.c.b16 %v10791, %v10787
        %v11564 = vpack.c.b16 %v10792, %v10788
        %v11565 = vpack.c.b16 %v10797, %v10793
        %v11566 = vpack.c.b16 %v10798, %v10794
        %v11567 = vpack.c.b16 %v10799, %v10795
        %v11568 = vpack.c.b16 %v10800, %v10796
        %v11569 = vpack.c.b16 %v10805, %v10801
        %v11570 = vpack.c.b16 %v10806, %v10802
        %v11571 = vpack.c.b16 %v10807, %v10803
        %v11572 = vpack.c.b16 %v10808, %v10804
        %v11573 = vpack.c.b16 %v10813, %v10809
        %v11574 = vpack.c.b16 %v10814, %v10810
        %v11575 = vpack.c.b16 %v10815, %v10811
        %v11576 = vpack.c.b16 %v10816, %v10812
        %v11577 = vpack.c.b16 %v10821, %v10817
        %v11578 = vpack.c.b16 %v10822, %v10818
        %v11579 = vpack.c.b16 %v10823, %v10819
        %v11580 = vpack.c.b16 %v10824, %v10820
        %v11581 = vpack.c.b16 %v10829, %v10825
        %v11582 = vpack.c.b16 %v10830, %v10826
        %v11583 = vpack.c.b16 %v10831, %v10827
        %v11584 = vpack.c.b16 %v10832, %v10828
        %v11585 = vpack.c.b16 %v10837, %v10833
        %v11586 = vpack.c.b16 %v10838, %v10834
        %v11587 = vpack.c.b16 %v10839, %v10835
        %v11588 = vpack.c.b16 %v10840, %v10836
        %v11589 = vpack.c.b16 %v10845, %v10841
        %v11590 = vpack.c.b16 %v10846, %v10842
        %v11591 = vpack.c.b16 %v10847, %v10843
        %v11592 = vpack.c.b16 %v10848, %v10844
        %v11593 = vpack.c.b16 %v10853, %v10849
        %v11594 = vpack.c.b16 %v10854, %v10850
        %v11595 = vpack.c.b16 %v10855, %v10851
        %v11596 = vpack.c.b16 %v10856, %v10852
        %v11597 = vpack.c.b16 %v10861, %v10857
        %v11598 = vpack.c.b16 %v10862, %v10858
        %v11599 = vpack.c.b16 %v10863, %v10859
        %v11600 = vpack.c.b16 %v10864, %v10860
        %v11601 = vpack.c.b16 %v10869, %v10865
        %v11602 = vpack.c.b16 %v10870, %v10866
        %v11603 = vpack.c.b16 %v10871, %v10867
        %v11604 = vpack.c.b16 %v10872, %v10868
        %v11605 = vpack.c.b16 %v10877, %v10873
        %v11606 = vpack.c.b16 %v10878, %v10874
        %v11607 = vpack.c.b16 %v10879, %v10875
        %v11608 = vpack.c.b16 %v10880, %v10876
        %v11609 = vpack.c.b16 %v10885, %v10881
        %v11610 = vpack.c.b16 %v10886, %v10882
        %v11611 = vpack.c.b16 %v10887, %v10883
        %v11612 = vpack.c.b16 %v10888, %v10884
        %v11613 = vpack.c.b16 %v10893, %v10889
        %v11614 = vpack.c.b16 %v10894, %v10890
        %v11615 = vpack.c.b16 %v10895, %v10891
        %v11616 = vpack.c.b16 %v10896, %v10892
        %v11617 = vpack.c.b16 %v10901, %v10897
        %v11618 = vpack.c.b16 %v10902, %v10898
        %v11619 = vpack.c.b16 %v10903, %v10899
        %v11620 = vpack.c.b16 %v10904, %v10900
        %v11621 = vpack.c.b16 %v10909, %v10905
        %v11622 = vpack.c.b16 %v10910, %v10906
        %v11623 = vpack.c.b16 %v10911, %v10907
        %v11624 = vpack.c.b16 %v10912, %v10908
        %v11625 = vpack.c.b16 %v10917, %v10913
        %v11626 = vpack.c.b16 %v10918, %v10914
        %v11627 = vpack.c.b16 %v10919, %v10915
        %v11628 = vpack.c.b16 %v10920, %v10916
        %v11629 = vpack.c.b16 %v10925, %v10921
        %v11630 = vpack.c.b16 %v10926, %v10922
        %v11631 = vpack.c.b16 %v10927, %v10923
        %v11632 = vpack.c.b16 %v10928, %v10924
        %v11633 = vpack.c.b16 %v10933, %v10929
        %v11634 = vpack.c.b16 %v10934, %v10930
        %v11635 = vpack.c.b16 %v10935, %v10931
        %v11636 = vpack.c.b16 %v10936, %v10932
        %v11637 = vpack.c.b16 %v10941, %v10937
        %v11638 = vpack.c.b16 %v10942, %v10938
        %v11639 = vpack.c.b16 %v10943, %v10939
        %v11640 = vpack.c.b16 %v10944, %v10940
        %v11641 = vpack.c.b16 %v10949, %v10945
        %v11642 = vpack.c.b16 %v10950, %v10946
        %v11643 = vpack.c.b16 %v10951, %v10947
        %v11644 = vpack.c.b16 %v10952, %v10948
        %v11645 = vpack.c.b16 %v10957, %v10953
        %v11646 = vpack.c.b16 %v10958, %v10954
        %v11647 = vpack.c.b16 %v10959, %v10955
        %v11648 = vpack.c.b16 %v10960, %v10956
        %v11649 = vpack.c.b16 %v10965, %v10961
        %v11650 = vpack.c.b16 %v10966, %v10962
        %v11651 = vpack.c.b16 %v10967, %v10963
        %v11652 = vpack.c.b16 %v10968, %v10964
        %v11653 = vpack.c.b16 %v10973, %v10969
        %v11654 = vpack.c.b16 %v10974, %v10970
        %v11655 = vpack.c.b16 %v10975, %v10971
        %v11656 = vpack.c.b16 %v10976, %v10972
        %v11657 = vpack.c.b16 %v10981, %v10977
        %v11658 = vpack.c.b16 %v10982, %v10978
        %v11659 = vpack.c.b16 %v10983, %v10979
        %v11660 = vpack.c.b16 %v10984, %v10980
        %v11661 = vpack.c.b16 %v10989, %v10985
        %v11662 = vpack.c.b16 %v10990, %v10986
        %v11663 = vpack.c.b16 %v10991, %v10987
        %v11664 = vpack.c.b16 %v10992, %v10988
        %v11665 = vpack.c.b16 %v10997, %v10993
        %v11666 = vpack.c.b16 %v10998, %v10994
        %v11667 = vpack.c.b16 %v10999, %v10995
        %v11668 = vpack.c.b16 %v11000, %v10996
        %v11669 = vpack.c.b16 %v11005, %v11001
        %v11670 = vpack.c.b16 %v11006, %v11002
        %v11671 = vpack.c.b16 %v11007, %v11003
        %v11672 = vpack.c.b16 %v11008, %v11004
        %v11673 = vpack.c.b16 %v11013, %v11009
        %v11674 = vpack.c.b16 %v11014, %v11010
        %v11675 = vpack.c.b16 %v11015, %v11011
        %v11676 = vpack.c.b16 %v11016, %v11012
        %v11677 = vpack.c.b16 %v11021, %v11017
        %v11678 = vpack.c.b16 %v11022, %v11018
        %v11679 = vpack.c.b16 %v11023, %v11019
        %v11680 = vpack.c.b16 %v11024, %v11020
        %v11681 = vpack.c.b16 %v11029, %v11025
        %v11682 = vpack.c.b16 %v11030, %v11026
        %v11683 = vpack.c.b16 %v11031, %v11027
        %v11684 = vpack.c.b16 %v11032, %v11028
        %v11685 = vpack.c.b16 %v11037, %v11033
        %v11686 = vpack.c.b16 %v11038, %v11034
        %v11687 = vpack.c.b16 %v11039, %v11035
        %v11688 = vpack.c.b16 %v11040, %v11036
        %v11689 = vpack.c.b16 %v11045, %v11041
        %v11690 = vpack.c.b16 %v11046, %v11042
        %v11691 = vpack.c.b16 %v11047, %v11043
        %v11692 = vpack.c.b16 %v11048, %v11044
        %v11693 = vpack.c.b16 %v11053, %v11049
        %v11694 = vpack.c.b16 %v11054, %v11050
        %v11695 = vpack.c.b16 %v11055, %v11051
        %v11696 = vpack.c.b16 %v11056, %v11052
        %v11697 = vpack.c.b16 %v11061, %v11057
        %v11698 = vpack.c.b16 %v11062, %v11058
        %v11699 = vpack.c.b16 %v11063, %v11059
        %v11700 = vpack.c.b16 %v11064, %v11060
        %v11701 = vpack.c.b16 %v11069, %v11065
        %v11702 = vpack.c.b16 %v11070, %v11066
        %v11703 = vpack.c.b16 %v11071, %v11067
        %v11704 = vpack.c.b16 %v11072, %v11068
        %v11705 = vpack.c.b16 %v11077, %v11073
        %v11706 = vpack.c.b16 %v11078, %v11074
        %v11707 = vpack.c.b16 %v11079, %v11075
        %v11708 = vpack.c.b16 %v11080, %v11076
        %v11709 = vpack.c.b16 %v11085, %v11081
        %v11710 = vpack.c.b16 %v11086, %v11082
        %v11711 = vpack.c.b16 %v11087, %v11083
        %v11712 = vpack.c.b16 %v11088, %v11084
        %v11713 = vpack.c.b16 %v11093, %v11089
        %v11714 = vpack.c.b16 %v11094, %v11090
        %v11715 = vpack.c.b16 %v11095, %v11091
        %v11716 = vpack.c.b16 %v11096, %v11092
        %v11717 = vpack.c.b16 %v11101, %v11097
        %v11718 = vpack.c.b16 %v11102, %v11098
        %v11719 = vpack.c.b16 %v11103, %v11099
        %v11720 = vpack.c.b16 %v11104, %v11100
        %v11721 = vpack.c.b16 %v11109, %v11105
        %v11722 = vpack.c.b16 %v11110, %v11106
        %v11723 = vpack.c.b16 %v11111, %v11107
        %v11724 = vpack.c.b16 %v11112, %v11108
        %v11725 = vpack.c.b16 %v11117, %v11113
        %v11726 = vpack.c.b16 %v11118, %v11114
        %v11727 = vpack.c.b16 %v11119, %v11115
        %v11728 = vpack.c.b16 %v11120, %v11116
        %v11729 = vpack.c.b16 %v11125, %v11121
        %v11730 = vpack.c.b16 %v11126, %v11122
        %v11731 = vpack.c.b16 %v11127, %v11123
        %v11732 = vpack.c.b16 %v11128, %v11124
        %v11733 = vpack.c.b16 %v11133, %v11129
        %v11734 = vpack.c.b16 %v11134, %v11130
        %v11735 = vpack.c.b16 %v11135, %v11131
        %v11736 = vpack.c.b16 %v11136, %v11132
        %v11737 = vpack.c.b16 %v11141, %v11137
        %v11738 = vpack.c.b16 %v11142, %v11138
        %v11739 = vpack.c.b16 %v11143, %v11139
        %v11740 = vpack.c.b16 %v11144, %v11140
        %v11741 = vpack.c.b16 %v11149, %v11145
        %v11742 = vpack.c.b16 %v11150, %v11146
        %v11743 = vpack.c.b16 %v11151, %v11147
        %v11744 = vpack.c.b16 %v11152, %v11148
        %v11745 = vpack.c.b16 %v11157, %v11153
        %v11746 = vpack.c.b16 %v11158, %v11154
        %v11747 = vpack.c.b16 %v11159, %v11155
        %v11748 = vpack.c.b16 %v11160, %v11156
        %v11749 = vpack.c.b16 %v11165, %v11161
        %v11750 = vpack.c.b16 %v11166, %v11162
        %v11751 = vpack.c.b16 %v11167, %v11163
        %v11752 = vpack.c.b16 %v11168, %v11164
        %v11753 = vpack.c.b16 %v11173, %v11169
        %v11754 = vpack.c.b16 %v11174, %v11170
        %v11755 = vpack.c.b16 %v11175, %v11171
        %v11756 = vpack.c.b16 %v11176, %v11172
        %v11757 = vpack.c.b16 %v11181, %v11177
        %v11758 = vpack.c.b16 %v11182, %v11178
        %v11759 = vpack.c.b16 %v11183, %v11179
        %v11760 = vpack.c.b16 %v11184, %v11180
        %v11761 = vpack.c.b16 %v11189, %v11185
        %v11762 = vpack.c.b16 %v11190, %v11186
        %v11763 = vpack.c.b16 %v11191, %v11187
        %v11764 = vpack.c.b16 %v11192, %v11188
        %v11765 = vpack.c.b16 %v11197, %v11193
        %v11766 = vpack.c.b16 %v11198, %v11194
        %v11767 = vpack.c.b16 %v11199, %v11195
        %v11768 = vpack.c.b16 %v11200, %v11196
        %v11769 = vpack.c.b16 %v11205, %v11201
        %v11770 = vpack.c.b16 %v11206, %v11202
        %v11771 = vpack.c.b16 %v11207, %v11203
        %v11772 = vpack.c.b16 %v11208, %v11204
        %v11773 = vpack.c.b16 %v11213, %v11209
        %v11774 = vpack.c.b16 %v11214, %v11210
        %v11775 = vpack.c.b16 %v11215, %v11211
        %v11776 = vpack.c.b16 %v11216, %v11212
        %v11777 = vpack.c.b16 %v11221, %v11217
        %v11778 = vpack.c.b16 %v11222, %v11218
        %v11779 = vpack.c.b16 %v11223, %v11219
        %v11780 = vpack.c.b16 %v11224, %v11220
        %v11781 = vpack.c.b16 %v11229, %v11225
        %v11782 = vpack.c.b16 %v11230, %v11226
        %v11783 = vpack.c.b16 %v11231, %v11227
        %v11784 = vpack.c.b16 %v11232, %v11228
        %v11785 = vpack.c.b16 %v11237, %v11233
        %v11786 = vpack.c.b16 %v11238, %v11234
        %v11787 = vpack.c.b16 %v11239, %v11235
        %v11788 = vpack.c.b16 %v11240, %v11236
        %v11789 = vpack.c.b16 %v11245, %v11241
        %v11790 = vpack.c.b16 %v11246, %v11242
        %v11791 = vpack.c.b16 %v11247, %v11243
        %v11792 = vpack.c.b16 %v11248, %v11244
        %v11793 = vpack.c.b16 %v11253, %v11249
        %v11794 = vpack.c.b16 %v11254, %v11250
        %v11795 = vpack.c.b16 %v11255, %v11251
        %v11796 = vpack.c.b16 %v11256, %v11252
        %v11797 = vpack.c.b16 %v11261, %v11257
        %v11798 = vpack.c.b16 %v11262, %v11258
        %v11799 = vpack.c.b16 %v11263, %v11259
        %v11800 = vpack.c.b16 %v11264, %v11260
        %v11801 = vpack.c.b16 %v11269, %v11265
        %v11802 = vpack.c.b16 %v11270, %v11266
        %v11803 = vpack.c.b16 %v11271, %v11267
        %v11804 = vpack.c.b16 %v11272, %v11268
        %v11805 = vpack.c.b16 %v11277, %v11273
        %v11806 = vpack.c.b16 %v11278, %v11274
        %v11807 = vpack.c.b16 %v11279, %v11275
        %v11808 = vpack.c.b16 %v11280, %v11276
        %v11809 = vpack.c.b16 %v11285, %v11281
        %v11810 = vpack.c.b16 %v11286, %v11282
        %v11811 = vpack.c.b16 %v11287, %v11283
        %v11812 = vpack.c.b16 %v11288, %v11284
        %v11813 = vpack.c.b16 %v11293, %v11289
        %v11814 = vpack.c.b16 %v11294, %v11290
        %v11815 = vpack.c.b16 %v11295, %v11291
        %v11816 = vpack.c.b16 %v11296, %v11292
        %v11817 = vpack.c.b16 %v11301, %v11297
        %v11818 = vpack.c.b16 %v11302, %v11298
        %v11819 = vpack.c.b16 %v11303, %v11299
        %v11820 = vpack.c.b16 %v11304, %v11300
        %v11821 = vpack.c.b16 %v11309, %v11305
        %v11822 = vpack.c.b16 %v11310, %v11306
        %v11823 = vpack.c.b16 %v11311, %v11307
        %v11824 = vpack.c.b16 %v11312, %v11308
        %12337 = vmatprep.subr.bf16.mxu0 %v11314
        %12338 = vmatpush1.bf16.msra.mxu0 %v11313
        %12339 = vmatprep.subr.bf16.mxu0 %v11318
        %12340 = vmatpush1.bf16.msra.mxu0 %v11317
        %12341 = vmatprep.subr.bf16.mxu0 %v11322
        %12342 = vmatpush1.bf16.msra.mxu0 %v11321
        %12343 = vmatprep.subr.bf16.mxu0 %v11326
        %12344 = vmatpush1.bf16.msra.mxu0 %v11325
        %12345 = vmatprep.subr.bf16.mxu0 %v11330
        %12346 = vmatpush1.bf16.msra.mxu0 %v11329
        %12347 = vmatprep.subr.bf16.mxu0 %v11334
        %12348 = vmatpush1.bf16.msra.mxu0 %v11333
        %12349 = vmatprep.subr.bf16.mxu0 %v11338
        %12350 = vmatpush1.bf16.msra.mxu0 %v11337
        %12351 = vmatprep.subr.bf16.mxu0 %v11342
        %12352 = vmatpush1.bf16.msra.mxu0 %v11341
        %12353 = vmatprep.subr.bf16.mxu0 %v11346
        %12354 = vmatpush1.bf16.msra.mxu0 %v11345
        %12355 = vmatprep.subr.bf16.mxu0 %v11350
        %12356 = vmatpush1.bf16.msra.mxu0 %v11349
        %12357 = vmatprep.subr.bf16.mxu0 %v11354
        %12358 = vmatpush1.bf16.msra.mxu0 %v11353
        %12359 = vmatprep.subr.bf16.mxu0 %v11358
        %12360 = vmatpush1.bf16.msra.mxu0 %v11357
        %12361 = vmatprep.subr.bf16.mxu0 %v11362
        %12362 = vmatpush1.bf16.msra.mxu0 %v11361
        %12363 = vmatprep.subr.bf16.mxu0 %v11366
        %12364 = vmatpush1.bf16.msra.mxu0 %v11365
        %12365 = vmatprep.subr.bf16.mxu0 %v11370
        %12366 = vmatpush1.bf16.msra.mxu0 %v11369
        %12367 = vmatprep.subr.bf16.mxu0 %v11374
        %12368 = vmatpush1.bf16.msra.mxu0 %v11373
        %12369 = vmatprep.mubr.bf16.mxu0 %v9746
        %12370 = vmatmul.mubr.bf16.gmra.mrb[0].mxu0 %v9745
        %v12371 = vpop.f32.mrb[0].mxu0
        %v12372 = vadd.f32 %v9704, %v12371
        %v12373 = vpop.f32.mrb[0].mxu0
        %v12374 = vadd.f32 %v9708, %v12373
        %v12375 = vpop.f32.mrb[0].mxu0
        %v12376 = vpop.f32.mrb[0].mxu0
        %12377 = vdwg.mxu0
        %12378 = vmatprep.subr.bf16.mxu0 %v11378
        %12379 = vmatpush1.bf16.msra.mxu0 %v11377
        %12380 = vmatprep.subr.bf16.mxu0 %v11382
        %12381 = vmatpush1.bf16.msra.mxu0 %v11381
        %12382 = vmatprep.subr.bf16.mxu0 %v11386
        %12383 = vmatpush1.bf16.msra.mxu0 %v11385
        %12384 = vmatprep.subr.bf16.mxu0 %v11390
        %12385 = vmatpush1.bf16.msra.mxu0 %v11389
        %12386 = vmatprep.subr.bf16.mxu0 %v11394
        %12387 = vmatpush1.bf16.msra.mxu0 %v11393
        %12388 = vmatprep.subr.bf16.mxu0 %v11398
        %12389 = vmatpush1.bf16.msra.mxu0 %v11397
        %12390 = vmatprep.subr.bf16.mxu0 %v11402
        %12391 = vmatpush1.bf16.msra.mxu0 %v11401
        %12392 = vmatprep.subr.bf16.mxu0 %v11406
        %12393 = vmatpush1.bf16.msra.mxu0 %v11405
        %12394 = vmatprep.subr.bf16.mxu0 %v11410
        %12395 = vmatpush1.bf16.msra.mxu0 %v11409
        %12396 = vmatprep.subr.bf16.mxu0 %v11414
        %12397 = vmatpush1.bf16.msra.mxu0 %v11413
        %12398 = vmatprep.subr.bf16.mxu0 %v11418
        %12399 = vmatpush1.bf16.msra.mxu0 %v11417
        %12400 = vmatprep.subr.bf16.mxu0 %v11422
        %12401 = vmatpush1.bf16.msra.mxu0 %v11421
        %12402 = vmatprep.subr.bf16.mxu0 %v11426
        %12403 = vmatpush1.bf16.msra.mxu0 %v11425
        %12404 = vmatprep.subr.bf16.mxu0 %v11430
        %12405 = vmatpush1.bf16.msra.mxu0 %v11429
        %12406 = vmatprep.subr.bf16.mxu0 %v11434
        %12407 = vmatpush1.bf16.msra.mxu0 %v11433
        %12408 = vmatprep.subr.bf16.mxu0 %v11438
        %12409 = vmatpush1.bf16.msra.mxu0 %v11437
        %12410 = vmatprep.mubr.bf16.mxu0 %v9748
        %12411 = vmatmul.mubr.bf16.gmra.mrb[0].mxu0 %v9747
        %v12412 = vpop.f32.mrb[0].mxu0
        %v12413 = vadd.f32 %v12372, %v12412
        %v12414 = vpop.f32.mrb[0].mxu0
        %v12415 = vadd.f32 %v12374, %v12414
        %v12416 = vpop.f32.mrb[0].mxu0
        %v12417 = vpop.f32.mrb[0].mxu0
        %12418 = vdwg.mxu0
        %12419 = vmatprep.subr.bf16.mxu0 %v11442
        %12420 = vmatpush1.bf16.msra.mxu0 %v11441
        %12421 = vmatprep.subr.bf16.mxu0 %v11446
        %12422 = vmatpush1.bf16.msra.mxu0 %v11445
        %12423 = vmatprep.subr.bf16.mxu0 %v11450
        %12424 = vmatpush1.bf16.msra.mxu0 %v11449
        %12425 = vmatprep.subr.bf16.mxu0 %v11454
        %12426 = vmatpush1.bf16.msra.mxu0 %v11453
        %12427 = vmatprep.subr.bf16.mxu0 %v11458
        %12428 = vmatpush1.bf16.msra.mxu0 %v11457
        %12429 = vmatprep.subr.bf16.mxu0 %v11462
        %12430 = vmatpush1.bf16.msra.mxu0 %v11461
        %12431 = vmatprep.subr.bf16.mxu0 %v11466
        %12432 = vmatpush1.bf16.msra.mxu0 %v11465
        %12433 = vmatprep.subr.bf16.mxu0 %v11470
        %12434 = vmatpush1.bf16.msra.mxu0 %v11469
        %12435 = vmatprep.subr.bf16.mxu0 %v11474
        %12436 = vmatpush1.bf16.msra.mxu0 %v11473
        %12437 = vmatprep.subr.bf16.mxu0 %v11478
        %12438 = vmatpush1.bf16.msra.mxu0 %v11477
        %12439 = vmatprep.subr.bf16.mxu0 %v11482
        %12440 = vmatpush1.bf16.msra.mxu0 %v11481
        %12441 = vmatprep.subr.bf16.mxu0 %v11486
        %12442 = vmatpush1.bf16.msra.mxu0 %v11485
        %12443 = vmatprep.subr.bf16.mxu0 %v11490
        %12444 = vmatpush1.bf16.msra.mxu0 %v11489
        %12445 = vmatprep.subr.bf16.mxu0 %v11494
        %12446 = vmatpush1.bf16.msra.mxu0 %v11493
        %12447 = vmatprep.subr.bf16.mxu0 %v11498
        %12448 = vmatpush1.bf16.msra.mxu0 %v11497
        %12449 = vmatprep.subr.bf16.mxu0 %v11502
        %12450 = vmatpush1.bf16.msra.mxu0 %v11501
        %12451 = vmatprep.mubr.bf16.mxu0 %v9750
        %12452 = vmatmul.mubr.bf16.gmra.mrb[0].mxu0 %v9749
        %v12453 = vpop.f32.mrb[0].mxu0
        %v12454 = vadd.f32 %v12413, %v12453
        %v12455 = vpop.f32.mrb[0].mxu0
        %v12456 = vadd.f32 %v12415, %v12455
        %v12457 = vpop.f32.mrb[0].mxu0
        %v12458 = vpop.f32.mrb[0].mxu0
        %12459 = vdwg.mxu0
        %12460 = vmatprep.subr.bf16.mxu0 %v11506
        %12461 = vmatpush1.bf16.msra.mxu0 %v11505
        %12462 = vmatprep.subr.bf16.mxu0 %v11510
        %12463 = vmatpush1.bf16.msra.mxu0 %v11509
        %12464 = vmatprep.subr.bf16.mxu0 %v11514
        %12465 = vmatpush1.bf16.msra.mxu0 %v11513
        %12466 = vmatprep.subr.bf16.mxu0 %v11518
        %12467 = vmatpush1.bf16.msra.mxu0 %v11517
        %12468 = vmatprep.subr.bf16.mxu0 %v11522
        %12469 = vmatpush1.bf16.msra.mxu0 %v11521
        %12470 = vmatprep.subr.bf16.mxu0 %v11526
        %12471 = vmatpush1.bf16.msra.mxu0 %v11525
        %12472 = vmatprep.subr.bf16.mxu0 %v11530
        %12473 = vmatpush1.bf16.msra.mxu0 %v11529
        %12474 = vmatprep.subr.bf16.mxu0 %v11534
        %12475 = vmatpush1.bf16.msra.mxu0 %v11533
        %12476 = vmatprep.subr.bf16.mxu0 %v11538
        %12477 = vmatpush1.bf16.msra.mxu0 %v11537
        %12478 = vmatprep.subr.bf16.mxu0 %v11542
        %12479 = vmatpush1.bf16.msra.mxu0 %v11541
        %12480 = vmatprep.subr.bf16.mxu0 %v11546
        %12481 = vmatpush1.bf16.msra.mxu0 %v11545
        %12482 = vmatprep.subr.bf16.mxu0 %v11550
        %12483 = vmatpush1.bf16.msra.mxu0 %v11549
        %12484 = vmatprep.subr.bf16.mxu0 %v11554
        %12485 = vmatpush1.bf16.msra.mxu0 %v11553
        %12486 = vmatprep.subr.bf16.mxu0 %v11558
        %12487 = vmatpush1.bf16.msra.mxu0 %v11557
        %12488 = vmatprep.subr.bf16.mxu0 %v11562
        %12489 = vmatpush1.bf16.msra.mxu0 %v11561
        %12490 = vmatprep.subr.bf16.mxu0 %v11566
        %12491 = vmatpush1.bf16.msra.mxu0 %v11565
        %12492 = vmatprep.mubr.bf16.mxu0 %v9752
        %12493 = vmatmul.mubr.bf16.gmra.mrb[0].mxu0 %v9751
        %v12494 = vpop.f32.mrb[0].mxu0
        %v12495 = vadd.f32 %v12454, %v12494
        %v12496 = vpop.f32.mrb[0].mxu0
        %v12497 = vadd.f32 %v12456, %v12496
        %v12498 = vpop.f32.mrb[0].mxu0
        %v12499 = vpop.f32.mrb[0].mxu0
        %12500 = vdwg.mxu0
        %12501 = vmatprep.subr.bf16.mxu0 %v11570
        %12502 = vmatpush1.bf16.msra.mxu0 %v11569
        %12503 = vmatprep.subr.bf16.mxu0 %v11574
        %12504 = vmatpush1.bf16.msra.mxu0 %v11573
        %12505 = vmatprep.subr.bf16.mxu0 %v11578
        %12506 = vmatpush1.bf16.msra.mxu0 %v11577
        %12507 = vmatprep.subr.bf16.mxu0 %v11582
        %12508 = vmatpush1.bf16.msra.mxu0 %v11581
        %12509 = vmatprep.subr.bf16.mxu0 %v11586
        %12510 = vmatpush1.bf16.msra.mxu0 %v11585
        %12511 = vmatprep.subr.bf16.mxu0 %v11590
        %12512 = vmatpush1.bf16.msra.mxu0 %v11589
        %12513 = vmatprep.subr.bf16.mxu0 %v11594
        %12514 = vmatpush1.bf16.msra.mxu0 %v11593
        %12515 = vmatprep.subr.bf16.mxu0 %v11598
        %12516 = vmatpush1.bf16.msra.mxu0 %v11597
        %12517 = vmatprep.subr.bf16.mxu0 %v11602
        %12518 = vmatpush1.bf16.msra.mxu0 %v11601
        %12519 = vmatprep.subr.bf16.mxu0 %v11606
        %12520 = vmatpush1.bf16.msra.mxu0 %v11605
        %12521 = vmatprep.subr.bf16.mxu0 %v11610
        %12522 = vmatpush1.bf16.msra.mxu0 %v11609
        %12523 = vmatprep.subr.bf16.mxu0 %v11614
        %12524 = vmatpush1.bf16.msra.mxu0 %v11613
        %12525 = vmatprep.subr.bf16.mxu0 %v11618
        %12526 = vmatpush1.bf16.msra.mxu0 %v11617
        %12527 = vmatprep.subr.bf16.mxu0 %v11622
        %12528 = vmatpush1.bf16.msra.mxu0 %v11621
        %12529 = vmatprep.subr.bf16.mxu0 %v11626
        %12530 = vmatpush1.bf16.msra.mxu0 %v11625
        %12531 = vmatprep.subr.bf16.mxu0 %v11630
        %12532 = vmatpush1.bf16.msra.mxu0 %v11629
        %12533 = vmatprep.mubr.bf16.mxu0 %v9754
        %12534 = vmatmul.mubr.bf16.gmra.mrb[0].mxu0 %v9753
        %v12535 = vpop.f32.mrb[0].mxu0
        %v12536 = vadd.f32 %v12495, %v12535
        %v12537 = vpop.f32.mrb[0].mxu0
        %v12538 = vadd.f32 %v12497, %v12537
        %v12539 = vpop.f32.mrb[0].mxu0
        %v12540 = vpop.f32.mrb[0].mxu0
        %12541 = vdwg.mxu0
        %12542 = vmatprep.subr.bf16.mxu0 %v11634
        %12543 = vmatpush1.bf16.msra.mxu0 %v11633
        %12544 = vmatprep.subr.bf16.mxu0 %v11638
        %12545 = vmatpush1.bf16.msra.mxu0 %v11637
        %12546 = vmatprep.subr.bf16.mxu0 %v11642
        %12547 = vmatpush1.bf16.msra.mxu0 %v11641
        %12548 = vmatprep.subr.bf16.mxu0 %v11646
        %12549 = vmatpush1.bf16.msra.mxu0 %v11645
        %12550 = vmatprep.subr.bf16.mxu0 %v11650
        %12551 = vmatpush1.bf16.msra.mxu0 %v11649
        %12552 = vmatprep.subr.bf16.mxu0 %v11654
        %12553 = vmatpush1.bf16.msra.mxu0 %v11653
        %12554 = vmatprep.subr.bf16.mxu0 %v11658
        %12555 = vmatpush1.bf16.msra.mxu0 %v11657
        %12556 = vmatprep.subr.bf16.mxu0 %v11662
        %12557 = vmatpush1.bf16.msra.mxu0 %v11661
        %12558 = vmatprep.subr.bf16.mxu0 %v11666
        %12559 = vmatpush1.bf16.msra.mxu0 %v11665
        %12560 = vmatprep.subr.bf16.mxu0 %v11670
        %12561 = vmatpush1.bf16.msra.mxu0 %v11669
        %12562 = vmatprep.subr.bf16.mxu0 %v11674
        %12563 = vmatpush1.bf16.msra.mxu0 %v11673
        %12564 = vmatprep.subr.bf16.mxu0 %v11678
        %12565 = vmatpush1.bf16.msra.mxu0 %v11677
        %12566 = vmatprep.subr.bf16.mxu0 %v11682
        %12567 = vmatpush1.bf16.msra.mxu0 %v11681
        %12568 = vmatprep.subr.bf16.mxu0 %v11686
        %12569 = vmatpush1.bf16.msra.mxu0 %v11685
        %12570 = vmatprep.subr.bf16.mxu0 %v11690
        %12571 = vmatpush1.bf16.msra.mxu0 %v11689
        %12572 = vmatprep.subr.bf16.mxu0 %v11694
        %12573 = vmatpush1.bf16.msra.mxu0 %v11693
        %12574 = vmatprep.mubr.bf16.mxu0 %v9756
        %12575 = vmatmul.mubr.bf16.gmra.mrb[0].mxu0 %v9755
        %v12576 = vpop.f32.mrb[0].mxu0
        %v12577 = vadd.f32 %v12536, %v12576
        %v12578 = vpop.f32.mrb[0].mxu0
        %v12579 = vadd.f32 %v12538, %v12578
        %v12580 = vpop.f32.mrb[0].mxu0
        %v12581 = vpop.f32.mrb[0].mxu0
        %12582 = vdwg.mxu0
        %12583 = vmatprep.subr.bf16.mxu0 %v11698
        %12584 = vmatpush1.bf16.msra.mxu0 %v11697
        %12585 = vmatprep.subr.bf16.mxu0 %v11702
        %12586 = vmatpush1.bf16.msra.mxu0 %v11701
        %12587 = vmatprep.subr.bf16.mxu0 %v11706
        %12588 = vmatpush1.bf16.msra.mxu0 %v11705
        %12589 = vmatprep.subr.bf16.mxu0 %v11710
        %12590 = vmatpush1.bf16.msra.mxu0 %v11709
        %12591 = vmatprep.subr.bf16.mxu0 %v11714
        %12592 = vmatpush1.bf16.msra.mxu0 %v11713
        %12593 = vmatprep.subr.bf16.mxu0 %v11718
        %12594 = vmatpush1.bf16.msra.mxu0 %v11717
        %12595 = vmatprep.subr.bf16.mxu0 %v11722
        %12596 = vmatpush1.bf16.msra.mxu0 %v11721
        %12597 = vmatprep.subr.bf16.mxu0 %v11726
        %12598 = vmatpush1.bf16.msra.mxu0 %v11725
        %12599 = vmatprep.subr.bf16.mxu0 %v11730
        %12600 = vmatpush1.bf16.msra.mxu0 %v11729
        %12601 = vmatprep.subr.bf16.mxu0 %v11734
        %12602 = vmatpush1.bf16.msra.mxu0 %v11733
        %12603 = vmatprep.subr.bf16.mxu0 %v11738
        %12604 = vmatpush1.bf16.msra.mxu0 %v11737
        %12605 = vmatprep.subr.bf16.mxu0 %v11742
        %12606 = vmatpush1.bf16.msra.mxu0 %v11741
        %12607 = vmatprep.subr.bf16.mxu0 %v11746
        %12608 = vmatpush1.bf16.msra.mxu0 %v11745
        %12609 = vmatprep.subr.bf16.mxu0 %v11750
        %12610 = vmatpush1.bf16.msra.mxu0 %v11749
        %12611 = vmatprep.subr.bf16.mxu0 %v11754
        %12612 = vmatpush1.bf16.msra.mxu0 %v11753
        %12613 = vmatprep.subr.bf16.mxu0 %v11758
        %12614 = vmatpush1.bf16.msra.mxu0 %v11757
        %12615 = vmatprep.mubr.bf16.mxu0 %v9758
        %12616 = vmatmul.mubr.bf16.gmra.mrb[0].mxu0 %v9757
        %v12617 = vpop.f32.mrb[0].mxu0
        %v12618 = vadd.f32 %v12577, %v12617
        %v12619 = vpop.f32.mrb[0].mxu0
        %v12620 = vadd.f32 %v12579, %v12619
        %v12621 = vpop.f32.mrb[0].mxu0
        %v12622 = vpop.f32.mrb[0].mxu0
        %12623 = vdwg.mxu0
        %12624 = vmatprep.subr.bf16.mxu0 %v11762
        %12625 = vmatpush1.bf16.msra.mxu0 %v11761
        %12626 = vmatprep.subr.bf16.mxu0 %v11766
        %12627 = vmatpush1.bf16.msra.mxu0 %v11765
        %12628 = vmatprep.subr.bf16.mxu0 %v11770
        %12629 = vmatpush1.bf16.msra.mxu0 %v11769
        %12630 = vmatprep.subr.bf16.mxu0 %v11774
        %12631 = vmatpush1.bf16.msra.mxu0 %v11773
        %12632 = vmatprep.subr.bf16.mxu0 %v11778
        %12633 = vmatpush1.bf16.msra.mxu0 %v11777
        %12634 = vmatprep.subr.bf16.mxu0 %v11782
        %12635 = vmatpush1.bf16.msra.mxu0 %v11781
        %12636 = vmatprep.subr.bf16.mxu0 %v11786
        %12637 = vmatpush1.bf16.msra.mxu0 %v11785
        %12638 = vmatprep.subr.bf16.mxu0 %v11790
        %12639 = vmatpush1.bf16.msra.mxu0 %v11789
        %12640 = vmatprep.subr.bf16.mxu0 %v11794
        %12641 = vmatpush1.bf16.msra.mxu0 %v11793
        %12642 = vmatprep.subr.bf16.mxu0 %v11798
        %12643 = vmatpush1.bf16.msra.mxu0 %v11797
        %12644 = vmatprep.subr.bf16.mxu0 %v11802
        %12645 = vmatpush1.bf16.msra.mxu0 %v11801
        %12646 = vmatprep.subr.bf16.mxu0 %v11806
        %12647 = vmatpush1.bf16.msra.mxu0 %v11805
        %12648 = vmatprep.subr.bf16.mxu0 %v11810
        %12649 = vmatpush1.bf16.msra.mxu0 %v11809
        %12650 = vmatprep.subr.bf16.mxu0 %v11814
        %12651 = vmatpush1.bf16.msra.mxu0 %v11813
        %12652 = vmatprep.subr.bf16.mxu0 %v11818
        %12653 = vmatpush1.bf16.msra.mxu0 %v11817
        %12654 = vmatprep.subr.bf16.mxu0 %v11822
        %12655 = vmatpush1.bf16.msra.mxu0 %v11821
        %12656 = vmatprep.mubr.bf16.mxu0 %v9760
        %12657 = vmatmul.mubr.bf16.gmra.mrb[0].mxu0 %v9759
        %v12658 = vpop.f32.mrb[0].mxu0
        %v12659 = vadd.f32 %v12618, %v12658
        %v12660 = vpop.f32.mrb[0].mxu0
        %v12661 = vadd.f32 %v12620, %v12660
        %v12662 = vpop.f32.mrb[0].mxu0
        %v12663 = vpop.f32.mrb[0].mxu0
        %12664 = vdwg.mxu0
        %12665 = vmatprep.subr.bf16.mxu0 %v11316
        %12666 = vmatpush1.bf16.msra.mxu0 %v11315
        %12667 = vmatprep.subr.bf16.mxu0 %v11320
        %12668 = vmatpush1.bf16.msra.mxu0 %v11319
        %12669 = vmatprep.subr.bf16.mxu0 %v11324
        %12670 = vmatpush1.bf16.msra.mxu0 %v11323
        %12671 = vmatprep.subr.bf16.mxu0 %v11328
        %12672 = vmatpush1.bf16.msra.mxu0 %v11327
        %12673 = vmatprep.subr.bf16.mxu0 %v11332
        %12674 = vmatpush1.bf16.msra.mxu0 %v11331
        %12675 = vmatprep.subr.bf16.mxu0 %v11336
        %12676 = vmatpush1.bf16.msra.mxu0 %v11335
        %12677 = vmatprep.subr.bf16.mxu0 %v11340
        %12678 = vmatpush1.bf16.msra.mxu0 %v11339
        %12679 = vmatprep.subr.bf16.mxu0 %v11344
        %12680 = vmatpush1.bf16.msra.mxu0 %v11343
        %12681 = vmatprep.subr.bf16.mxu0 %v11348
        %12682 = vmatpush1.bf16.msra.mxu0 %v11347
        %12683 = vmatprep.subr.bf16.mxu0 %v11352
        %12684 = vmatpush1.bf16.msra.mxu0 %v11351
        %12685 = vmatprep.subr.bf16.mxu0 %v11356
        %12686 = vmatpush1.bf16.msra.mxu0 %v11355
        %12687 = vmatprep.subr.bf16.mxu0 %v11360
        %12688 = vmatpush1.bf16.msra.mxu0 %v11359
        %12689 = vmatprep.subr.bf16.mxu0 %v11364
        %12690 = vmatpush1.bf16.msra.mxu0 %v11363
        %12691 = vmatprep.subr.bf16.mxu0 %v11368
        %12692 = vmatpush1.bf16.msra.mxu0 %v11367
        %12693 = vmatprep.subr.bf16.mxu0 %v11372
        %12694 = vmatpush1.bf16.msra.mxu0 %v11371
        %12695 = vmatprep.subr.bf16.mxu0 %v11376
        %12696 = vmatpush1.bf16.msra.mxu0 %v11375
        %12697 = vmatprep.mubr.bf16.mxu0 %v9746
        %12698 = vmatmul.mubr.bf16.gmra.mrb[0].mxu0 %v9745
        %v12699 = vpop.f32.mrb[0].mxu0
        %v12700 = vadd.f32 %v9712, %v12699
        %v12701 = vpop.f32.mrb[0].mxu0
        %v12702 = vadd.f32 %v9716, %v12701
        %v12703 = vpop.f32.mrb[0].mxu0
        %v12704 = vpop.f32.mrb[0].mxu0
        %12705 = vdwg.mxu0
        %12706 = vmatprep.subr.bf16.mxu0 %v11380
        %12707 = vmatpush1.bf16.msra.mxu0 %v11379
        %12708 = vmatprep.subr.bf16.mxu0 %v11384
        %12709 = vmatpush1.bf16.msra.mxu0 %v11383
        %12710 = vmatprep.subr.bf16.mxu0 %v11388
        %12711 = vmatpush1.bf16.msra.mxu0 %v11387
        %12712 = vmatprep.subr.bf16.mxu0 %v11392
        %12713 = vmatpush1.bf16.msra.mxu0 %v11391
        %12714 = vmatprep.subr.bf16.mxu0 %v11396
        %12715 = vmatpush1.bf16.msra.mxu0 %v11395
        %12716 = vmatprep.subr.bf16.mxu0 %v11400
        %12717 = vmatpush1.bf16.msra.mxu0 %v11399
        %12718 = vmatprep.subr.bf16.mxu0 %v11404
        %12719 = vmatpush1.bf16.msra.mxu0 %v11403
        %12720 = vmatprep.subr.bf16.mxu0 %v11408
        %12721 = vmatpush1.bf16.msra.mxu0 %v11407
        %12722 = vmatprep.subr.bf16.mxu0 %v11412
        %12723 = vmatpush1.bf16.msra.mxu0 %v11411
        %12724 = vmatprep.subr.bf16.mxu0 %v11416
        %12725 = vmatpush1.bf16.msra.mxu0 %v11415
        %12726 = vmatprep.subr.bf16.mxu0 %v11420
        %12727 = vmatpush1.bf16.msra.mxu0 %v11419
        %12728 = vmatprep.subr.bf16.mxu0 %v11424
        %12729 = vmatpush1.bf16.msra.mxu0 %v11423
        %12730 = vmatprep.subr.bf16.mxu0 %v11428
        %12731 = vmatpush1.bf16.msra.mxu0 %v11427
        %12732 = vmatprep.subr.bf16.mxu0 %v11432
        %12733 = vmatpush1.bf16.msra.mxu0 %v11431
        %12734 = vmatprep.subr.bf16.mxu0 %v11436
        %12735 = vmatpush1.bf16.msra.mxu0 %v11435
        %12736 = vmatprep.subr.bf16.mxu0 %v11440
        %12737 = vmatpush1.bf16.msra.mxu0 %v11439
        %12738 = vmatprep.mubr.bf16.mxu0 %v9748
        %12739 = vmatmul.mubr.bf16.gmra.mrb[0].mxu0 %v9747
        %v12740 = vpop.f32.mrb[0].mxu0
        %v12741 = vadd.f32 %v12700, %v12740
        %v12742 = vpop.f32.mrb[0].mxu0
        %v12743 = vadd.f32 %v12702, %v12742
        %v12744 = vpop.f32.mrb[0].mxu0
        %v12745 = vpop.f32.mrb[0].mxu0
        %12746 = vdwg.mxu0
        %12747 = vmatprep.subr.bf16.mxu0 %v11444
        %12748 = vmatpush1.bf16.msra.mxu0 %v11443
        %12749 = vmatprep.subr.bf16.mxu0 %v11448
        %12750 = vmatpush1.bf16.msra.mxu0 %v11447
        %12751 = vmatprep.subr.bf16.mxu0 %v11452
        %12752 = vmatpush1.bf16.msra.mxu0 %v11451
        %12753 = vmatprep.subr.bf16.mxu0 %v11456
        %12754 = vmatpush1.bf16.msra.mxu0 %v11455
        %12755 = vmatprep.subr.bf16.mxu0 %v11460
        %12756 = vmatpush1.bf16.msra.mxu0 %v11459
        %12757 = vmatprep.subr.bf16.mxu0 %v11464
        %12758 = vmatpush1.bf16.msra.mxu0 %v11463
        %12759 = vmatprep.subr.bf16.mxu0 %v11468
        %12760 = vmatpush1.bf16.msra.mxu0 %v11467
        %12761 = vmatprep.subr.bf16.mxu0 %v11472
        %12762 = vmatpush1.bf16.msra.mxu0 %v11471
        %12763 = vmatprep.subr.bf16.mxu0 %v11476
        %12764 = vmatpush1.bf16.msra.mxu0 %v11475
        %12765 = vmatprep.subr.bf16.mxu0 %v11480
        %12766 = vmatpush1.bf16.msra.mxu0 %v11479
        %12767 = vmatprep.subr.bf16.mxu0 %v11484
        %12768 = vmatpush1.bf16.msra.mxu0 %v11483
        %12769 = vmatprep.subr.bf16.mxu0 %v11488
        %12770 = vmatpush1.bf16.msra.mxu0 %v11487
        %12771 = vmatprep.subr.bf16.mxu0 %v11492
        %12772 = vmatpush1.bf16.msra.mxu0 %v11491
        %12773 = vmatprep.subr.bf16.mxu0 %v11496
        %12774 = vmatpush1.bf16.msra.mxu0 %v11495
        %12775 = vmatprep.subr.bf16.mxu0 %v11500
        %12776 = vmatpush1.bf16.msra.mxu0 %v11499
        %12777 = vmatprep.subr.bf16.mxu0 %v11504
        %12778 = vmatpush1.bf16.msra.mxu0 %v11503
        %12779 = vmatprep.mubr.bf16.mxu0 %v9750
        %12780 = vmatmul.mubr.bf16.gmra.mrb[0].mxu0 %v9749
        %v12781 = vpop.f32.mrb[0].mxu0
        %v12782 = vadd.f32 %v12741, %v12781
        %v12783 = vpop.f32.mrb[0].mxu0
        %v12784 = vadd.f32 %v12743, %v12783
        %v12785 = vpop.f32.mrb[0].mxu0
        %v12786 = vpop.f32.mrb[0].mxu0
        %12787 = vdwg.mxu0
        %12788 = vmatprep.subr.bf16.mxu0 %v11508
        %12789 = vmatpush1.bf16.msra.mxu0 %v11507
        %12790 = vmatprep.subr.bf16.mxu0 %v11512
        %12791 = vmatpush1.bf16.msra.mxu0 %v11511
        %12792 = vmatprep.subr.bf16.mxu0 %v11516
        %12793 = vmatpush1.bf16.msra.mxu0 %v11515
        %12794 = vmatprep.subr.bf16.mxu0 %v11520
        %12795 = vmatpush1.bf16.msra.mxu0 %v11519
        %12796 = vmatprep.subr.bf16.mxu0 %v11524
        %12797 = vmatpush1.bf16.msra.mxu0 %v11523
        %12798 = vmatprep.subr.bf16.mxu0 %v11528
        %12799 = vmatpush1.bf16.msra.mxu0 %v11527
        %12800 = vmatprep.subr.bf16.mxu0 %v11532
        %12801 = vmatpush1.bf16.msra.mxu0 %v11531
        %12802 = vmatprep.subr.bf16.mxu0 %v11536
        %12803 = vmatpush1.bf16.msra.mxu0 %v11535
        %12804 = vmatprep.subr.bf16.mxu0 %v11540
        %12805 = vmatpush1.bf16.msra.mxu0 %v11539
        %12806 = vmatprep.subr.bf16.mxu0 %v11544
        %12807 = vmatpush1.bf16.msra.mxu0 %v11543
        %12808 = vmatprep.subr.bf16.mxu0 %v11548
        %12809 = vmatpush1.bf16.msra.mxu0 %v11547
        %12810 = vmatprep.subr.bf16.mxu0 %v11552
        %12811 = vmatpush1.bf16.msra.mxu0 %v11551
        %12812 = vmatprep.subr.bf16.mxu0 %v11556
        %12813 = vmatpush1.bf16.msra.mxu0 %v11555
        %12814 = vmatprep.subr.bf16.mxu0 %v11560
        %12815 = vmatpush1.bf16.msra.mxu0 %v11559
        %12816 = vmatprep.subr.bf16.mxu0 %v11564
        %12817 = vmatpush1.bf16.msra.mxu0 %v11563
        %12818 = vmatprep.subr.bf16.mxu0 %v11568
        %12819 = vmatpush1.bf16.msra.mxu0 %v11567
        %12820 = vmatprep.mubr.bf16.mxu0 %v9752
        %12821 = vmatmul.mubr.bf16.gmra.mrb[0].mxu0 %v9751
        %v12822 = vpop.f32.mrb[0].mxu0
        %v12823 = vadd.f32 %v12782, %v12822
        %v12824 = vpop.f32.mrb[0].mxu0
        %v12825 = vadd.f32 %v12784, %v12824
        %v12826 = vpop.f32.mrb[0].mxu0
        %v12827 = vpop.f32.mrb[0].mxu0
        %12828 = vdwg.mxu0
        %12829 = vmatprep.subr.bf16.mxu0 %v11572
        %12830 = vmatpush1.bf16.msra.mxu0 %v11571
        %12831 = vmatprep.subr.bf16.mxu0 %v11576
        %12832 = vmatpush1.bf16.msra.mxu0 %v11575
        %12833 = vmatprep.subr.bf16.mxu0 %v11580
        %12834 = vmatpush1.bf16.msra.mxu0 %v11579
        %12835 = vmatprep.subr.bf16.mxu0 %v11584
        %12836 = vmatpush1.bf16.msra.mxu0 %v11583
        %12837 = vmatprep.subr.bf16.mxu0 %v11588
        %12838 = vmatpush1.bf16.msra.mxu0 %v11587
        %12839 = vmatprep.subr.bf16.mxu0 %v11592
        %12840 = vmatpush1.bf16.msra.mxu0 %v11591
        %12841 = vmatprep.subr.bf16.mxu0 %v11596
        %12842 = vmatpush1.bf16.msra.mxu0 %v11595
        %12843 = vmatprep.subr.bf16.mxu0 %v11600
        %12844 = vmatpush1.bf16.msra.mxu0 %v11599
        %12845 = vmatprep.subr.bf16.mxu0 %v11604
        %12846 = vmatpush1.bf16.msra.mxu0 %v11603
        %12847 = vmatprep.subr.bf16.mxu0 %v11608
        %12848 = vmatpush1.bf16.msra.mxu0 %v11607
        %12849 = vmatprep.subr.bf16.mxu0 %v11612
        %12850 = vmatpush1.bf16.msra.mxu0 %v11611
        %12851 = vmatprep.subr.bf16.mxu0 %v11616
        %12852 = vmatpush1.bf16.msra.mxu0 %v11615
        %12853 = vmatprep.subr.bf16.mxu0 %v11620
        %12854 = vmatpush1.bf16.msra.mxu0 %v11619
        %12855 = vmatprep.subr.bf16.mxu0 %v11624
        %12856 = vmatpush1.bf16.msra.mxu0 %v11623
        %12857 = vmatprep.subr.bf16.mxu0 %v11628
        %12858 = vmatpush1.bf16.msra.mxu0 %v11627
        %12859 = vmatprep.subr.bf16.mxu0 %v11632
        %12860 = vmatpush1.bf16.msra.mxu0 %v11631
        %12861 = vmatprep.mubr.bf16.mxu0 %v9754
        %12862 = vmatmul.mubr.bf16.gmra.mrb[0].mxu0 %v9753
        %v12863 = vpop.f32.mrb[0].mxu0
        %v12864 = vadd.f32 %v12823, %v12863
        %v12865 = vpop.f32.mrb[0].mxu0
        %v12866 = vadd.f32 %v12825, %v12865
        %v12867 = vpop.f32.mrb[0].mxu0
        %v12868 = vpop.f32.mrb[0].mxu0
        %12869 = vdwg.mxu0
        %12870 = vmatprep.subr.bf16.mxu0 %v11636
        %12871 = vmatpush1.bf16.msra.mxu0 %v11635
        %12872 = vmatprep.subr.bf16.mxu0 %v11640
        %12873 = vmatpush1.bf16.msra.mxu0 %v11639
        %12874 = vmatprep.subr.bf16.mxu0 %v11644
        %12875 = vmatpush1.bf16.msra.mxu0 %v11643
        %12876 = vmatprep.subr.bf16.mxu0 %v11648
        %12877 = vmatpush1.bf16.msra.mxu0 %v11647
        %12878 = vmatprep.subr.bf16.mxu0 %v11652
        %12879 = vmatpush1.bf16.msra.mxu0 %v11651
        %12880 = vmatprep.subr.bf16.mxu0 %v11656
        %12881 = vmatpush1.bf16.msra.mxu0 %v11655
        %12882 = vmatprep.subr.bf16.mxu0 %v11660
        %12883 = vmatpush1.bf16.msra.mxu0 %v11659
        %12884 = vmatprep.subr.bf16.mxu0 %v11664
        %12885 = vmatpush1.bf16.msra.mxu0 %v11663
        %12886 = vmatprep.subr.bf16.mxu0 %v11668
        %12887 = vmatpush1.bf16.msra.mxu0 %v11667
        %12888 = vmatprep.subr.bf16.mxu0 %v11672
        %12889 = vmatpush1.bf16.msra.mxu0 %v11671
        %12890 = vmatprep.subr.bf16.mxu0 %v11676
        %12891 = vmatpush1.bf16.msra.mxu0 %v11675
        %12892 = vmatprep.subr.bf16.mxu0 %v11680
        %12893 = vmatpush1.bf16.msra.mxu0 %v11679
        %12894 = vmatprep.subr.bf16.mxu0 %v11684
        %12895 = vmatpush1.bf16.msra.mxu0 %v11683
        %12896 = vmatprep.subr.bf16.mxu0 %v11688
        %12897 = vmatpush1.bf16.msra.mxu0 %v11687
        %12898 = vmatprep.subr.bf16.mxu0 %v11692
        %12899 = vmatpush1.bf16.msra.mxu0 %v11691
        %12900 = vmatprep.subr.bf16.mxu0 %v11696
        %12901 = vmatpush1.bf16.msra.mxu0 %v11695
        %12902 = vmatprep.mubr.bf16.mxu0 %v9756
        %12903 = vmatmul.mubr.bf16.gmra.mrb[0].mxu0 %v9755
        %v12904 = vpop.f32.mrb[0].mxu0
        %v12905 = vadd.f32 %v12864, %v12904
        %v12906 = vpop.f32.mrb[0].mxu0
        %v12907 = vadd.f32 %v12866, %v12906
        %v12908 = vpop.f32.mrb[0].mxu0
        %v12909 = vpop.f32.mrb[0].mxu0
        %12910 = vdwg.mxu0
        %12911 = vmatprep.subr.bf16.mxu0 %v11700
        %12912 = vmatpush1.bf16.msra.mxu0 %v11699
        %12913 = vmatprep.subr.bf16.mxu0 %v11704
        %12914 = vmatpush1.bf16.msra.mxu0 %v11703
        %12915 = vmatprep.subr.bf16.mxu0 %v11708
        %12916 = vmatpush1.bf16.msra.mxu0 %v11707
        %12917 = vmatprep.subr.bf16.mxu0 %v11712
        %12918 = vmatpush1.bf16.msra.mxu0 %v11711
        %12919 = vmatprep.subr.bf16.mxu0 %v11716
        %12920 = vmatpush1.bf16.msra.mxu0 %v11715
        %12921 = vmatprep.subr.bf16.mxu0 %v11720
        %12922 = vmatpush1.bf16.msra.mxu0 %v11719
        %12923 = vmatprep.subr.bf16.mxu0 %v11724
        %12924 = vmatpush1.bf16.msra.mxu0 %v11723
        %12925 = vmatprep.subr.bf16.mxu0 %v11728
        %12926 = vmatpush1.bf16.msra.mxu0 %v11727
        %12927 = vmatprep.subr.bf16.mxu0 %v11732
        %12928 = vmatpush1.bf16.msra.mxu0 %v11731
        %12929 = vmatprep.subr.bf16.mxu0 %v11736
        %12930 = vmatpush1.bf16.msra.mxu0 %v11735
        %12931 = vmatprep.subr.bf16.mxu0 %v11740
        %12932 = vmatpush1.bf16.msra.mxu0 %v11739
        %12933 = vmatprep.subr.bf16.mxu0 %v11744
        %12934 = vmatpush1.bf16.msra.mxu0 %v11743
        %12935 = vmatprep.subr.bf16.mxu0 %v11748
        %12936 = vmatpush1.bf16.msra.mxu0 %v11747
        %12937 = vmatprep.subr.bf16.mxu0 %v11752
        %12938 = vmatpush1.bf16.msra.mxu0 %v11751
        %12939 = vmatprep.subr.bf16.mxu0 %v11756
        %12940 = vmatpush1.bf16.msra.mxu0 %v11755
        %12941 = vmatprep.subr.bf16.mxu0 %v11760
        %12942 = vmatpush1.bf16.msra.mxu0 %v11759
        %12943 = vmatprep.mubr.bf16.mxu0 %v9758
        %12944 = vmatmul.mubr.bf16.gmra.mrb[0].mxu0 %v9757
        %v12945 = vpop.f32.mrb[0].mxu0
        %v12946 = vadd.f32 %v12905, %v12945
        %v12947 = vpop.f32.mrb[0].mxu0
        %v12948 = vadd.f32 %v12907, %v12947
        %v12949 = vpop.f32.mrb[0].mxu0
        %v12950 = vpop.f32.mrb[0].mxu0
        %12951 = vdwg.mxu0
        %12952 = vmatprep.subr.bf16.mxu0 %v11764
        %12953 = vmatpush1.bf16.msra.mxu0 %v11763
        %12954 = vmatprep.subr.bf16.mxu0 %v11768
        %12955 = vmatpush1.bf16.msra.mxu0 %v11767
        %12956 = vmatprep.subr.bf16.mxu0 %v11772
        %12957 = vmatpush1.bf16.msra.mxu0 %v11771
        %12958 = vmatprep.subr.bf16.mxu0 %v11776
        %12959 = vmatpush1.bf16.msra.mxu0 %v11775
        %12960 = vmatprep.subr.bf16.mxu0 %v11780
        %12961 = vmatpush1.bf16.msra.mxu0 %v11779
        %12962 = vmatprep.subr.bf16.mxu0 %v11784
        %12963 = vmatpush1.bf16.msra.mxu0 %v11783
        %12964 = vmatprep.subr.bf16.mxu0 %v11788
        %12965 = vmatpush1.bf16.msra.mxu0 %v11787
        %12966 = vmatprep.subr.bf16.mxu0 %v11792
        %12967 = vmatpush1.bf16.msra.mxu0 %v11791
        %12968 = vmatprep.subr.bf16.mxu0 %v11796
        %12969 = vmatpush1.bf16.msra.mxu0 %v11795
        %12970 = vmatprep.subr.bf16.mxu0 %v11800
        %12971 = vmatpush1.bf16.msra.mxu0 %v11799
        %12972 = vmatprep.subr.bf16.mxu0 %v11804
        %12973 = vmatpush1.bf16.msra.mxu0 %v11803
        %12974 = vmatprep.subr.bf16.mxu0 %v11808
        %12975 = vmatpush1.bf16.msra.mxu0 %v11807
        %12976 = vmatprep.subr.bf16.mxu0 %v11812
        %12977 = vmatpush1.bf16.msra.mxu0 %v11811
        %12978 = vmatprep.subr.bf16.mxu0 %v11816
        %12979 = vmatpush1.bf16.msra.mxu0 %v11815
        %12980 = vmatprep.subr.bf16.mxu0 %v11820
        %12981 = vmatpush1.bf16.msra.mxu0 %v11819
        %12982 = vmatprep.subr.bf16.mxu0 %v11824
        %12983 = vmatpush1.bf16.msra.mxu0 %v11823
        %12984 = vmatprep.mubr.bf16.mxu0 %v9760
        %12985 = vmatmul.mubr.bf16.gmra.mrb[0].mxu0 %v9759
        %v12986 = vpop.f32.mrb[0].mxu0
        %v12987 = vadd.f32 %v12946, %v12986
        %v12988 = vpop.f32.mrb[0].mxu0
        %v12989 = vadd.f32 %v12948, %v12988
        %v12990 = vpop.f32.mrb[0].mxu0
        %v12991 = vpop.f32.mrb[0].mxu0
        %12992 = vdwg.mxu0
        %12993 = vst [vmem:[%s510] sm:$0xff] %v12659
        %12994 = vst [vmem:[%s510 + $0x8] sm:$0xff] %v12661
        %12995 = vst [vmem:[%s510 + $0x10] sm:$0xff] %v12987
        %12996 = vst [vmem:[%s510 + $0x18] sm:$0xff] %v12989
        %s12997 = smul.u32 4, %s28
        %p12998 = scmp.lt.s32.totalorder %s29, 0
        %s12999 = scalar_select %p12998, %s29, 0
        %p13000 = scmp.lt.s32.totalorder %s12997, 83
        %s13001 = scalar_select %p13000, %s12997, 83
        %s13002 = smul.addr %s12999, 84
        %s13003 = sadd.s32 %s13001, %s13002
        %s13004 = smul.addr %s13003, 8
        %s13005 = scalar_lea.vmem %s9, %s13004
        // Predicated region
        $region93: #{one_step_net_forward.1} parent=55 // pred_check
          %p13006 = pneg %p260
        $region94: #{one_step_net_forward.1} parent=55 // pred_check_branch
          %13008 = sbr.rel (%p13006) target = $region96
        $region95: #{one_step_net_forward.1} parent=55 // pred_region
          %s13009 = smul.u32 4, %s28
        $region96: #{one_step_net_forward.1} parent=55 // pred_fallthru
          _
      $region56: #{one_step_net_forward.1} parent=5 // pred_fallthru
        _
      %p13010 = scmp.le.s32.totalorder 2, %s19
      // Predicated region
      $region97: #{one_step_net_forward.1} parent=5 // pred_check
        %p13011 = pneg %p13010
      $region98: #{one_step_net_forward.1} parent=5 // pred_check_branch
        %13013 = sbr.rel (%p13011) target = $region100
      $region99: #{one_step_net_forward.1} parent=5 // pred_region
        %s13014 = ssub.s32 %s19, 2
        // Predicated region
        $region101: #{one_step_net_forward.1} parent=99 // pred_check
          %p13015 = pneg %p266
        $region102: #{one_step_net_forward.1} parent=99 // pred_check_branch
          %13017 = sbr.rel (%p13015) target = $region104
        $region103: #{one_step_net_forward.1} parent=99 // pred_region
          %s13018 = smul.u32 4, %s30
          %p13019 = scmp.lt.s32.totalorder %s31, 0
          %s13020 = scalar_select %p13019, %s31, 0
          %p13021 = scmp.lt.s32.totalorder %s13018, 83
          %s13022 = scalar_select %p13021, %s13018, 83
          %s13023 = smul.addr %s13020, 84
          %s13024 = sadd.s32 %s13022, %s13023
          %s13025 = smul.addr %s13024, 8
          %s13026 = scalar_lea.vmem %s9, %s13025
        $region104: #{one_step_net_forward.1} parent=99 // pred_fallthru
          _
      $region100: #{one_step_net_forward.1} parent=5 // pred_fallthru
        _
    $region6: #{one_step_net_forward.1} parent=1 // loop_footer
      %s23 = sadd.s32 1, %s19
    $region7: #{one_step_net_forward.1} parent=1 // loop_footer_branch
      %18 = sbr.rel target = $region3
    $region8: #{one_step_net_forward.1} parent=1 // loop_exit
      _
    %13027 = vsyncpa [#allocation4], 1
    %s13028 = scalar_lea.sflag [#allocation4], 1
    %13029 = vsyncpa %s13028, 1
    %13030 = vsyncpa [#allocation6], 1
    %13031 = vsyncpa [#allocation9], 1
    %13032 = vsyncpa [#allocation12], 1

</llo_original>
